<compile_context>
chip_gen: v7x
topology: tpu7x:2x2x1
jax: 0.10.0
libtpu: 0.0.40
codegen_flags: <defaults>
</compile_context>

<pallas_src>
import jax
import jax.numpy as jnp
import numpy as np
from jax import lax
from jax.experimental import pallas as pl
from jax.experimental.pallas import tpu as pltpu

NUM_LAYERS = 3
FC1_DIM = 100
OUTPUT_SIZE = 1
LANE = 128
BATCH_TILE = 16       # batch-block granularity (bf16 sublane tile)


def _round_up(x, m):
    return (x + m - 1) // m * m


def _prep_gates(w, H, Hp):
    """Reorder the trailing 4H gate axis from PyTorch's [i,f,g,o] to [i,f,o,g]
    and zero-pad each gate block H -> Hp so gate slices are lane-aligned."""
    lead = w.shape[:-1]
    w4 = w.reshape(lead + (4, H))
    w4 = jnp.take(w4, jnp.array([0, 1, 3, 2]), axis=-2)
    pad = [(0, 0)] * len(lead) + [(0, 0), (0, Hp - H)]
    return jnp.pad(w4, pad).reshape(lead + (4 * Hp,))


def _vmem_tile_bytes(shape, dtype):
    """Bytes of one VMEM buffer of `shape`, including (sublane, lane) padding."""
    itemsize = np.dtype(dtype).itemsize
    dims = list(shape)
    dims[-1] = _round_up(dims[-1], LANE)
    if len(dims) >= 2:
        dims[-2] = _round_up(dims[-2], 8 * (4 // itemsize))
    return int(np.prod(dims)) * itemsize


def lstm_model_kernel(
    x_ref,                          # (T, BB, D)   time-major input block, bf16
    wih0_ref, whh0_ref, b0_ref,     # layer 0: (D, 4Hp) bf16, (Hp, 4Hp) bf16, (1, 4Hp) f32
    wih1_ref, whh1_ref, b1_ref,     # layer 1: (Hp, 4Hp) bf16, (Hp, 4Hp) bf16, (1, 4Hp) f32
    wih2_ref, whh2_ref, b2_ref,     # layer 2
    w_head_ref, b_head_ref,         # folded fc1@fc2 head: (Hp, 1) f32, (1, 1) f32
    out_ref,                        # (BB, 1) f32
    gx_ref,                         # (T, BB, 4Hp) bf16 scratch: per-step gate pre-activations
):
    T, BB, D = x_ref.shape
    Hp = whh0_ref.shape[0]
    G = 4 * Hp
    unroll = min(T, 8 if BB <= 32 else 4)   # limit vreg pressure at large batch blocks

    # ---- Layer 0 input projection, hoisted off the serial path:
    #      one (T*BB, D) @ (D, 4Hp) bf16 matmul with f32 accumulation.
    x2d = x_ref[...].reshape(T * BB, D)
    gx0 = jnp.dot(x2d, wih0_ref[...], preferred_element_type=jnp.float32) + b0_ref[...]
    gx_ref[...] = gx0.reshape(T, BB, G).astype(gx_ref.dtype)

    def recurrence(whh_ref, wih_next_ref=None, b_next_ref=None):
        """Serial time loop; (h, c) live in registers as f32.

        If a next layer exists, its input projection is fused in: gx_ref[t]
        has already been consumed at step t, so overwriting it in place with
        h_t @ wih_next + b_next is safe, and the write is off the loop-carried
        (h, c) dependence chain so it overlaps the next step under unrolling.
        """

        def step(t, carry):
            h, c = carry
            gates = gx_ref[t].astype(jnp.float32) + jnp.dot(
                h.astype(jnp.bfloat16), whh_ref[...],
                preferred_element_type=jnp.float32)
            # Gate layout is [i, f, o, g]: one fused sigmoid over the first
            # 3*Hp lanes via the tanh identity (single EUP op per vreg) and
            # one tanh for the cell candidate.
            sig = 0.5 * jnp.tanh(0.5 * gates[:, :3 * Hp]) + 0.5
            i_g = sig[:, 0 * Hp:1 * Hp]
            f_g = sig[:, 1 * Hp:2 * Hp]
            o_g = sig[:, 2 * Hp:3 * Hp]
            g_g = jnp.tanh(gates[:, 3 * Hp:4 * Hp])
            c = f_g * c + i_g * g_g
            h = o_g * jnp.tanh(c)
            if wih_next_ref is not None:
                nxt = jnp.dot(h.astype(jnp.bfloat16), wih_next_ref[...],
                              preferred_element_type=jnp.float32) + b_next_ref[...]
                gx_ref[t] = nxt.astype(gx_ref.dtype)
            return (h, c)

        zeros = jnp.zeros((BB, Hp), jnp.float32)
        h, _ = lax.fori_loop(0, T, step, (zeros, zeros), unroll=unroll)
        return h

    recurrence(whh0_ref, wih1_ref, b1_ref)       # layer 0 (+ fused layer-1 projection)
    recurrence(whh1_ref, wih2_ref, b2_ref)       # layer 1 (+ fused layer-2 projection)
    h_last = recurrence(whh2_ref)                # layer 2 (final hidden state only)

    # Folded fc1/fc2 head (no activation between them; dropout identity at eval).
    out_ref[...] = (jnp.dot(h_last, w_head_ref[...],
                            preferred_element_type=jnp.float32) + b_head_ref[...])


def init_params(key, input_dim, hidden_dim,
                num_layers=NUM_LAYERS, fc1_dim=FC1_DIM, out_dim=OUTPUT_SIZE):
    """Deterministic params matching the PyTorch module's shapes / init scheme."""
    H = hidden_dim
    params = {}
    keys = jax.random.split(key, 4 * num_layers + 4)
    idx = 0
    k_lstm = 1.0 / float(np.sqrt(H))
    for layer in range(num_layers):
        din = input_dim if layer == 0 else H
        wih = jax.random.uniform(keys[idx], (4 * H, din), jnp.float32, -k_lstm, k_lstm); idx += 1
        whh = jax.random.uniform(keys[idx], (4 * H, H), jnp.float32, -k_lstm, k_lstm); idx += 1
        bih = jax.random.uniform(keys[idx], (4 * H,), jnp.float32, -k_lstm, k_lstm); idx += 1
        bhh = jax.random.uniform(keys[idx], (4 * H,), jnp.float32, -k_lstm, k_lstm); idx += 1
        params[f"wih{layer}_T"] = wih.T                       # (Din, 4H), gate order [i,f,g,o]
        params[f"whh{layer}_T"] = whh.T                       # (H, 4H)
        params[f"b{layer}"] = (bih + bhh).reshape(1, 4 * H)   # combined bias
    k_fc1 = 1.0 / float(np.sqrt(H))
    params["fc1_w_T"] = jax.random.uniform(keys[idx], (fc1_dim, H), jnp.float32, -k_fc1, k_fc1).T; idx += 1
    params["fc1_b"] = jax.random.uniform(keys[idx], (fc1_dim,), jnp.float32, -k_fc1, k_fc1).reshape(1, fc1_dim); idx += 1
    k_fc2 = 1.0 / float(np.sqrt(fc1_dim))
    params["fc2_w_T"] = jax.random.uniform(keys[idx], (out_dim, fc1_dim), jnp.float32, -k_fc2, k_fc2).T; idx += 1
    params["fc2_b"] = jax.random.uniform(keys[idx], (out_dim,), jnp.float32, -k_fc2, k_fc2).reshape(1, out_dim); idx += 1
    return params


@jax.jit
def lstm_model_forward(x, params):
    """x: (B, T, D) batch-first, float32. Returns (B, 1) float32 (eval mode)."""
    B, T, D = x.shape
    H = params["whh0_T"].shape[0]
    Hp = _round_up(H, LANE)                       # lane-aligned gate blocks

    # ---- Weights: gate-permuted [i,f,o,g], lane/row padded, bf16 MXU operands.
    weight_args = []
    for layer in range(NUM_LAYERS):
        wih = _prep_gates(params[f"wih{layer}_T"], H, Hp)      # (Din, 4Hp)
        if layer > 0:                                          # rows come from padded h
            wih = jnp.pad(wih, ((0, Hp - H), (0, 0)))
        whh = jnp.pad(_prep_gates(params[f"whh{layer}_T"], H, Hp), ((0, Hp - H), (0, 0)))
        b = _prep_gates(params[f"b{layer}"], H, Hp)            # f32 bias, added post-accum
        weight_args += [wih.astype(jnp.bfloat16), whh.astype(jnp.bfloat16), b]
    # Fold fc1 -> fc2 (valid: no activation between fc1 and fc2; dropout is eval identity).
    w_head = params["fc1_w_T"] @ params["fc2_w_T"]                     # (H, 1)
    b_head = params["fc1_b"] @ params["fc2_w_T"] + params["fc2_b"]     # (1, 1)
    weight_args += [jnp.pad(w_head, ((0, Hp - H), (0, 0))), b_head]    # head kept f32 (tiny)

    # ---- Generation-aware VMEM budget and batch-block choice.
    try:
        phys_vmem = int(pltpu.get_tpu_info().vmem_capacity_bytes)
    except Exception:
        phys_vmem = 64 << 20                      # conservative (v7x per-core)
    budget = int(phys_vmem * 0.75)
    try:
        kind = jax.devices()[0].device_kind.lower()
    except Exception:
        kind = ""
    multi_tc = ("v4" in kind) or ("v5p" in kind) or ("v7" in kind) or ("tpu7" in kind)

    def footprint(bb):                            # bytes, incl. lane/sublane padding
        est = 2 * _vmem_tile_bytes((T, bb, D), jnp.bfloat16)           # x block (double-buffered)
        est += 2 * _vmem_tile_bytes((bb, OUTPUT_SIZE), jnp.float32)    # out block (double-buffered)
        est += sum(2 * _vmem_tile_bytes(a.shape, a.dtype) for a in weight_args)
        est += _vmem_tile_bytes((T, bb, 4 * Hp), jnp.bfloat16)         # gx scratch (single)
        return est

    block_b = min(_round_up(B, BATCH_TILE), 128)
    if multi_tc and B >= 64:                      # make megacore actually engage (grid >= 2)
        block_b = min(block_b, _round_up(-(-B // 2), BATCH_TILE))
    while footprint(block_b) > budget and block_b > BATCH_TILE:
        block_b = max(BATCH_TILE, _round_up(block_b // 2, BATCH_TILE))
    # TODO(synk): if footprint(BATCH_TILE) still exceeds the budget (very long T),
    #             chunk gx_ref over T instead of relying on block_b reduction alone.
    Bp = _round_up(B, block_b)
    vmem_limit = int(min(budget,
                         max(16 << 20, int(footprint(block_b) * 1.25) + (4 << 20))))

    # ---- Inputs: time-major, bf16, batch padded to the block size.
    x_tm = jnp.transpose(x, (1, 0, 2)).astype(jnp.bfloat16)
    x_tm = jnp.pad(x_tm, ((0, 0), (0, Bp - B), (0, 0)))

    grid = (Bp // block_b,)
    in_specs = [pl.BlockSpec((T, block_b, D), lambda b: (0, b, 0))]
    in_specs += [pl.BlockSpec(a.shape, lambda b: (0, 0)) for a in weight_args]
    out_specs = pl.BlockSpec((block_b, OUTPUT_SIZE), lambda b: (b, 0))
    scratch_shapes = [pltpu.VMEM((T, block_b, 4 * Hp), jnp.bfloat16)]

    out = pl.pallas_call(
        lstm_model_kernel,
        out_shape=jax.ShapeDtypeStruct((Bp, OUTPUT_SIZE), jnp.float32),
        grid=grid,
        in_specs=in_specs,
        out_specs=out_specs,
        scratch_shapes=scratch_shapes,
        compiler_params=pltpu.CompilerParams(
            dimension_semantics=("parallel",),
            vmem_limit_bytes=vmem_limit,
        ),
    )(x_tm, *weight_args)
    return out[:B]


def reference_forward(x, params):
    """Pure-JAX f32 reference matching the PyTorch forward (eval mode)."""
    B, T, D = x.shape
    H = params["whh0_T"].shape[0]
    seq = x.astype(jnp.float32)
    for layer in range(NUM_LAYERS):
        wih = params[f"wih{layer}_T"]
        whh = params[f"whh{layer}_T"]
        b = params[f"b{layer}"]

        def step(carry, x_t):
            h, c = carry
            gates = x_t @ wih + h @ whh + b
            i = jax.nn.sigmoid(gates[:, :H])
            f = jax.nn.sigmoid(gates[:, H:2 * H])
            g = jnp.tanh(gates[:, 2 * H:3 * H])
            o = jax.nn.sigmoid(gates[:, 3 * H:])
            c = f * c + i * g
            h = o * jnp.tanh(c)
            return (h, c), h

        h0 = jnp.zeros((B, H), jnp.float32)
        (_, _), ys = jax.lax.scan(step, (h0, h0), jnp.transpose(seq, (1, 0, 2)))
        seq = jnp.transpose(ys, (1, 0, 2))
    h_last = seq[:, -1, :]
    fc1 = h_last @ params["fc1_w_T"] + params["fc1_b"]
    return fc1 @ params["fc2_w_T"] + params["fc2_b"]


if __name__ == "__main__":
    B, T, D, H = 2, 8, 4, 32   # batch, seq, input_dim, hidden_dim

    key = jax.random.PRNGKey(0)
    k_x, k_p = jax.random.split(key)
    x = jax.random.normal(k_x, (B, T, D), jnp.float32)
    params = init_params(k_p, input_dim=D, hidden_dim=H)

    out = lstm_model_forward(x, params)
    out = jax.block_until_ready(out)

    ref = reference_forward(x, params)
    assert out.shape == (B, OUTPUT_SIZE)
    # bf16 MXU operands (with f32 accumulation) dominate the error vs. the f32 reference.
    np.testing.assert_allclose(np.asarray(out), np.asarray(ref), rtol=5e-2, atol=5e-2)
    print("KERNEL_OK")
</pallas_src>

<mosaic_0001>
module attributes {stable_mosaic.version = 11 : i64} {
  func.func @lstm_model_kernel(%arg0: i32, %arg1: memref<8x16x4xbf16, #tpu.memory_space<vmem>>, %arg2: memref<4x512xbf16, #tpu.memory_space<vmem>>, %arg3: memref<128x512xbf16, #tpu.memory_space<vmem>>, %arg4: memref<1x512xf32, #tpu.memory_space<vmem>>, %arg5: memref<128x512xbf16, #tpu.memory_space<vmem>>, %arg6: memref<128x512xbf16, #tpu.memory_space<vmem>>, %arg7: memref<1x512xf32, #tpu.memory_space<vmem>>, %arg8: memref<128x512xbf16, #tpu.memory_space<vmem>>, %arg9: memref<128x512xbf16, #tpu.memory_space<vmem>>, %arg10: memref<1x512xf32, #tpu.memory_space<vmem>>, %arg11: memref<128x1xf32, #tpu.memory_space<vmem>>, %arg12: memref<1x1xf32, #tpu.memory_space<vmem>>, %arg13: memref<16x1xf32, #tpu.memory_space<vmem>>, %arg14: memref<8x16x512xbf16, #tpu.memory_space<vmem>>) attributes {dimension_semantics = [#tpu.dimension_semantics<parallel>], iteration_bounds = array<i64: 1>, scalar_prefetch = 0 : i64, scratch_operands = 1 : i64, tpu.core_type = #tpu.core_type<tc>, window_params = [{transform_indices = @transform_0, window_bounds = array<i64: 8, 16, 4>}, {pipeline_mode = #tpu.pipeline_mode<synchronous>, transform_indices = @transform_1, window_bounds = array<i64: 4, 512>}, {pipeline_mode = #tpu.pipeline_mode<synchronous>, transform_indices = @transform_2, window_bounds = array<i64: 128, 512>}, {pipeline_mode = #tpu.pipeline_mode<synchronous>, transform_indices = @transform_3, window_bounds = array<i64: 1, 512>}, {pipeline_mode = #tpu.pipeline_mode<synchronous>, transform_indices = @transform_4, window_bounds = array<i64: 128, 512>}, {pipeline_mode = #tpu.pipeline_mode<synchronous>, transform_indices = @transform_5, window_bounds = array<i64: 128, 512>}, {pipeline_mode = #tpu.pipeline_mode<synchronous>, transform_indices = @transform_6, window_bounds = array<i64: 1, 512>}, {pipeline_mode = #tpu.pipeline_mode<synchronous>, transform_indices = @transform_7, window_bounds = array<i64: 128, 512>}, {pipeline_mode = #tpu.pipeline_mode<synchronous>, transform_indices = @transform_8, window_bounds = array<i64: 128, 512>}, {pipeline_mode = #tpu.pipeline_mode<synchronous>, transform_indices = @transform_9, window_bounds = array<i64: 1, 512>}, {pipeline_mode = #tpu.pipeline_mode<synchronous>, transform_indices = @transform_10, window_bounds = array<i64: 128, 1>}, {pipeline_mode = #tpu.pipeline_mode<synchronous>, transform_indices = @transform_11, window_bounds = array<i64: 1, 1>}, {transform_indices = @transform_12, window_bounds = array<i64: 16, 1>}]} {
    %c0 = arith.constant 0 : index
    %c0_0 = arith.constant 0 : index
    %c0_1 = arith.constant 0 : index
    %0 = vector.load %arg1[%c0, %c0_0, %c0_1] : memref<8x16x4xbf16, #tpu.memory_space<vmem>>, vector<8x16x4xbf16>
    %1 = vector.shape_cast %0 : vector<8x16x4xbf16> to vector<128x4xbf16>
    %c0_2 = arith.constant 0 : index
    %c0_3 = arith.constant 0 : index
    %2 = vector.load %arg2[%c0_2, %c0_3] : memref<4x512xbf16, #tpu.memory_space<vmem>>, vector<4x512xbf16>
    %cst = arith.constant dense<0.000000e+00> : vector<128x512xf32>
    %3 = tpu.matmul %1, %2, %cst {dimension_numbers = #tpu.dot_dimension_numbers<[1], [0], [0], [1], [0, 0, 1, 1], [], []>} : vector<128x4xbf16>, vector<4x512xbf16>, vector<128x512xf32> -> vector<128x512xf32>
    %c0_4 = arith.constant 0 : index
    %c0_5 = arith.constant 0 : index
    %4 = vector.load %arg4[%c0_4, %c0_5] : memref<1x512xf32, #tpu.memory_space<vmem>>, vector<1x512xf32>
    %5 = vector.broadcast %4 : vector<1x512xf32> to vector<128x512xf32>
    %6 = arith.addf %3, %5 : vector<128x512xf32>
    %7 = vector.shape_cast %6 : vector<128x512xf32> to vector<8x16x512xf32>
    %8 = arith.truncf %7 : vector<8x16x512xf32> to vector<8x16x512xbf16>
    %c0_6 = arith.constant 0 : index
    %c0_7 = arith.constant 0 : index
    %c0_8 = arith.constant 0 : index
    %9 = vector.load %arg14[%c0_6, %c0_7, %c0_8] : memref<8x16x512xbf16, #tpu.memory_space<vmem>>, vector<8x16x512xbf16>
    tpu.vector_store %arg14[%c0_6, %c0_7, %c0_8], %8 {strides = array<i32>} : memref<8x16x512xbf16, #tpu.memory_space<vmem>>, vector<8x16x512xbf16>,
    %cst_9 = arith.constant 0.000000e+00 : f32
    %10 = vector.broadcast %cst_9 : f32 to vector<16x128xf32>
    %c0_i32 = arith.constant 0 : i32
    %11 = arith.index_cast %c0_i32 : i32 to index
    %c0_10 = arith.constant 0 : index
    %c0_11 = arith.constant 0 : index
    %12 = vector.load %arg14[%11, %c0_10, %c0_11] : memref<8x16x512xbf16, #tpu.memory_space<vmem>>, vector<1x16x512xbf16>
    %13 = vector.shape_cast %12 : vector<1x16x512xbf16> to vector<16x512xbf16>
    %14 = arith.extf %13 : vector<16x512xbf16> to vector<16x512xf32>
    %15 = arith.truncf %10 : vector<16x128xf32> to vector<16x128xbf16>
    %c0_12 = arith.constant 0 : index
    %c0_13 = arith.constant 0 : index
    %16 = vector.load %arg3[%c0_12, %c0_13] : memref<128x512xbf16, #tpu.memory_space<vmem>>, vector<128x512xbf16>
    %cst_14 = arith.constant dense<0.000000e+00> : vector<16x512xf32>
    %17 = tpu.matmul %15, %16, %cst_14 {dimension_numbers = #tpu.dot_dimension_numbers<[1], [0], [0], [1], [0, 0, 1, 1], [], []>} : vector<16x128xbf16>, vector<128x512xbf16>, vector<16x512xf32> -> vector<16x512xf32>
    %18 = arith.addf %14, %17 : vector<16x512xf32>
    %19 = vector.extract_strided_slice %18 {offsets = [0, 0], sizes = [16, 384], strides = [1, 1]} : vector<16x512xf32> to vector<16x384xf32>
    %cst_15 = arith.constant 5.000000e-01 : f32
    %20 = vector.broadcast %cst_15 : f32 to vector<16x384xf32>
    %21 = arith.mulf %20, %19 : vector<16x384xf32>
    %22 = math.tanh %21 : vector<16x384xf32>
    %cst_16 = arith.constant 5.000000e-01 : f32
    %23 = vector.broadcast %cst_16 : f32 to vector<16x384xf32>
    %24 = arith.mulf %23, %22 : vector<16x384xf32>
    %cst_17 = arith.constant 5.000000e-01 : f32
    %25 = vector.broadcast %cst_17 : f32 to vector<16x384xf32>
    %26 = arith.addf %24, %25 : vector<16x384xf32>
    %27 = vector.extract_strided_slice %26 {offsets = [0, 0], sizes = [16, 128], strides = [1, 1]} : vector<16x384xf32> to vector<16x128xf32>
    %28 = vector.extract_strided_slice %26 {offsets = [0, 128], sizes = [16, 128], strides = [1, 1]} : vector<16x384xf32> to vector<16x128xf32>
    %29 = vector.extract_strided_slice %26 {offsets = [0, 256], sizes = [16, 128], strides = [1, 1]} : vector<16x384xf32> to vector<16x128xf32>
    %30 = vector.extract_strided_slice %18 {offsets = [0, 384], sizes = [16, 128], strides = [1, 1]} : vector<16x512xf32> to vector<16x128xf32>
    %31 = math.tanh %30 : vector<16x128xf32>
    %32 = arith.mulf %28, %10 : vector<16x128xf32>
    %33 = arith.mulf %27, %31 : vector<16x128xf32>
    %34 = arith.addf %32, %33 : vector<16x128xf32>
    %35 = math.tanh %34 : vector<16x128xf32>
    %36 = arith.mulf %29, %35 : vector<16x128xf32>
    %37 = arith.truncf %36 : vector<16x128xf32> to vector<16x128xbf16>
    %c0_18 = arith.constant 0 : index
    %c0_19 = arith.constant 0 : index
    %38 = vector.load %arg5[%c0_18, %c0_19] : memref<128x512xbf16, #tpu.memory_space<vmem>>, vector<128x512xbf16>
    %cst_20 = arith.constant dense<0.000000e+00> : vector<16x512xf32>
    %39 = tpu.matmul %37, %38, %cst_20 {dimension_numbers = #tpu.dot_dimension_numbers<[1], [0], [0], [1], [0, 0, 1, 1], [], []>} : vector<16x128xbf16>, vector<128x512xbf16>, vector<16x512xf32> -> vector<16x512xf32>
    %c0_21 = arith.constant 0 : index
    %c0_22 = arith.constant 0 : index
    %40 = vector.load %arg7[%c0_21, %c0_22] : memref<1x512xf32, #tpu.memory_space<vmem>>, vector<1x512xf32>
    %41 = vector.broadcast %40 : vector<1x512xf32> to vector<16x512xf32>
    %42 = arith.addf %39, %41 : vector<16x512xf32>
    %43 = arith.truncf %42 : vector<16x512xf32> to vector<16x512xbf16>
    %44 = arith.index_cast %c0_i32 : i32 to index
    %c0_23 = arith.constant 0 : index
    %c0_24 = arith.constant 0 : index
    %45 = vector.load %arg14[%44, %c0_23, %c0_24] : memref<8x16x512xbf16, #tpu.memory_space<vmem>>, vector<1x16x512xbf16>
    %46 = vector.shape_cast %45 : vector<1x16x512xbf16> to vector<16x512xbf16>
    %47 = vector.shape_cast %43 : vector<16x512xbf16> to vector<1x16x512xbf16>
    tpu.vector_store %arg14[%44, %c0_23, %c0_24], %47 {strides = array<i32>} : memref<8x16x512xbf16, #tpu.memory_space<vmem>>, vector<1x16x512xbf16>,
    %c1_i32 = arith.constant 1 : i32
    %48 = arith.index_cast %c1_i32 : i32 to index
    %c0_25 = arith.constant 0 : index
    %c0_26 = arith.constant 0 : index
    %49 = vector.load %arg14[%48, %c0_25, %c0_26] : memref<8x16x512xbf16, #tpu.memory_space<vmem>>, vector<1x16x512xbf16>
    %50 = vector.shape_cast %49 : vector<1x16x512xbf16> to vector<16x512xbf16>
    %51 = arith.extf %50 : vector<16x512xbf16> to vector<16x512xf32>
    %52 = arith.truncf %36 : vector<16x128xf32> to vector<16x128xbf16>
    %c0_27 = arith.constant 0 : index
    %c0_28 = arith.constant 0 : index
    %53 = vector.load %arg3[%c0_27, %c0_28] : memref<128x512xbf16, #tpu.memory_space<vmem>>, vector<128x512xbf16>
    %cst_29 = arith.constant dense<0.000000e+00> : vector<16x512xf32>
    %54 = tpu.matmul %52, %53, %cst_29 {dimension_numbers = #tpu.dot_dimension_numbers<[1], [0], [0], [1], [0, 0, 1, 1], [], []>} : vector<16x128xbf16>, vector<128x512xbf16>, vector<16x512xf32> -> vector<16x512xf32>
    %55 = arith.addf %51, %54 : vector<16x512xf32>
    %56 = vector.extract_strided_slice %55 {offsets = [0, 0], sizes = [16, 384], strides = [1, 1]} : vector<16x512xf32> to vector<16x384xf32>
    %cst_30 = arith.constant 5.000000e-01 : f32
    %57 = vector.broadcast %cst_30 : f32 to vector<16x384xf32>
    %58 = arith.mulf %57, %56 : vector<16x384xf32>
    %59 = math.tanh %58 : vector<16x384xf32>
    %cst_31 = arith.constant 5.000000e-01 : f32
    %60 = vector.broadcast %cst_31 : f32 to vector<16x384xf32>
    %61 = arith.mulf %60, %59 : vector<16x384xf32>
    %cst_32 = arith.constant 5.000000e-01 : f32
    %62 = vector.broadcast %cst_32 : f32 to vector<16x384xf32>
    %63 = arith.addf %61, %62 : vector<16x384xf32>
    %64 = vector.extract_strided_slice %63 {offsets = [0, 0], sizes = [16, 128], strides = [1, 1]} : vector<16x384xf32> to vector<16x128xf32>
    %65 = vector.extract_strided_slice %63 {offsets = [0, 128], sizes = [16, 128], strides = [1, 1]} : vector<16x384xf32> to vector<16x128xf32>
    %66 = vector.extract_strided_slice %63 {offsets = [0, 256], sizes = [16, 128], strides = [1, 1]} : vector<16x384xf32> to vector<16x128xf32>
    %67 = vector.extract_strided_slice %55 {offsets = [0, 384], sizes = [16, 128], strides = [1, 1]} : vector<16x512xf32> to vector<16x128xf32>
    %68 = math.tanh %67 : vector<16x128xf32>
    %69 = arith.mulf %65, %34 : vector<16x128xf32>
    %70 = arith.mulf %64, %68 : vector<16x128xf32>
    %71 = arith.addf %69, %70 : vector<16x128xf32>
    %72 = math.tanh %71 : vector<16x128xf32>
    %73 = arith.mulf %66, %72 : vector<16x128xf32>
    %74 = arith.truncf %73 : vector<16x128xf32> to vector<16x128xbf16>
    %c0_33 = arith.constant 0 : index
    %c0_34 = arith.constant 0 : index
    %75 = vector.load %arg5[%c0_33, %c0_34] : memref<128x512xbf16, #tpu.memory_space<vmem>>, vector<128x512xbf16>
    %cst_35 = arith.constant dense<0.000000e+00> : vector<16x512xf32>
    %76 = tpu.matmul %74, %75, %cst_35 {dimension_numbers = #tpu.dot_dimension_numbers<[1], [0], [0], [1], [0, 0, 1, 1], [], []>} : vector<16x128xbf16>, vector<128x512xbf16>, vector<16x512xf32> -> vector<16x512xf32>
    %c0_36 = arith.constant 0 : index
    %c0_37 = arith.constant 0 : index
    %77 = vector.load %arg7[%c0_36, %c0_37] : memref<1x512xf32, #tpu.memory_space<vmem>>, vector<1x512xf32>
    %78 = vector.broadcast %77 : vector<1x512xf32> to vector<16x512xf32>
    %79 = arith.addf %76, %78 : vector<16x512xf32>
    %80 = arith.truncf %79 : vector<16x512xf32> to vector<16x512xbf16>
    %81 = arith.index_cast %c1_i32 : i32 to index
    %c0_38 = arith.constant 0 : index
    %c0_39 = arith.constant 0 : index
    %82 = vector.load %arg14[%81, %c0_38, %c0_39] : memref<8x16x512xbf16, #tpu.memory_space<vmem>>, vector<1x16x512xbf16>
    %83 = vector.shape_cast %82 : vector<1x16x512xbf16> to vector<16x512xbf16>
    %84 = vector.shape_cast %80 : vector<16x512xbf16> to vector<1x16x512xbf16>
    tpu.vector_store %arg14[%81, %c0_38, %c0_39], %84 {strides = array<i32>} : memref<8x16x512xbf16, #tpu.memory_space<vmem>>, vector<1x16x512xbf16>,
    %c2_i32 = arith.constant 2 : i32
    %85 = arith.index_cast %c2_i32 : i32 to index
    %c0_40 = arith.constant 0 : index
    %c0_41 = arith.constant 0 : index
    %86 = vector.load %arg14[%85, %c0_40, %c0_41] : memref<8x16x512xbf16, #tpu.memory_space<vmem>>, vector<1x16x512xbf16>
    %87 = vector.shape_cast %86 : vector<1x16x512xbf16> to vector<16x512xbf16>
    %88 = arith.extf %87 : vector<16x512xbf16> to vector<16x512xf32>
    %89 = arith.truncf %73 : vector<16x128xf32> to vector<16x128xbf16>
    %c0_42 = arith.constant 0 : index
    %c0_43 = arith.constant 0 : index
    %90 = vector.load %arg3[%c0_42, %c0_43] : memref<128x512xbf16, #tpu.memory_space<vmem>>, vector<128x512xbf16>
    %cst_44 = arith.constant dense<0.000000e+00> : vector<16x512xf32>
    %91 = tpu.matmul %89, %90, %cst_44 {dimension_numbers = #tpu.dot_dimension_numbers<[1], [0], [0], [1], [0, 0, 1, 1], [], []>} : vector<16x128xbf16>, vector<128x512xbf16>, vector<16x512xf32> -> vector<16x512xf32>
    %92 = arith.addf %88, %91 : vector<16x512xf32>
    %93 = vector.extract_strided_slice %92 {offsets = [0, 0], sizes = [16, 384], strides = [1, 1]} : vector<16x512xf32> to vector<16x384xf32>
    %cst_45 = arith.constant 5.000000e-01 : f32
    %94 = vector.broadcast %cst_45 : f32 to vector<16x384xf32>
    %95 = arith.mulf %94, %93 : vector<16x384xf32>
    %96 = math.tanh %95 : vector<16x384xf32>
    %cst_46 = arith.constant 5.000000e-01 : f32
    %97 = vector.broadcast %cst_46 : f32 to vector<16x384xf32>
    %98 = arith.mulf %97, %96 : vector<16x384xf32>
    %cst_47 = arith.constant 5.000000e-01 : f32
    %99 = vector.broadcast %cst_47 : f32 to vector<16x384xf32>
    %100 = arith.addf %98, %99 : vector<16x384xf32>
    %101 = vector.extract_strided_slice %100 {offsets = [0, 0], sizes = [16, 128], strides = [1, 1]} : vector<16x384xf32> to vector<16x128xf32>
    %102 = vector.extract_strided_slice %100 {offsets = [0, 128], sizes = [16, 128], strides = [1, 1]} : vector<16x384xf32> to vector<16x128xf32>
    %103 = vector.extract_strided_slice %100 {offsets = [0, 256], sizes = [16, 128], strides = [1, 1]} : vector<16x384xf32> to vector<16x128xf32>
    %104 = vector.extract_strided_slice %92 {offsets = [0, 384], sizes = [16, 128], strides = [1, 1]} : vector<16x512xf32> to vector<16x128xf32>
    %105 = math.tanh %104 : vector<16x128xf32>
    %106 = arith.mulf %102, %71 : vector<16x128xf32>
    %107 = arith.mulf %101, %105 : vector<16x128xf32>
    %108 = arith.addf %106, %107 : vector<16x128xf32>
    %109 = math.tanh %108 : vector<16x128xf32>
    %110 = arith.mulf %103, %109 : vector<16x128xf32>
    %111 = arith.truncf %110 : vector<16x128xf32> to vector<16x128xbf16>
    %c0_48 = arith.constant 0 : index
    %c0_49 = arith.constant 0 : index
    %112 = vector.load %arg5[%c0_48, %c0_49] : memref<128x512xbf16, #tpu.memory_space<vmem>>, vector<128x512xbf16>
    %cst_50 = arith.constant dense<0.000000e+00> : vector<16x512xf32>
    %113 = tpu.matmul %111, %112, %cst_50 {dimension_numbers = #tpu.dot_dimension_numbers<[1], [0], [0], [1], [0, 0, 1, 1], [], []>} : vector<16x128xbf16>, vector<128x512xbf16>, vector<16x512xf32> -> vector<16x512xf32>
    %c0_51 = arith.constant 0 : index
    %c0_52 = arith.constant 0 : index
    %114 = vector.load %arg7[%c0_51, %c0_52] : memref<1x512xf32, #tpu.memory_space<vmem>>, vector<1x512xf32>
    %115 = vector.broadcast %114 : vector<1x512xf32> to vector<16x512xf32>
    %116 = arith.addf %113, %115 : vector<16x512xf32>
    %117 = arith.truncf %116 : vector<16x512xf32> to vector<16x512xbf16>
    %118 = arith.index_cast %c2_i32 : i32 to index
    %c0_53 = arith.constant 0 : index
    %c0_54 = arith.constant 0 : index
    %119 = vector.load %arg14[%118, %c0_53, %c0_54] : memref<8x16x512xbf16, #tpu.memory_space<vmem>>, vector<1x16x512xbf16>
    %120 = vector.shape_cast %119 : vector<1x16x512xbf16> to vector<16x512xbf16>
    %121 = vector.shape_cast %117 : vector<16x512xbf16> to vector<1x16x512xbf16>
    tpu.vector_store %arg14[%118, %c0_53, %c0_54], %121 {strides = array<i32>} : memref<8x16x512xbf16, #tpu.memory_space<vmem>>, vector<1x16x512xbf16>,
    %c3_i32 = arith.constant 3 : i32
    %122 = arith.index_cast %c3_i32 : i32 to index
    %c0_55 = arith.constant 0 : index
    %c0_56 = arith.constant 0 : index
    %123 = vector.load %arg14[%122, %c0_55, %c0_56] : memref<8x16x512xbf16, #tpu.memory_space<vmem>>, vector<1x16x512xbf16>
    %124 = vector.shape_cast %123 : vector<1x16x512xbf16> to vector<16x512xbf16>
    %125 = arith.extf %124 : vector<16x512xbf16> to vector<16x512xf32>
    %126 = arith.truncf %110 : vector<16x128xf32> to vector<16x128xbf16>
    %c0_57 = arith.constant 0 : index
    %c0_58 = arith.constant 0 : index
    %127 = vector.load %arg3[%c0_57, %c0_58] : memref<128x512xbf16, #tpu.memory_space<vmem>>, vector<128x512xbf16>
    %cst_59 = arith.constant dense<0.000000e+00> : vector<16x512xf32>
    %128 = tpu.matmul %126, %127, %cst_59 {dimension_numbers = #tpu.dot_dimension_numbers<[1], [0], [0], [1], [0, 0, 1, 1], [], []>} : vector<16x128xbf16>, vector<128x512xbf16>, vector<16x512xf32> -> vector<16x512xf32>
    %129 = arith.addf %125, %128 : vector<16x512xf32>
    %130 = vector.extract_strided_slice %129 {offsets = [0, 0], sizes = [16, 384], strides = [1, 1]} : vector<16x512xf32> to vector<16x384xf32>
    %cst_60 = arith.constant 5.000000e-01 : f32
    %131 = vector.broadcast %cst_60 : f32 to vector<16x384xf32>
    %132 = arith.mulf %131, %130 : vector<16x384xf32>
    %133 = math.tanh %132 : vector<16x384xf32>
    %cst_61 = arith.constant 5.000000e-01 : f32
    %134 = vector.broadcast %cst_61 : f32 to vector<16x384xf32>
    %135 = arith.mulf %134, %133 : vector<16x384xf32>
    %cst_62 = arith.constant 5.000000e-01 : f32
    %136 = vector.broadcast %cst_62 : f32 to vector<16x384xf32>
    %137 = arith.addf %135, %136 : vector<16x384xf32>
    %138 = vector.extract_strided_slice %137 {offsets = [0, 0], sizes = [16, 128], strides = [1, 1]} : vector<16x384xf32> to vector<16x128xf32>
    %139 = vector.extract_strided_slice %137 {offsets = [0, 128], sizes = [16, 128], strides = [1, 1]} : vector<16x384xf32> to vector<16x128xf32>
    %140 = vector.extract_strided_slice %137 {offsets = [0, 256], sizes = [16, 128], strides = [1, 1]} : vector<16x384xf32> to vector<16x128xf32>
    %141 = vector.extract_strided_slice %129 {offsets = [0, 384], sizes = [16, 128], strides = [1, 1]} : vector<16x512xf32> to vector<16x128xf32>
    %142 = math.tanh %141 : vector<16x128xf32>
    %143 = arith.mulf %139, %108 : vector<16x128xf32>
    %144 = arith.mulf %138, %142 : vector<16x128xf32>
    %145 = arith.addf %143, %144 : vector<16x128xf32>
    %146 = math.tanh %145 : vector<16x128xf32>
    %147 = arith.mulf %140, %146 : vector<16x128xf32>
    %148 = arith.truncf %147 : vector<16x128xf32> to vector<16x128xbf16>
    %c0_63 = arith.constant 0 : index
    %c0_64 = arith.constant 0 : index
    %149 = vector.load %arg5[%c0_63, %c0_64] : memref<128x512xbf16, #tpu.memory_space<vmem>>, vector<128x512xbf16>
    %cst_65 = arith.constant dense<0.000000e+00> : vector<16x512xf32>
    %150 = tpu.matmul %148, %149, %cst_65 {dimension_numbers = #tpu.dot_dimension_numbers<[1], [0], [0], [1], [0, 0, 1, 1], [], []>} : vector<16x128xbf16>, vector<128x512xbf16>, vector<16x512xf32> -> vector<16x512xf32>
    %c0_66 = arith.constant 0 : index
    %c0_67 = arith.constant 0 : index
    %151 = vector.load %arg7[%c0_66, %c0_67] : memref<1x512xf32, #tpu.memory_space<vmem>>, vector<1x512xf32>
    %152 = vector.broadcast %151 : vector<1x512xf32> to vector<16x512xf32>
    %153 = arith.addf %150, %152 : vector<16x512xf32>
    %154 = arith.truncf %153 : vector<16x512xf32> to vector<16x512xbf16>
    %155 = arith.index_cast %c3_i32 : i32 to index
    %c0_68 = arith.constant 0 : index
    %c0_69 = arith.constant 0 : index
    %156 = vector.load %arg14[%155, %c0_68, %c0_69] : memref<8x16x512xbf16, #tpu.memory_space<vmem>>, vector<1x16x512xbf16>
    %157 = vector.shape_cast %156 : vector<1x16x512xbf16> to vector<16x512xbf16>
    %158 = vector.shape_cast %154 : vector<16x512xbf16> to vector<1x16x512xbf16>
    tpu.vector_store %arg14[%155, %c0_68, %c0_69], %158 {strides = array<i32>} : memref<8x16x512xbf16, #tpu.memory_space<vmem>>, vector<1x16x512xbf16>,
    %c4_i32 = arith.constant 4 : i32
    %159 = arith.index_cast %c4_i32 : i32 to index
    %c0_70 = arith.constant 0 : index
    %c0_71 = arith.constant 0 : index
    %160 = vector.load %arg14[%159, %c0_70, %c0_71] : memref<8x16x512xbf16, #tpu.memory_space<vmem>>, vector<1x16x512xbf16>
    %161 = vector.shape_cast %160 : vector<1x16x512xbf16> to vector<16x512xbf16>
    %162 = arith.extf %161 : vector<16x512xbf16> to vector<16x512xf32>
    %163 = arith.truncf %147 : vector<16x128xf32> to vector<16x128xbf16>
    %c0_72 = arith.constant 0 : index
    %c0_73 = arith.constant 0 : index
    %164 = vector.load %arg3[%c0_72, %c0_73] : memref<128x512xbf16, #tpu.memory_space<vmem>>, vector<128x512xbf16>
    %cst_74 = arith.constant dense<0.000000e+00> : vector<16x512xf32>
    %165 = tpu.matmul %163, %164, %cst_74 {dimension_numbers = #tpu.dot_dimension_numbers<[1], [0], [0], [1], [0, 0, 1, 1], [], []>} : vector<16x128xbf16>, vector<128x512xbf16>, vector<16x512xf32> -> vector<16x512xf32>
    %166 = arith.addf %162, %165 : vector<16x512xf32>
    %167 = vector.extract_strided_slice %166 {offsets = [0, 0], sizes = [16, 384], strides = [1, 1]} : vector<16x512xf32> to vector<16x384xf32>
    %cst_75 = arith.constant 5.000000e-01 : f32
    %168 = vector.broadcast %cst_75 : f32 to vector<16x384xf32>
    %169 = arith.mulf %168, %167 : vector<16x384xf32>
    %170 = math.tanh %169 : vector<16x384xf32>
    %cst_76 = arith.constant 5.000000e-01 : f32
    %171 = vector.broadcast %cst_76 : f32 to vector<16x384xf32>
    %172 = arith.mulf %171, %170 : vector<16x384xf32>
    %cst_77 = arith.constant 5.000000e-01 : f32
    %173 = vector.broadcast %cst_77 : f32 to vector<16x384xf32>
    %174 = arith.addf %172, %173 : vector<16x384xf32>
    %175 = vector.extract_strided_slice %174 {offsets = [0, 0], sizes = [16, 128], strides = [1, 1]} : vector<16x384xf32> to vector<16x128xf32>
    %176 = vector.extract_strided_slice %174 {offsets = [0, 128], sizes = [16, 128], strides = [1, 1]} : vector<16x384xf32> to vector<16x128xf32>
    %177 = vector.extract_strided_slice %174 {offsets = [0, 256], sizes = [16, 128], strides = [1, 1]} : vector<16x384xf32> to vector<16x128xf32>
    %178 = vector.extract_strided_slice %166 {offsets = [0, 384], sizes = [16, 128], strides = [1, 1]} : vector<16x512xf32> to vector<16x128xf32>
    %179 = math.tanh %178 : vector<16x128xf32>
    %180 = arith.mulf %176, %145 : vector<16x128xf32>
    %181 = arith.mulf %175, %179 : vector<16x128xf32>
    %182 = arith.addf %180, %181 : vector<16x128xf32>
    %183 = math.tanh %182 : vector<16x128xf32>
    %184 = arith.mulf %177, %183 : vector<16x128xf32>
    %185 = arith.truncf %184 : vector<16x128xf32> to vector<16x128xbf16>
    %c0_78 = arith.constant 0 : index
    %c0_79 = arith.constant 0 : index
    %186 = vector.load %arg5[%c0_78, %c0_79] : memref<128x512xbf16, #tpu.memory_space<vmem>>, vector<128x512xbf16>
    %cst_80 = arith.constant dense<0.000000e+00> : vector<16x512xf32>
    %187 = tpu.matmul %185, %186, %cst_80 {dimension_numbers = #tpu.dot_dimension_numbers<[1], [0], [0], [1], [0, 0, 1, 1], [], []>} : vector<16x128xbf16>, vector<128x512xbf16>, vector<16x512xf32> -> vector<16x512xf32>
    %c0_81 = arith.constant 0 : index
    %c0_82 = arith.constant 0 : index
    %188 = vector.load %arg7[%c0_81, %c0_82] : memref<1x512xf32, #tpu.memory_space<vmem>>, vector<1x512xf32>
    %189 = vector.broadcast %188 : vector<1x512xf32> to vector<16x512xf32>
    %190 = arith.addf %187, %189 : vector<16x512xf32>
    %191 = arith.truncf %190 : vector<16x512xf32> to vector<16x512xbf16>
    %192 = arith.index_cast %c4_i32 : i32 to index
    %c0_83 = arith.constant 0 : index
    %c0_84 = arith.constant 0 : index
    %193 = vector.load %arg14[%192, %c0_83, %c0_84] : memref<8x16x512xbf16, #tpu.memory_space<vmem>>, vector<1x16x512xbf16>
    %194 = vector.shape_cast %193 : vector<1x16x512xbf16> to vector<16x512xbf16>
    %195 = vector.shape_cast %191 : vector<16x512xbf16> to vector<1x16x512xbf16>
    tpu.vector_store %arg14[%192, %c0_83, %c0_84], %195 {strides = array<i32>} : memref<8x16x512xbf16, #tpu.memory_space<vmem>>, vector<1x16x512xbf16>,
    %c5_i32 = arith.constant 5 : i32
    %196 = arith.index_cast %c5_i32 : i32 to index
    %c0_85 = arith.constant 0 : index
    %c0_86 = arith.constant 0 : index
    %197 = vector.load %arg14[%196, %c0_85, %c0_86] : memref<8x16x512xbf16, #tpu.memory_space<vmem>>, vector<1x16x512xbf16>
    %198 = vector.shape_cast %197 : vector<1x16x512xbf16> to vector<16x512xbf16>
    %199 = arith.extf %198 : vector<16x512xbf16> to vector<16x512xf32>
    %200 = arith.truncf %184 : vector<16x128xf32> to vector<16x128xbf16>
    %c0_87 = arith.constant 0 : index
    %c0_88 = arith.constant 0 : index
    %201 = vector.load %arg3[%c0_87, %c0_88] : memref<128x512xbf16, #tpu.memory_space<vmem>>, vector<128x512xbf16>
    %cst_89 = arith.constant dense<0.000000e+00> : vector<16x512xf32>
    %202 = tpu.matmul %200, %201, %cst_89 {dimension_numbers = #tpu.dot_dimension_numbers<[1], [0], [0], [1], [0, 0, 1, 1], [], []>} : vector<16x128xbf16>, vector<128x512xbf16>, vector<16x512xf32> -> vector<16x512xf32>
    %203 = arith.addf %199, %202 : vector<16x512xf32>
    %204 = vector.extract_strided_slice %203 {offsets = [0, 0], sizes = [16, 384], strides = [1, 1]} : vector<16x512xf32> to vector<16x384xf32>
    %cst_90 = arith.constant 5.000000e-01 : f32
    %205 = vector.broadcast %cst_90 : f32 to vector<16x384xf32>
    %206 = arith.mulf %205, %204 : vector<16x384xf32>
    %207 = math.tanh %206 : vector<16x384xf32>
    %cst_91 = arith.constant 5.000000e-01 : f32
    %208 = vector.broadcast %cst_91 : f32 to vector<16x384xf32>
    %209 = arith.mulf %208, %207 : vector<16x384xf32>
    %cst_92 = arith.constant 5.000000e-01 : f32
    %210 = vector.broadcast %cst_92 : f32 to vector<16x384xf32>
    %211 = arith.addf %209, %210 : vector<16x384xf32>
    %212 = vector.extract_strided_slice %211 {offsets = [0, 0], sizes = [16, 128], strides = [1, 1]} : vector<16x384xf32> to vector<16x128xf32>
    %213 = vector.extract_strided_slice %211 {offsets = [0, 128], sizes = [16, 128], strides = [1, 1]} : vector<16x384xf32> to vector<16x128xf32>
    %214 = vector.extract_strided_slice %211 {offsets = [0, 256], sizes = [16, 128], strides = [1, 1]} : vector<16x384xf32> to vector<16x128xf32>
    %215 = vector.extract_strided_slice %203 {offsets = [0, 384], sizes = [16, 128], strides = [1, 1]} : vector<16x512xf32> to vector<16x128xf32>
    %216 = math.tanh %215 : vector<16x128xf32>
    %217 = arith.mulf %213, %182 : vector<16x128xf32>
    %218 = arith.mulf %212, %216 : vector<16x128xf32>
    %219 = arith.addf %217, %218 : vector<16x128xf32>
    %220 = math.tanh %219 : vector<16x128xf32>
    %221 = arith.mulf %214, %220 : vector<16x128xf32>
    %222 = arith.truncf %221 : vector<16x128xf32> to vector<16x128xbf16>
    %c0_93 = arith.constant 0 : index
    %c0_94 = arith.constant 0 : index
    %223 = vector.load %arg5[%c0_93, %c0_94] : memref<128x512xbf16, #tpu.memory_space<vmem>>, vector<128x512xbf16>
    %cst_95 = arith.constant dense<0.000000e+00> : vector<16x512xf32>
    %224 = tpu.matmul %222, %223, %cst_95 {dimension_numbers = #tpu.dot_dimension_numbers<[1], [0], [0], [1], [0, 0, 1, 1], [], []>} : vector<16x128xbf16>, vector<128x512xbf16>, vector<16x512xf32> -> vector<16x512xf32>
    %c0_96 = arith.constant 0 : index
    %c0_97 = arith.constant 0 : index
    %225 = vector.load %arg7[%c0_96, %c0_97] : memref<1x512xf32, #tpu.memory_space<vmem>>, vector<1x512xf32>
    %226 = vector.broadcast %225 : vector<1x512xf32> to vector<16x512xf32>
    %227 = arith.addf %224, %226 : vector<16x512xf32>
    %228 = arith.truncf %227 : vector<16x512xf32> to vector<16x512xbf16>
    %229 = arith.index_cast %c5_i32 : i32 to index
    %c0_98 = arith.constant 0 : index
    %c0_99 = arith.constant 0 : index
    %230 = vector.load %arg14[%229, %c0_98, %c0_99] : memref<8x16x512xbf16, #tpu.memory_space<vmem>>, vector<1x16x512xbf16>
    %231 = vector.shape_cast %230 : vector<1x16x512xbf16> to vector<16x512xbf16>
    %232 = vector.shape_cast %228 : vector<16x512xbf16> to vector<1x16x512xbf16>
    tpu.vector_store %arg14[%229, %c0_98, %c0_99], %232 {strides = array<i32>} : memref<8x16x512xbf16, #tpu.memory_space<vmem>>, vector<1x16x512xbf16>,
    %c6_i32 = arith.constant 6 : i32
    %233 = arith.index_cast %c6_i32 : i32 to index
    %c0_100 = arith.constant 0 : index
    %c0_101 = arith.constant 0 : index
    %234 = vector.load %arg14[%233, %c0_100, %c0_101] : memref<8x16x512xbf16, #tpu.memory_space<vmem>>, vector<1x16x512xbf16>
    %235 = vector.shape_cast %234 : vector<1x16x512xbf16> to vector<16x512xbf16>
    %236 = arith.extf %235 : vector<16x512xbf16> to vector<16x512xf32>
    %237 = arith.truncf %221 : vector<16x128xf32> to vector<16x128xbf16>
    %c0_102 = arith.constant 0 : index
    %c0_103 = arith.constant 0 : index
    %238 = vector.load %arg3[%c0_102, %c0_103] : memref<128x512xbf16, #tpu.memory_space<vmem>>, vector<128x512xbf16>
    %cst_104 = arith.constant dense<0.000000e+00> : vector<16x512xf32>
    %239 = tpu.matmul %237, %238, %cst_104 {dimension_numbers = #tpu.dot_dimension_numbers<[1], [0], [0], [1], [0, 0, 1, 1], [], []>} : vector<16x128xbf16>, vector<128x512xbf16>, vector<16x512xf32> -> vector<16x512xf32>
    %240 = arith.addf %236, %239 : vector<16x512xf32>
    %241 = vector.extract_strided_slice %240 {offsets = [0, 0], sizes = [16, 384], strides = [1, 1]} : vector<16x512xf32> to vector<16x384xf32>
    %cst_105 = arith.constant 5.000000e-01 : f32
    %242 = vector.broadcast %cst_105 : f32 to vector<16x384xf32>
    %243 = arith.mulf %242, %241 : vector<16x384xf32>
    %244 = math.tanh %243 : vector<16x384xf32>
    %cst_106 = arith.constant 5.000000e-01 : f32
    %245 = vector.broadcast %cst_106 : f32 to vector<16x384xf32>
    %246 = arith.mulf %245, %244 : vector<16x384xf32>
    %cst_107 = arith.constant 5.000000e-01 : f32
    %247 = vector.broadcast %cst_107 : f32 to vector<16x384xf32>
    %248 = arith.addf %246, %247 : vector<16x384xf32>
    %249 = vector.extract_strided_slice %248 {offsets = [0, 0], sizes = [16, 128], strides = [1, 1]} : vector<16x384xf32> to vector<16x128xf32>
    %250 = vector.extract_strided_slice %248 {offsets = [0, 128], sizes = [16, 128], strides = [1, 1]} : vector<16x384xf32> to vector<16x128xf32>
    %251 = vector.extract_strided_slice %248 {offsets = [0, 256], sizes = [16, 128], strides = [1, 1]} : vector<16x384xf32> to vector<16x128xf32>
    %252 = vector.extract_strided_slice %240 {offsets = [0, 384], sizes = [16, 128], strides = [1, 1]} : vector<16x512xf32> to vector<16x128xf32>
    %253 = math.tanh %252 : vector<16x128xf32>
    %254 = arith.mulf %250, %219 : vector<16x128xf32>
    %255 = arith.mulf %249, %253 : vector<16x128xf32>
    %256 = arith.addf %254, %255 : vector<16x128xf32>
    %257 = math.tanh %256 : vector<16x128xf32>
    %258 = arith.mulf %251, %257 : vector<16x128xf32>
    %259 = arith.truncf %258 : vector<16x128xf32> to vector<16x128xbf16>
    %c0_108 = arith.constant 0 : index
    %c0_109 = arith.constant 0 : index
    %260 = vector.load %arg5[%c0_108, %c0_109] : memref<128x512xbf16, #tpu.memory_space<vmem>>, vector<128x512xbf16>
    %cst_110 = arith.constant dense<0.000000e+00> : vector<16x512xf32>
    %261 = tpu.matmul %259, %260, %cst_110 {dimension_numbers = #tpu.dot_dimension_numbers<[1], [0], [0], [1], [0, 0, 1, 1], [], []>} : vector<16x128xbf16>, vector<128x512xbf16>, vector<16x512xf32> -> vector<16x512xf32>
    %c0_111 = arith.constant 0 : index
    %c0_112 = arith.constant 0 : index
    %262 = vector.load %arg7[%c0_111, %c0_112] : memref<1x512xf32, #tpu.memory_space<vmem>>, vector<1x512xf32>
    %263 = vector.broadcast %262 : vector<1x512xf32> to vector<16x512xf32>
    %264 = arith.addf %261, %263 : vector<16x512xf32>
    %265 = arith.truncf %264 : vector<16x512xf32> to vector<16x512xbf16>
    %266 = arith.index_cast %c6_i32 : i32 to index
    %c0_113 = arith.constant 0 : index
    %c0_114 = arith.constant 0 : index
    %267 = vector.load %arg14[%266, %c0_113, %c0_114] : memref<8x16x512xbf16, #tpu.memory_space<vmem>>, vector<1x16x512xbf16>
    %268 = vector.shape_cast %267 : vector<1x16x512xbf16> to vector<16x512xbf16>
    %269 = vector.shape_cast %265 : vector<16x512xbf16> to vector<1x16x512xbf16>
    tpu.vector_store %arg14[%266, %c0_113, %c0_114], %269 {strides = array<i32>} : memref<8x16x512xbf16, #tpu.memory_space<vmem>>, vector<1x16x512xbf16>,
    %c7_i32 = arith.constant 7 : i32
    %270 = arith.index_cast %c7_i32 : i32 to index
    %c0_115 = arith.constant 0 : index
    %c0_116 = arith.constant 0 : index
    %271 = vector.load %arg14[%270, %c0_115, %c0_116] : memref<8x16x512xbf16, #tpu.memory_space<vmem>>, vector<1x16x512xbf16>
    %272 = vector.shape_cast %271 : vector<1x16x512xbf16> to vector<16x512xbf16>
    %273 = arith.extf %272 : vector<16x512xbf16> to vector<16x512xf32>
    %274 = arith.truncf %258 : vector<16x128xf32> to vector<16x128xbf16>
    %c0_117 = arith.constant 0 : index
    %c0_118 = arith.constant 0 : index
    %275 = vector.load %arg3[%c0_117, %c0_118] : memref<128x512xbf16, #tpu.memory_space<vmem>>, vector<128x512xbf16>
    %cst_119 = arith.constant dense<0.000000e+00> : vector<16x512xf32>
    %276 = tpu.matmul %274, %275, %cst_119 {dimension_numbers = #tpu.dot_dimension_numbers<[1], [0], [0], [1], [0, 0, 1, 1], [], []>} : vector<16x128xbf16>, vector<128x512xbf16>, vector<16x512xf32> -> vector<16x512xf32>
    %277 = arith.addf %273, %276 : vector<16x512xf32>
    %278 = vector.extract_strided_slice %277 {offsets = [0, 0], sizes = [16, 384], strides = [1, 1]} : vector<16x512xf32> to vector<16x384xf32>
    %cst_120 = arith.constant 5.000000e-01 : f32
    %279 = vector.broadcast %cst_120 : f32 to vector<16x384xf32>
    %280 = arith.mulf %279, %278 : vector<16x384xf32>
    %281 = math.tanh %280 : vector<16x384xf32>
    %cst_121 = arith.constant 5.000000e-01 : f32
    %282 = vector.broadcast %cst_121 : f32 to vector<16x384xf32>
    %283 = arith.mulf %282, %281 : vector<16x384xf32>
    %cst_122 = arith.constant 5.000000e-01 : f32
    %284 = vector.broadcast %cst_122 : f32 to vector<16x384xf32>
    %285 = arith.addf %283, %284 : vector<16x384xf32>
    %286 = vector.extract_strided_slice %285 {offsets = [0, 0], sizes = [16, 128], strides = [1, 1]} : vector<16x384xf32> to vector<16x128xf32>
    %287 = vector.extract_strided_slice %285 {offsets = [0, 128], sizes = [16, 128], strides = [1, 1]} : vector<16x384xf32> to vector<16x128xf32>
    %288 = vector.extract_strided_slice %285 {offsets = [0, 256], sizes = [16, 128], strides = [1, 1]} : vector<16x384xf32> to vector<16x128xf32>
    %289 = vector.extract_strided_slice %277 {offsets = [0, 384], sizes = [16, 128], strides = [1, 1]} : vector<16x512xf32> to vector<16x128xf32>
    %290 = math.tanh %289 : vector<16x128xf32>
    %291 = arith.mulf %287, %256 : vector<16x128xf32>
    %292 = arith.mulf %286, %290 : vector<16x128xf32>
    %293 = arith.addf %291, %292 : vector<16x128xf32>
    %294 = math.tanh %293 : vector<16x128xf32>
    %295 = arith.mulf %288, %294 : vector<16x128xf32>
    %296 = arith.truncf %295 : vector<16x128xf32> to vector<16x128xbf16>
    %c0_123 = arith.constant 0 : index
    %c0_124 = arith.constant 0 : index
    %297 = vector.load %arg5[%c0_123, %c0_124] : memref<128x512xbf16, #tpu.memory_space<vmem>>, vector<128x512xbf16>
    %cst_125 = arith.constant dense<0.000000e+00> : vector<16x512xf32>
    %298 = tpu.matmul %296, %297, %cst_125 {dimension_numbers = #tpu.dot_dimension_numbers<[1], [0], [0], [1], [0, 0, 1, 1], [], []>} : vector<16x128xbf16>, vector<128x512xbf16>, vector<16x512xf32> -> vector<16x512xf32>
    %c0_126 = arith.constant 0 : index
    %c0_127 = arith.constant 0 : index
    %299 = vector.load %arg7[%c0_126, %c0_127] : memref<1x512xf32, #tpu.memory_space<vmem>>, vector<1x512xf32>
    %300 = vector.broadcast %299 : vector<1x512xf32> to vector<16x512xf32>
    %301 = arith.addf %298, %300 : vector<16x512xf32>
    %302 = arith.truncf %301 : vector<16x512xf32> to vector<16x512xbf16>
    %303 = arith.index_cast %c7_i32 : i32 to index
    %c0_128 = arith.constant 0 : index
    %c0_129 = arith.constant 0 : index
    %304 = vector.load %arg14[%303, %c0_128, %c0_129] : memref<8x16x512xbf16, #tpu.memory_space<vmem>>, vector<1x16x512xbf16>
    %305 = vector.shape_cast %304 : vector<1x16x512xbf16> to vector<16x512xbf16>
    %306 = vector.shape_cast %302 : vector<16x512xbf16> to vector<1x16x512xbf16>
    tpu.vector_store %arg14[%303, %c0_128, %c0_129], %306 {strides = array<i32>} : memref<8x16x512xbf16, #tpu.memory_space<vmem>>, vector<1x16x512xbf16>,
    %c8_i32 = arith.constant 8 : i32
    %cst_130 = arith.constant 0.000000e+00 : f32
    %307 = vector.broadcast %cst_130 : f32 to vector<16x128xf32>
    %c0_i32_131 = arith.constant 0 : i32
    %308 = arith.index_cast %c0_i32_131 : i32 to index
    %c0_132 = arith.constant 0 : index
    %c0_133 = arith.constant 0 : index
    %309 = vector.load %arg14[%308, %c0_132, %c0_133] : memref<8x16x512xbf16, #tpu.memory_space<vmem>>, vector<1x16x512xbf16>
    %310 = vector.shape_cast %309 : vector<1x16x512xbf16> to vector<16x512xbf16>
    %311 = arith.extf %310 : vector<16x512xbf16> to vector<16x512xf32>
    %312 = arith.truncf %307 : vector<16x128xf32> to vector<16x128xbf16>
    %c0_134 = arith.constant 0 : index
    %c0_135 = arith.constant 0 : index
    %313 = vector.load %arg6[%c0_134, %c0_135] : memref<128x512xbf16, #tpu.memory_space<vmem>>, vector<128x512xbf16>
    %cst_136 = arith.constant dense<0.000000e+00> : vector<16x512xf32>
    %314 = tpu.matmul %312, %313, %cst_136 {dimension_numbers = #tpu.dot_dimension_numbers<[1], [0], [0], [1], [0, 0, 1, 1], [], []>} : vector<16x128xbf16>, vector<128x512xbf16>, vector<16x512xf32> -> vector<16x512xf32>
    %315 = arith.addf %311, %314 : vector<16x512xf32>
    %316 = vector.extract_strided_slice %315 {offsets = [0, 0], sizes = [16, 384], strides = [1, 1]} : vector<16x512xf32> to vector<16x384xf32>
    %cst_137 = arith.constant 5.000000e-01 : f32
    %317 = vector.broadcast %cst_137 : f32 to vector<16x384xf32>
    %318 = arith.mulf %317, %316 : vector<16x384xf32>
    %319 = math.tanh %318 : vector<16x384xf32>
    %cst_138 = arith.constant 5.000000e-01 : f32
    %320 = vector.broadcast %cst_138 : f32 to vector<16x384xf32>
    %321 = arith.mulf %320, %319 : vector<16x384xf32>
    %cst_139 = arith.constant 5.000000e-01 : f32
    %322 = vector.broadcast %cst_139 : f32 to vector<16x384xf32>
    %323 = arith.addf %321, %322 : vector<16x384xf32>
    %324 = vector.extract_strided_slice %323 {offsets = [0, 0], sizes = [16, 128], strides = [1, 1]} : vector<16x384xf32> to vector<16x128xf32>
    %325 = vector.extract_strided_slice %323 {offsets = [0, 128], sizes = [16, 128], strides = [1, 1]} : vector<16x384xf32> to vector<16x128xf32>
    %326 = vector.extract_strided_slice %323 {offsets = [0, 256], sizes = [16, 128], strides = [1, 1]} : vector<16x384xf32> to vector<16x128xf32>
    %327 = vector.extract_strided_slice %315 {offsets = [0, 384], sizes = [16, 128], strides = [1, 1]} : vector<16x512xf32> to vector<16x128xf32>
    %328 = math.tanh %327 : vector<16x128xf32>
    %329 = arith.mulf %325, %307 : vector<16x128xf32>
    %330 = arith.mulf %324, %328 : vector<16x128xf32>
    %331 = arith.addf %329, %330 : vector<16x128xf32>
    %332 = math.tanh %331 : vector<16x128xf32>
    %333 = arith.mulf %326, %332 : vector<16x128xf32>
    %334 = arith.truncf %333 : vector<16x128xf32> to vector<16x128xbf16>
    %c0_140 = arith.constant 0 : index
    %c0_141 = arith.constant 0 : index
    %335 = vector.load %arg8[%c0_140, %c0_141] : memref<128x512xbf16, #tpu.memory_space<vmem>>, vector<128x512xbf16>
    %cst_142 = arith.constant dense<0.000000e+00> : vector<16x512xf32>
    %336 = tpu.matmul %334, %335, %cst_142 {dimension_numbers = #tpu.dot_dimension_numbers<[1], [0], [0], [1], [0, 0, 1, 1], [], []>} : vector<16x128xbf16>, vector<128x512xbf16>, vector<16x512xf32> -> vector<16x512xf32>
    %c0_143 = arith.constant 0 : index
    %c0_144 = arith.constant 0 : index
    %337 = vector.load %arg10[%c0_143, %c0_144] : memref<1x512xf32, #tpu.memory_space<vmem>>, vector<1x512xf32>
    %338 = vector.broadcast %337 : vector<1x512xf32> to vector<16x512xf32>
    %339 = arith.addf %336, %338 : vector<16x512xf32>
    %340 = arith.truncf %339 : vector<16x512xf32> to vector<16x512xbf16>
    %341 = arith.index_cast %c0_i32_131 : i32 to index
    %c0_145 = arith.constant 0 : index
    %c0_146 = arith.constant 0 : index
    %342 = vector.load %arg14[%341, %c0_145, %c0_146] : memref<8x16x512xbf16, #tpu.memory_space<vmem>>, vector<1x16x512xbf16>
    %343 = vector.shape_cast %342 : vector<1x16x512xbf16> to vector<16x512xbf16>
    %344 = vector.shape_cast %340 : vector<16x512xbf16> to vector<1x16x512xbf16>
    tpu.vector_store %arg14[%341, %c0_145, %c0_146], %344 {strides = array<i32>} : memref<8x16x512xbf16, #tpu.memory_space<vmem>>, vector<1x16x512xbf16>,
    %c1_i32_147 = arith.constant 1 : i32
    %345 = arith.index_cast %c1_i32_147 : i32 to index
    %c0_148 = arith.constant 0 : index
    %c0_149 = arith.constant 0 : index
    %346 = vector.load %arg14[%345, %c0_148, %c0_149] : memref<8x16x512xbf16, #tpu.memory_space<vmem>>, vector<1x16x512xbf16>
    %347 = vector.shape_cast %346 : vector<1x16x512xbf16> to vector<16x512xbf16>
    %348 = arith.extf %347 : vector<16x512xbf16> to vector<16x512xf32>
    %349 = arith.truncf %333 : vector<16x128xf32> to vector<16x128xbf16>
    %c0_150 = arith.constant 0 : index
    %c0_151 = arith.constant 0 : index
    %350 = vector.load %arg6[%c0_150, %c0_151] : memref<128x512xbf16, #tpu.memory_space<vmem>>, vector<128x512xbf16>
    %cst_152 = arith.constant dense<0.000000e+00> : vector<16x512xf32>
    %351 = tpu.matmul %349, %350, %cst_152 {dimension_numbers = #tpu.dot_dimension_numbers<[1], [0], [0], [1], [0, 0, 1, 1], [], []>} : vector<16x128xbf16>, vector<128x512xbf16>, vector<16x512xf32> -> vector<16x512xf32>
    %352 = arith.addf %348, %351 : vector<16x512xf32>
    %353 = vector.extract_strided_slice %352 {offsets = [0, 0], sizes = [16, 384], strides = [1, 1]} : vector<16x512xf32> to vector<16x384xf32>
    %cst_153 = arith.constant 5.000000e-01 : f32
    %354 = vector.broadcast %cst_153 : f32 to vector<16x384xf32>
    %355 = arith.mulf %354, %353 : vector<16x384xf32>
    %356 = math.tanh %355 : vector<16x384xf32>
    %cst_154 = arith.constant 5.000000e-01 : f32
    %357 = vector.broadcast %cst_154 : f32 to vector<16x384xf32>
    %358 = arith.mulf %357, %356 : vector<16x384xf32>
    %cst_155 = arith.constant 5.000000e-01 : f32
    %359 = vector.broadcast %cst_155 : f32 to vector<16x384xf32>
    %360 = arith.addf %358, %359 : vector<16x384xf32>
    %361 = vector.extract_strided_slice %360 {offsets = [0, 0], sizes = [16, 128], strides = [1, 1]} : vector<16x384xf32> to vector<16x128xf32>
    %362 = vector.extract_strided_slice %360 {offsets = [0, 128], sizes = [16, 128], strides = [1, 1]} : vector<16x384xf32> to vector<16x128xf32>
    %363 = vector.extract_strided_slice %360 {offsets = [0, 256], sizes = [16, 128], strides = [1, 1]} : vector<16x384xf32> to vector<16x128xf32>
    %364 = vector.extract_strided_slice %352 {offsets = [0, 384], sizes = [16, 128], strides = [1, 1]} : vector<16x512xf32> to vector<16x128xf32>
    %365 = math.tanh %364 : vector<16x128xf32>
    %366 = arith.mulf %362, %331 : vector<16x128xf32>
    %367 = arith.mulf %361, %365 : vector<16x128xf32>
    %368 = arith.addf %366, %367 : vector<16x128xf32>
    %369 = math.tanh %368 : vector<16x128xf32>
    %370 = arith.mulf %363, %369 : vector<16x128xf32>
    %371 = arith.truncf %370 : vector<16x128xf32> to vector<16x128xbf16>
    %c0_156 = arith.constant 0 : index
    %c0_157 = arith.constant 0 : index
    %372 = vector.load %arg8[%c0_156, %c0_157] : memref<128x512xbf16, #tpu.memory_space<vmem>>, vector<128x512xbf16>
    %cst_158 = arith.constant dense<0.000000e+00> : vector<16x512xf32>
    %373 = tpu.matmul %371, %372, %cst_158 {dimension_numbers = #tpu.dot_dimension_numbers<[1], [0], [0], [1], [0, 0, 1, 1], [], []>} : vector<16x128xbf16>, vector<128x512xbf16>, vector<16x512xf32> -> vector<16x512xf32>
    %c0_159 = arith.constant 0 : index
    %c0_160 = arith.constant 0 : index
    %374 = vector.load %arg10[%c0_159, %c0_160] : memref<1x512xf32, #tpu.memory_space<vmem>>, vector<1x512xf32>
    %375 = vector.broadcast %374 : vector<1x512xf32> to vector<16x512xf32>
    %376 = arith.addf %373, %375 : vector<16x512xf32>
    %377 = arith.truncf %376 : vector<16x512xf32> to vector<16x512xbf16>
    %378 = arith.index_cast %c1_i32_147 : i32 to index
    %c0_161 = arith.constant 0 : index
    %c0_162 = arith.constant 0 : index
    %379 = vector.load %arg14[%378, %c0_161, %c0_162] : memref<8x16x512xbf16, #tpu.memory_space<vmem>>, vector<1x16x512xbf16>
    %380 = vector.shape_cast %379 : vector<1x16x512xbf16> to vector<16x512xbf16>
    %381 = vector.shape_cast %377 : vector<16x512xbf16> to vector<1x16x512xbf16>
    tpu.vector_store %arg14[%378, %c0_161, %c0_162], %381 {strides = array<i32>} : memref<8x16x512xbf16, #tpu.memory_space<vmem>>, vector<1x16x512xbf16>,
    %c2_i32_163 = arith.constant 2 : i32
    %382 = arith.index_cast %c2_i32_163 : i32 to index
    %c0_164 = arith.constant 0 : index
    %c0_165 = arith.constant 0 : index
    %383 = vector.load %arg14[%382, %c0_164, %c0_165] : memref<8x16x512xbf16, #tpu.memory_space<vmem>>, vector<1x16x512xbf16>
    %384 = vector.shape_cast %383 : vector<1x16x512xbf16> to vector<16x512xbf16>
    %385 = arith.extf %384 : vector<16x512xbf16> to vector<16x512xf32>
    %386 = arith.truncf %370 : vector<16x128xf32> to vector<16x128xbf16>
    %c0_166 = arith.constant 0 : index
    %c0_167 = arith.constant 0 : index
    %387 = vector.load %arg6[%c0_166, %c0_167] : memref<128x512xbf16, #tpu.memory_space<vmem>>, vector<128x512xbf16>
    %cst_168 = arith.constant dense<0.000000e+00> : vector<16x512xf32>
    %388 = tpu.matmul %386, %387, %cst_168 {dimension_numbers = #tpu.dot_dimension_numbers<[1], [0], [0], [1], [0, 0, 1, 1], [], []>} : vector<16x128xbf16>, vector<128x512xbf16>, vector<16x512xf32> -> vector<16x512xf32>
    %389 = arith.addf %385, %388 : vector<16x512xf32>
    %390 = vector.extract_strided_slice %389 {offsets = [0, 0], sizes = [16, 384], strides = [1, 1]} : vector<16x512xf32> to vector<16x384xf32>
    %cst_169 = arith.constant 5.000000e-01 : f32
    %391 = vector.broadcast %cst_169 : f32 to vector<16x384xf32>
    %392 = arith.mulf %391, %390 : vector<16x384xf32>
    %393 = math.tanh %392 : vector<16x384xf32>
    %cst_170 = arith.constant 5.000000e-01 : f32
    %394 = vector.broadcast %cst_170 : f32 to vector<16x384xf32>
    %395 = arith.mulf %394, %393 : vector<16x384xf32>
    %cst_171 = arith.constant 5.000000e-01 : f32
    %396 = vector.broadcast %cst_171 : f32 to vector<16x384xf32>
    %397 = arith.addf %395, %396 : vector<16x384xf32>
    %398 = vector.extract_strided_slice %397 {offsets = [0, 0], sizes = [16, 128], strides = [1, 1]} : vector<16x384xf32> to vector<16x128xf32>
    %399 = vector.extract_strided_slice %397 {offsets = [0, 128], sizes = [16, 128], strides = [1, 1]} : vector<16x384xf32> to vector<16x128xf32>
    %400 = vector.extract_strided_slice %397 {offsets = [0, 256], sizes = [16, 128], strides = [1, 1]} : vector<16x384xf32> to vector<16x128xf32>
    %401 = vector.extract_strided_slice %389 {offsets = [0, 384], sizes = [16, 128], strides = [1, 1]} : vector<16x512xf32> to vector<16x128xf32>
    %402 = math.tanh %401 : vector<16x128xf32>
    %403 = arith.mulf %399, %368 : vector<16x128xf32>
    %404 = arith.mulf %398, %402 : vector<16x128xf32>
    %405 = arith.addf %403, %404 : vector<16x128xf32>
    %406 = math.tanh %405 : vector<16x128xf32>
    %407 = arith.mulf %400, %406 : vector<16x128xf32>
    %408 = arith.truncf %407 : vector<16x128xf32> to vector<16x128xbf16>
    %c0_172 = arith.constant 0 : index
    %c0_173 = arith.constant 0 : index
    %409 = vector.load %arg8[%c0_172, %c0_173] : memref<128x512xbf16, #tpu.memory_space<vmem>>, vector<128x512xbf16>
    %cst_174 = arith.constant dense<0.000000e+00> : vector<16x512xf32>
    %410 = tpu.matmul %408, %409, %cst_174 {dimension_numbers = #tpu.dot_dimension_numbers<[1], [0], [0], [1], [0, 0, 1, 1], [], []>} : vector<16x128xbf16>, vector<128x512xbf16>, vector<16x512xf32> -> vector<16x512xf32>
    %c0_175 = arith.constant 0 : index
    %c0_176 = arith.constant 0 : index
    %411 = vector.load %arg10[%c0_175, %c0_176] : memref<1x512xf32, #tpu.memory_space<vmem>>, vector<1x512xf32>
    %412 = vector.broadcast %411 : vector<1x512xf32> to vector<16x512xf32>
    %413 = arith.addf %410, %412 : vector<16x512xf32>
    %414 = arith.truncf %413 : vector<16x512xf32> to vector<16x512xbf16>
    %415 = arith.index_cast %c2_i32_163 : i32 to index
    %c0_177 = arith.constant 0 : index
    %c0_178 = arith.constant 0 : index
    %416 = vector.load %arg14[%415, %c0_177, %c0_178] : memref<8x16x512xbf16, #tpu.memory_space<vmem>>, vector<1x16x512xbf16>
    %417 = vector.shape_cast %416 : vector<1x16x512xbf16> to vector<16x512xbf16>
    %418 = vector.shape_cast %414 : vector<16x512xbf16> to vector<1x16x512xbf16>
    tpu.vector_store %arg14[%415, %c0_177, %c0_178], %418 {strides = array<i32>} : memref<8x16x512xbf16, #tpu.memory_space<vmem>>, vector<1x16x512xbf16>,
    %c3_i32_179 = arith.constant 3 : i32
    %419 = arith.index_cast %c3_i32_179 : i32 to index
    %c0_180 = arith.constant 0 : index
    %c0_181 = arith.constant 0 : index
    %420 = vector.load %arg14[%419, %c0_180, %c0_181] : memref<8x16x512xbf16, #tpu.memory_space<vmem>>, vector<1x16x512xbf16>
    %421 = vector.shape_cast %420 : vector<1x16x512xbf16> to vector<16x512xbf16>
    %422 = arith.extf %421 : vector<16x512xbf16> to vector<16x512xf32>
    %423 = arith.truncf %407 : vector<16x128xf32> to vector<16x128xbf16>
    %c0_182 = arith.constant 0 : index
    %c0_183 = arith.constant 0 : index
    %424 = vector.load %arg6[%c0_182, %c0_183] : memref<128x512xbf16, #tpu.memory_space<vmem>>, vector<128x512xbf16>
    %cst_184 = arith.constant dense<0.000000e+00> : vector<16x512xf32>
    %425 = tpu.matmul %423, %424, %cst_184 {dimension_numbers = #tpu.dot_dimension_numbers<[1], [0], [0], [1], [0, 0, 1, 1], [], []>} : vector<16x128xbf16>, vector<128x512xbf16>, vector<16x512xf32> -> vector<16x512xf32>
    %426 = arith.addf %422, %425 : vector<16x512xf32>
    %427 = vector.extract_strided_slice %426 {offsets = [0, 0], sizes = [16, 384], strides = [1, 1]} : vector<16x512xf32> to vector<16x384xf32>
    %cst_185 = arith.constant 5.000000e-01 : f32
    %428 = vector.broadcast %cst_185 : f32 to vector<16x384xf32>
    %429 = arith.mulf %428, %427 : vector<16x384xf32>
    %430 = math.tanh %429 : vector<16x384xf32>
    %cst_186 = arith.constant 5.000000e-01 : f32
    %431 = vector.broadcast %cst_186 : f32 to vector<16x384xf32>
    %432 = arith.mulf %431, %430 : vector<16x384xf32>
    %cst_187 = arith.constant 5.000000e-01 : f32
    %433 = vector.broadcast %cst_187 : f32 to vector<16x384xf32>
    %434 = arith.addf %432, %433 : vector<16x384xf32>
    %435 = vector.extract_strided_slice %434 {offsets = [0, 0], sizes = [16, 128], strides = [1, 1]} : vector<16x384xf32> to vector<16x128xf32>
    %436 = vector.extract_strided_slice %434 {offsets = [0, 128], sizes = [16, 128], strides = [1, 1]} : vector<16x384xf32> to vector<16x128xf32>
    %437 = vector.extract_strided_slice %434 {offsets = [0, 256], sizes = [16, 128], strides = [1, 1]} : vector<16x384xf32> to vector<16x128xf32>
    %438 = vector.extract_strided_slice %426 {offsets = [0, 384], sizes = [16, 128], strides = [1, 1]} : vector<16x512xf32> to vector<16x128xf32>
    %439 = math.tanh %438 : vector<16x128xf32>
    %440 = arith.mulf %436, %405 : vector<16x128xf32>
    %441 = arith.mulf %435, %439 : vector<16x128xf32>
    %442 = arith.addf %440, %441 : vector<16x128xf32>
    %443 = math.tanh %442 : vector<16x128xf32>
    %444 = arith.mulf %437, %443 : vector<16x128xf32>
    %445 = arith.truncf %444 : vector<16x128xf32> to vector<16x128xbf16>
    %c0_188 = arith.constant 0 : index
    %c0_189 = arith.constant 0 : index
    %446 = vector.load %arg8[%c0_188, %c0_189] : memref<128x512xbf16, #tpu.memory_space<vmem>>, vector<128x512xbf16>
    %cst_190 = arith.constant dense<0.000000e+00> : vector<16x512xf32>
    %447 = tpu.matmul %445, %446, %cst_190 {dimension_numbers = #tpu.dot_dimension_numbers<[1], [0], [0], [1], [0, 0, 1, 1], [], []>} : vector<16x128xbf16>, vector<128x512xbf16>, vector<16x512xf32> -> vector<16x512xf32>
    %c0_191 = arith.constant 0 : index
    %c0_192 = arith.constant 0 : index
    %448 = vector.load %arg10[%c0_191, %c0_192] : memref<1x512xf32, #tpu.memory_space<vmem>>, vector<1x512xf32>
    %449 = vector.broadcast %448 : vector<1x512xf32> to vector<16x512xf32>
    %450 = arith.addf %447, %449 : vector<16x512xf32>
    %451 = arith.truncf %450 : vector<16x512xf32> to vector<16x512xbf16>
    %452 = arith.index_cast %c3_i32_179 : i32 to index
    %c0_193 = arith.constant 0 : index
    %c0_194 = arith.constant 0 : index
    %453 = vector.load %arg14[%452, %c0_193, %c0_194] : memref<8x16x512xbf16, #tpu.memory_space<vmem>>, vector<1x16x512xbf16>
    %454 = vector.shape_cast %453 : vector<1x16x512xbf16> to vector<16x512xbf16>
    %455 = vector.shape_cast %451 : vector<16x512xbf16> to vector<1x16x512xbf16>
    tpu.vector_store %arg14[%452, %c0_193, %c0_194], %455 {strides = array<i32>} : memref<8x16x512xbf16, #tpu.memory_space<vmem>>, vector<1x16x512xbf16>,
    %c4_i32_195 = arith.constant 4 : i32
    %456 = arith.index_cast %c4_i32_195 : i32 to index
    %c0_196 = arith.constant 0 : index
    %c0_197 = arith.constant 0 : index
    %457 = vector.load %arg14[%456, %c0_196, %c0_197] : memref<8x16x512xbf16, #tpu.memory_space<vmem>>, vector<1x16x512xbf16>
    %458 = vector.shape_cast %457 : vector<1x16x512xbf16> to vector<16x512xbf16>
    %459 = arith.extf %458 : vector<16x512xbf16> to vector<16x512xf32>
    %460 = arith.truncf %444 : vector<16x128xf32> to vector<16x128xbf16>
    %c0_198 = arith.constant 0 : index
    %c0_199 = arith.constant 0 : index
    %461 = vector.load %arg6[%c0_198, %c0_199] : memref<128x512xbf16, #tpu.memory_space<vmem>>, vector<128x512xbf16>
    %cst_200 = arith.constant dense<0.000000e+00> : vector<16x512xf32>
    %462 = tpu.matmul %460, %461, %cst_200 {dimension_numbers = #tpu.dot_dimension_numbers<[1], [0], [0], [1], [0, 0, 1, 1], [], []>} : vector<16x128xbf16>, vector<128x512xbf16>, vector<16x512xf32> -> vector<16x512xf32>
    %463 = arith.addf %459, %462 : vector<16x512xf32>
    %464 = vector.extract_strided_slice %463 {offsets = [0, 0], sizes = [16, 384], strides = [1, 1]} : vector<16x512xf32> to vector<16x384xf32>
    %cst_201 = arith.constant 5.000000e-01 : f32
    %465 = vector.broadcast %cst_201 : f32 to vector<16x384xf32>
    %466 = arith.mulf %465, %464 : vector<16x384xf32>
    %467 = math.tanh %466 : vector<16x384xf32>
    %cst_202 = arith.constant 5.000000e-01 : f32
    %468 = vector.broadcast %cst_202 : f32 to vector<16x384xf32>
    %469 = arith.mulf %468, %467 : vector<16x384xf32>
    %cst_203 = arith.constant 5.000000e-01 : f32
    %470 = vector.broadcast %cst_203 : f32 to vector<16x384xf32>
    %471 = arith.addf %469, %470 : vector<16x384xf32>
    %472 = vector.extract_strided_slice %471 {offsets = [0, 0], sizes = [16, 128], strides = [1, 1]} : vector<16x384xf32> to vector<16x128xf32>
    %473 = vector.extract_strided_slice %471 {offsets = [0, 128], sizes = [16, 128], strides = [1, 1]} : vector<16x384xf32> to vector<16x128xf32>
    %474 = vector.extract_strided_slice %471 {offsets = [0, 256], sizes = [16, 128], strides = [1, 1]} : vector<16x384xf32> to vector<16x128xf32>
    %475 = vector.extract_strided_slice %463 {offsets = [0, 384], sizes = [16, 128], strides = [1, 1]} : vector<16x512xf32> to vector<16x128xf32>
    %476 = math.tanh %475 : vector<16x128xf32>
    %477 = arith.mulf %473, %442 : vector<16x128xf32>
    %478 = arith.mulf %472, %476 : vector<16x128xf32>
    %479 = arith.addf %477, %478 : vector<16x128xf32>
    %480 = math.tanh %479 : vector<16x128xf32>
    %481 = arith.mulf %474, %480 : vector<16x128xf32>
    %482 = arith.truncf %481 : vector<16x128xf32> to vector<16x128xbf16>
    %c0_204 = arith.constant 0 : index
    %c0_205 = arith.constant 0 : index
    %483 = vector.load %arg8[%c0_204, %c0_205] : memref<128x512xbf16, #tpu.memory_space<vmem>>, vector<128x512xbf16>
    %cst_206 = arith.constant dense<0.000000e+00> : vector<16x512xf32>
    %484 = tpu.matmul %482, %483, %cst_206 {dimension_numbers = #tpu.dot_dimension_numbers<[1], [0], [0], [1], [0, 0, 1, 1], [], []>} : vector<16x128xbf16>, vector<128x512xbf16>, vector<16x512xf32> -> vector<16x512xf32>
    %c0_207 = arith.constant 0 : index
    %c0_208 = arith.constant 0 : index
    %485 = vector.load %arg10[%c0_207, %c0_208] : memref<1x512xf32, #tpu.memory_space<vmem>>, vector<1x512xf32>
    %486 = vector.broadcast %485 : vector<1x512xf32> to vector<16x512xf32>
    %487 = arith.addf %484, %486 : vector<16x512xf32>
    %488 = arith.truncf %487 : vector<16x512xf32> to vector<16x512xbf16>
    %489 = arith.index_cast %c4_i32_195 : i32 to index
    %c0_209 = arith.constant 0 : index
    %c0_210 = arith.constant 0 : index
    %490 = vector.load %arg14[%489, %c0_209, %c0_210] : memref<8x16x512xbf16, #tpu.memory_space<vmem>>, vector<1x16x512xbf16>
    %491 = vector.shape_cast %490 : vector<1x16x512xbf16> to vector<16x512xbf16>
    %492 = vector.shape_cast %488 : vector<16x512xbf16> to vector<1x16x512xbf16>
    tpu.vector_store %arg14[%489, %c0_209, %c0_210], %492 {strides = array<i32>} : memref<8x16x512xbf16, #tpu.memory_space<vmem>>, vector<1x16x512xbf16>,
    %c5_i32_211 = arith.constant 5 : i32
    %493 = arith.index_cast %c5_i32_211 : i32 to index
    %c0_212 = arith.constant 0 : index
    %c0_213 = arith.constant 0 : index
    %494 = vector.load %arg14[%493, %c0_212, %c0_213] : memref<8x16x512xbf16, #tpu.memory_space<vmem>>, vector<1x16x512xbf16>
    %495 = vector.shape_cast %494 : vector<1x16x512xbf16> to vector<16x512xbf16>
    %496 = arith.extf %495 : vector<16x512xbf16> to vector<16x512xf32>
    %497 = arith.truncf %481 : vector<16x128xf32> to vector<16x128xbf16>
    %c0_214 = arith.constant 0 : index
    %c0_215 = arith.constant 0 : index
    %498 = vector.load %arg6[%c0_214, %c0_215] : memref<128x512xbf16, #tpu.memory_space<vmem>>, vector<128x512xbf16>
    %cst_216 = arith.constant dense<0.000000e+00> : vector<16x512xf32>
    %499 = tpu.matmul %497, %498, %cst_216 {dimension_numbers = #tpu.dot_dimension_numbers<[1], [0], [0], [1], [0, 0, 1, 1], [], []>} : vector<16x128xbf16>, vector<128x512xbf16>, vector<16x512xf32> -> vector<16x512xf32>
    %500 = arith.addf %496, %499 : vector<16x512xf32>
    %501 = vector.extract_strided_slice %500 {offsets = [0, 0], sizes = [16, 384], strides = [1, 1]} : vector<16x512xf32> to vector<16x384xf32>
    %cst_217 = arith.constant 5.000000e-01 : f32
    %502 = vector.broadcast %cst_217 : f32 to vector<16x384xf32>
    %503 = arith.mulf %502, %501 : vector<16x384xf32>
    %504 = math.tanh %503 : vector<16x384xf32>
    %cst_218 = arith.constant 5.000000e-01 : f32
    %505 = vector.broadcast %cst_218 : f32 to vector<16x384xf32>
    %506 = arith.mulf %505, %504 : vector<16x384xf32>
    %cst_219 = arith.constant 5.000000e-01 : f32
    %507 = vector.broadcast %cst_219 : f32 to vector<16x384xf32>
    %508 = arith.addf %506, %507 : vector<16x384xf32>
    %509 = vector.extract_strided_slice %508 {offsets = [0, 0], sizes = [16, 128], strides = [1, 1]} : vector<16x384xf32> to vector<16x128xf32>
    %510 = vector.extract_strided_slice %508 {offsets = [0, 128], sizes = [16, 128], strides = [1, 1]} : vector<16x384xf32> to vector<16x128xf32>
    %511 = vector.extract_strided_slice %508 {offsets = [0, 256], sizes = [16, 128], strides = [1, 1]} : vector<16x384xf32> to vector<16x128xf32>
    %512 = vector.extract_strided_slice %500 {offsets = [0, 384], sizes = [16, 128], strides = [1, 1]} : vector<16x512xf32> to vector<16x128xf32>
    %513 = math.tanh %512 : vector<16x128xf32>
    %514 = arith.mulf %510, %479 : vector<16x128xf32>
    %515 = arith.mulf %509, %513 : vector<16x128xf32>
    %516 = arith.addf %514, %515 : vector<16x128xf32>
    %517 = math.tanh %516 : vector<16x128xf32>
    %518 = arith.mulf %511, %517 : vector<16x128xf32>
    %519 = arith.truncf %518 : vector<16x128xf32> to vector<16x128xbf16>
    %c0_220 = arith.constant 0 : index
    %c0_221 = arith.constant 0 : index
    %520 = vector.load %arg8[%c0_220, %c0_221] : memref<128x512xbf16, #tpu.memory_space<vmem>>, vector<128x512xbf16>
    %cst_222 = arith.constant dense<0.000000e+00> : vector<16x512xf32>
    %521 = tpu.matmul %519, %520, %cst_222 {dimension_numbers = #tpu.dot_dimension_numbers<[1], [0], [0], [1], [0, 0, 1, 1], [], []>} : vector<16x128xbf16>, vector<128x512xbf16>, vector<16x512xf32> -> vector<16x512xf32>
    %c0_223 = arith.constant 0 : index
    %c0_224 = arith.constant 0 : index
    %522 = vector.load %arg10[%c0_223, %c0_224] : memref<1x512xf32, #tpu.memory_space<vmem>>, vector<1x512xf32>
    %523 = vector.broadcast %522 : vector<1x512xf32> to vector<16x512xf32>
    %524 = arith.addf %521, %523 : vector<16x512xf32>
    %525 = arith.truncf %524 : vector<16x512xf32> to vector<16x512xbf16>
    %526 = arith.index_cast %c5_i32_211 : i32 to index
    %c0_225 = arith.constant 0 : index
    %c0_226 = arith.constant 0 : index
    %527 = vector.load %arg14[%526, %c0_225, %c0_226] : memref<8x16x512xbf16, #tpu.memory_space<vmem>>, vector<1x16x512xbf16>
    %528 = vector.shape_cast %527 : vector<1x16x512xbf16> to vector<16x512xbf16>
    %529 = vector.shape_cast %525 : vector<16x512xbf16> to vector<1x16x512xbf16>
    tpu.vector_store %arg14[%526, %c0_225, %c0_226], %529 {strides = array<i32>} : memref<8x16x512xbf16, #tpu.memory_space<vmem>>, vector<1x16x512xbf16>,
    %c6_i32_227 = arith.constant 6 : i32
    %530 = arith.index_cast %c6_i32_227 : i32 to index
    %c0_228 = arith.constant 0 : index
    %c0_229 = arith.constant 0 : index
    %531 = vector.load %arg14[%530, %c0_228, %c0_229] : memref<8x16x512xbf16, #tpu.memory_space<vmem>>, vector<1x16x512xbf16>
    %532 = vector.shape_cast %531 : vector<1x16x512xbf16> to vector<16x512xbf16>
    %533 = arith.extf %532 : vector<16x512xbf16> to vector<16x512xf32>
    %534 = arith.truncf %518 : vector<16x128xf32> to vector<16x128xbf16>
    %c0_230 = arith.constant 0 : index
    %c0_231 = arith.constant 0 : index
    %535 = vector.load %arg6[%c0_230, %c0_231] : memref<128x512xbf16, #tpu.memory_space<vmem>>, vector<128x512xbf16>
    %cst_232 = arith.constant dense<0.000000e+00> : vector<16x512xf32>
    %536 = tpu.matmul %534, %535, %cst_232 {dimension_numbers = #tpu.dot_dimension_numbers<[1], [0], [0], [1], [0, 0, 1, 1], [], []>} : vector<16x128xbf16>, vector<128x512xbf16>, vector<16x512xf32> -> vector<16x512xf32>
    %537 = arith.addf %533, %536 : vector<16x512xf32>
    %538 = vector.extract_strided_slice %537 {offsets = [0, 0], sizes = [16, 384], strides = [1, 1]} : vector<16x512xf32> to vector<16x384xf32>
    %cst_233 = arith.constant 5.000000e-01 : f32
    %539 = vector.broadcast %cst_233 : f32 to vector<16x384xf32>
    %540 = arith.mulf %539, %538 : vector<16x384xf32>
    %541 = math.tanh %540 : vector<16x384xf32>
    %cst_234 = arith.constant 5.000000e-01 : f32
    %542 = vector.broadcast %cst_234 : f32 to vector<16x384xf32>
    %543 = arith.mulf %542, %541 : vector<16x384xf32>
    %cst_235 = arith.constant 5.000000e-01 : f32
    %544 = vector.broadcast %cst_235 : f32 to vector<16x384xf32>
    %545 = arith.addf %543, %544 : vector<16x384xf32>
    %546 = vector.extract_strided_slice %545 {offsets = [0, 0], sizes = [16, 128], strides = [1, 1]} : vector<16x384xf32> to vector<16x128xf32>
    %547 = vector.extract_strided_slice %545 {offsets = [0, 128], sizes = [16, 128], strides = [1, 1]} : vector<16x384xf32> to vector<16x128xf32>
    %548 = vector.extract_strided_slice %545 {offsets = [0, 256], sizes = [16, 128], strides = [1, 1]} : vector<16x384xf32> to vector<16x128xf32>
    %549 = vector.extract_strided_slice %537 {offsets = [0, 384], sizes = [16, 128], strides = [1, 1]} : vector<16x512xf32> to vector<16x128xf32>
    %550 = math.tanh %549 : vector<16x128xf32>
    %551 = arith.mulf %547, %516 : vector<16x128xf32>
    %552 = arith.mulf %546, %550 : vector<16x128xf32>
    %553 = arith.addf %551, %552 : vector<16x128xf32>
    %554 = math.tanh %553 : vector<16x128xf32>
    %555 = arith.mulf %548, %554 : vector<16x128xf32>
    %556 = arith.truncf %555 : vector<16x128xf32> to vector<16x128xbf16>
    %c0_236 = arith.constant 0 : index
    %c0_237 = arith.constant 0 : index
    %557 = vector.load %arg8[%c0_236, %c0_237] : memref<128x512xbf16, #tpu.memory_space<vmem>>, vector<128x512xbf16>
    %cst_238 = arith.constant dense<0.000000e+00> : vector<16x512xf32>
    %558 = tpu.matmul %556, %557, %cst_238 {dimension_numbers = #tpu.dot_dimension_numbers<[1], [0], [0], [1], [0, 0, 1, 1], [], []>} : vector<16x128xbf16>, vector<128x512xbf16>, vector<16x512xf32> -> vector<16x512xf32>
    %c0_239 = arith.constant 0 : index
    %c0_240 = arith.constant 0 : index
    %559 = vector.load %arg10[%c0_239, %c0_240] : memref<1x512xf32, #tpu.memory_space<vmem>>, vector<1x512xf32>
    %560 = vector.broadcast %559 : vector<1x512xf32> to vector<16x512xf32>
    %561 = arith.addf %558, %560 : vector<16x512xf32>
    %562 = arith.truncf %561 : vector<16x512xf32> to vector<16x512xbf16>
    %563 = arith.index_cast %c6_i32_227 : i32 to index
    %c0_241 = arith.constant 0 : index
    %c0_242 = arith.constant 0 : index
    %564 = vector.load %arg14[%563, %c0_241, %c0_242] : memref<8x16x512xbf16, #tpu.memory_space<vmem>>, vector<1x16x512xbf16>
    %565 = vector.shape_cast %564 : vector<1x16x512xbf16> to vector<16x512xbf16>
    %566 = vector.shape_cast %562 : vector<16x512xbf16> to vector<1x16x512xbf16>
    tpu.vector_store %arg14[%563, %c0_241, %c0_242], %566 {strides = array<i32>} : memref<8x16x512xbf16, #tpu.memory_space<vmem>>, vector<1x16x512xbf16>,
    %c7_i32_243 = arith.constant 7 : i32
    %567 = arith.index_cast %c7_i32_243 : i32 to index
    %c0_244 = arith.constant 0 : index
    %c0_245 = arith.constant 0 : index
    %568 = vector.load %arg14[%567, %c0_244, %c0_245] : memref<8x16x512xbf16, #tpu.memory_space<vmem>>, vector<1x16x512xbf16>
    %569 = vector.shape_cast %568 : vector<1x16x512xbf16> to vector<16x512xbf16>
    %570 = arith.extf %569 : vector<16x512xbf16> to vector<16x512xf32>
    %571 = arith.truncf %555 : vector<16x128xf32> to vector<16x128xbf16>
    %c0_246 = arith.constant 0 : index
    %c0_247 = arith.constant 0 : index
    %572 = vector.load %arg6[%c0_246, %c0_247] : memref<128x512xbf16, #tpu.memory_space<vmem>>, vector<128x512xbf16>
    %cst_248 = arith.constant dense<0.000000e+00> : vector<16x512xf32>
    %573 = tpu.matmul %571, %572, %cst_248 {dimension_numbers = #tpu.dot_dimension_numbers<[1], [0], [0], [1], [0, 0, 1, 1], [], []>} : vector<16x128xbf16>, vector<128x512xbf16>, vector<16x512xf32> -> vector<16x512xf32>
    %574 = arith.addf %570, %573 : vector<16x512xf32>
    %575 = vector.extract_strided_slice %574 {offsets = [0, 0], sizes = [16, 384], strides = [1, 1]} : vector<16x512xf32> to vector<16x384xf32>
    %cst_249 = arith.constant 5.000000e-01 : f32
    %576 = vector.broadcast %cst_249 : f32 to vector<16x384xf32>
    %577 = arith.mulf %576, %575 : vector<16x384xf32>
    %578 = math.tanh %577 : vector<16x384xf32>
    %cst_250 = arith.constant 5.000000e-01 : f32
    %579 = vector.broadcast %cst_250 : f32 to vector<16x384xf32>
    %580 = arith.mulf %579, %578 : vector<16x384xf32>
    %cst_251 = arith.constant 5.000000e-01 : f32
    %581 = vector.broadcast %cst_251 : f32 to vector<16x384xf32>
    %582 = arith.addf %580, %581 : vector<16x384xf32>
    %583 = vector.extract_strided_slice %582 {offsets = [0, 0], sizes = [16, 128], strides = [1, 1]} : vector<16x384xf32> to vector<16x128xf32>
    %584 = vector.extract_strided_slice %582 {offsets = [0, 128], sizes = [16, 128], strides = [1, 1]} : vector<16x384xf32> to vector<16x128xf32>
    %585 = vector.extract_strided_slice %582 {offsets = [0, 256], sizes = [16, 128], strides = [1, 1]} : vector<16x384xf32> to vector<16x128xf32>
    %586 = vector.extract_strided_slice %574 {offsets = [0, 384], sizes = [16, 128], strides = [1, 1]} : vector<16x512xf32> to vector<16x128xf32>
    %587 = math.tanh %586 : vector<16x128xf32>
    %588 = arith.mulf %584, %553 : vector<16x128xf32>
    %589 = arith.mulf %583, %587 : vector<16x128xf32>
    %590 = arith.addf %588, %589 : vector<16x128xf32>
    %591 = math.tanh %590 : vector<16x128xf32>
    %592 = arith.mulf %585, %591 : vector<16x128xf32>
    %593 = arith.truncf %592 : vector<16x128xf32> to vector<16x128xbf16>
    %c0_252 = arith.constant 0 : index
    %c0_253 = arith.constant 0 : index
    %594 = vector.load %arg8[%c0_252, %c0_253] : memref<128x512xbf16, #tpu.memory_space<vmem>>, vector<128x512xbf16>
    %cst_254 = arith.constant dense<0.000000e+00> : vector<16x512xf32>
    %595 = tpu.matmul %593, %594, %cst_254 {dimension_numbers = #tpu.dot_dimension_numbers<[1], [0], [0], [1], [0, 0, 1, 1], [], []>} : vector<16x128xbf16>, vector<128x512xbf16>, vector<16x512xf32> -> vector<16x512xf32>
    %c0_255 = arith.constant 0 : index
    %c0_256 = arith.constant 0 : index
    %596 = vector.load %arg10[%c0_255, %c0_256] : memref<1x512xf32, #tpu.memory_space<vmem>>, vector<1x512xf32>
    %597 = vector.broadcast %596 : vector<1x512xf32> to vector<16x512xf32>
    %598 = arith.addf %595, %597 : vector<16x512xf32>
    %599 = arith.truncf %598 : vector<16x512xf32> to vector<16x512xbf16>
    %600 = arith.index_cast %c7_i32_243 : i32 to index
    %c0_257 = arith.constant 0 : index
    %c0_258 = arith.constant 0 : index
    %601 = vector.load %arg14[%600, %c0_257, %c0_258] : memref<8x16x512xbf16, #tpu.memory_space<vmem>>, vector<1x16x512xbf16>
    %602 = vector.shape_cast %601 : vector<1x16x512xbf16> to vector<16x512xbf16>
    %603 = vector.shape_cast %599 : vector<16x512xbf16> to vector<1x16x512xbf16>
    tpu.vector_store %arg14[%600, %c0_257, %c0_258], %603 {strides = array<i32>} : memref<8x16x512xbf16, #tpu.memory_space<vmem>>, vector<1x16x512xbf16>,
    %c8_i32_259 = arith.constant 8 : i32
    %cst_260 = arith.constant 0.000000e+00 : f32
    %604 = vector.broadcast %cst_260 : f32 to vector<16x128xf32>
    %c0_i32_261 = arith.constant 0 : i32
    %605 = arith.index_cast %c0_i32_261 : i32 to index
    %c0_262 = arith.constant 0 : index
    %c0_263 = arith.constant 0 : index
    %606 = vector.load %arg14[%605, %c0_262, %c0_263] : memref<8x16x512xbf16, #tpu.memory_space<vmem>>, vector<1x16x512xbf16>
    %607 = vector.shape_cast %606 : vector<1x16x512xbf16> to vector<16x512xbf16>
    %608 = arith.extf %607 : vector<16x512xbf16> to vector<16x512xf32>
    %609 = arith.truncf %604 : vector<16x128xf32> to vector<16x128xbf16>
    %c0_264 = arith.constant 0 : index
    %c0_265 = arith.constant 0 : index
    %610 = vector.load %arg9[%c0_264, %c0_265] : memref<128x512xbf16, #tpu.memory_space<vmem>>, vector<128x512xbf16>
    %cst_266 = arith.constant dense<0.000000e+00> : vector<16x512xf32>
    %611 = tpu.matmul %609, %610, %cst_266 {dimension_numbers = #tpu.dot_dimension_numbers<[1], [0], [0], [1], [0, 0, 1, 1], [], []>} : vector<16x128xbf16>, vector<128x512xbf16>, vector<16x512xf32> -> vector<16x512xf32>
    %612 = arith.addf %608, %611 : vector<16x512xf32>
    %613 = vector.extract_strided_slice %612 {offsets = [0, 0], sizes = [16, 384], strides = [1, 1]} : vector<16x512xf32> to vector<16x384xf32>
    %cst_267 = arith.constant 5.000000e-01 : f32
    %614 = vector.broadcast %cst_267 : f32 to vector<16x384xf32>
    %615 = arith.mulf %614, %613 : vector<16x384xf32>
    %616 = math.tanh %615 : vector<16x384xf32>
    %cst_268 = arith.constant 5.000000e-01 : f32
    %617 = vector.broadcast %cst_268 : f32 to vector<16x384xf32>
    %618 = arith.mulf %617, %616 : vector<16x384xf32>
    %cst_269 = arith.constant 5.000000e-01 : f32
    %619 = vector.broadcast %cst_269 : f32 to vector<16x384xf32>
    %620 = arith.addf %618, %619 : vector<16x384xf32>
    %621 = vector.extract_strided_slice %620 {offsets = [0, 0], sizes = [16, 128], strides = [1, 1]} : vector<16x384xf32> to vector<16x128xf32>
    %622 = vector.extract_strided_slice %620 {offsets = [0, 128], sizes = [16, 128], strides = [1, 1]} : vector<16x384xf32> to vector<16x128xf32>
    %623 = vector.extract_strided_slice %620 {offsets = [0, 256], sizes = [16, 128], strides = [1, 1]} : vector<16x384xf32> to vector<16x128xf32>
    %624 = vector.extract_strided_slice %612 {offsets = [0, 384], sizes = [16, 128], strides = [1, 1]} : vector<16x512xf32> to vector<16x128xf32>
    %625 = math.tanh %624 : vector<16x128xf32>
    %626 = arith.mulf %622, %604 : vector<16x128xf32>
    %627 = arith.mulf %621, %625 : vector<16x128xf32>
    %628 = arith.addf %626, %627 : vector<16x128xf32>
    %629 = math.tanh %628 : vector<16x128xf32>
    %630 = arith.mulf %623, %629 : vector<16x128xf32>
    %c1_i32_270 = arith.constant 1 : i32
    %631 = arith.index_cast %c1_i32_270 : i32 to index
    %c0_271 = arith.constant 0 : index
    %c0_272 = arith.constant 0 : index
    %632 = vector.load %arg14[%631, %c0_271, %c0_272] : memref<8x16x512xbf16, #tpu.memory_space<vmem>>, vector<1x16x512xbf16>
    %633 = vector.shape_cast %632 : vector<1x16x512xbf16> to vector<16x512xbf16>
    %634 = arith.extf %633 : vector<16x512xbf16> to vector<16x512xf32>
    %635 = arith.truncf %630 : vector<16x128xf32> to vector<16x128xbf16>
    %c0_273 = arith.constant 0 : index
    %c0_274 = arith.constant 0 : index
    %636 = vector.load %arg9[%c0_273, %c0_274] : memref<128x512xbf16, #tpu.memory_space<vmem>>, vector<128x512xbf16>
    %cst_275 = arith.constant dense<0.000000e+00> : vector<16x512xf32>
    %637 = tpu.matmul %635, %636, %cst_275 {dimension_numbers = #tpu.dot_dimension_numbers<[1], [0], [0], [1], [0, 0, 1, 1], [], []>} : vector<16x128xbf16>, vector<128x512xbf16>, vector<16x512xf32> -> vector<16x512xf32>
    %638 = arith.addf %634, %637 : vector<16x512xf32>
    %639 = vector.extract_strided_slice %638 {offsets = [0, 0], sizes = [16, 384], strides = [1, 1]} : vector<16x512xf32> to vector<16x384xf32>
    %cst_276 = arith.constant 5.000000e-01 : f32
    %640 = vector.broadcast %cst_276 : f32 to vector<16x384xf32>
    %641 = arith.mulf %640, %639 : vector<16x384xf32>
    %642 = math.tanh %641 : vector<16x384xf32>
    %cst_277 = arith.constant 5.000000e-01 : f32
    %643 = vector.broadcast %cst_277 : f32 to vector<16x384xf32>
    %644 = arith.mulf %643, %642 : vector<16x384xf32>
    %cst_278 = arith.constant 5.000000e-01 : f32
    %645 = vector.broadcast %cst_278 : f32 to vector<16x384xf32>
    %646 = arith.addf %644, %645 : vector<16x384xf32>
    %647 = vector.extract_strided_slice %646 {offsets = [0, 0], sizes = [16, 128], strides = [1, 1]} : vector<16x384xf32> to vector<16x128xf32>
    %648 = vector.extract_strided_slice %646 {offsets = [0, 128], sizes = [16, 128], strides = [1, 1]} : vector<16x384xf32> to vector<16x128xf32>
    %649 = vector.extract_strided_slice %646 {offsets = [0, 256], sizes = [16, 128], strides = [1, 1]} : vector<16x384xf32> to vector<16x128xf32>
    %650 = vector.extract_strided_slice %638 {offsets = [0, 384], sizes = [16, 128], strides = [1, 1]} : vector<16x512xf32> to vector<16x128xf32>
    %651 = math.tanh %650 : vector<16x128xf32>
    %652 = arith.mulf %648, %628 : vector<16x128xf32>
    %653 = arith.mulf %647, %651 : vector<16x128xf32>
    %654 = arith.addf %652, %653 : vector<16x128xf32>
    %655 = math.tanh %654 : vector<16x128xf32>
    %656 = arith.mulf %649, %655 : vector<16x128xf32>
    %c2_i32_279 = arith.constant 2 : i32
    %657 = arith.index_cast %c2_i32_279 : i32 to index
    %c0_280 = arith.constant 0 : index
    %c0_281 = arith.constant 0 : index
    %658 = vector.load %arg14[%657, %c0_280, %c0_281] : memref<8x16x512xbf16, #tpu.memory_space<vmem>>, vector<1x16x512xbf16>
    %659 = vector.shape_cast %658 : vector<1x16x512xbf16> to vector<16x512xbf16>
    %660 = arith.extf %659 : vector<16x512xbf16> to vector<16x512xf32>
    %661 = arith.truncf %656 : vector<16x128xf32> to vector<16x128xbf16>
    %c0_282 = arith.constant 0 : index
    %c0_283 = arith.constant 0 : index
    %662 = vector.load %arg9[%c0_282, %c0_283] : memref<128x512xbf16, #tpu.memory_space<vmem>>, vector<128x512xbf16>
    %cst_284 = arith.constant dense<0.000000e+00> : vector<16x512xf32>
    %663 = tpu.matmul %661, %662, %cst_284 {dimension_numbers = #tpu.dot_dimension_numbers<[1], [0], [0], [1], [0, 0, 1, 1], [], []>} : vector<16x128xbf16>, vector<128x512xbf16>, vector<16x512xf32> -> vector<16x512xf32>
    %664 = arith.addf %660, %663 : vector<16x512xf32>
    %665 = vector.extract_strided_slice %664 {offsets = [0, 0], sizes = [16, 384], strides = [1, 1]} : vector<16x512xf32> to vector<16x384xf32>
    %cst_285 = arith.constant 5.000000e-01 : f32
    %666 = vector.broadcast %cst_285 : f32 to vector<16x384xf32>
    %667 = arith.mulf %666, %665 : vector<16x384xf32>
    %668 = math.tanh %667 : vector<16x384xf32>
    %cst_286 = arith.constant 5.000000e-01 : f32
    %669 = vector.broadcast %cst_286 : f32 to vector<16x384xf32>
    %670 = arith.mulf %669, %668 : vector<16x384xf32>
    %cst_287 = arith.constant 5.000000e-01 : f32
    %671 = vector.broadcast %cst_287 : f32 to vector<16x384xf32>
    %672 = arith.addf %670, %671 : vector<16x384xf32>
    %673 = vector.extract_strided_slice %672 {offsets = [0, 0], sizes = [16, 128], strides = [1, 1]} : vector<16x384xf32> to vector<16x128xf32>
    %674 = vector.extract_strided_slice %672 {offsets = [0, 128], sizes = [16, 128], strides = [1, 1]} : vector<16x384xf32> to vector<16x128xf32>
    %675 = vector.extract_strided_slice %672 {offsets = [0, 256], sizes = [16, 128], strides = [1, 1]} : vector<16x384xf32> to vector<16x128xf32>
    %676 = vector.extract_strided_slice %664 {offsets = [0, 384], sizes = [16, 128], strides = [1, 1]} : vector<16x512xf32> to vector<16x128xf32>
    %677 = math.tanh %676 : vector<16x128xf32>
    %678 = arith.mulf %674, %654 : vector<16x128xf32>
    %679 = arith.mulf %673, %677 : vector<16x128xf32>
    %680 = arith.addf %678, %679 : vector<16x128xf32>
    %681 = math.tanh %680 : vector<16x128xf32>
    %682 = arith.mulf %675, %681 : vector<16x128xf32>
    %c3_i32_288 = arith.constant 3 : i32
    %683 = arith.index_cast %c3_i32_288 : i32 to index
    %c0_289 = arith.constant 0 : index
    %c0_290 = arith.constant 0 : index
    %684 = vector.load %arg14[%683, %c0_289, %c0_290] : memref<8x16x512xbf16, #tpu.memory_space<vmem>>, vector<1x16x512xbf16>
    %685 = vector.shape_cast %684 : vector<1x16x512xbf16> to vector<16x512xbf16>
    %686 = arith.extf %685 : vector<16x512xbf16> to vector<16x512xf32>
    %687 = arith.truncf %682 : vector<16x128xf32> to vector<16x128xbf16>
    %c0_291 = arith.constant 0 : index
    %c0_292 = arith.constant 0 : index
    %688 = vector.load %arg9[%c0_291, %c0_292] : memref<128x512xbf16, #tpu.memory_space<vmem>>, vector<128x512xbf16>
    %cst_293 = arith.constant dense<0.000000e+00> : vector<16x512xf32>
    %689 = tpu.matmul %687, %688, %cst_293 {dimension_numbers = #tpu.dot_dimension_numbers<[1], [0], [0], [1], [0, 0, 1, 1], [], []>} : vector<16x128xbf16>, vector<128x512xbf16>, vector<16x512xf32> -> vector<16x512xf32>
    %690 = arith.addf %686, %689 : vector<16x512xf32>
    %691 = vector.extract_strided_slice %690 {offsets = [0, 0], sizes = [16, 384], strides = [1, 1]} : vector<16x512xf32> to vector<16x384xf32>
    %cst_294 = arith.constant 5.000000e-01 : f32
    %692 = vector.broadcast %cst_294 : f32 to vector<16x384xf32>
    %693 = arith.mulf %692, %691 : vector<16x384xf32>
    %694 = math.tanh %693 : vector<16x384xf32>
    %cst_295 = arith.constant 5.000000e-01 : f32
    %695 = vector.broadcast %cst_295 : f32 to vector<16x384xf32>
    %696 = arith.mulf %695, %694 : vector<16x384xf32>
    %cst_296 = arith.constant 5.000000e-01 : f32
    %697 = vector.broadcast %cst_296 : f32 to vector<16x384xf32>
    %698 = arith.addf %696, %697 : vector<16x384xf32>
    %699 = vector.extract_strided_slice %698 {offsets = [0, 0], sizes = [16, 128], strides = [1, 1]} : vector<16x384xf32> to vector<16x128xf32>
    %700 = vector.extract_strided_slice %698 {offsets = [0, 128], sizes = [16, 128], strides = [1, 1]} : vector<16x384xf32> to vector<16x128xf32>
    %701 = vector.extract_strided_slice %698 {offsets = [0, 256], sizes = [16, 128], strides = [1, 1]} : vector<16x384xf32> to vector<16x128xf32>
    %702 = vector.extract_strided_slice %690 {offsets = [0, 384], sizes = [16, 128], strides = [1, 1]} : vector<16x512xf32> to vector<16x128xf32>
    %703 = math.tanh %702 : vector<16x128xf32>
    %704 = arith.mulf %700, %680 : vector<16x128xf32>
    %705 = arith.mulf %699, %703 : vector<16x128xf32>
    %706 = arith.addf %704, %705 : vector<16x128xf32>
    %707 = math.tanh %706 : vector<16x128xf32>
    %708 = arith.mulf %701, %707 : vector<16x128xf32>
    %c4_i32_297 = arith.constant 4 : i32
    %709 = arith.index_cast %c4_i32_297 : i32 to index
    %c0_298 = arith.constant 0 : index
    %c0_299 = arith.constant 0 : index
    %710 = vector.load %arg14[%709, %c0_298, %c0_299] : memref<8x16x512xbf16, #tpu.memory_space<vmem>>, vector<1x16x512xbf16>
    %711 = vector.shape_cast %710 : vector<1x16x512xbf16> to vector<16x512xbf16>
    %712 = arith.extf %711 : vector<16x512xbf16> to vector<16x512xf32>
    %713 = arith.truncf %708 : vector<16x128xf32> to vector<16x128xbf16>
    %c0_300 = arith.constant 0 : index
    %c0_301 = arith.constant 0 : index
    %714 = vector.load %arg9[%c0_300, %c0_301] : memref<128x512xbf16, #tpu.memory_space<vmem>>, vector<128x512xbf16>
    %cst_302 = arith.constant dense<0.000000e+00> : vector<16x512xf32>
    %715 = tpu.matmul %713, %714, %cst_302 {dimension_numbers = #tpu.dot_dimension_numbers<[1], [0], [0], [1], [0, 0, 1, 1], [], []>} : vector<16x128xbf16>, vector<128x512xbf16>, vector<16x512xf32> -> vector<16x512xf32>
    %716 = arith.addf %712, %715 : vector<16x512xf32>
    %717 = vector.extract_strided_slice %716 {offsets = [0, 0], sizes = [16, 384], strides = [1, 1]} : vector<16x512xf32> to vector<16x384xf32>
    %cst_303 = arith.constant 5.000000e-01 : f32
    %718 = vector.broadcast %cst_303 : f32 to vector<16x384xf32>
    %719 = arith.mulf %718, %717 : vector<16x384xf32>
    %720 = math.tanh %719 : vector<16x384xf32>
    %cst_304 = arith.constant 5.000000e-01 : f32
    %721 = vector.broadcast %cst_304 : f32 to vector<16x384xf32>
    %722 = arith.mulf %721, %720 : vector<16x384xf32>
    %cst_305 = arith.constant 5.000000e-01 : f32
    %723 = vector.broadcast %cst_305 : f32 to vector<16x384xf32>
    %724 = arith.addf %722, %723 : vector<16x384xf32>
    %725 = vector.extract_strided_slice %724 {offsets = [0, 0], sizes = [16, 128], strides = [1, 1]} : vector<16x384xf32> to vector<16x128xf32>
    %726 = vector.extract_strided_slice %724 {offsets = [0, 128], sizes = [16, 128], strides = [1, 1]} : vector<16x384xf32> to vector<16x128xf32>
    %727 = vector.extract_strided_slice %724 {offsets = [0, 256], sizes = [16, 128], strides = [1, 1]} : vector<16x384xf32> to vector<16x128xf32>
    %728 = vector.extract_strided_slice %716 {offsets = [0, 384], sizes = [16, 128], strides = [1, 1]} : vector<16x512xf32> to vector<16x128xf32>
    %729 = math.tanh %728 : vector<16x128xf32>
    %730 = arith.mulf %726, %706 : vector<16x128xf32>
    %731 = arith.mulf %725, %729 : vector<16x128xf32>
    %732 = arith.addf %730, %731 : vector<16x128xf32>
    %733 = math.tanh %732 : vector<16x128xf32>
    %734 = arith.mulf %727, %733 : vector<16x128xf32>
    %c5_i32_306 = arith.constant 5 : i32
    %735 = arith.index_cast %c5_i32_306 : i32 to index
    %c0_307 = arith.constant 0 : index
    %c0_308 = arith.constant 0 : index
    %736 = vector.load %arg14[%735, %c0_307, %c0_308] : memref<8x16x512xbf16, #tpu.memory_space<vmem>>, vector<1x16x512xbf16>
    %737 = vector.shape_cast %736 : vector<1x16x512xbf16> to vector<16x512xbf16>
    %738 = arith.extf %737 : vector<16x512xbf16> to vector<16x512xf32>
    %739 = arith.truncf %734 : vector<16x128xf32> to vector<16x128xbf16>
    %c0_309 = arith.constant 0 : index
    %c0_310 = arith.constant 0 : index
    %740 = vector.load %arg9[%c0_309, %c0_310] : memref<128x512xbf16, #tpu.memory_space<vmem>>, vector<128x512xbf16>
    %cst_311 = arith.constant dense<0.000000e+00> : vector<16x512xf32>
    %741 = tpu.matmul %739, %740, %cst_311 {dimension_numbers = #tpu.dot_dimension_numbers<[1], [0], [0], [1], [0, 0, 1, 1], [], []>} : vector<16x128xbf16>, vector<128x512xbf16>, vector<16x512xf32> -> vector<16x512xf32>
    %742 = arith.addf %738, %741 : vector<16x512xf32>
    %743 = vector.extract_strided_slice %742 {offsets = [0, 0], sizes = [16, 384], strides = [1, 1]} : vector<16x512xf32> to vector<16x384xf32>
    %cst_312 = arith.constant 5.000000e-01 : f32
    %744 = vector.broadcast %cst_312 : f32 to vector<16x384xf32>
    %745 = arith.mulf %744, %743 : vector<16x384xf32>
    %746 = math.tanh %745 : vector<16x384xf32>
    %cst_313 = arith.constant 5.000000e-01 : f32
    %747 = vector.broadcast %cst_313 : f32 to vector<16x384xf32>
    %748 = arith.mulf %747, %746 : vector<16x384xf32>
    %cst_314 = arith.constant 5.000000e-01 : f32
    %749 = vector.broadcast %cst_314 : f32 to vector<16x384xf32>
    %750 = arith.addf %748, %749 : vector<16x384xf32>
    %751 = vector.extract_strided_slice %750 {offsets = [0, 0], sizes = [16, 128], strides = [1, 1]} : vector<16x384xf32> to vector<16x128xf32>
    %752 = vector.extract_strided_slice %750 {offsets = [0, 128], sizes = [16, 128], strides = [1, 1]} : vector<16x384xf32> to vector<16x128xf32>
    %753 = vector.extract_strided_slice %750 {offsets = [0, 256], sizes = [16, 128], strides = [1, 1]} : vector<16x384xf32> to vector<16x128xf32>
    %754 = vector.extract_strided_slice %742 {offsets = [0, 384], sizes = [16, 128], strides = [1, 1]} : vector<16x512xf32> to vector<16x128xf32>
    %755 = math.tanh %754 : vector<16x128xf32>
    %756 = arith.mulf %752, %732 : vector<16x128xf32>
    %757 = arith.mulf %751, %755 : vector<16x128xf32>
    %758 = arith.addf %756, %757 : vector<16x128xf32>
    %759 = math.tanh %758 : vector<16x128xf32>
    %760 = arith.mulf %753, %759 : vector<16x128xf32>
    %c6_i32_315 = arith.constant 6 : i32
    %761 = arith.index_cast %c6_i32_315 : i32 to index
    %c0_316 = arith.constant 0 : index
    %c0_317 = arith.constant 0 : index
    %762 = vector.load %arg14[%761, %c0_316, %c0_317] : memref<8x16x512xbf16, #tpu.memory_space<vmem>>, vector<1x16x512xbf16>
    %763 = vector.shape_cast %762 : vector<1x16x512xbf16> to vector<16x512xbf16>
    %764 = arith.extf %763 : vector<16x512xbf16> to vector<16x512xf32>
    %765 = arith.truncf %760 : vector<16x128xf32> to vector<16x128xbf16>
    %c0_318 = arith.constant 0 : index
    %c0_319 = arith.constant 0 : index
    %766 = vector.load %arg9[%c0_318, %c0_319] : memref<128x512xbf16, #tpu.memory_space<vmem>>, vector<128x512xbf16>
    %cst_320 = arith.constant dense<0.000000e+00> : vector<16x512xf32>
    %767 = tpu.matmul %765, %766, %cst_320 {dimension_numbers = #tpu.dot_dimension_numbers<[1], [0], [0], [1], [0, 0, 1, 1], [], []>} : vector<16x128xbf16>, vector<128x512xbf16>, vector<16x512xf32> -> vector<16x512xf32>
    %768 = arith.addf %764, %767 : vector<16x512xf32>
    %769 = vector.extract_strided_slice %768 {offsets = [0, 0], sizes = [16, 384], strides = [1, 1]} : vector<16x512xf32> to vector<16x384xf32>
    %cst_321 = arith.constant 5.000000e-01 : f32
    %770 = vector.broadcast %cst_321 : f32 to vector<16x384xf32>
    %771 = arith.mulf %770, %769 : vector<16x384xf32>
    %772 = math.tanh %771 : vector<16x384xf32>
    %cst_322 = arith.constant 5.000000e-01 : f32
    %773 = vector.broadcast %cst_322 : f32 to vector<16x384xf32>
    %774 = arith.mulf %773, %772 : vector<16x384xf32>
    %cst_323 = arith.constant 5.000000e-01 : f32
    %775 = vector.broadcast %cst_323 : f32 to vector<16x384xf32>
    %776 = arith.addf %774, %775 : vector<16x384xf32>
    %777 = vector.extract_strided_slice %776 {offsets = [0, 0], sizes = [16, 128], strides = [1, 1]} : vector<16x384xf32> to vector<16x128xf32>
    %778 = vector.extract_strided_slice %776 {offsets = [0, 128], sizes = [16, 128], strides = [1, 1]} : vector<16x384xf32> to vector<16x128xf32>
    %779 = vector.extract_strided_slice %776 {offsets = [0, 256], sizes = [16, 128], strides = [1, 1]} : vector<16x384xf32> to vector<16x128xf32>
    %780 = vector.extract_strided_slice %768 {offsets = [0, 384], sizes = [16, 128], strides = [1, 1]} : vector<16x512xf32> to vector<16x128xf32>
    %781 = math.tanh %780 : vector<16x128xf32>
    %782 = arith.mulf %778, %758 : vector<16x128xf32>
    %783 = arith.mulf %777, %781 : vector<16x128xf32>
    %784 = arith.addf %782, %783 : vector<16x128xf32>
    %785 = math.tanh %784 : vector<16x128xf32>
    %786 = arith.mulf %779, %785 : vector<16x128xf32>
    %c7_i32_324 = arith.constant 7 : i32
    %787 = arith.index_cast %c7_i32_324 : i32 to index
    %c0_325 = arith.constant 0 : index
    %c0_326 = arith.constant 0 : index
    %788 = vector.load %arg14[%787, %c0_325, %c0_326] : memref<8x16x512xbf16, #tpu.memory_space<vmem>>, vector<1x16x512xbf16>
    %789 = vector.shape_cast %788 : vector<1x16x512xbf16> to vector<16x512xbf16>
    %790 = arith.extf %789 : vector<16x512xbf16> to vector<16x512xf32>
    %791 = arith.truncf %786 : vector<16x128xf32> to vector<16x128xbf16>
    %c0_327 = arith.constant 0 : index
    %c0_328 = arith.constant 0 : index
    %792 = vector.load %arg9[%c0_327, %c0_328] : memref<128x512xbf16, #tpu.memory_space<vmem>>, vector<128x512xbf16>
    %cst_329 = arith.constant dense<0.000000e+00> : vector<16x512xf32>
    %793 = tpu.matmul %791, %792, %cst_329 {dimension_numbers = #tpu.dot_dimension_numbers<[1], [0], [0], [1], [0, 0, 1, 1], [], []>} : vector<16x128xbf16>, vector<128x512xbf16>, vector<16x512xf32> -> vector<16x512xf32>
    %794 = arith.addf %790, %793 : vector<16x512xf32>
    %795 = vector.extract_strided_slice %794 {offsets = [0, 0], sizes = [16, 384], strides = [1, 1]} : vector<16x512xf32> to vector<16x384xf32>
    %cst_330 = arith.constant 5.000000e-01 : f32
    %796 = vector.broadcast %cst_330 : f32 to vector<16x384xf32>
    %797 = arith.mulf %796, %795 : vector<16x384xf32>
    %798 = math.tanh %797 : vector<16x384xf32>
    %cst_331 = arith.constant 5.000000e-01 : f32
    %799 = vector.broadcast %cst_331 : f32 to vector<16x384xf32>
    %800 = arith.mulf %799, %798 : vector<16x384xf32>
    %cst_332 = arith.constant 5.000000e-01 : f32
    %801 = vector.broadcast %cst_332 : f32 to vector<16x384xf32>
    %802 = arith.addf %800, %801 : vector<16x384xf32>
    %803 = vector.extract_strided_slice %802 {offsets = [0, 0], sizes = [16, 128], strides = [1, 1]} : vector<16x384xf32> to vector<16x128xf32>
    %804 = vector.extract_strided_slice %802 {offsets = [0, 128], sizes = [16, 128], strides = [1, 1]} : vector<16x384xf32> to vector<16x128xf32>
    %805 = vector.extract_strided_slice %802 {offsets = [0, 256], sizes = [16, 128], strides = [1, 1]} : vector<16x384xf32> to vector<16x128xf32>
    %806 = vector.extract_strided_slice %794 {offsets = [0, 384], sizes = [16, 128], strides = [1, 1]} : vector<16x512xf32> to vector<16x128xf32>
    %807 = math.tanh %806 : vector<16x128xf32>
    %808 = arith.mulf %804, %784 : vector<16x128xf32>
    %809 = arith.mulf %803, %807 : vector<16x128xf32>
    %810 = arith.addf %808, %809 : vector<16x128xf32>
    %811 = math.tanh %810 : vector<16x128xf32>
    %812 = arith.mulf %805, %811 : vector<16x128xf32>
    %c8_i32_333 = arith.constant 8 : i32
    %c0_334 = arith.constant 0 : index
    %c0_335 = arith.constant 0 : index
    %813 = vector.load %arg11[%c0_334, %c0_335] : memref<128x1xf32, #tpu.memory_space<vmem>>, vector<128x1xf32>
    %cst_336 = arith.constant dense<0.000000e+00> : vector<16x1xf32>
    %814 = tpu.matmul %812, %813, %cst_336 {dimension_numbers = #tpu.dot_dimension_numbers<[1], [0], [0], [1], [0, 0, 1, 1], [], []>} : vector<16x128xf32>, vector<128x1xf32>, vector<16x1xf32> -> vector<16x1xf32>
    %c0_337 = arith.constant 0 : index
    %c0_338 = arith.constant 0 : index
    %815 = vector.load %arg12[%c0_337, %c0_338] : memref<1x1xf32, #tpu.memory_space<vmem>>, vector<1x1xf32>
    %816 = vector.broadcast %815 : vector<1x1xf32> to vector<16x1xf32>
    %817 = arith.addf %814, %816 : vector<16x1xf32>
    %c0_339 = arith.constant 0 : index
    %c0_340 = arith.constant 0 : index
    %818 = vector.load %arg13[%c0_339, %c0_340] : memref<16x1xf32, #tpu.memory_space<vmem>>, vector<16x1xf32>
    tpu.vector_store %arg13[%c0_339, %c0_340], %817 {strides = array<i32>} : memref<16x1xf32, #tpu.memory_space<vmem>>, vector<16x1xf32>,
    return
  }
  func.func @transform_0(%arg0: i32) -> (i32, i32, i32) {
    %c0_i32 = arith.constant 0 : i32
    %c0_i32_0 = arith.constant 0 : i32
    %c0_i32_1 = arith.constant 0 : i32
    return %c0_i32, %arg0, %c0_i32_0 : i32, i32, i32
  }
  func.func @transform_1(%arg0: i32) -> (i32, i32) {
    %c0_i32 = arith.constant 0 : i32
    %c0_i32_0 = arith.constant 0 : i32
    %c0_i32_1 = arith.constant 0 : i32
    return %c0_i32, %c0_i32_0 : i32, i32
  }
  func.func @transform_2(%arg0: i32) -> (i32, i32) {
    %c0_i32 = arith.constant 0 : i32
    %c0_i32_0 = arith.constant 0 : i32
    %c0_i32_1 = arith.constant 0 : i32
    return %c0_i32, %c0_i32_0 : i32, i32
  }
  func.func @transform_3(%arg0: i32) -> (i32, i32) {
    %c0_i32 = arith.constant 0 : i32
    %c0_i32_0 = arith.constant 0 : i32
    %c0_i32_1 = arith.constant 0 : i32
    return %c0_i32, %c0_i32_0 : i32, i32
  }
  func.func @transform_4(%arg0: i32) -> (i32, i32) {
    %c0_i32 = arith.constant 0 : i32
    %c0_i32_0 = arith.constant 0 : i32
    %c0_i32_1 = arith.constant 0 : i32
    return %c0_i32, %c0_i32_0 : i32, i32
  }
  func.func @transform_5(%arg0: i32) -> (i32, i32) {
    %c0_i32 = arith.constant 0 : i32
    %c0_i32_0 = arith.constant 0 : i32
    %c0_i32_1 = arith.constant 0 : i32
    return %c0_i32, %c0_i32_0 : i32, i32
  }
  func.func @transform_6(%arg0: i32) -> (i32, i32) {
    %c0_i32 = arith.constant 0 : i32
    %c0_i32_0 = arith.constant 0 : i32
    %c0_i32_1 = arith.constant 0 : i32
    return %c0_i32, %c0_i32_0 : i32, i32
  }
  func.func @transform_7(%arg0: i32) -> (i32, i32) {
    %c0_i32 = arith.constant 0 : i32
    %c0_i32_0 = arith.constant 0 : i32
    %c0_i32_1 = arith.constant 0 : i32
    return %c0_i32, %c0_i32_0 : i32, i32
  }
  func.func @transform_8(%arg0: i32) -> (i32, i32) {
    %c0_i32 = arith.constant 0 : i32
    %c0_i32_0 = arith.constant 0 : i32
    %c0_i32_1 = arith.constant 0 : i32
    return %c0_i32, %c0_i32_0 : i32, i32
  }
  func.func @transform_9(%arg0: i32) -> (i32, i32) {
    %c0_i32 = arith.constant 0 : i32
    %c0_i32_0 = arith.constant 0 : i32
    %c0_i32_1 = arith.constant 0 : i32
    return %c0_i32, %c0_i32_0 : i32, i32
  }
  func.func @transform_10(%arg0: i32) -> (i32, i32) {
    %c0_i32 = arith.constant 0 : i32
    %c0_i32_0 = arith.constant 0 : i32
    %c0_i32_1 = arith.constant 0 : i32
    return %c0_i32, %c0_i32_0 : i32, i32
  }
  func.func @transform_11(%arg0: i32) -> (i32, i32) {
    %c0_i32 = arith.constant 0 : i32
    %c0_i32_0 = arith.constant 0 : i32
    %c0_i32_1 = arith.constant 0 : i32
    return %c0_i32, %c0_i32_0 : i32, i32
  }
  func.func @transform_12(%arg0: i32) -> (i32, i32) {
    %c0_i32 = arith.constant 0 : i32
    %c0_i32_0 = arith.constant 0 : i32
    return %arg0, %c0_i32 : i32, i32
  }
}

</mosaic_0001>

<llo_original>
// kernel: lstm_model_forward.1
$region0: #{lstm_model_forward.1}
  #allocation0 [shape = 'u32[]', space=smem, size = 0x4, offset = 0x4, fixed_abs, tag = 'smem constant byte address 0x4 - core index']
  #allocation1 [shape = 'u32[144,128]{1,0:T(1,128)}', space=vmem, size = 0x12000, scoped, tag = 'internal scratch']
  #allocation2 [shape = 'bf16[8,16,512]{2,1,0:T(16,128)(2,1)}', space=vmem, size = 0x20000, scoped, tag = 'scratch operand']
  #allocation3 [shape = 'f32[1,1]{1,0:T(1,128)S(1)}', space=vmem, size = 0x200, scoped, tag = 'scoped memory for lstm_model_forward.1']
  %s0 = inlined_call_operand.vmem [shape: bf16[8,16,4], index: 0, kind: input, shape index: {}]
  %s1 = inlined_call_operand.vmem [shape: bf16[4,512], index: 1, kind: input, shape index: {}]
  %s2 = inlined_call_operand.vmem [shape: bf16[128,512], index: 2, kind: input, shape index: {}]
  %s3 = inlined_call_operand.vmem [shape: f32[1,512], index: 3, kind: input, shape index: {}]
  %s4 = inlined_call_operand.vmem [shape: bf16[128,512], index: 4, kind: input, shape index: {}]
  %s5 = inlined_call_operand.vmem [shape: bf16[128,512], index: 5, kind: input, shape index: {}]
  %s6 = inlined_call_operand.vmem [shape: f32[1,512], index: 6, kind: input, shape index: {}]
  %s7 = inlined_call_operand.vmem [shape: bf16[128,512], index: 7, kind: input, shape index: {}]
  %s8 = inlined_call_operand.vmem [shape: bf16[128,512], index: 8, kind: input, shape index: {}]
  %s9 = inlined_call_operand.vmem [shape: f32[1,512], index: 9, kind: input, shape index: {}]
  %s10 = inlined_call_operand.vmem [shape: f32[128,1], index: 10, kind: input, shape index: {}]
  %s11 = inlined_call_operand.<no memory space> [shape: f32[1,1], index: 11, kind: input, shape index: {}]
  %s12 = inlined_call_operand.vmem [shape: f32[16,1], index: 12, kind: output, shape index: {}]
  %s13 = sld [smem:[#allocation0]]
  $region58: #{lstm_model_forward.1} parent=0
    _
  %s15 = ssub.s32 1, %s13
  %s16 = scalar_select 0, %s15, %s13
  %v17 = vstv %s11
  %18 = vst [vmem:[#allocation3] sm:$0x1] %v17
  // Predicated region
  $region2: #{lstm_model_forward.1} parent=0 // pred_check
    _
  $region3: #{lstm_model_forward.1} parent=0 // pred_check_branch
    %20 = sbr.rel (0) target = $region5
  $region4: #{lstm_model_forward.1} parent=0 // pred_region
    _
  $region5: #{lstm_model_forward.1} parent=0 // pred_fallthru
    _
  // Predicated region
  $region6: #{lstm_model_forward.1} parent=0 // pred_check
    _
  $region7: #{lstm_model_forward.1} parent=0 // pred_check_branch
    %22 = sbr.rel (0) target = $region9
  $region8: #{lstm_model_forward.1} parent=0 // pred_region
    _
  $region9: #{lstm_model_forward.1} parent=0 // pred_fallthru
    _
  // Predicated region
  $region10: #{lstm_model_forward.1} parent=0 // pred_check
    _
  $region11: #{lstm_model_forward.1} parent=0 // pred_check_branch
    %24 = sbr.rel (0) target = $region13
  $region12: #{lstm_model_forward.1} parent=0 // pred_region
    _
  $region13: #{lstm_model_forward.1} parent=0 // pred_fallthru
    _
  // Predicated region
  $region14: #{lstm_model_forward.1} parent=0 // pred_check
    _
  $region15: #{lstm_model_forward.1} parent=0 // pred_check_branch
    %26 = sbr.rel (0) target = $region17
  $region16: #{lstm_model_forward.1} parent=0 // pred_region
    _
  $region17: #{lstm_model_forward.1} parent=0 // pred_fallthru
    _
  // Predicated region
  $region18: #{lstm_model_forward.1} parent=0 // pred_check
    _
  $region19: #{lstm_model_forward.1} parent=0 // pred_check_branch
    %28 = sbr.rel (0) target = $region21
  $region20: #{lstm_model_forward.1} parent=0 // pred_region
    _
  $region21: #{lstm_model_forward.1} parent=0 // pred_fallthru
    _
  // Predicated region
  $region22: #{lstm_model_forward.1} parent=0 // pred_check
    _
  $region23: #{lstm_model_forward.1} parent=0 // pred_check_branch
    %30 = sbr.rel (0) target = $region25
  $region24: #{lstm_model_forward.1} parent=0 // pred_region
    _
  $region25: #{lstm_model_forward.1} parent=0 // pred_fallthru
    _
  // Predicated region
  $region26: #{lstm_model_forward.1} parent=0 // pred_check
    _
  $region27: #{lstm_model_forward.1} parent=0 // pred_check_branch
    %32 = sbr.rel (0) target = $region29
  $region28: #{lstm_model_forward.1} parent=0 // pred_region
    _
  $region29: #{lstm_model_forward.1} parent=0 // pred_fallthru
    _
  // Predicated region
  $region30: #{lstm_model_forward.1} parent=0 // pred_check
    _
  $region31: #{lstm_model_forward.1} parent=0 // pred_check_branch
    %34 = sbr.rel (0) target = $region33
  $region32: #{lstm_model_forward.1} parent=0 // pred_region
    _
  $region33: #{lstm_model_forward.1} parent=0 // pred_fallthru
    _
  // Predicated region
  $region34: #{lstm_model_forward.1} parent=0 // pred_check
    _
  $region35: #{lstm_model_forward.1} parent=0 // pred_check_branch
    %36 = sbr.rel (0) target = $region37
  $region36: #{lstm_model_forward.1} parent=0 // pred_region
    _
  $region37: #{lstm_model_forward.1} parent=0 // pred_fallthru
    _
  // Predicated region
  $region38: #{lstm_model_forward.1} parent=0 // pred_check
    _
  $region39: #{lstm_model_forward.1} parent=0 // pred_check_branch
    %38 = sbr.rel (0) target = $region41
  $region40: #{lstm_model_forward.1} parent=0 // pred_region
    _
  $region41: #{lstm_model_forward.1} parent=0 // pred_fallthru
    _
  // Predicated region
  $region42: #{lstm_model_forward.1} parent=0 // pred_check
    _
  $region43: #{lstm_model_forward.1} parent=0 // pred_check_branch
    %40 = sbr.rel (0) target = $region45
  $region44: #{lstm_model_forward.1} parent=0 // pred_region
    _
  $region45: #{lstm_model_forward.1} parent=0 // pred_fallthru
    _
  // Predicated region
  $region46: #{lstm_model_forward.1} parent=0 // pred_check
    _
  $region47: #{lstm_model_forward.1} parent=0 // pred_check_branch
    %42 = sbr.rel (0) target = $region49
  $region48: #{lstm_model_forward.1} parent=0 // pred_region
    _
  $region49: #{lstm_model_forward.1} parent=0 // pred_fallthru
    _
  %v44 = vld [vmem:[%s0] sm:$0xf]
  %v45 = vld [vmem:[%s0 + $0x4] sm:$0xf]
  %v46 = vld [vmem:[%s0 + $0x8] sm:$0xf]
  %v47 = vld [vmem:[%s0 + $0xc] sm:$0xf]
  %v48 = vld [vmem:[%s0 + $0x10] sm:$0xf]
  %v49 = vld [vmem:[%s0 + $0x14] sm:$0xf]
  %v50 = vld [vmem:[%s0 + $0x18] sm:$0xf]
  %v51 = vld [vmem:[%s0 + $0x1c] sm:$0xf]
  %v52 = vld [vmem:[%s0 + $0x20] sm:$0xf]
  %v53 = vld [vmem:[%s0 + $0x24] sm:$0xf]
  %v54 = vld [vmem:[%s0 + $0x28] sm:$0xf]
  %v55 = vld [vmem:[%s0 + $0x2c] sm:$0xf]
  %v56 = vld [vmem:[%s0 + $0x30] sm:$0xf]
  %v57 = vld [vmem:[%s0 + $0x34] sm:$0xf]
  %v58 = vld [vmem:[%s0 + $0x38] sm:$0xf]
  %v59 = vld [vmem:[%s0 + $0x3c] sm:$0xf]
  %v60 = vld [vmem:[%s1] sm:$0xff]
  %v61 = vld [vmem:[%s3] sm:$0xf]
  %v63 = vlaneseq
  %v64 = vshrl.u32 %v63, 7
  %v65 = vsub.s32 0, %v64
  %v66 = vrot.slane %v61, %v65
  %v67 = vlaneseq
  %v68 = vshrl.u32 %v67, 7
  %v69 = vsub.s32 1, %v68
  %v70 = vrot.slane %v61, %v69
  %v71 = vlaneseq
  %v72 = vshrl.u32 %v71, 7
  %v73 = vsub.s32 2, %v72
  %v74 = vrot.slane %v61, %v73
  %v75 = vlaneseq
  %v76 = vshrl.u32 %v75, 7
  %v77 = vsub.s32 3, %v76
  %v78 = vrot.slane %v61, %v77
  %v99 = vunpack.c.l.b16 %v44
  %v100 = vunpack.c.l.b16 %v45
  %v101 = vunpack.c.l.b16 %v46
  %v102 = vunpack.c.l.b16 %v47
  %v103 = vunpack.c.l.b16 %v48
  %v104 = vunpack.c.l.b16 %v49
  %v105 = vunpack.c.l.b16 %v50
  %v106 = vunpack.c.l.b16 %v51
  %v107 = vunpack.c.l.b16 %v52
  %v108 = vunpack.c.l.b16 %v53
  %v109 = vunpack.c.l.b16 %v54
  %v110 = vunpack.c.l.b16 %v55
  %v111 = vunpack.c.l.b16 %v56
  %v112 = vunpack.c.l.b16 %v57
  %v113 = vunpack.c.l.b16 %v58
  %v114 = vunpack.c.l.b16 %v59
  %v115 = vpack.c.b16 %v100, %v99
  %v116 = vpack.c.b16 %v102, %v101
  %v117 = vpack.c.b16 %v104, %v103
  %v118 = vpack.c.b16 %v106, %v105
  %v119 = vpack.c.b16 %v108, %v107
  %v120 = vpack.c.b16 %v110, %v109
  %v121 = vpack.c.b16 %v112, %v111
  %v122 = vpack.c.b16 %v114, %v113
  %v124 = vcombine.high %v60, %v60
  %v126 = vunpack.c.l.s4 1983009808
  %v127 = vunpack.c.0.s8 %v126
  %v128 = vlaneseq
  %v129 = vshrl.u32 %v128, 7
  %v130 = vsub.s32 %v127, %v129
  %v131 = vrot.slane %v60, %v130
  %v133 = vunpack.c.l.s4 1983009808
  %v134 = vunpack.c.0.s8 %v133
  %v135 = vlaneseq
  %v136 = vshrl.u32 %v135, 7
  %v137 = vsub.s32 %v134, %v136
  %v138 = vrot.slane %v124, %v137
  %v139 = vcombine.high %v131, %v131
  %v140 = vcombine.high %v138, %v138
  %vm141 = vcmask 31744
  %v143 = vsel %vm141, %v115, 0
  %v146 = vsel %vm141, %v116, 0
  %v149 = vsel %vm141, %v117, 0
  %v152 = vsel %vm141, %v118, 0
  %v155 = vsel %vm141, %v119, 0
  %v158 = vsel %vm141, %v120, 0
  %v161 = vsel %vm141, %v121, 0
  %v164 = vsel %vm141, %v122, 0
  %vm166 = vcmask 1041408
  %v168 = vsel %vm166, %v131, 0
  %v171 = vsel %vm166, %v139, 0
  %v174 = vsel %vm166, %v138, 0
  %v177 = vsel %vm166, %v140, 0
  %179 = vmatprep.subr.bf16.mxu0 %v171
  %180 = vmatpush1.bf16.msra.mxu0 %v168
  %181 = vmatprep.subr.bf16.mxu0 0
  %182 = vmatpush1.bf16.msra.mxu0 0
  %183 = vmatprep.subr.bf16.mxu0 0
  %184 = vmatpush1.bf16.msra.mxu0 0
  %185 = vmatprep.subr.bf16.mxu0 0
  %186 = vmatpush1.bf16.msra.mxu0 0
  %187 = vmatprep.subr.bf16.mxu0 0
  %188 = vmatpush1.bf16.msra.mxu0 0
  %189 = vmatprep.subr.bf16.mxu0 0
  %190 = vmatpush1.bf16.msra.mxu0 0
  %191 = vmatprep.subr.bf16.mxu0 0
  %192 = vmatpush1.bf16.msra.mxu0 0
  %193 = vmatprep.subr.bf16.mxu0 0
  %194 = vmatpush1.bf16.msra.mxu0 0
  %195 = vmatprep.subr.bf16.mxu0 0
  %196 = vmatpush1.bf16.msra.mxu0 0
  %197 = vmatprep.subr.bf16.mxu0 0
  %198 = vmatpush1.bf16.msra.mxu0 0
  %199 = vmatprep.subr.bf16.mxu0 0
  %200 = vmatpush1.bf16.msra.mxu0 0
  %201 = vmatprep.subr.bf16.mxu0 0
  %202 = vmatpush1.bf16.msra.mxu0 0
  %203 = vmatprep.subr.bf16.mxu0 0
  %204 = vmatpush1.bf16.msra.mxu0 0
  %205 = vmatprep.subr.bf16.mxu0 0
  %206 = vmatpush1.bf16.msra.mxu0 0
  %207 = vmatprep.subr.bf16.mxu0 0
  %208 = vmatpush1.bf16.msra.mxu0 0
  %209 = vmatprep.subr.bf16.mxu0 0
  %210 = vmatpush1.bf16.msra.mxu0 0
  %211 = vmatprep.mubr.bf16.mxu0 0
  %212 = vmatmul.mubr.bf16.gmra.mrb[0].mxu0 %v143
  %v213 = vpop.f32.mrb[0].mxu0
  %v214 = vadd.f32 %v66, %v213
  %v215 = vpop.f32.mrb[0].mxu0
  %v216 = vadd.f32 %v70, %v215
  %v217 = vpop.f32.mrb[0].mxu0
  %v218 = vadd.f32 %v66, %v217
  %v219 = vpop.f32.mrb[0].mxu0
  %v220 = vadd.f32 %v70, %v219
  %221 = vmatprep.mubr.bf16.mxu0 0
  %222 = vmatmul.mubr.bf16.gmra.mrb[0].mxu0 %v146
  %v223 = vpop.f32.mrb[0].mxu0
  %v224 = vadd.f32 %v66, %v223
  %v225 = vpop.f32.mrb[0].mxu0
  %v226 = vadd.f32 %v70, %v225
  %v227 = vpop.f32.mrb[0].mxu0
  %v228 = vadd.f32 %v66, %v227
  %v229 = vpop.f32.mrb[0].mxu0
  %v230 = vadd.f32 %v70, %v229
  %231 = vmatprep.mubr.bf16.mxu0 0
  %232 = vmatmul.mubr.bf16.gmra.mrb[0].mxu0 %v149
  %v233 = vpop.f32.mrb[0].mxu0
  %v234 = vadd.f32 %v66, %v233
  %v235 = vpop.f32.mrb[0].mxu0
  %v236 = vadd.f32 %v70, %v235
  %v237 = vpop.f32.mrb[0].mxu0
  %v238 = vadd.f32 %v66, %v237
  %v239 = vpop.f32.mrb[0].mxu0
  %v240 = vadd.f32 %v70, %v239
  %241 = vmatprep.mubr.bf16.mxu0 0
  %242 = vmatmul.mubr.bf16.gmra.mrb[0].mxu0 %v152
  %v243 = vpop.f32.mrb[0].mxu0
  %v244 = vadd.f32 %v66, %v243
  %v245 = vpop.f32.mrb[0].mxu0
  %v246 = vadd.f32 %v70, %v245
  %v247 = vpop.f32.mrb[0].mxu0
  %v248 = vadd.f32 %v66, %v247
  %v249 = vpop.f32.mrb[0].mxu0
  %v250 = vadd.f32 %v70, %v249
  %251 = vmatprep.mubr.bf16.mxu0 0
  %252 = vmatmul.mubr.bf16.gmra.mrb[0].mxu0 %v155
  %v253 = vpop.f32.mrb[0].mxu0
  %v254 = vadd.f32 %v66, %v253
  %v255 = vpop.f32.mrb[0].mxu0
  %v256 = vadd.f32 %v70, %v255
  %v257 = vpop.f32.mrb[0].mxu0
  %v258 = vadd.f32 %v66, %v257
  %v259 = vpop.f32.mrb[0].mxu0
  %v260 = vadd.f32 %v70, %v259
  %261 = vmatprep.mubr.bf16.mxu0 0
  %262 = vmatmul.mubr.bf16.gmra.mrb[0].mxu0 %v158
  %v263 = vpop.f32.mrb[0].mxu0
  %v264 = vadd.f32 %v66, %v263
  %v265 = vpop.f32.mrb[0].mxu0
  %v266 = vadd.f32 %v70, %v265
  %v267 = vpop.f32.mrb[0].mxu0
  %v268 = vadd.f32 %v66, %v267
  %v269 = vpop.f32.mrb[0].mxu0
  %v270 = vadd.f32 %v70, %v269
  %271 = vmatprep.mubr.bf16.mxu0 0
  %272 = vmatmul.mubr.bf16.gmra.mrb[0].mxu0 %v161
  %v273 = vpop.f32.mrb[0].mxu0
  %v274 = vadd.f32 %v66, %v273
  %v275 = vpop.f32.mrb[0].mxu0
  %v276 = vadd.f32 %v70, %v275
  %v277 = vpop.f32.mrb[0].mxu0
  %v278 = vadd.f32 %v66, %v277
  %v279 = vpop.f32.mrb[0].mxu0
  %v280 = vadd.f32 %v70, %v279
  %281 = vmatprep.mubr.bf16.mxu0 0
  %282 = vmatmul.mubr.bf16.gmra.mrb[0].mxu0 %v164
  %v283 = vpop.f32.mrb[0].mxu0
  %v284 = vadd.f32 %v66, %v283
  %v285 = vpop.f32.mrb[0].mxu0
  %v286 = vadd.f32 %v70, %v285
  %v287 = vpop.f32.mrb[0].mxu0
  %v288 = vadd.f32 %v66, %v287
  %v289 = vpop.f32.mrb[0].mxu0
  %v290 = vadd.f32 %v70, %v289
  %291 = vdwg.mxu0
  %292 = vmatprep.subr.bf16.mxu0 %v177
  %293 = vmatpush1.bf16.msra.mxu0 %v174
  %294 = vmatprep.subr.bf16.mxu0 0
  %295 = vmatpush1.bf16.msra.mxu0 0
  %296 = vmatprep.subr.bf16.mxu0 0
  %297 = vmatpush1.bf16.msra.mxu0 0
  %298 = vmatprep.subr.bf16.mxu0 0
  %299 = vmatpush1.bf16.msra.mxu0 0
  %300 = vmatprep.subr.bf16.mxu0 0
  %301 = vmatpush1.bf16.msra.mxu0 0
  %302 = vmatprep.subr.bf16.mxu0 0
  %303 = vmatpush1.bf16.msra.mxu0 0
  %304 = vmatprep.subr.bf16.mxu0 0
  %305 = vmatpush1.bf16.msra.mxu0 0
  %306 = vmatprep.subr.bf16.mxu0 0
  %307 = vmatpush1.bf16.msra.mxu0 0
  %308 = vmatprep.subr.bf16.mxu0 0
  %309 = vmatpush1.bf16.msra.mxu0 0
  %310 = vmatprep.subr.bf16.mxu0 0
  %311 = vmatpush1.bf16.msra.mxu0 0
  %312 = vmatprep.subr.bf16.mxu0 0
  %313 = vmatpush1.bf16.msra.mxu0 0
  %314 = vmatprep.subr.bf16.mxu0 0
  %315 = vmatpush1.bf16.msra.mxu0 0
  %316 = vmatprep.subr.bf16.mxu0 0
  %317 = vmatpush1.bf16.msra.mxu0 0
  %318 = vmatprep.subr.bf16.mxu0 0
  %319 = vmatpush1.bf16.msra.mxu0 0
  %320 = vmatprep.subr.bf16.mxu0 0
  %321 = vmatpush1.bf16.msra.mxu0 0
  %322 = vmatprep.subr.bf16.mxu0 0
  %323 = vmatpush1.bf16.msra.mxu0 0
  %324 = vmatprep.mubr.bf16.mxu0 0
  %325 = vmatmul.mubr.bf16.gmra.mrb[0].mxu0 %v143
  %v326 = vpop.f32.mrb[0].mxu0
  %v327 = vadd.f32 %v74, %v326
  %v328 = vpop.f32.mrb[0].mxu0
  %v329 = vadd.f32 %v78, %v328
  %v330 = vpop.f32.mrb[0].mxu0
  %v331 = vadd.f32 %v74, %v330
  %v332 = vpop.f32.mrb[0].mxu0
  %v333 = vadd.f32 %v78, %v332
  %334 = vmatprep.mubr.bf16.mxu0 0
  %335 = vmatmul.mubr.bf16.gmra.mrb[0].mxu0 %v146
  %v336 = vpop.f32.mrb[0].mxu0
  %v337 = vadd.f32 %v74, %v336
  %v338 = vpop.f32.mrb[0].mxu0
  %v339 = vadd.f32 %v78, %v338
  %v340 = vpop.f32.mrb[0].mxu0
  %v341 = vadd.f32 %v74, %v340
  %v342 = vpop.f32.mrb[0].mxu0
  %v343 = vadd.f32 %v78, %v342
  %344 = vmatprep.mubr.bf16.mxu0 0
  %345 = vmatmul.mubr.bf16.gmra.mrb[0].mxu0 %v149
  %v346 = vpop.f32.mrb[0].mxu0
  %v347 = vadd.f32 %v74, %v346
  %v348 = vpop.f32.mrb[0].mxu0
  %v349 = vadd.f32 %v78, %v348
  %v350 = vpop.f32.mrb[0].mxu0
  %v351 = vadd.f32 %v74, %v350
  %v352 = vpop.f32.mrb[0].mxu0
  %v353 = vadd.f32 %v78, %v352
  %354 = vmatprep.mubr.bf16.mxu0 0
  %355 = vmatmul.mubr.bf16.gmra.mrb[0].mxu0 %v152
  %v356 = vpop.f32.mrb[0].mxu0
  %v357 = vadd.f32 %v74, %v356
  %v358 = vpop.f32.mrb[0].mxu0
  %v359 = vadd.f32 %v78, %v358
  %v360 = vpop.f32.mrb[0].mxu0
  %v361 = vadd.f32 %v74, %v360
  %v362 = vpop.f32.mrb[0].mxu0
  %v363 = vadd.f32 %v78, %v362
  %364 = vmatprep.mubr.bf16.mxu0 0
  %365 = vmatmul.mubr.bf16.gmra.mrb[0].mxu0 %v155
  %v366 = vpop.f32.mrb[0].mxu0
  %v367 = vadd.f32 %v74, %v366
  %v368 = vpop.f32.mrb[0].mxu0
  %v369 = vadd.f32 %v78, %v368
  %v370 = vpop.f32.mrb[0].mxu0
  %v371 = vadd.f32 %v74, %v370
  %v372 = vpop.f32.mrb[0].mxu0
  %v373 = vadd.f32 %v78, %v372
  %374 = vmatprep.mubr.bf16.mxu0 0
  %375 = vmatmul.mubr.bf16.gmra.mrb[0].mxu0 %v158
  %v376 = vpop.f32.mrb[0].mxu0
  %v377 = vadd.f32 %v74, %v376
  %v378 = vpop.f32.mrb[0].mxu0
  %v379 = vadd.f32 %v78, %v378
  %v380 = vpop.f32.mrb[0].mxu0
  %v381 = vadd.f32 %v74, %v380
  %v382 = vpop.f32.mrb[0].mxu0
  %v383 = vadd.f32 %v78, %v382
  %384 = vmatprep.mubr.bf16.mxu0 0
  %385 = vmatmul.mubr.bf16.gmra.mrb[0].mxu0 %v161
  %v386 = vpop.f32.mrb[0].mxu0
  %v387 = vadd.f32 %v74, %v386
  %v388 = vpop.f32.mrb[0].mxu0
  %v389 = vadd.f32 %v78, %v388
  %v390 = vpop.f32.mrb[0].mxu0
  %v391 = vadd.f32 %v74, %v390
  %v392 = vpop.f32.mrb[0].mxu0
  %v393 = vadd.f32 %v78, %v392
  %394 = vmatprep.mubr.bf16.mxu0 0
  %395 = vmatmul.mubr.bf16.gmra.mrb[0].mxu0 %v164
  %v396 = vpop.f32.mrb[0].mxu0
  %v397 = vadd.f32 %v74, %v396
  %v398 = vpop.f32.mrb[0].mxu0
  %v399 = vadd.f32 %v78, %v398
  %v400 = vpop.f32.mrb[0].mxu0
  %v401 = vadd.f32 %v74, %v400
  %v402 = vpop.f32.mrb[0].mxu0
  %v403 = vadd.f32 %v78, %v402
  %404 = vdwg.mxu0
  %v405 = vpack.c.bf16 %v218, %v214
  %v406 = vpack.c.bf16 %v220, %v216
  %v407 = vpack.c.bf16 %v331, %v327
  %v408 = vpack.c.bf16 %v333, %v329
  %v409 = vpack.c.bf16 %v228, %v224
  %v410 = vpack.c.bf16 %v230, %v226
  %v411 = vpack.c.bf16 %v341, %v337
  %v412 = vpack.c.bf16 %v343, %v339
  %v413 = vpack.c.bf16 %v238, %v234
  %v414 = vpack.c.bf16 %v240, %v236
  %v415 = vpack.c.bf16 %v351, %v347
  %v416 = vpack.c.bf16 %v353, %v349
  %v417 = vpack.c.bf16 %v248, %v244
  %v418 = vpack.c.bf16 %v250, %v246
  %v419 = vpack.c.bf16 %v361, %v357
  %v420 = vpack.c.bf16 %v363, %v359
  %v421 = vpack.c.bf16 %v258, %v254
  %v422 = vpack.c.bf16 %v260, %v256
  %v423 = vpack.c.bf16 %v371, %v367
  %v424 = vpack.c.bf16 %v373, %v369
  %v425 = vpack.c.bf16 %v268, %v264
  %v426 = vpack.c.bf16 %v270, %v266
  %v427 = vpack.c.bf16 %v381, %v377
  %v428 = vpack.c.bf16 %v383, %v379
  %v429 = vpack.c.bf16 %v278, %v274
  %v430 = vpack.c.bf16 %v280, %v276
  %v431 = vpack.c.bf16 %v391, %v387
  %v432 = vpack.c.bf16 %v393, %v389
  %v433 = vpack.c.bf16 %v288, %v284
  %v434 = vpack.c.bf16 %v290, %v286
  %v435 = vpack.c.bf16 %v401, %v397
  %v436 = vpack.c.bf16 %v403, %v399
  %437 = vst [vmem:[#allocation2] sm:$0xff] %v405
  %438 = vst [vmem:[#allocation2 + $0x8] sm:$0xff] %v406
  %439 = vst [vmem:[#allocation2 + $0x10] sm:$0xff] %v407
  %440 = vst [vmem:[#allocation2 + $0x18] sm:$0xff] %v408
  %441 = vst [vmem:[#allocation2 + $0x20] sm:$0xff] %v409
  %442 = vst [vmem:[#allocation2 + $0x28] sm:$0xff] %v410
  %443 = vst [vmem:[#allocation2 + $0x30] sm:$0xff] %v411
  %444 = vst [vmem:[#allocation2 + $0x38] sm:$0xff] %v412
  %445 = vst [vmem:[#allocation2 + $0x40] sm:$0xff] %v413
  %446 = vst [vmem:[#allocation2 + $0x48] sm:$0xff] %v414
  %447 = vst [vmem:[#allocation2 + $0x50] sm:$0xff] %v415
  %448 = vst [vmem:[#allocation2 + $0x58] sm:$0xff] %v416
  %449 = vst [vmem:[#allocation2 + $0x60] sm:$0xff] %v417
  %450 = vst [vmem:[#allocation2 + $0x68] sm:$0xff] %v418
  %451 = vst [vmem:[#allocation2 + $0x70] sm:$0xff] %v419
  %452 = vst [vmem:[#allocation2 + $0x78] sm:$0xff] %v420
  %453 = vst [vmem:[#allocation2 + $0x80] sm:$0xff] %v421
  %454 = vst [vmem:[#allocation2 + $0x88] sm:$0xff] %v422
  %455 = vst [vmem:[#allocation2 + $0x90] sm:$0xff] %v423
  %456 = vst [vmem:[#allocation2 + $0x98] sm:$0xff] %v424
  %457 = vst [vmem:[#allocation2 + $0xa0] sm:$0xff] %v425
  %458 = vst [vmem:[#allocation2 + $0xa8] sm:$0xff] %v426
  %459 = vst [vmem:[#allocation2 + $0xb0] sm:$0xff] %v427
  %460 = vst [vmem:[#allocation2 + $0xb8] sm:$0xff] %v428
  %461 = vst [vmem:[#allocation2 + $0xc0] sm:$0xff] %v429
  %462 = vst [vmem:[#allocation2 + $0xc8] sm:$0xff] %v430
  %463 = vst [vmem:[#allocation2 + $0xd0] sm:$0xff] %v431
  %464 = vst [vmem:[#allocation2 + $0xd8] sm:$0xff] %v432
  %465 = vst [vmem:[#allocation2 + $0xe0] sm:$0xff] %v433
  %466 = vst [vmem:[#allocation2 + $0xe8] sm:$0xff] %v434
  %467 = vst [vmem:[#allocation2 + $0xf0] sm:$0xff] %v435
  %468 = vst [vmem:[#allocation2 + $0xf8] sm:$0xff] %v436
  %v469 = vld [vmem:[#allocation2] sm:$0xff]
  %v470 = vld [vmem:[#allocation2 + $0x8] sm:$0xff]
  %v471 = vld [vmem:[#allocation2 + $0x10] sm:$0xff]
  %v472 = vld [vmem:[#allocation2 + $0x18] sm:$0xff]
  %v473 = vunpack.c.l.bf16 %v469
  %v474 = vunpack.c.l.bf16 %v470
  %v475 = vunpack.c.l.bf16 %v471
  %v476 = vunpack.c.l.bf16 %v472
  %v477 = vunpack.c.h.bf16 %v469
  %v478 = vunpack.c.h.bf16 %v470
  %v479 = vunpack.c.h.bf16 %v471
  %v480 = vunpack.c.h.bf16 %v472
  %v481 = vld [vmem:[%s2] sm:$0xff]
  %v482 = vld [vmem:[%s2 + $0x8] sm:$0xff]
  %v483 = vld [vmem:[%s2 + $0x10] sm:$0xff]
  %v484 = vld [vmem:[%s2 + $0x18] sm:$0xff]
  %v485 = vld [vmem:[%s2 + $0x20] sm:$0xff]
  %v486 = vld [vmem:[%s2 + $0x28] sm:$0xff]
  %v487 = vld [vmem:[%s2 + $0x30] sm:$0xff]
  %v488 = vld [vmem:[%s2 + $0x38] sm:$0xff]
  %v489 = vld [vmem:[%s2 + $0x40] sm:$0xff]
  %v490 = vld [vmem:[%s2 + $0x48] sm:$0xff]
  %v491 = vld [vmem:[%s2 + $0x50] sm:$0xff]
  %v492 = vld [vmem:[%s2 + $0x58] sm:$0xff]
  %v493 = vld [vmem:[%s2 + $0x60] sm:$0xff]
  %v494 = vld [vmem:[%s2 + $0x68] sm:$0xff]
  %v495 = vld [vmem:[%s2 + $0x70] sm:$0xff]
  %v496 = vld [vmem:[%s2 + $0x78] sm:$0xff]
  %v497 = vld [vmem:[%s2 + $0x80] sm:$0xff]
  %v498 = vld [vmem:[%s2 + $0x88] sm:$0xff]
  %v499 = vld [vmem:[%s2 + $0x90] sm:$0xff]
  %v500 = vld [vmem:[%s2 + $0x98] sm:$0xff]
  %v501 = vld [vmem:[%s2 + $0xa0] sm:$0xff]
  %v502 = vld [vmem:[%s2 + $0xa8] sm:$0xff]
  %v503 = vld [vmem:[%s2 + $0xb0] sm:$0xff]
  %v504 = vld [vmem:[%s2 + $0xb8] sm:$0xff]
  %v505 = vld [vmem:[%s2 + $0xc0] sm:$0xff]
  %v506 = vld [vmem:[%s2 + $0xc8] sm:$0xff]
  %v507 = vld [vmem:[%s2 + $0xd0] sm:$0xff]
  %v508 = vld [vmem:[%s2 + $0xd8] sm:$0xff]
  %v509 = vld [vmem:[%s2 + $0xe0] sm:$0xff]
  %v510 = vld [vmem:[%s2 + $0xe8] sm:$0xff]
  %v511 = vld [vmem:[%s2 + $0xf0] sm:$0xff]
  %v512 = vld [vmem:[%s2 + $0xf8] sm:$0xff]
  %v545 = vunpack.c.l.b16 %v481
  %v546 = vunpack.c.h.b16 %v481
  %v547 = vunpack.c.l.b16 %v482
  %v548 = vunpack.c.h.b16 %v482
  %v549 = vunpack.c.l.b16 %v483
  %v550 = vunpack.c.h.b16 %v483
  %v551 = vunpack.c.l.b16 %v484
  %v552 = vunpack.c.h.b16 %v484
  %v553 = vunpack.c.l.b16 %v485
  %v554 = vunpack.c.h.b16 %v485
  %v555 = vunpack.c.l.b16 %v486
  %v556 = vunpack.c.h.b16 %v486
  %v557 = vunpack.c.l.b16 %v487
  %v558 = vunpack.c.h.b16 %v487
  %v559 = vunpack.c.l.b16 %v488
  %v560 = vunpack.c.h.b16 %v488
  %v561 = vunpack.c.l.b16 %v489
  %v562 = vunpack.c.h.b16 %v489
  %v563 = vunpack.c.l.b16 %v490
  %v564 = vunpack.c.h.b16 %v490
  %v565 = vunpack.c.l.b16 %v491
  %v566 = vunpack.c.h.b16 %v491
  %v567 = vunpack.c.l.b16 %v492
  %v568 = vunpack.c.h.b16 %v492
  %v569 = vunpack.c.l.b16 %v493
  %v570 = vunpack.c.h.b16 %v493
  %v571 = vunpack.c.l.b16 %v494
  %v572 = vunpack.c.h.b16 %v494
  %v573 = vunpack.c.l.b16 %v495
  %v574 = vunpack.c.h.b16 %v495
  %v575 = vunpack.c.l.b16 %v496
  %v576 = vunpack.c.h.b16 %v496
  %v577 = vunpack.c.l.b16 %v497
  %v578 = vunpack.c.h.b16 %v497
  %v579 = vunpack.c.l.b16 %v498
  %v580 = vunpack.c.h.b16 %v498
  %v581 = vunpack.c.l.b16 %v499
  %v582 = vunpack.c.h.b16 %v499
  %v583 = vunpack.c.l.b16 %v500
  %v584 = vunpack.c.h.b16 %v500
  %v585 = vunpack.c.l.b16 %v501
  %v586 = vunpack.c.h.b16 %v501
  %v587 = vunpack.c.l.b16 %v502
  %v588 = vunpack.c.h.b16 %v502
  %v589 = vunpack.c.l.b16 %v503
  %v590 = vunpack.c.h.b16 %v503
  %v591 = vunpack.c.l.b16 %v504
  %v592 = vunpack.c.h.b16 %v504
  %v593 = vunpack.c.l.b16 %v505
  %v594 = vunpack.c.h.b16 %v505
  %v595 = vunpack.c.l.b16 %v506
  %v596 = vunpack.c.h.b16 %v506
  %v597 = vunpack.c.l.b16 %v507
  %v598 = vunpack.c.h.b16 %v507
  %v599 = vunpack.c.l.b16 %v508
  %v600 = vunpack.c.h.b16 %v508
  %v601 = vunpack.c.l.b16 %v509
  %v602 = vunpack.c.h.b16 %v509
  %v603 = vunpack.c.l.b16 %v510
  %v604 = vunpack.c.h.b16 %v510
  %v605 = vunpack.c.l.b16 %v511
  %v606 = vunpack.c.h.b16 %v511
  %v607 = vunpack.c.l.b16 %v512
  %v608 = vunpack.c.h.b16 %v512
  %v609 = vpack.c.b16 %v549, %v545
  %v610 = vpack.c.b16 %v550, %v546
  %v611 = vpack.c.b16 %v551, %v547
  %v612 = vpack.c.b16 %v552, %v548
  %v613 = vpack.c.b16 %v557, %v553
  %v614 = vpack.c.b16 %v558, %v554
  %v615 = vpack.c.b16 %v559, %v555
  %v616 = vpack.c.b16 %v560, %v556
  %v617 = vpack.c.b16 %v565, %v561
  %v618 = vpack.c.b16 %v566, %v562
  %v619 = vpack.c.b16 %v567, %v563
  %v620 = vpack.c.b16 %v568, %v564
  %v621 = vpack.c.b16 %v573, %v569
  %v622 = vpack.c.b16 %v574, %v570
  %v623 = vpack.c.b16 %v575, %v571
  %v624 = vpack.c.b16 %v576, %v572
  %v625 = vpack.c.b16 %v581, %v577
  %v626 = vpack.c.b16 %v582, %v578
  %v627 = vpack.c.b16 %v583, %v579
  %v628 = vpack.c.b16 %v584, %v580
  %v629 = vpack.c.b16 %v589, %v585
  %v630 = vpack.c.b16 %v590, %v586
  %v631 = vpack.c.b16 %v591, %v587
  %v632 = vpack.c.b16 %v592, %v588
  %v633 = vpack.c.b16 %v597, %v593
  %v634 = vpack.c.b16 %v598, %v594
  %v635 = vpack.c.b16 %v599, %v595
  %v636 = vpack.c.b16 %v600, %v596
  %v637 = vpack.c.b16 %v605, %v601
  %v638 = vpack.c.b16 %v606, %v602
  %v639 = vpack.c.b16 %v607, %v603
  %v640 = vpack.c.b16 %v608, %v604
  %673 = vmatprep.subr.bf16.mxu0 %v610
  %674 = vmatpush1.bf16.msra.mxu0 %v609
  %675 = vmatprep.subr.bf16.mxu0 %v614
  %676 = vmatpush1.bf16.msra.mxu0 %v613
  %677 = vmatprep.subr.bf16.mxu0 %v618
  %678 = vmatpush1.bf16.msra.mxu0 %v617
  %679 = vmatprep.subr.bf16.mxu0 %v622
  %680 = vmatpush1.bf16.msra.mxu0 %v621
  %681 = vmatprep.subr.bf16.mxu0 %v626
  %682 = vmatpush1.bf16.msra.mxu0 %v625
  %683 = vmatprep.subr.bf16.mxu0 %v630
  %684 = vmatpush1.bf16.msra.mxu0 %v629
  %685 = vmatprep.subr.bf16.mxu0 %v634
  %686 = vmatpush1.bf16.msra.mxu0 %v633
  %687 = vmatprep.subr.bf16.mxu0 %v638
  %688 = vmatpush1.bf16.msra.mxu0 %v637
  %689 = vmatprep.subr.bf16.mxu0 0
  %690 = vmatpush1.bf16.msra.mxu0 0
  %691 = vmatprep.subr.bf16.mxu0 0
  %692 = vmatpush1.bf16.msra.mxu0 0
  %693 = vmatprep.subr.bf16.mxu0 0
  %694 = vmatpush1.bf16.msra.mxu0 0
  %695 = vmatprep.subr.bf16.mxu0 0
  %696 = vmatpush1.bf16.msra.mxu0 0
  %697 = vmatprep.subr.bf16.mxu0 0
  %698 = vmatpush1.bf16.msra.mxu0 0
  %699 = vmatprep.subr.bf16.mxu0 0
  %700 = vmatpush1.bf16.msra.mxu0 0
  %701 = vmatprep.subr.bf16.mxu0 0
  %702 = vmatpush1.bf16.msra.mxu0 0
  %703 = vmatprep.subr.bf16.mxu0 0
  %704 = vmatpush1.bf16.msra.mxu0 0
  %705 = vmatprep.mubr.bf16.mxu0 0
  %706 = vmatmul.mubr.bf16.gmra.mrb[0].mxu0 0
  %v707 = vpop.f32.mrb[0].mxu0
  %v708 = vadd.f32 0.0, %v707
  %v709 = vpop.f32.mrb[0].mxu0
  %v710 = vadd.f32 0.0, %v709
  %v711 = vpop.f32.mrb[0].mxu0
  %v712 = vadd.f32 0.0, %v711
  %v713 = vpop.f32.mrb[0].mxu0
  %v714 = vadd.f32 0.0, %v713
  %715 = vdwg.mxu0
  %716 = vmatprep.subr.bf16.mxu0 %v612
  %717 = vmatpush1.bf16.msra.mxu0 %v611
  %718 = vmatprep.subr.bf16.mxu0 %v616
  %719 = vmatpush1.bf16.msra.mxu0 %v615
  %720 = vmatprep.subr.bf16.mxu0 %v620
  %721 = vmatpush1.bf16.msra.mxu0 %v619
  %722 = vmatprep.subr.bf16.mxu0 %v624
  %723 = vmatpush1.bf16.msra.mxu0 %v623
  %724 = vmatprep.subr.bf16.mxu0 %v628
  %725 = vmatpush1.bf16.msra.mxu0 %v627
  %726 = vmatprep.subr.bf16.mxu0 %v632
  %727 = vmatpush1.bf16.msra.mxu0 %v631
  %728 = vmatprep.subr.bf16.mxu0 %v636
  %729 = vmatpush1.bf16.msra.mxu0 %v635
  %730 = vmatprep.subr.bf16.mxu0 %v640
  %731 = vmatpush1.bf16.msra.mxu0 %v639
  %732 = vmatprep.subr.bf16.mxu0 0
  %733 = vmatpush1.bf16.msra.mxu0 0
  %734 = vmatprep.subr.bf16.mxu0 0
  %735 = vmatpush1.bf16.msra.mxu0 0
  %736 = vmatprep.subr.bf16.mxu0 0
  %737 = vmatpush1.bf16.msra.mxu0 0
  %738 = vmatprep.subr.bf16.mxu0 0
  %739 = vmatpush1.bf16.msra.mxu0 0
  %740 = vmatprep.subr.bf16.mxu0 0
  %741 = vmatpush1.bf16.msra.mxu0 0
  %742 = vmatprep.subr.bf16.mxu0 0
  %743 = vmatpush1.bf16.msra.mxu0 0
  %744 = vmatprep.subr.bf16.mxu0 0
  %745 = vmatpush1.bf16.msra.mxu0 0
  %746 = vmatprep.subr.bf16.mxu0 0
  %747 = vmatpush1.bf16.msra.mxu0 0
  %748 = vmatprep.mubr.bf16.mxu0 0
  %749 = vmatmul.mubr.bf16.gmra.mrb[0].mxu0 0
  %v750 = vpop.f32.mrb[0].mxu0
  %v751 = vadd.f32 0.0, %v750
  %v752 = vpop.f32.mrb[0].mxu0
  %v753 = vadd.f32 0.0, %v752
  %v754 = vpop.f32.mrb[0].mxu0
  %v755 = vadd.f32 0.0, %v754
  %v756 = vpop.f32.mrb[0].mxu0
  %v757 = vadd.f32 0.0, %v756
  %758 = vdwg.mxu0
  %v759 = vadd.f32 %v473, %v708
  %v760 = vadd.f32 %v474, %v710
  %v761 = vadd.f32 %v475, %v751
  %v762 = vadd.f32 %v476, %v753
  %v763 = vadd.f32 %v477, %v712
  %v764 = vadd.f32 %v478, %v714
  %v765 = vadd.f32 %v479, %v755
  %v766 = vadd.f32 %v480, %v757
  %v767 = vmul.f32 %v759, 0.5
  %v768 = vmul.f32 %v760, 0.5
  %v769 = vmul.f32 %v761, 0.5
  %v770 = vmul.f32 %v763, 0.5
  %v771 = vmul.f32 %v764, 0.5
  %v772 = vmul.f32 %v765, 0.5
  %v773 = vtanh.pop %v767
  %v774 = vtanh.pop %v768
  %v775 = vtanh.pop %v769
  %v776 = vtanh.pop %v770
  %v777 = vtanh.pop %v771
  %v778 = vtanh.pop %v772
  %v779 = vmul.f32 %v773, 0.5
  %v780 = vmul.f32 %v774, 0.5
  %v781 = vmul.f32 %v775, 0.5
  %v782 = vmul.f32 %v776, 0.5
  %v783 = vmul.f32 %v777, 0.5
  %v784 = vmul.f32 %v778, 0.5
  %v785 = vadd.f32 %v779, 0.5
  %v786 = vadd.f32 %v780, 0.5
  %v787 = vadd.f32 %v781, 0.5
  %v788 = vadd.f32 %v782, 0.5
  %v789 = vadd.f32 %v783, 0.5
  %v790 = vadd.f32 %v784, 0.5
  %v791 = vtanh.pop %v762
  %v792 = vtanh.pop %v766
  %v793 = vmul.f32 %v786, 0.0
  %v794 = vmul.f32 %v789, 0.0
  %v795 = vmul.f32 %v785, %v791
  %v796 = vmul.f32 %v788, %v792
  %v797 = vadd.f32 %v793, %v795
  %v798 = vadd.f32 %v794, %v796
  %v799 = vtanh.pop %v797
  %v800 = vtanh.pop %v798
  %v801 = vmul.f32 %v787, %v799
  %v802 = vmul.f32 %v790, %v800
  %v803 = vpack.c.bf16 %v802, %v801
  %v804 = vld [vmem:[%s4] sm:$0xff]
  %v805 = vld [vmem:[%s4 + $0x8] sm:$0xff]
  %v806 = vld [vmem:[%s4 + $0x10] sm:$0xff]
  %v807 = vld [vmem:[%s4 + $0x18] sm:$0xff]
  %v808 = vld [vmem:[%s4 + $0x20] sm:$0xff]
  %v809 = vld [vmem:[%s4 + $0x28] sm:$0xff]
  %v810 = vld [vmem:[%s4 + $0x30] sm:$0xff]
  %v811 = vld [vmem:[%s4 + $0x38] sm:$0xff]
  %v812 = vld [vmem:[%s4 + $0x40] sm:$0xff]
  %v813 = vld [vmem:[%s4 + $0x48] sm:$0xff]
  %v814 = vld [vmem:[%s4 + $0x50] sm:$0xff]
  %v815 = vld [vmem:[%s4 + $0x58] sm:$0xff]
  %v816 = vld [vmem:[%s4 + $0x60] sm:$0xff]
  %v817 = vld [vmem:[%s4 + $0x68] sm:$0xff]
  %v818 = vld [vmem:[%s4 + $0x70] sm:$0xff]
  %v819 = vld [vmem:[%s4 + $0x78] sm:$0xff]
  %v820 = vld [vmem:[%s4 + $0x80] sm:$0xff]
  %v821 = vld [vmem:[%s4 + $0x88] sm:$0xff]
  %v822 = vld [vmem:[%s4 + $0x90] sm:$0xff]
  %v823 = vld [vmem:[%s4 + $0x98] sm:$0xff]
  %v824 = vld [vmem:[%s4 + $0xa0] sm:$0xff]
  %v825 = vld [vmem:[%s4 + $0xa8] sm:$0xff]
  %v826 = vld [vmem:[%s4 + $0xb0] sm:$0xff]
  %v827 = vld [vmem:[%s4 + $0xb8] sm:$0xff]
  %v828 = vld [vmem:[%s4 + $0xc0] sm:$0xff]
  %v829 = vld [vmem:[%s4 + $0xc8] sm:$0xff]
  %v830 = vld [vmem:[%s4 + $0xd0] sm:$0xff]
  %v831 = vld [vmem:[%s4 + $0xd8] sm:$0xff]
  %v832 = vld [vmem:[%s4 + $0xe0] sm:$0xff]
  %v833 = vld [vmem:[%s4 + $0xe8] sm:$0xff]
  %v834 = vld [vmem:[%s4 + $0xf0] sm:$0xff]
  %v835 = vld [vmem:[%s4 + $0xf8] sm:$0xff]
  %v836 = vld [vmem:[%s6] sm:$0xf]
  %v838 = vlaneseq
  %v839 = vshrl.u32 %v838, 7
  %v840 = vsub.s32 0, %v839
  %v841 = vrot.slane %v836, %v840
  %v842 = vlaneseq
  %v843 = vshrl.u32 %v842, 7
  %v844 = vsub.s32 1, %v843
  %v845 = vrot.slane %v836, %v844
  %v846 = vlaneseq
  %v847 = vshrl.u32 %v846, 7
  %v848 = vsub.s32 2, %v847
  %v849 = vrot.slane %v836, %v848
  %v850 = vlaneseq
  %v851 = vshrl.u32 %v850, 7
  %v852 = vsub.s32 3, %v851
  %v853 = vrot.slane %v836, %v852
  %v890 = vunpack.c.l.b16 %v804
  %v891 = vunpack.c.h.b16 %v804
  %v892 = vunpack.c.l.b16 %v805
  %v893 = vunpack.c.h.b16 %v805
  %v894 = vunpack.c.l.b16 %v806
  %v895 = vunpack.c.h.b16 %v806
  %v896 = vunpack.c.l.b16 %v807
  %v897 = vunpack.c.h.b16 %v807
  %v898 = vunpack.c.l.b16 %v808
  %v899 = vunpack.c.h.b16 %v808
  %v900 = vunpack.c.l.b16 %v809
  %v901 = vunpack.c.h.b16 %v809
  %v902 = vunpack.c.l.b16 %v810
  %v903 = vunpack.c.h.b16 %v810
  %v904 = vunpack.c.l.b16 %v811
  %v905 = vunpack.c.h.b16 %v811
  %v906 = vunpack.c.l.b16 %v812
  %v907 = vunpack.c.h.b16 %v812
  %v908 = vunpack.c.l.b16 %v813
  %v909 = vunpack.c.h.b16 %v813
  %v910 = vunpack.c.l.b16 %v814
  %v911 = vunpack.c.h.b16 %v814
  %v912 = vunpack.c.l.b16 %v815
  %v913 = vunpack.c.h.b16 %v815
  %v914 = vunpack.c.l.b16 %v816
  %v915 = vunpack.c.h.b16 %v816
  %v916 = vunpack.c.l.b16 %v817
  %v917 = vunpack.c.h.b16 %v817
  %v918 = vunpack.c.l.b16 %v818
  %v919 = vunpack.c.h.b16 %v818
  %v920 = vunpack.c.l.b16 %v819
  %v921 = vunpack.c.h.b16 %v819
  %v922 = vunpack.c.l.b16 %v820
  %v923 = vunpack.c.h.b16 %v820
  %v924 = vunpack.c.l.b16 %v821
  %v925 = vunpack.c.h.b16 %v821
  %v926 = vunpack.c.l.b16 %v822
  %v927 = vunpack.c.h.b16 %v822
  %v928 = vunpack.c.l.b16 %v823
  %v929 = vunpack.c.h.b16 %v823
  %v930 = vunpack.c.l.b16 %v824
  %v931 = vunpack.c.h.b16 %v824
  %v932 = vunpack.c.l.b16 %v825
  %v933 = vunpack.c.h.b16 %v825
  %v934 = vunpack.c.l.b16 %v826
  %v935 = vunpack.c.h.b16 %v826
  %v936 = vunpack.c.l.b16 %v827
  %v937 = vunpack.c.h.b16 %v827
  %v938 = vunpack.c.l.b16 %v828
  %v939 = vunpack.c.h.b16 %v828
  %v940 = vunpack.c.l.b16 %v829
  %v941 = vunpack.c.h.b16 %v829
  %v942 = vunpack.c.l.b16 %v830
  %v943 = vunpack.c.h.b16 %v830
  %v944 = vunpack.c.l.b16 %v831
  %v945 = vunpack.c.h.b16 %v831
  %v946 = vunpack.c.l.b16 %v832
  %v947 = vunpack.c.h.b16 %v832
  %v948 = vunpack.c.l.b16 %v833
  %v949 = vunpack.c.h.b16 %v833
  %v950 = vunpack.c.l.b16 %v834
  %v951 = vunpack.c.h.b16 %v834
  %v952 = vunpack.c.l.b16 %v835
  %v953 = vunpack.c.h.b16 %v835
  %v954 = vpack.c.b16 %v894, %v890
  %v955 = vpack.c.b16 %v895, %v891
  %v956 = vpack.c.b16 %v896, %v892
  %v957 = vpack.c.b16 %v897, %v893
  %v958 = vpack.c.b16 %v902, %v898
  %v959 = vpack.c.b16 %v903, %v899
  %v960 = vpack.c.b16 %v904, %v900
  %v961 = vpack.c.b16 %v905, %v901
  %v962 = vpack.c.b16 %v910, %v906
  %v963 = vpack.c.b16 %v911, %v907
  %v964 = vpack.c.b16 %v912, %v908
  %v965 = vpack.c.b16 %v913, %v909
  %v966 = vpack.c.b16 %v918, %v914
  %v967 = vpack.c.b16 %v919, %v915
  %v968 = vpack.c.b16 %v920, %v916
  %v969 = vpack.c.b16 %v921, %v917
  %v970 = vpack.c.b16 %v926, %v922
  %v971 = vpack.c.b16 %v927, %v923
  %v972 = vpack.c.b16 %v928, %v924
  %v973 = vpack.c.b16 %v929, %v925
  %v974 = vpack.c.b16 %v934, %v930
  %v975 = vpack.c.b16 %v935, %v931
  %v976 = vpack.c.b16 %v936, %v932
  %v977 = vpack.c.b16 %v937, %v933
  %v978 = vpack.c.b16 %v942, %v938
  %v979 = vpack.c.b16 %v943, %v939
  %v980 = vpack.c.b16 %v944, %v940
  %v981 = vpack.c.b16 %v945, %v941
  %v982 = vpack.c.b16 %v950, %v946
  %v983 = vpack.c.b16 %v951, %v947
  %v984 = vpack.c.b16 %v952, %v948
  %v985 = vpack.c.b16 %v953, %v949
  %1018 = vmatprep.subr.bf16.mxu0 %v955
  %1019 = vmatpush1.bf16.msra.mxu0 %v954
  %1020 = vmatprep.subr.bf16.mxu0 %v959
  %1021 = vmatpush1.bf16.msra.mxu0 %v958
  %1022 = vmatprep.subr.bf16.mxu0 %v963
  %1023 = vmatpush1.bf16.msra.mxu0 %v962
  %1024 = vmatprep.subr.bf16.mxu0 %v967
  %1025 = vmatpush1.bf16.msra.mxu0 %v966
  %1026 = vmatprep.subr.bf16.mxu0 %v971
  %1027 = vmatpush1.bf16.msra.mxu0 %v970
  %1028 = vmatprep.subr.bf16.mxu0 %v975
  %1029 = vmatpush1.bf16.msra.mxu0 %v974
  %1030 = vmatprep.subr.bf16.mxu0 %v979
  %1031 = vmatpush1.bf16.msra.mxu0 %v978
  %1032 = vmatprep.subr.bf16.mxu0 %v983
  %1033 = vmatpush1.bf16.msra.mxu0 %v982
  %1034 = vmatprep.subr.bf16.mxu0 0
  %1035 = vmatpush1.bf16.msra.mxu0 0
  %1036 = vmatprep.subr.bf16.mxu0 0
  %1037 = vmatpush1.bf16.msra.mxu0 0
  %1038 = vmatprep.subr.bf16.mxu0 0
  %1039 = vmatpush1.bf16.msra.mxu0 0
  %1040 = vmatprep.subr.bf16.mxu0 0
  %1041 = vmatpush1.bf16.msra.mxu0 0
  %1042 = vmatprep.subr.bf16.mxu0 0
  %1043 = vmatpush1.bf16.msra.mxu0 0
  %1044 = vmatprep.subr.bf16.mxu0 0
  %1045 = vmatpush1.bf16.msra.mxu0 0
  %1046 = vmatprep.subr.bf16.mxu0 0
  %1047 = vmatpush1.bf16.msra.mxu0 0
  %1048 = vmatprep.subr.bf16.mxu0 0
  %1049 = vmatpush1.bf16.msra.mxu0 0
  %1050 = vmatprep.mubr.bf16.mxu0 0
  %1051 = vmatmul.mubr.bf16.gmra.mrb[0].mxu0 %v803
  %v1052 = vpop.f32.mrb[0].mxu0
  %v1053 = vadd.f32 %v841, %v1052
  %v1054 = vpop.f32.mrb[0].mxu0
  %v1055 = vadd.f32 %v845, %v1054
  %v1056 = vpop.f32.mrb[0].mxu0
  %v1057 = vadd.f32 %v841, %v1056
  %v1058 = vpop.f32.mrb[0].mxu0
  %v1059 = vadd.f32 %v845, %v1058
  %1060 = vdwg.mxu0
  %1061 = vmatprep.subr.bf16.mxu0 %v957
  %1062 = vmatpush1.bf16.msra.mxu0 %v956
  %1063 = vmatprep.subr.bf16.mxu0 %v961
  %1064 = vmatpush1.bf16.msra.mxu0 %v960
  %1065 = vmatprep.subr.bf16.mxu0 %v965
  %1066 = vmatpush1.bf16.msra.mxu0 %v964
  %1067 = vmatprep.subr.bf16.mxu0 %v969
  %1068 = vmatpush1.bf16.msra.mxu0 %v968
  %1069 = vmatprep.subr.bf16.mxu0 %v973
  %1070 = vmatpush1.bf16.msra.mxu0 %v972
  %1071 = vmatprep.subr.bf16.mxu0 %v977
  %1072 = vmatpush1.bf16.msra.mxu0 %v976
  %1073 = vmatprep.subr.bf16.mxu0 %v981
  %1074 = vmatpush1.bf16.msra.mxu0 %v980
  %1075 = vmatprep.subr.bf16.mxu0 %v985
  %1076 = vmatpush1.bf16.msra.mxu0 %v984
  %1077 = vmatprep.subr.bf16.mxu0 0
  %1078 = vmatpush1.bf16.msra.mxu0 0
  %1079 = vmatprep.subr.bf16.mxu0 0
  %1080 = vmatpush1.bf16.msra.mxu0 0
  %1081 = vmatprep.subr.bf16.mxu0 0
  %1082 = vmatpush1.bf16.msra.mxu0 0
  %1083 = vmatprep.subr.bf16.mxu0 0
  %1084 = vmatpush1.bf16.msra.mxu0 0
  %1085 = vmatprep.subr.bf16.mxu0 0
  %1086 = vmatpush1.bf16.msra.mxu0 0
  %1087 = vmatprep.subr.bf16.mxu0 0
  %1088 = vmatpush1.bf16.msra.mxu0 0
  %1089 = vmatprep.subr.bf16.mxu0 0
  %1090 = vmatpush1.bf16.msra.mxu0 0
  %1091 = vmatprep.subr.bf16.mxu0 0
  %1092 = vmatpush1.bf16.msra.mxu0 0
  %1093 = vmatprep.mubr.bf16.mxu0 0
  %1094 = vmatmul.mubr.bf16.gmra.mrb[0].mxu0 %v803
  %v1095 = vpop.f32.mrb[0].mxu0
  %v1096 = vadd.f32 %v849, %v1095
  %v1097 = vpop.f32.mrb[0].mxu0
  %v1098 = vadd.f32 %v853, %v1097
  %v1099 = vpop.f32.mrb[0].mxu0
  %v1100 = vadd.f32 %v849, %v1099
  %v1101 = vpop.f32.mrb[0].mxu0
  %v1102 = vadd.f32 %v853, %v1101
  %1103 = vdwg.mxu0
  %v1104 = vpack.c.bf16 %v1057, %v1053
  %v1105 = vpack.c.bf16 %v1059, %v1055
  %v1106 = vpack.c.bf16 %v1100, %v1096
  %v1107 = vpack.c.bf16 %v1102, %v1098
  %1108 = vst [vmem:[#allocation2] sm:$0xff] %v1104
  %1109 = vst [vmem:[#allocation2 + $0x8] sm:$0xff] %v1105
  %1110 = vst [vmem:[#allocation2 + $0x10] sm:$0xff] %v1106
  %1111 = vst [vmem:[#allocation2 + $0x18] sm:$0xff] %v1107
  %s1112 = scalar_lea.vmem [#allocation2], 32
  %v1113 = vld [vmem:[%s1112] sm:$0xff]
  %v1114 = vld [vmem:[%s1112 + $0x8] sm:$0xff]
  %v1115 = vld [vmem:[%s1112 + $0x10] sm:$0xff]
  %v1116 = vld [vmem:[%s1112 + $0x18] sm:$0xff]
  %v1117 = vunpack.c.l.bf16 %v1113
  %v1118 = vunpack.c.l.bf16 %v1114
  %v1119 = vunpack.c.l.bf16 %v1115
  %v1120 = vunpack.c.l.bf16 %v1116
  %v1121 = vunpack.c.h.bf16 %v1113
  %v1122 = vunpack.c.h.bf16 %v1114
  %v1123 = vunpack.c.h.bf16 %v1115
  %v1124 = vunpack.c.h.bf16 %v1116
  %v1125 = vld [vmem:[%s2] sm:$0xff]
  %v1126 = vld [vmem:[%s2 + $0x8] sm:$0xff]
  %v1127 = vld [vmem:[%s2 + $0x10] sm:$0xff]
  %v1128 = vld [vmem:[%s2 + $0x18] sm:$0xff]
  %v1129 = vld [vmem:[%s2 + $0x20] sm:$0xff]
  %v1130 = vld [vmem:[%s2 + $0x28] sm:$0xff]
  %v1131 = vld [vmem:[%s2 + $0x30] sm:$0xff]
  %v1132 = vld [vmem:[%s2 + $0x38] sm:$0xff]
  %v1133 = vld [vmem:[%s2 + $0x40] sm:$0xff]
  %v1134 = vld [vmem:[%s2 + $0x48] sm:$0xff]
  %v1135 = vld [vmem:[%s2 + $0x50] sm:$0xff]
  %v1136 = vld [vmem:[%s2 + $0x58] sm:$0xff]
  %v1137 = vld [vmem:[%s2 + $0x60] sm:$0xff]
  %v1138 = vld [vmem:[%s2 + $0x68] sm:$0xff]
  %v1139 = vld [vmem:[%s2 + $0x70] sm:$0xff]
  %v1140 = vld [vmem:[%s2 + $0x78] sm:$0xff]
  %v1141 = vld [vmem:[%s2 + $0x80] sm:$0xff]
  %v1142 = vld [vmem:[%s2 + $0x88] sm:$0xff]
  %v1143 = vld [vmem:[%s2 + $0x90] sm:$0xff]
  %v1144 = vld [vmem:[%s2 + $0x98] sm:$0xff]
  %v1145 = vld [vmem:[%s2 + $0xa0] sm:$0xff]
  %v1146 = vld [vmem:[%s2 + $0xa8] sm:$0xff]
  %v1147 = vld [vmem:[%s2 + $0xb0] sm:$0xff]
  %v1148 = vld [vmem:[%s2 + $0xb8] sm:$0xff]
  %v1149 = vld [vmem:[%s2 + $0xc0] sm:$0xff]
  %v1150 = vld [vmem:[%s2 + $0xc8] sm:$0xff]
  %v1151 = vld [vmem:[%s2 + $0xd0] sm:$0xff]
  %v1152 = vld [vmem:[%s2 + $0xd8] sm:$0xff]
  %v1153 = vld [vmem:[%s2 + $0xe0] sm:$0xff]
  %v1154 = vld [vmem:[%s2 + $0xe8] sm:$0xff]
  %v1155 = vld [vmem:[%s2 + $0xf0] sm:$0xff]
  %v1156 = vld [vmem:[%s2 + $0xf8] sm:$0xff]
  %v1189 = vunpack.c.l.b16 %v1125
  %v1190 = vunpack.c.h.b16 %v1125
  %v1191 = vunpack.c.l.b16 %v1126
  %v1192 = vunpack.c.h.b16 %v1126
  %v1193 = vunpack.c.l.b16 %v1127
  %v1194 = vunpack.c.h.b16 %v1127
  %v1195 = vunpack.c.l.b16 %v1128
  %v1196 = vunpack.c.h.b16 %v1128
  %v1197 = vunpack.c.l.b16 %v1129
  %v1198 = vunpack.c.h.b16 %v1129
  %v1199 = vunpack.c.l.b16 %v1130
  %v1200 = vunpack.c.h.b16 %v1130
  %v1201 = vunpack.c.l.b16 %v1131
  %v1202 = vunpack.c.h.b16 %v1131
  %v1203 = vunpack.c.l.b16 %v1132
  %v1204 = vunpack.c.h.b16 %v1132
  %v1205 = vunpack.c.l.b16 %v1133
  %v1206 = vunpack.c.h.b16 %v1133
  %v1207 = vunpack.c.l.b16 %v1134
  %v1208 = vunpack.c.h.b16 %v1134
  %v1209 = vunpack.c.l.b16 %v1135
  %v1210 = vunpack.c.h.b16 %v1135
  %v1211 = vunpack.c.l.b16 %v1136
  %v1212 = vunpack.c.h.b16 %v1136
  %v1213 = vunpack.c.l.b16 %v1137
  %v1214 = vunpack.c.h.b16 %v1137
  %v1215 = vunpack.c.l.b16 %v1138
  %v1216 = vunpack.c.h.b16 %v1138
  %v1217 = vunpack.c.l.b16 %v1139
  %v1218 = vunpack.c.h.b16 %v1139
  %v1219 = vunpack.c.l.b16 %v1140
  %v1220 = vunpack.c.h.b16 %v1140
  %v1221 = vunpack.c.l.b16 %v1141
  %v1222 = vunpack.c.h.b16 %v1141
  %v1223 = vunpack.c.l.b16 %v1142
  %v1224 = vunpack.c.h.b16 %v1142
  %v1225 = vunpack.c.l.b16 %v1143
  %v1226 = vunpack.c.h.b16 %v1143
  %v1227 = vunpack.c.l.b16 %v1144
  %v1228 = vunpack.c.h.b16 %v1144
  %v1229 = vunpack.c.l.b16 %v1145
  %v1230 = vunpack.c.h.b16 %v1145
  %v1231 = vunpack.c.l.b16 %v1146
  %v1232 = vunpack.c.h.b16 %v1146
  %v1233 = vunpack.c.l.b16 %v1147
  %v1234 = vunpack.c.h.b16 %v1147
  %v1235 = vunpack.c.l.b16 %v1148
  %v1236 = vunpack.c.h.b16 %v1148
  %v1237 = vunpack.c.l.b16 %v1149
  %v1238 = vunpack.c.h.b16 %v1149
  %v1239 = vunpack.c.l.b16 %v1150
  %v1240 = vunpack.c.h.b16 %v1150
  %v1241 = vunpack.c.l.b16 %v1151
  %v1242 = vunpack.c.h.b16 %v1151
  %v1243 = vunpack.c.l.b16 %v1152
  %v1244 = vunpack.c.h.b16 %v1152
  %v1245 = vunpack.c.l.b16 %v1153
  %v1246 = vunpack.c.h.b16 %v1153
  %v1247 = vunpack.c.l.b16 %v1154
  %v1248 = vunpack.c.h.b16 %v1154
  %v1249 = vunpack.c.l.b16 %v1155
  %v1250 = vunpack.c.h.b16 %v1155
  %v1251 = vunpack.c.l.b16 %v1156
  %v1252 = vunpack.c.h.b16 %v1156
  %v1253 = vpack.c.b16 %v1193, %v1189
  %v1254 = vpack.c.b16 %v1194, %v1190
  %v1255 = vpack.c.b16 %v1195, %v1191
  %v1256 = vpack.c.b16 %v1196, %v1192
  %v1257 = vpack.c.b16 %v1201, %v1197
  %v1258 = vpack.c.b16 %v1202, %v1198
  %v1259 = vpack.c.b16 %v1203, %v1199
  %v1260 = vpack.c.b16 %v1204, %v1200
  %v1261 = vpack.c.b16 %v1209, %v1205
  %v1262 = vpack.c.b16 %v1210, %v1206
  %v1263 = vpack.c.b16 %v1211, %v1207
  %v1264 = vpack.c.b16 %v1212, %v1208
  %v1265 = vpack.c.b16 %v1217, %v1213
  %v1266 = vpack.c.b16 %v1218, %v1214
  %v1267 = vpack.c.b16 %v1219, %v1215
  %v1268 = vpack.c.b16 %v1220, %v1216
  %v1269 = vpack.c.b16 %v1225, %v1221
  %v1270 = vpack.c.b16 %v1226, %v1222
  %v1271 = vpack.c.b16 %v1227, %v1223
  %v1272 = vpack.c.b16 %v1228, %v1224
  %v1273 = vpack.c.b16 %v1233, %v1229
  %v1274 = vpack.c.b16 %v1234, %v1230
  %v1275 = vpack.c.b16 %v1235, %v1231
  %v1276 = vpack.c.b16 %v1236, %v1232
  %v1277 = vpack.c.b16 %v1241, %v1237
  %v1278 = vpack.c.b16 %v1242, %v1238
  %v1279 = vpack.c.b16 %v1243, %v1239
  %v1280 = vpack.c.b16 %v1244, %v1240
  %v1281 = vpack.c.b16 %v1249, %v1245
  %v1282 = vpack.c.b16 %v1250, %v1246
  %v1283 = vpack.c.b16 %v1251, %v1247
  %v1284 = vpack.c.b16 %v1252, %v1248
  %1317 = vmatprep.subr.bf16.mxu0 %v1254
  %1318 = vmatpush1.bf16.msra.mxu0 %v1253
  %1319 = vmatprep.subr.bf16.mxu0 %v1258
  %1320 = vmatpush1.bf16.msra.mxu0 %v1257
  %1321 = vmatprep.subr.bf16.mxu0 %v1262
  %1322 = vmatpush1.bf16.msra.mxu0 %v1261
  %1323 = vmatprep.subr.bf16.mxu0 %v1266
  %1324 = vmatpush1.bf16.msra.mxu0 %v1265
  %1325 = vmatprep.subr.bf16.mxu0 %v1270
  %1326 = vmatpush1.bf16.msra.mxu0 %v1269
  %1327 = vmatprep.subr.bf16.mxu0 %v1274
  %1328 = vmatpush1.bf16.msra.mxu0 %v1273
  %1329 = vmatprep.subr.bf16.mxu0 %v1278
  %1330 = vmatpush1.bf16.msra.mxu0 %v1277
  %1331 = vmatprep.subr.bf16.mxu0 %v1282
  %1332 = vmatpush1.bf16.msra.mxu0 %v1281
  %1333 = vmatprep.subr.bf16.mxu0 0
  %1334 = vmatpush1.bf16.msra.mxu0 0
  %1335 = vmatprep.subr.bf16.mxu0 0
  %1336 = vmatpush1.bf16.msra.mxu0 0
  %1337 = vmatprep.subr.bf16.mxu0 0
  %1338 = vmatpush1.bf16.msra.mxu0 0
  %1339 = vmatprep.subr.bf16.mxu0 0
  %1340 = vmatpush1.bf16.msra.mxu0 0
  %1341 = vmatprep.subr.bf16.mxu0 0
  %1342 = vmatpush1.bf16.msra.mxu0 0
  %1343 = vmatprep.subr.bf16.mxu0 0
  %1344 = vmatpush1.bf16.msra.mxu0 0
  %1345 = vmatprep.subr.bf16.mxu0 0
  %1346 = vmatpush1.bf16.msra.mxu0 0
  %1347 = vmatprep.subr.bf16.mxu0 0
  %1348 = vmatpush1.bf16.msra.mxu0 0
  %1349 = vmatprep.mubr.bf16.mxu0 0
  %1350 = vmatmul.mubr.bf16.gmra.mrb[0].mxu0 %v803
  %v1351 = vpop.f32.mrb[0].mxu0
  %v1352 = vadd.f32 0.0, %v1351
  %v1353 = vpop.f32.mrb[0].mxu0
  %v1354 = vadd.f32 0.0, %v1353
  %v1355 = vpop.f32.mrb[0].mxu0
  %v1356 = vadd.f32 0.0, %v1355
  %v1357 = vpop.f32.mrb[0].mxu0
  %v1358 = vadd.f32 0.0, %v1357
  %1359 = vdwg.mxu0
  %1360 = vmatprep.subr.bf16.mxu0 %v1256
  %1361 = vmatpush1.bf16.msra.mxu0 %v1255
  %1362 = vmatprep.subr.bf16.mxu0 %v1260
  %1363 = vmatpush1.bf16.msra.mxu0 %v1259
  %1364 = vmatprep.subr.bf16.mxu0 %v1264
  %1365 = vmatpush1.bf16.msra.mxu0 %v1263
  %1366 = vmatprep.subr.bf16.mxu0 %v1268
  %1367 = vmatpush1.bf16.msra.mxu0 %v1267
  %1368 = vmatprep.subr.bf16.mxu0 %v1272
  %1369 = vmatpush1.bf16.msra.mxu0 %v1271
  %1370 = vmatprep.subr.bf16.mxu0 %v1276
  %1371 = vmatpush1.bf16.msra.mxu0 %v1275
  %1372 = vmatprep.subr.bf16.mxu0 %v1280
  %1373 = vmatpush1.bf16.msra.mxu0 %v1279
  %1374 = vmatprep.subr.bf16.mxu0 %v1284
  %1375 = vmatpush1.bf16.msra.mxu0 %v1283
  %1376 = vmatprep.subr.bf16.mxu0 0
  %1377 = vmatpush1.bf16.msra.mxu0 0
  %1378 = vmatprep.subr.bf16.mxu0 0
  %1379 = vmatpush1.bf16.msra.mxu0 0
  %1380 = vmatprep.subr.bf16.mxu0 0
  %1381 = vmatpush1.bf16.msra.mxu0 0
  %1382 = vmatprep.subr.bf16.mxu0 0
  %1383 = vmatpush1.bf16.msra.mxu0 0
  %1384 = vmatprep.subr.bf16.mxu0 0
  %1385 = vmatpush1.bf16.msra.mxu0 0
  %1386 = vmatprep.subr.bf16.mxu0 0
  %1387 = vmatpush1.bf16.msra.mxu0 0
  %1388 = vmatprep.subr.bf16.mxu0 0
  %1389 = vmatpush1.bf16.msra.mxu0 0
  %1390 = vmatprep.subr.bf16.mxu0 0
  %1391 = vmatpush1.bf16.msra.mxu0 0
  %1392 = vmatprep.mubr.bf16.mxu0 0
  %1393 = vmatmul.mubr.bf16.gmra.mrb[0].mxu0 %v803
  %v1394 = vpop.f32.mrb[0].mxu0
  %v1395 = vadd.f32 0.0, %v1394
  %v1396 = vpop.f32.mrb[0].mxu0
  %v1397 = vadd.f32 0.0, %v1396
  %v1398 = vpop.f32.mrb[0].mxu0
  %v1399 = vadd.f32 0.0, %v1398
  %v1400 = vpop.f32.mrb[0].mxu0
  %v1401 = vadd.f32 0.0, %v1400
  %1402 = vdwg.mxu0
  %v1403 = vadd.f32 %v1117, %v1352
  %v1404 = vadd.f32 %v1118, %v1354
  %v1405 = vadd.f32 %v1119, %v1395
  %v1406 = vadd.f32 %v1120, %v1397
  %v1407 = vadd.f32 %v1121, %v1356
  %v1408 = vadd.f32 %v1122, %v1358
  %v1409 = vadd.f32 %v1123, %v1399
  %v1410 = vadd.f32 %v1124, %v1401
  %v1411 = vmul.f32 %v1403, 0.5
  %v1412 = vmul.f32 %v1404, 0.5
  %v1413 = vmul.f32 %v1405, 0.5
  %v1414 = vmul.f32 %v1407, 0.5
  %v1415 = vmul.f32 %v1408, 0.5
  %v1416 = vmul.f32 %v1409, 0.5
  %v1417 = vtanh.pop %v1411
  %v1418 = vtanh.pop %v1412
  %v1419 = vtanh.pop %v1413
  %v1420 = vtanh.pop %v1414
  %v1421 = vtanh.pop %v1415
  %v1422 = vtanh.pop %v1416
  %v1423 = vmul.f32 %v1417, 0.5
  %v1424 = vmul.f32 %v1418, 0.5
  %v1425 = vmul.f32 %v1419, 0.5
  %v1426 = vmul.f32 %v1420, 0.5
  %v1427 = vmul.f32 %v1421, 0.5
  %v1428 = vmul.f32 %v1422, 0.5
  %v1429 = vadd.f32 %v1423, 0.5
  %v1430 = vadd.f32 %v1424, 0.5
  %v1431 = vadd.f32 %v1425, 0.5
  %v1432 = vadd.f32 %v1426, 0.5
  %v1433 = vadd.f32 %v1427, 0.5
  %v1434 = vadd.f32 %v1428, 0.5
  %v1435 = vtanh.pop %v1406
  %v1436 = vtanh.pop %v1410
  %v1437 = vmul.f32 %v1430, %v797
  %v1438 = vmul.f32 %v1433, %v798
  %v1439 = vmul.f32 %v1429, %v1435
  %v1440 = vmul.f32 %v1432, %v1436
  %v1441 = vadd.f32 %v1437, %v1439
  %v1442 = vadd.f32 %v1438, %v1440
  %v1443 = vtanh.pop %v1441
  %v1444 = vtanh.pop %v1442
  %v1445 = vmul.f32 %v1431, %v1443
  %v1446 = vmul.f32 %v1434, %v1444
  %v1447 = vpack.c.bf16 %v1446, %v1445
  %v1448 = vld [vmem:[%s4] sm:$0xff]
  %v1449 = vld [vmem:[%s4 + $0x8] sm:$0xff]
  %v1450 = vld [vmem:[%s4 + $0x10] sm:$0xff]
  %v1451 = vld [vmem:[%s4 + $0x18] sm:$0xff]
  %v1452 = vld [vmem:[%s4 + $0x20] sm:$0xff]
  %v1453 = vld [vmem:[%s4 + $0x28] sm:$0xff]
  %v1454 = vld [vmem:[%s4 + $0x30] sm:$0xff]
  %v1455 = vld [vmem:[%s4 + $0x38] sm:$0xff]
  %v1456 = vld [vmem:[%s4 + $0x40] sm:$0xff]
  %v1457 = vld [vmem:[%s4 + $0x48] sm:$0xff]
  %v1458 = vld [vmem:[%s4 + $0x50] sm:$0xff]
  %v1459 = vld [vmem:[%s4 + $0x58] sm:$0xff]
  %v1460 = vld [vmem:[%s4 + $0x60] sm:$0xff]
  %v1461 = vld [vmem:[%s4 + $0x68] sm:$0xff]
  %v1462 = vld [vmem:[%s4 + $0x70] sm:$0xff]
  %v1463 = vld [vmem:[%s4 + $0x78] sm:$0xff]
  %v1464 = vld [vmem:[%s4 + $0x80] sm:$0xff]
  %v1465 = vld [vmem:[%s4 + $0x88] sm:$0xff]
  %v1466 = vld [vmem:[%s4 + $0x90] sm:$0xff]
  %v1467 = vld [vmem:[%s4 + $0x98] sm:$0xff]
  %v1468 = vld [vmem:[%s4 + $0xa0] sm:$0xff]
  %v1469 = vld [vmem:[%s4 + $0xa8] sm:$0xff]
  %v1470 = vld [vmem:[%s4 + $0xb0] sm:$0xff]
  %v1471 = vld [vmem:[%s4 + $0xb8] sm:$0xff]
  %v1472 = vld [vmem:[%s4 + $0xc0] sm:$0xff]
  %v1473 = vld [vmem:[%s4 + $0xc8] sm:$0xff]
  %v1474 = vld [vmem:[%s4 + $0xd0] sm:$0xff]
  %v1475 = vld [vmem:[%s4 + $0xd8] sm:$0xff]
  %v1476 = vld [vmem:[%s4 + $0xe0] sm:$0xff]
  %v1477 = vld [vmem:[%s4 + $0xe8] sm:$0xff]
  %v1478 = vld [vmem:[%s4 + $0xf0] sm:$0xff]
  %v1479 = vld [vmem:[%s4 + $0xf8] sm:$0xff]
  %v1480 = vld [vmem:[%s6] sm:$0xf]
  %v1482 = vlaneseq
  %v1483 = vshrl.u32 %v1482, 7
  %v1484 = vsub.s32 0, %v1483
  %v1485 = vrot.slane %v1480, %v1484
  %v1486 = vlaneseq
  %v1487 = vshrl.u32 %v1486, 7
  %v1488 = vsub.s32 1, %v1487
  %v1489 = vrot.slane %v1480, %v1488
  %v1490 = vlaneseq
  %v1491 = vshrl.u32 %v1490, 7
  %v1492 = vsub.s32 2, %v1491
  %v1493 = vrot.slane %v1480, %v1492
  %v1494 = vlaneseq
  %v1495 = vshrl.u32 %v1494, 7
  %v1496 = vsub.s32 3, %v1495
  %v1497 = vrot.slane %v1480, %v1496
  %v1534 = vunpack.c.l.b16 %v1448
  %v1535 = vunpack.c.h.b16 %v1448
  %v1536 = vunpack.c.l.b16 %v1449
  %v1537 = vunpack.c.h.b16 %v1449
  %v1538 = vunpack.c.l.b16 %v1450
  %v1539 = vunpack.c.h.b16 %v1450
  %v1540 = vunpack.c.l.b16 %v1451
  %v1541 = vunpack.c.h.b16 %v1451
  %v1542 = vunpack.c.l.b16 %v1452
  %v1543 = vunpack.c.h.b16 %v1452
  %v1544 = vunpack.c.l.b16 %v1453
  %v1545 = vunpack.c.h.b16 %v1453
  %v1546 = vunpack.c.l.b16 %v1454
  %v1547 = vunpack.c.h.b16 %v1454
  %v1548 = vunpack.c.l.b16 %v1455
  %v1549 = vunpack.c.h.b16 %v1455
  %v1550 = vunpack.c.l.b16 %v1456
  %v1551 = vunpack.c.h.b16 %v1456
  %v1552 = vunpack.c.l.b16 %v1457
  %v1553 = vunpack.c.h.b16 %v1457
  %v1554 = vunpack.c.l.b16 %v1458
  %v1555 = vunpack.c.h.b16 %v1458
  %v1556 = vunpack.c.l.b16 %v1459
  %v1557 = vunpack.c.h.b16 %v1459
  %v1558 = vunpack.c.l.b16 %v1460
  %v1559 = vunpack.c.h.b16 %v1460
  %v1560 = vunpack.c.l.b16 %v1461
  %v1561 = vunpack.c.h.b16 %v1461
  %v1562 = vunpack.c.l.b16 %v1462
  %v1563 = vunpack.c.h.b16 %v1462
  %v1564 = vunpack.c.l.b16 %v1463
  %v1565 = vunpack.c.h.b16 %v1463
  %v1566 = vunpack.c.l.b16 %v1464
  %v1567 = vunpack.c.h.b16 %v1464
  %v1568 = vunpack.c.l.b16 %v1465
  %v1569 = vunpack.c.h.b16 %v1465
  %v1570 = vunpack.c.l.b16 %v1466
  %v1571 = vunpack.c.h.b16 %v1466
  %v1572 = vunpack.c.l.b16 %v1467
  %v1573 = vunpack.c.h.b16 %v1467
  %v1574 = vunpack.c.l.b16 %v1468
  %v1575 = vunpack.c.h.b16 %v1468
  %v1576 = vunpack.c.l.b16 %v1469
  %v1577 = vunpack.c.h.b16 %v1469
  %v1578 = vunpack.c.l.b16 %v1470
  %v1579 = vunpack.c.h.b16 %v1470
  %v1580 = vunpack.c.l.b16 %v1471
  %v1581 = vunpack.c.h.b16 %v1471
  %v1582 = vunpack.c.l.b16 %v1472
  %v1583 = vunpack.c.h.b16 %v1472
  %v1584 = vunpack.c.l.b16 %v1473
  %v1585 = vunpack.c.h.b16 %v1473
  %v1586 = vunpack.c.l.b16 %v1474
  %v1587 = vunpack.c.h.b16 %v1474
  %v1588 = vunpack.c.l.b16 %v1475
  %v1589 = vunpack.c.h.b16 %v1475
  %v1590 = vunpack.c.l.b16 %v1476
  %v1591 = vunpack.c.h.b16 %v1476
  %v1592 = vunpack.c.l.b16 %v1477
  %v1593 = vunpack.c.h.b16 %v1477
  %v1594 = vunpack.c.l.b16 %v1478
  %v1595 = vunpack.c.h.b16 %v1478
  %v1596 = vunpack.c.l.b16 %v1479
  %v1597 = vunpack.c.h.b16 %v1479
  %v1598 = vpack.c.b16 %v1538, %v1534
  %v1599 = vpack.c.b16 %v1539, %v1535
  %v1600 = vpack.c.b16 %v1540, %v1536
  %v1601 = vpack.c.b16 %v1541, %v1537
  %v1602 = vpack.c.b16 %v1546, %v1542
  %v1603 = vpack.c.b16 %v1547, %v1543
  %v1604 = vpack.c.b16 %v1548, %v1544
  %v1605 = vpack.c.b16 %v1549, %v1545
  %v1606 = vpack.c.b16 %v1554, %v1550
  %v1607 = vpack.c.b16 %v1555, %v1551
  %v1608 = vpack.c.b16 %v1556, %v1552
  %v1609 = vpack.c.b16 %v1557, %v1553
  %v1610 = vpack.c.b16 %v1562, %v1558
  %v1611 = vpack.c.b16 %v1563, %v1559
  %v1612 = vpack.c.b16 %v1564, %v1560
  %v1613 = vpack.c.b16 %v1565, %v1561
  %v1614 = vpack.c.b16 %v1570, %v1566
  %v1615 = vpack.c.b16 %v1571, %v1567
  %v1616 = vpack.c.b16 %v1572, %v1568
  %v1617 = vpack.c.b16 %v1573, %v1569
  %v1618 = vpack.c.b16 %v1578, %v1574
  %v1619 = vpack.c.b16 %v1579, %v1575
  %v1620 = vpack.c.b16 %v1580, %v1576
  %v1621 = vpack.c.b16 %v1581, %v1577
  %v1622 = vpack.c.b16 %v1586, %v1582
  %v1623 = vpack.c.b16 %v1587, %v1583
  %v1624 = vpack.c.b16 %v1588, %v1584
  %v1625 = vpack.c.b16 %v1589, %v1585
  %v1626 = vpack.c.b16 %v1594, %v1590
  %v1627 = vpack.c.b16 %v1595, %v1591
  %v1628 = vpack.c.b16 %v1596, %v1592
  %v1629 = vpack.c.b16 %v1597, %v1593
  %1662 = vmatprep.subr.bf16.mxu0 %v1599
  %1663 = vmatpush1.bf16.msra.mxu0 %v1598
  %1664 = vmatprep.subr.bf16.mxu0 %v1603
  %1665 = vmatpush1.bf16.msra.mxu0 %v1602
  %1666 = vmatprep.subr.bf16.mxu0 %v1607
  %1667 = vmatpush1.bf16.msra.mxu0 %v1606
  %1668 = vmatprep.subr.bf16.mxu0 %v1611
  %1669 = vmatpush1.bf16.msra.mxu0 %v1610
  %1670 = vmatprep.subr.bf16.mxu0 %v1615
  %1671 = vmatpush1.bf16.msra.mxu0 %v1614
  %1672 = vmatprep.subr.bf16.mxu0 %v1619
  %1673 = vmatpush1.bf16.msra.mxu0 %v1618
  %1674 = vmatprep.subr.bf16.mxu0 %v1623
  %1675 = vmatpush1.bf16.msra.mxu0 %v1622
  %1676 = vmatprep.subr.bf16.mxu0 %v1627
  %1677 = vmatpush1.bf16.msra.mxu0 %v1626
  %1678 = vmatprep.subr.bf16.mxu0 0
  %1679 = vmatpush1.bf16.msra.mxu0 0
  %1680 = vmatprep.subr.bf16.mxu0 0
  %1681 = vmatpush1.bf16.msra.mxu0 0
  %1682 = vmatprep.subr.bf16.mxu0 0
  %1683 = vmatpush1.bf16.msra.mxu0 0
  %1684 = vmatprep.subr.bf16.mxu0 0
  %1685 = vmatpush1.bf16.msra.mxu0 0
  %1686 = vmatprep.subr.bf16.mxu0 0
  %1687 = vmatpush1.bf16.msra.mxu0 0
  %1688 = vmatprep.subr.bf16.mxu0 0
  %1689 = vmatpush1.bf16.msra.mxu0 0
  %1690 = vmatprep.subr.bf16.mxu0 0
  %1691 = vmatpush1.bf16.msra.mxu0 0
  %1692 = vmatprep.subr.bf16.mxu0 0
  %1693 = vmatpush1.bf16.msra.mxu0 0
  %1694 = vmatprep.mubr.bf16.mxu0 0
  %1695 = vmatmul.mubr.bf16.gmra.mrb[0].mxu0 %v1447
  %v1696 = vpop.f32.mrb[0].mxu0
  %v1697 = vadd.f32 %v1485, %v1696
  %v1698 = vpop.f32.mrb[0].mxu0
  %v1699 = vadd.f32 %v1489, %v1698
  %v1700 = vpop.f32.mrb[0].mxu0
  %v1701 = vadd.f32 %v1485, %v1700
  %v1702 = vpop.f32.mrb[0].mxu0
  %v1703 = vadd.f32 %v1489, %v1702
  %1704 = vdwg.mxu0
  %1705 = vmatprep.subr.bf16.mxu0 %v1601
  %1706 = vmatpush1.bf16.msra.mxu0 %v1600
  %1707 = vmatprep.subr.bf16.mxu0 %v1605
  %1708 = vmatpush1.bf16.msra.mxu0 %v1604
  %1709 = vmatprep.subr.bf16.mxu0 %v1609
  %1710 = vmatpush1.bf16.msra.mxu0 %v1608
  %1711 = vmatprep.subr.bf16.mxu0 %v1613
  %1712 = vmatpush1.bf16.msra.mxu0 %v1612
  %1713 = vmatprep.subr.bf16.mxu0 %v1617
  %1714 = vmatpush1.bf16.msra.mxu0 %v1616
  %1715 = vmatprep.subr.bf16.mxu0 %v1621
  %1716 = vmatpush1.bf16.msra.mxu0 %v1620
  %1717 = vmatprep.subr.bf16.mxu0 %v1625
  %1718 = vmatpush1.bf16.msra.mxu0 %v1624
  %1719 = vmatprep.subr.bf16.mxu0 %v1629
  %1720 = vmatpush1.bf16.msra.mxu0 %v1628
  %1721 = vmatprep.subr.bf16.mxu0 0
  %1722 = vmatpush1.bf16.msra.mxu0 0
  %1723 = vmatprep.subr.bf16.mxu0 0
  %1724 = vmatpush1.bf16.msra.mxu0 0
  %1725 = vmatprep.subr.bf16.mxu0 0
  %1726 = vmatpush1.bf16.msra.mxu0 0
  %1727 = vmatprep.subr.bf16.mxu0 0
  %1728 = vmatpush1.bf16.msra.mxu0 0
  %1729 = vmatprep.subr.bf16.mxu0 0
  %1730 = vmatpush1.bf16.msra.mxu0 0
  %1731 = vmatprep.subr.bf16.mxu0 0
  %1732 = vmatpush1.bf16.msra.mxu0 0
  %1733 = vmatprep.subr.bf16.mxu0 0
  %1734 = vmatpush1.bf16.msra.mxu0 0
  %1735 = vmatprep.subr.bf16.mxu0 0
  %1736 = vmatpush1.bf16.msra.mxu0 0
  %1737 = vmatprep.mubr.bf16.mxu0 0
  %1738 = vmatmul.mubr.bf16.gmra.mrb[0].mxu0 %v1447
  %v1739 = vpop.f32.mrb[0].mxu0
  %v1740 = vadd.f32 %v1493, %v1739
  %v1741 = vpop.f32.mrb[0].mxu0
  %v1742 = vadd.f32 %v1497, %v1741
  %v1743 = vpop.f32.mrb[0].mxu0
  %v1744 = vadd.f32 %v1493, %v1743
  %v1745 = vpop.f32.mrb[0].mxu0
  %v1746 = vadd.f32 %v1497, %v1745
  %1747 = vdwg.mxu0
  %v1748 = vpack.c.bf16 %v1701, %v1697
  %v1749 = vpack.c.bf16 %v1703, %v1699
  %v1750 = vpack.c.bf16 %v1744, %v1740
  %v1751 = vpack.c.bf16 %v1746, %v1742
  %1752 = vst [vmem:[%s1112] sm:$0xff] %v1748
  %1753 = vst [vmem:[%s1112 + $0x8] sm:$0xff] %v1749
  %1754 = vst [vmem:[%s1112 + $0x10] sm:$0xff] %v1750
  %1755 = vst [vmem:[%s1112 + $0x18] sm:$0xff] %v1751
  %s1756 = scalar_lea.vmem [#allocation2], 64
  %v1757 = vld [vmem:[%s1756] sm:$0xff]
  %v1758 = vld [vmem:[%s1756 + $0x8] sm:$0xff]
  %v1759 = vld [vmem:[%s1756 + $0x10] sm:$0xff]
  %v1760 = vld [vmem:[%s1756 + $0x18] sm:$0xff]
  %v1761 = vunpack.c.l.bf16 %v1757
  %v1762 = vunpack.c.l.bf16 %v1758
  %v1763 = vunpack.c.l.bf16 %v1759
  %v1764 = vunpack.c.l.bf16 %v1760
  %v1765 = vunpack.c.h.bf16 %v1757
  %v1766 = vunpack.c.h.bf16 %v1758
  %v1767 = vunpack.c.h.bf16 %v1759
  %v1768 = vunpack.c.h.bf16 %v1760
  %v1769 = vld [vmem:[%s2] sm:$0xff]
  %v1770 = vld [vmem:[%s2 + $0x8] sm:$0xff]
  %v1771 = vld [vmem:[%s2 + $0x10] sm:$0xff]
  %v1772 = vld [vmem:[%s2 + $0x18] sm:$0xff]
  %v1773 = vld [vmem:[%s2 + $0x20] sm:$0xff]
  %v1774 = vld [vmem:[%s2 + $0x28] sm:$0xff]
  %v1775 = vld [vmem:[%s2 + $0x30] sm:$0xff]
  %v1776 = vld [vmem:[%s2 + $0x38] sm:$0xff]
  %v1777 = vld [vmem:[%s2 + $0x40] sm:$0xff]
  %v1778 = vld [vmem:[%s2 + $0x48] sm:$0xff]
  %v1779 = vld [vmem:[%s2 + $0x50] sm:$0xff]
  %v1780 = vld [vmem:[%s2 + $0x58] sm:$0xff]
  %v1781 = vld [vmem:[%s2 + $0x60] sm:$0xff]
  %v1782 = vld [vmem:[%s2 + $0x68] sm:$0xff]
  %v1783 = vld [vmem:[%s2 + $0x70] sm:$0xff]
  %v1784 = vld [vmem:[%s2 + $0x78] sm:$0xff]
  %v1785 = vld [vmem:[%s2 + $0x80] sm:$0xff]
  %v1786 = vld [vmem:[%s2 + $0x88] sm:$0xff]
  %v1787 = vld [vmem:[%s2 + $0x90] sm:$0xff]
  %v1788 = vld [vmem:[%s2 + $0x98] sm:$0xff]
  %v1789 = vld [vmem:[%s2 + $0xa0] sm:$0xff]
  %v1790 = vld [vmem:[%s2 + $0xa8] sm:$0xff]
  %v1791 = vld [vmem:[%s2 + $0xb0] sm:$0xff]
  %v1792 = vld [vmem:[%s2 + $0xb8] sm:$0xff]
  %v1793 = vld [vmem:[%s2 + $0xc0] sm:$0xff]
  %v1794 = vld [vmem:[%s2 + $0xc8] sm:$0xff]
  %v1795 = vld [vmem:[%s2 + $0xd0] sm:$0xff]
  %v1796 = vld [vmem:[%s2 + $0xd8] sm:$0xff]
  %v1797 = vld [vmem:[%s2 + $0xe0] sm:$0xff]
  %v1798 = vld [vmem:[%s2 + $0xe8] sm:$0xff]
  %v1799 = vld [vmem:[%s2 + $0xf0] sm:$0xff]
  %v1800 = vld [vmem:[%s2 + $0xf8] sm:$0xff]
  %v1833 = vunpack.c.l.b16 %v1769
  %v1834 = vunpack.c.h.b16 %v1769
  %v1835 = vunpack.c.l.b16 %v1770
  %v1836 = vunpack.c.h.b16 %v1770
  %v1837 = vunpack.c.l.b16 %v1771
  %v1838 = vunpack.c.h.b16 %v1771
  %v1839 = vunpack.c.l.b16 %v1772
  %v1840 = vunpack.c.h.b16 %v1772
  %v1841 = vunpack.c.l.b16 %v1773
  %v1842 = vunpack.c.h.b16 %v1773
  %v1843 = vunpack.c.l.b16 %v1774
  %v1844 = vunpack.c.h.b16 %v1774
  %v1845 = vunpack.c.l.b16 %v1775
  %v1846 = vunpack.c.h.b16 %v1775
  %v1847 = vunpack.c.l.b16 %v1776
  %v1848 = vunpack.c.h.b16 %v1776
  %v1849 = vunpack.c.l.b16 %v1777
  %v1850 = vunpack.c.h.b16 %v1777
  %v1851 = vunpack.c.l.b16 %v1778
  %v1852 = vunpack.c.h.b16 %v1778
  %v1853 = vunpack.c.l.b16 %v1779
  %v1854 = vunpack.c.h.b16 %v1779
  %v1855 = vunpack.c.l.b16 %v1780
  %v1856 = vunpack.c.h.b16 %v1780
  %v1857 = vunpack.c.l.b16 %v1781
  %v1858 = vunpack.c.h.b16 %v1781
  %v1859 = vunpack.c.l.b16 %v1782
  %v1860 = vunpack.c.h.b16 %v1782
  %v1861 = vunpack.c.l.b16 %v1783
  %v1862 = vunpack.c.h.b16 %v1783
  %v1863 = vunpack.c.l.b16 %v1784
  %v1864 = vunpack.c.h.b16 %v1784
  %v1865 = vunpack.c.l.b16 %v1785
  %v1866 = vunpack.c.h.b16 %v1785
  %v1867 = vunpack.c.l.b16 %v1786
  %v1868 = vunpack.c.h.b16 %v1786
  %v1869 = vunpack.c.l.b16 %v1787
  %v1870 = vunpack.c.h.b16 %v1787
  %v1871 = vunpack.c.l.b16 %v1788
  %v1872 = vunpack.c.h.b16 %v1788
  %v1873 = vunpack.c.l.b16 %v1789
  %v1874 = vunpack.c.h.b16 %v1789
  %v1875 = vunpack.c.l.b16 %v1790
  %v1876 = vunpack.c.h.b16 %v1790
  %v1877 = vunpack.c.l.b16 %v1791
  %v1878 = vunpack.c.h.b16 %v1791
  %v1879 = vunpack.c.l.b16 %v1792
  %v1880 = vunpack.c.h.b16 %v1792
  %v1881 = vunpack.c.l.b16 %v1793
  %v1882 = vunpack.c.h.b16 %v1793
  %v1883 = vunpack.c.l.b16 %v1794
  %v1884 = vunpack.c.h.b16 %v1794
  %v1885 = vunpack.c.l.b16 %v1795
  %v1886 = vunpack.c.h.b16 %v1795
  %v1887 = vunpack.c.l.b16 %v1796
  %v1888 = vunpack.c.h.b16 %v1796
  %v1889 = vunpack.c.l.b16 %v1797
  %v1890 = vunpack.c.h.b16 %v1797
  %v1891 = vunpack.c.l.b16 %v1798
  %v1892 = vunpack.c.h.b16 %v1798
  %v1893 = vunpack.c.l.b16 %v1799
  %v1894 = vunpack.c.h.b16 %v1799
  %v1895 = vunpack.c.l.b16 %v1800
  %v1896 = vunpack.c.h.b16 %v1800
  %v1897 = vpack.c.b16 %v1837, %v1833
  %v1898 = vpack.c.b16 %v1838, %v1834
  %v1899 = vpack.c.b16 %v1839, %v1835
  %v1900 = vpack.c.b16 %v1840, %v1836
  %v1901 = vpack.c.b16 %v1845, %v1841
  %v1902 = vpack.c.b16 %v1846, %v1842
  %v1903 = vpack.c.b16 %v1847, %v1843
  %v1904 = vpack.c.b16 %v1848, %v1844
  %v1905 = vpack.c.b16 %v1853, %v1849
  %v1906 = vpack.c.b16 %v1854, %v1850
  %v1907 = vpack.c.b16 %v1855, %v1851
  %v1908 = vpack.c.b16 %v1856, %v1852
  %v1909 = vpack.c.b16 %v1861, %v1857
  %v1910 = vpack.c.b16 %v1862, %v1858
  %v1911 = vpack.c.b16 %v1863, %v1859
  %v1912 = vpack.c.b16 %v1864, %v1860
  %v1913 = vpack.c.b16 %v1869, %v1865
  %v1914 = vpack.c.b16 %v1870, %v1866
  %v1915 = vpack.c.b16 %v1871, %v1867
  %v1916 = vpack.c.b16 %v1872, %v1868
  %v1917 = vpack.c.b16 %v1877, %v1873
  %v1918 = vpack.c.b16 %v1878, %v1874
  %v1919 = vpack.c.b16 %v1879, %v1875
  %v1920 = vpack.c.b16 %v1880, %v1876
  %v1921 = vpack.c.b16 %v1885, %v1881
  %v1922 = vpack.c.b16 %v1886, %v1882
  %v1923 = vpack.c.b16 %v1887, %v1883
  %v1924 = vpack.c.b16 %v1888, %v1884
  %v1925 = vpack.c.b16 %v1893, %v1889
  %v1926 = vpack.c.b16 %v1894, %v1890
  %v1927 = vpack.c.b16 %v1895, %v1891
  %v1928 = vpack.c.b16 %v1896, %v1892
  %1961 = vmatprep.subr.bf16.mxu0 %v1898
  %1962 = vmatpush1.bf16.msra.mxu0 %v1897
  %1963 = vmatprep.subr.bf16.mxu0 %v1902
  %1964 = vmatpush1.bf16.msra.mxu0 %v1901
  %1965 = vmatprep.subr.bf16.mxu0 %v1906
  %1966 = vmatpush1.bf16.msra.mxu0 %v1905
  %1967 = vmatprep.subr.bf16.mxu0 %v1910
  %1968 = vmatpush1.bf16.msra.mxu0 %v1909
  %1969 = vmatprep.subr.bf16.mxu0 %v1914
  %1970 = vmatpush1.bf16.msra.mxu0 %v1913
  %1971 = vmatprep.subr.bf16.mxu0 %v1918
  %1972 = vmatpush1.bf16.msra.mxu0 %v1917
  %1973 = vmatprep.subr.bf16.mxu0 %v1922
  %1974 = vmatpush1.bf16.msra.mxu0 %v1921
  %1975 = vmatprep.subr.bf16.mxu0 %v1926
  %1976 = vmatpush1.bf16.msra.mxu0 %v1925
  %1977 = vmatprep.subr.bf16.mxu0 0
  %1978 = vmatpush1.bf16.msra.mxu0 0
  %1979 = vmatprep.subr.bf16.mxu0 0
  %1980 = vmatpush1.bf16.msra.mxu0 0
  %1981 = vmatprep.subr.bf16.mxu0 0
  %1982 = vmatpush1.bf16.msra.mxu0 0
  %1983 = vmatprep.subr.bf16.mxu0 0
  %1984 = vmatpush1.bf16.msra.mxu0 0
  %1985 = vmatprep.subr.bf16.mxu0 0
  %1986 = vmatpush1.bf16.msra.mxu0 0
  %1987 = vmatprep.subr.bf16.mxu0 0
  %1988 = vmatpush1.bf16.msra.mxu0 0
  %1989 = vmatprep.subr.bf16.mxu0 0
  %1990 = vmatpush1.bf16.msra.mxu0 0
  %1991 = vmatprep.subr.bf16.mxu0 0
  %1992 = vmatpush1.bf16.msra.mxu0 0
  %1993 = vmatprep.mubr.bf16.mxu0 0
  %1994 = vmatmul.mubr.bf16.gmra.mrb[0].mxu0 %v1447
  %v1995 = vpop.f32.mrb[0].mxu0
  %v1996 = vadd.f32 0.0, %v1995
  %v1997 = vpop.f32.mrb[0].mxu0
  %v1998 = vadd.f32 0.0, %v1997
  %v1999 = vpop.f32.mrb[0].mxu0
  %v2000 = vadd.f32 0.0, %v1999
  %v2001 = vpop.f32.mrb[0].mxu0
  %v2002 = vadd.f32 0.0, %v2001
  %2003 = vdwg.mxu0
  %2004 = vmatprep.subr.bf16.mxu0 %v1900
  %2005 = vmatpush1.bf16.msra.mxu0 %v1899
  %2006 = vmatprep.subr.bf16.mxu0 %v1904
  %2007 = vmatpush1.bf16.msra.mxu0 %v1903
  %2008 = vmatprep.subr.bf16.mxu0 %v1908
  %2009 = vmatpush1.bf16.msra.mxu0 %v1907
  %2010 = vmatprep.subr.bf16.mxu0 %v1912
  %2011 = vmatpush1.bf16.msra.mxu0 %v1911
  %2012 = vmatprep.subr.bf16.mxu0 %v1916
  %2013 = vmatpush1.bf16.msra.mxu0 %v1915
  %2014 = vmatprep.subr.bf16.mxu0 %v1920
  %2015 = vmatpush1.bf16.msra.mxu0 %v1919
  %2016 = vmatprep.subr.bf16.mxu0 %v1924
  %2017 = vmatpush1.bf16.msra.mxu0 %v1923
  %2018 = vmatprep.subr.bf16.mxu0 %v1928
  %2019 = vmatpush1.bf16.msra.mxu0 %v1927
  %2020 = vmatprep.subr.bf16.mxu0 0
  %2021 = vmatpush1.bf16.msra.mxu0 0
  %2022 = vmatprep.subr.bf16.mxu0 0
  %2023 = vmatpush1.bf16.msra.mxu0 0
  %2024 = vmatprep.subr.bf16.mxu0 0
  %2025 = vmatpush1.bf16.msra.mxu0 0
  %2026 = vmatprep.subr.bf16.mxu0 0
  %2027 = vmatpush1.bf16.msra.mxu0 0
  %2028 = vmatprep.subr.bf16.mxu0 0
  %2029 = vmatpush1.bf16.msra.mxu0 0
  %2030 = vmatprep.subr.bf16.mxu0 0
  %2031 = vmatpush1.bf16.msra.mxu0 0
  %2032 = vmatprep.subr.bf16.mxu0 0
  %2033 = vmatpush1.bf16.msra.mxu0 0
  %2034 = vmatprep.subr.bf16.mxu0 0
  %2035 = vmatpush1.bf16.msra.mxu0 0
  %2036 = vmatprep.mubr.bf16.mxu0 0
  %2037 = vmatmul.mubr.bf16.gmra.mrb[0].mxu0 %v1447
  %v2038 = vpop.f32.mrb[0].mxu0
  %v2039 = vadd.f32 0.0, %v2038
  %v2040 = vpop.f32.mrb[0].mxu0
  %v2041 = vadd.f32 0.0, %v2040
  %v2042 = vpop.f32.mrb[0].mxu0
  %v2043 = vadd.f32 0.0, %v2042
  %v2044 = vpop.f32.mrb[0].mxu0
  %v2045 = vadd.f32 0.0, %v2044
  %2046 = vdwg.mxu0
  %v2047 = vadd.f32 %v1761, %v1996
  %v2048 = vadd.f32 %v1762, %v1998
  %v2049 = vadd.f32 %v1763, %v2039
  %v2050 = vadd.f32 %v1764, %v2041
  %v2051 = vadd.f32 %v1765, %v2000
  %v2052 = vadd.f32 %v1766, %v2002
  %v2053 = vadd.f32 %v1767, %v2043
  %v2054 = vadd.f32 %v1768, %v2045
  %v2055 = vmul.f32 %v2047, 0.5
  %v2056 = vmul.f32 %v2048, 0.5
  %v2057 = vmul.f32 %v2049, 0.5
  %v2058 = vmul.f32 %v2051, 0.5
  %v2059 = vmul.f32 %v2052, 0.5
  %v2060 = vmul.f32 %v2053, 0.5
  %v2061 = vtanh.pop %v2055
  %v2062 = vtanh.pop %v2056
  %v2063 = vtanh.pop %v2057
  %v2064 = vtanh.pop %v2058
  %v2065 = vtanh.pop %v2059
  %v2066 = vtanh.pop %v2060
  %v2067 = vmul.f32 %v2061, 0.5
  %v2068 = vmul.f32 %v2062, 0.5
  %v2069 = vmul.f32 %v2063, 0.5
  %v2070 = vmul.f32 %v2064, 0.5
  %v2071 = vmul.f32 %v2065, 0.5
  %v2072 = vmul.f32 %v2066, 0.5
  %v2073 = vadd.f32 %v2067, 0.5
  %v2074 = vadd.f32 %v2068, 0.5
  %v2075 = vadd.f32 %v2069, 0.5
  %v2076 = vadd.f32 %v2070, 0.5
  %v2077 = vadd.f32 %v2071, 0.5
  %v2078 = vadd.f32 %v2072, 0.5
  %v2079 = vtanh.pop %v2050
  %v2080 = vtanh.pop %v2054
  %v2081 = vmul.f32 %v2074, %v1441
  %v2082 = vmul.f32 %v2077, %v1442
  %v2083 = vmul.f32 %v2073, %v2079
  %v2084 = vmul.f32 %v2076, %v2080
  %v2085 = vadd.f32 %v2081, %v2083
  %v2086 = vadd.f32 %v2082, %v2084
  %v2087 = vtanh.pop %v2085
  %v2088 = vtanh.pop %v2086
  %v2089 = vmul.f32 %v2075, %v2087
  %v2090 = vmul.f32 %v2078, %v2088
  %v2091 = vpack.c.bf16 %v2090, %v2089
  %v2092 = vld [vmem:[%s4] sm:$0xff]
  %v2093 = vld [vmem:[%s4 + $0x8] sm:$0xff]
  %v2094 = vld [vmem:[%s4 + $0x10] sm:$0xff]
  %v2095 = vld [vmem:[%s4 + $0x18] sm:$0xff]
  %v2096 = vld [vmem:[%s4 + $0x20] sm:$0xff]
  %v2097 = vld [vmem:[%s4 + $0x28] sm:$0xff]
  %v2098 = vld [vmem:[%s4 + $0x30] sm:$0xff]
  %v2099 = vld [vmem:[%s4 + $0x38] sm:$0xff]
  %v2100 = vld [vmem:[%s4 + $0x40] sm:$0xff]
  %v2101 = vld [vmem:[%s4 + $0x48] sm:$0xff]
  %v2102 = vld [vmem:[%s4 + $0x50] sm:$0xff]
  %v2103 = vld [vmem:[%s4 + $0x58] sm:$0xff]
  %v2104 = vld [vmem:[%s4 + $0x60] sm:$0xff]
  %v2105 = vld [vmem:[%s4 + $0x68] sm:$0xff]
  %v2106 = vld [vmem:[%s4 + $0x70] sm:$0xff]
  %v2107 = vld [vmem:[%s4 + $0x78] sm:$0xff]
  %v2108 = vld [vmem:[%s4 + $0x80] sm:$0xff]
  %v2109 = vld [vmem:[%s4 + $0x88] sm:$0xff]
  %v2110 = vld [vmem:[%s4 + $0x90] sm:$0xff]
  %v2111 = vld [vmem:[%s4 + $0x98] sm:$0xff]
  %v2112 = vld [vmem:[%s4 + $0xa0] sm:$0xff]
  %v2113 = vld [vmem:[%s4 + $0xa8] sm:$0xff]
  %v2114 = vld [vmem:[%s4 + $0xb0] sm:$0xff]
  %v2115 = vld [vmem:[%s4 + $0xb8] sm:$0xff]
  %v2116 = vld [vmem:[%s4 + $0xc0] sm:$0xff]
  %v2117 = vld [vmem:[%s4 + $0xc8] sm:$0xff]
  %v2118 = vld [vmem:[%s4 + $0xd0] sm:$0xff]
  %v2119 = vld [vmem:[%s4 + $0xd8] sm:$0xff]
  %v2120 = vld [vmem:[%s4 + $0xe0] sm:$0xff]
  %v2121 = vld [vmem:[%s4 + $0xe8] sm:$0xff]
  %v2122 = vld [vmem:[%s4 + $0xf0] sm:$0xff]
  %v2123 = vld [vmem:[%s4 + $0xf8] sm:$0xff]
  %v2124 = vld [vmem:[%s6] sm:$0xf]
  %v2126 = vlaneseq
  %v2127 = vshrl.u32 %v2126, 7
  %v2128 = vsub.s32 0, %v2127
  %v2129 = vrot.slane %v2124, %v2128
  %v2130 = vlaneseq
  %v2131 = vshrl.u32 %v2130, 7
  %v2132 = vsub.s32 1, %v2131
  %v2133 = vrot.slane %v2124, %v2132
  %v2134 = vlaneseq
  %v2135 = vshrl.u32 %v2134, 7
  %v2136 = vsub.s32 2, %v2135
  %v2137 = vrot.slane %v2124, %v2136
  %v2138 = vlaneseq
  %v2139 = vshrl.u32 %v2138, 7
  %v2140 = vsub.s32 3, %v2139
  %v2141 = vrot.slane %v2124, %v2140
  %v2178 = vunpack.c.l.b16 %v2092
  %v2179 = vunpack.c.h.b16 %v2092
  %v2180 = vunpack.c.l.b16 %v2093
  %v2181 = vunpack.c.h.b16 %v2093
  %v2182 = vunpack.c.l.b16 %v2094
  %v2183 = vunpack.c.h.b16 %v2094
  %v2184 = vunpack.c.l.b16 %v2095
  %v2185 = vunpack.c.h.b16 %v2095
  %v2186 = vunpack.c.l.b16 %v2096
  %v2187 = vunpack.c.h.b16 %v2096
  %v2188 = vunpack.c.l.b16 %v2097
  %v2189 = vunpack.c.h.b16 %v2097
  %v2190 = vunpack.c.l.b16 %v2098
  %v2191 = vunpack.c.h.b16 %v2098
  %v2192 = vunpack.c.l.b16 %v2099
  %v2193 = vunpack.c.h.b16 %v2099
  %v2194 = vunpack.c.l.b16 %v2100
  %v2195 = vunpack.c.h.b16 %v2100
  %v2196 = vunpack.c.l.b16 %v2101
  %v2197 = vunpack.c.h.b16 %v2101
  %v2198 = vunpack.c.l.b16 %v2102
  %v2199 = vunpack.c.h.b16 %v2102
  %v2200 = vunpack.c.l.b16 %v2103
  %v2201 = vunpack.c.h.b16 %v2103
  %v2202 = vunpack.c.l.b16 %v2104
  %v2203 = vunpack.c.h.b16 %v2104
  %v2204 = vunpack.c.l.b16 %v2105
  %v2205 = vunpack.c.h.b16 %v2105
  %v2206 = vunpack.c.l.b16 %v2106
  %v2207 = vunpack.c.h.b16 %v2106
  %v2208 = vunpack.c.l.b16 %v2107
  %v2209 = vunpack.c.h.b16 %v2107
  %v2210 = vunpack.c.l.b16 %v2108
  %v2211 = vunpack.c.h.b16 %v2108
  %v2212 = vunpack.c.l.b16 %v2109
  %v2213 = vunpack.c.h.b16 %v2109
  %v2214 = vunpack.c.l.b16 %v2110
  %v2215 = vunpack.c.h.b16 %v2110
  %v2216 = vunpack.c.l.b16 %v2111
  %v2217 = vunpack.c.h.b16 %v2111
  %v2218 = vunpack.c.l.b16 %v2112
  %v2219 = vunpack.c.h.b16 %v2112
  %v2220 = vunpack.c.l.b16 %v2113
  %v2221 = vunpack.c.h.b16 %v2113
  %v2222 = vunpack.c.l.b16 %v2114
  %v2223 = vunpack.c.h.b16 %v2114
  %v2224 = vunpack.c.l.b16 %v2115
  %v2225 = vunpack.c.h.b16 %v2115
  %v2226 = vunpack.c.l.b16 %v2116
  %v2227 = vunpack.c.h.b16 %v2116
  %v2228 = vunpack.c.l.b16 %v2117
  %v2229 = vunpack.c.h.b16 %v2117
  %v2230 = vunpack.c.l.b16 %v2118
  %v2231 = vunpack.c.h.b16 %v2118
  %v2232 = vunpack.c.l.b16 %v2119
  %v2233 = vunpack.c.h.b16 %v2119
  %v2234 = vunpack.c.l.b16 %v2120
  %v2235 = vunpack.c.h.b16 %v2120
  %v2236 = vunpack.c.l.b16 %v2121
  %v2237 = vunpack.c.h.b16 %v2121
  %v2238 = vunpack.c.l.b16 %v2122
  %v2239 = vunpack.c.h.b16 %v2122
  %v2240 = vunpack.c.l.b16 %v2123
  %v2241 = vunpack.c.h.b16 %v2123
  %v2242 = vpack.c.b16 %v2182, %v2178
  %v2243 = vpack.c.b16 %v2183, %v2179
  %v2244 = vpack.c.b16 %v2184, %v2180
  %v2245 = vpack.c.b16 %v2185, %v2181
  %v2246 = vpack.c.b16 %v2190, %v2186
  %v2247 = vpack.c.b16 %v2191, %v2187
  %v2248 = vpack.c.b16 %v2192, %v2188
  %v2249 = vpack.c.b16 %v2193, %v2189
  %v2250 = vpack.c.b16 %v2198, %v2194
  %v2251 = vpack.c.b16 %v2199, %v2195
  %v2252 = vpack.c.b16 %v2200, %v2196
  %v2253 = vpack.c.b16 %v2201, %v2197
  %v2254 = vpack.c.b16 %v2206, %v2202
  %v2255 = vpack.c.b16 %v2207, %v2203
  %v2256 = vpack.c.b16 %v2208, %v2204
  %v2257 = vpack.c.b16 %v2209, %v2205
  %v2258 = vpack.c.b16 %v2214, %v2210
  %v2259 = vpack.c.b16 %v2215, %v2211
  %v2260 = vpack.c.b16 %v2216, %v2212
  %v2261 = vpack.c.b16 %v2217, %v2213
  %v2262 = vpack.c.b16 %v2222, %v2218
  %v2263 = vpack.c.b16 %v2223, %v2219
  %v2264 = vpack.c.b16 %v2224, %v2220
  %v2265 = vpack.c.b16 %v2225, %v2221
  %v2266 = vpack.c.b16 %v2230, %v2226
  %v2267 = vpack.c.b16 %v2231, %v2227
  %v2268 = vpack.c.b16 %v2232, %v2228
  %v2269 = vpack.c.b16 %v2233, %v2229
  %v2270 = vpack.c.b16 %v2238, %v2234
  %v2271 = vpack.c.b16 %v2239, %v2235
  %v2272 = vpack.c.b16 %v2240, %v2236
  %v2273 = vpack.c.b16 %v2241, %v2237
  %2306 = vmatprep.subr.bf16.mxu0 %v2243
  %2307 = vmatpush1.bf16.msra.mxu0 %v2242
  %2308 = vmatprep.subr.bf16.mxu0 %v2247
  %2309 = vmatpush1.bf16.msra.mxu0 %v2246
  %2310 = vmatprep.subr.bf16.mxu0 %v2251
  %2311 = vmatpush1.bf16.msra.mxu0 %v2250
  %2312 = vmatprep.subr.bf16.mxu0 %v2255
  %2313 = vmatpush1.bf16.msra.mxu0 %v2254
  %2314 = vmatprep.subr.bf16.mxu0 %v2259
  %2315 = vmatpush1.bf16.msra.mxu0 %v2258
  %2316 = vmatprep.subr.bf16.mxu0 %v2263
  %2317 = vmatpush1.bf16.msra.mxu0 %v2262
  %2318 = vmatprep.subr.bf16.mxu0 %v2267
  %2319 = vmatpush1.bf16.msra.mxu0 %v2266
  %2320 = vmatprep.subr.bf16.mxu0 %v2271
  %2321 = vmatpush1.bf16.msra.mxu0 %v2270
  %2322 = vmatprep.subr.bf16.mxu0 0
  %2323 = vmatpush1.bf16.msra.mxu0 0
  %2324 = vmatprep.subr.bf16.mxu0 0
  %2325 = vmatpush1.bf16.msra.mxu0 0
  %2326 = vmatprep.subr.bf16.mxu0 0
  %2327 = vmatpush1.bf16.msra.mxu0 0
  %2328 = vmatprep.subr.bf16.mxu0 0
  %2329 = vmatpush1.bf16.msra.mxu0 0
  %2330 = vmatprep.subr.bf16.mxu0 0
  %2331 = vmatpush1.bf16.msra.mxu0 0
  %2332 = vmatprep.subr.bf16.mxu0 0
  %2333 = vmatpush1.bf16.msra.mxu0 0
  %2334 = vmatprep.subr.bf16.mxu0 0
  %2335 = vmatpush1.bf16.msra.mxu0 0
  %2336 = vmatprep.subr.bf16.mxu0 0
  %2337 = vmatpush1.bf16.msra.mxu0 0
  %2338 = vmatprep.mubr.bf16.mxu0 0
  %2339 = vmatmul.mubr.bf16.gmra.mrb[0].mxu0 %v2091
  %v2340 = vpop.f32.mrb[0].mxu0
  %v2341 = vadd.f32 %v2129, %v2340
  %v2342 = vpop.f32.mrb[0].mxu0
  %v2343 = vadd.f32 %v2133, %v2342
  %v2344 = vpop.f32.mrb[0].mxu0
  %v2345 = vadd.f32 %v2129, %v2344
  %v2346 = vpop.f32.mrb[0].mxu0
  %v2347 = vadd.f32 %v2133, %v2346
  %2348 = vdwg.mxu0
  %2349 = vmatprep.subr.bf16.mxu0 %v2245
  %2350 = vmatpush1.bf16.msra.mxu0 %v2244
  %2351 = vmatprep.subr.bf16.mxu0 %v2249
  %2352 = vmatpush1.bf16.msra.mxu0 %v2248
  %2353 = vmatprep.subr.bf16.mxu0 %v2253
  %2354 = vmatpush1.bf16.msra.mxu0 %v2252
  %2355 = vmatprep.subr.bf16.mxu0 %v2257
  %2356 = vmatpush1.bf16.msra.mxu0 %v2256
  %2357 = vmatprep.subr.bf16.mxu0 %v2261
  %2358 = vmatpush1.bf16.msra.mxu0 %v2260
  %2359 = vmatprep.subr.bf16.mxu0 %v2265
  %2360 = vmatpush1.bf16.msra.mxu0 %v2264
  %2361 = vmatprep.subr.bf16.mxu0 %v2269
  %2362 = vmatpush1.bf16.msra.mxu0 %v2268
  %2363 = vmatprep.subr.bf16.mxu0 %v2273
  %2364 = vmatpush1.bf16.msra.mxu0 %v2272
  %2365 = vmatprep.subr.bf16.mxu0 0
  %2366 = vmatpush1.bf16.msra.mxu0 0
  %2367 = vmatprep.subr.bf16.mxu0 0
  %2368 = vmatpush1.bf16.msra.mxu0 0
  %2369 = vmatprep.subr.bf16.mxu0 0
  %2370 = vmatpush1.bf16.msra.mxu0 0
  %2371 = vmatprep.subr.bf16.mxu0 0
  %2372 = vmatpush1.bf16.msra.mxu0 0
  %2373 = vmatprep.subr.bf16.mxu0 0
  %2374 = vmatpush1.bf16.msra.mxu0 0
  %2375 = vmatprep.subr.bf16.mxu0 0
  %2376 = vmatpush1.bf16.msra.mxu0 0
  %2377 = vmatprep.subr.bf16.mxu0 0
  %2378 = vmatpush1.bf16.msra.mxu0 0
  %2379 = vmatprep.subr.bf16.mxu0 0
  %2380 = vmatpush1.bf16.msra.mxu0 0
  %2381 = vmatprep.mubr.bf16.mxu0 0
  %2382 = vmatmul.mubr.bf16.gmra.mrb[0].mxu0 %v2091
  %v2383 = vpop.f32.mrb[0].mxu0
  %v2384 = vadd.f32 %v2137, %v2383
  %v2385 = vpop.f32.mrb[0].mxu0
  %v2386 = vadd.f32 %v2141, %v2385
  %v2387 = vpop.f32.mrb[0].mxu0
  %v2388 = vadd.f32 %v2137, %v2387
  %v2389 = vpop.f32.mrb[0].mxu0
  %v2390 = vadd.f32 %v2141, %v2389
  %2391 = vdwg.mxu0
  %v2392 = vpack.c.bf16 %v2345, %v2341
  %v2393 = vpack.c.bf16 %v2347, %v2343
  %v2394 = vpack.c.bf16 %v2388, %v2384
  %v2395 = vpack.c.bf16 %v2390, %v2386
  %2396 = vst [vmem:[%s1756] sm:$0xff] %v2392
  %2397 = vst [vmem:[%s1756 + $0x8] sm:$0xff] %v2393
  %2398 = vst [vmem:[%s1756 + $0x10] sm:$0xff] %v2394
  %2399 = vst [vmem:[%s1756 + $0x18] sm:$0xff] %v2395
  %s2400 = scalar_lea.vmem [#allocation2], 96
  %v2401 = vld [vmem:[%s2400] sm:$0xff]
  %v2402 = vld [vmem:[%s2400 + $0x8] sm:$0xff]
  %v2403 = vld [vmem:[%s2400 + $0x10] sm:$0xff]
  %v2404 = vld [vmem:[%s2400 + $0x18] sm:$0xff]
  %v2405 = vunpack.c.l.bf16 %v2401
  %v2406 = vunpack.c.l.bf16 %v2402
  %v2407 = vunpack.c.l.bf16 %v2403
  %v2408 = vunpack.c.l.bf16 %v2404
  %v2409 = vunpack.c.h.bf16 %v2401
  %v2410 = vunpack.c.h.bf16 %v2402
  %v2411 = vunpack.c.h.bf16 %v2403
  %v2412 = vunpack.c.h.bf16 %v2404
  %v2413 = vld [vmem:[%s2] sm:$0xff]
  %v2414 = vld [vmem:[%s2 + $0x8] sm:$0xff]
  %v2415 = vld [vmem:[%s2 + $0x10] sm:$0xff]
  %v2416 = vld [vmem:[%s2 + $0x18] sm:$0xff]
  %v2417 = vld [vmem:[%s2 + $0x20] sm:$0xff]
  %v2418 = vld [vmem:[%s2 + $0x28] sm:$0xff]
  %v2419 = vld [vmem:[%s2 + $0x30] sm:$0xff]
  %v2420 = vld [vmem:[%s2 + $0x38] sm:$0xff]
  %v2421 = vld [vmem:[%s2 + $0x40] sm:$0xff]
  %v2422 = vld [vmem:[%s2 + $0x48] sm:$0xff]
  %v2423 = vld [vmem:[%s2 + $0x50] sm:$0xff]
  %v2424 = vld [vmem:[%s2 + $0x58] sm:$0xff]
  %v2425 = vld [vmem:[%s2 + $0x60] sm:$0xff]
  %v2426 = vld [vmem:[%s2 + $0x68] sm:$0xff]
  %v2427 = vld [vmem:[%s2 + $0x70] sm:$0xff]
  %v2428 = vld [vmem:[%s2 + $0x78] sm:$0xff]
  %v2429 = vld [vmem:[%s2 + $0x80] sm:$0xff]
  %v2430 = vld [vmem:[%s2 + $0x88] sm:$0xff]
  %v2431 = vld [vmem:[%s2 + $0x90] sm:$0xff]
  %v2432 = vld [vmem:[%s2 + $0x98] sm:$0xff]
  %v2433 = vld [vmem:[%s2 + $0xa0] sm:$0xff]
  %v2434 = vld [vmem:[%s2 + $0xa8] sm:$0xff]
  %v2435 = vld [vmem:[%s2 + $0xb0] sm:$0xff]
  %v2436 = vld [vmem:[%s2 + $0xb8] sm:$0xff]
  %v2437 = vld [vmem:[%s2 + $0xc0] sm:$0xff]
  %v2438 = vld [vmem:[%s2 + $0xc8] sm:$0xff]
  %v2439 = vld [vmem:[%s2 + $0xd0] sm:$0xff]
  %v2440 = vld [vmem:[%s2 + $0xd8] sm:$0xff]
  %v2441 = vld [vmem:[%s2 + $0xe0] sm:$0xff]
  %v2442 = vld [vmem:[%s2 + $0xe8] sm:$0xff]
  %v2443 = vld [vmem:[%s2 + $0xf0] sm:$0xff]
  %v2444 = vld [vmem:[%s2 + $0xf8] sm:$0xff]
  %v2477 = vunpack.c.l.b16 %v2413
  %v2478 = vunpack.c.h.b16 %v2413
  %v2479 = vunpack.c.l.b16 %v2414
  %v2480 = vunpack.c.h.b16 %v2414
  %v2481 = vunpack.c.l.b16 %v2415
  %v2482 = vunpack.c.h.b16 %v2415
  %v2483 = vunpack.c.l.b16 %v2416
  %v2484 = vunpack.c.h.b16 %v2416
  %v2485 = vunpack.c.l.b16 %v2417
  %v2486 = vunpack.c.h.b16 %v2417
  %v2487 = vunpack.c.l.b16 %v2418
  %v2488 = vunpack.c.h.b16 %v2418
  %v2489 = vunpack.c.l.b16 %v2419
  %v2490 = vunpack.c.h.b16 %v2419
  %v2491 = vunpack.c.l.b16 %v2420
  %v2492 = vunpack.c.h.b16 %v2420
  %v2493 = vunpack.c.l.b16 %v2421
  %v2494 = vunpack.c.h.b16 %v2421
  %v2495 = vunpack.c.l.b16 %v2422
  %v2496 = vunpack.c.h.b16 %v2422
  %v2497 = vunpack.c.l.b16 %v2423
  %v2498 = vunpack.c.h.b16 %v2423
  %v2499 = vunpack.c.l.b16 %v2424
  %v2500 = vunpack.c.h.b16 %v2424
  %v2501 = vunpack.c.l.b16 %v2425
  %v2502 = vunpack.c.h.b16 %v2425
  %v2503 = vunpack.c.l.b16 %v2426
  %v2504 = vunpack.c.h.b16 %v2426
  %v2505 = vunpack.c.l.b16 %v2427
  %v2506 = vunpack.c.h.b16 %v2427
  %v2507 = vunpack.c.l.b16 %v2428
  %v2508 = vunpack.c.h.b16 %v2428
  %v2509 = vunpack.c.l.b16 %v2429
  %v2510 = vunpack.c.h.b16 %v2429
  %v2511 = vunpack.c.l.b16 %v2430
  %v2512 = vunpack.c.h.b16 %v2430
  %v2513 = vunpack.c.l.b16 %v2431
  %v2514 = vunpack.c.h.b16 %v2431
  %v2515 = vunpack.c.l.b16 %v2432
  %v2516 = vunpack.c.h.b16 %v2432
  %v2517 = vunpack.c.l.b16 %v2433
  %v2518 = vunpack.c.h.b16 %v2433
  %v2519 = vunpack.c.l.b16 %v2434
  %v2520 = vunpack.c.h.b16 %v2434
  %v2521 = vunpack.c.l.b16 %v2435
  %v2522 = vunpack.c.h.b16 %v2435
  %v2523 = vunpack.c.l.b16 %v2436
  %v2524 = vunpack.c.h.b16 %v2436
  %v2525 = vunpack.c.l.b16 %v2437
  %v2526 = vunpack.c.h.b16 %v2437
  %v2527 = vunpack.c.l.b16 %v2438
  %v2528 = vunpack.c.h.b16 %v2438
  %v2529 = vunpack.c.l.b16 %v2439
  %v2530 = vunpack.c.h.b16 %v2439
  %v2531 = vunpack.c.l.b16 %v2440
  %v2532 = vunpack.c.h.b16 %v2440
  %v2533 = vunpack.c.l.b16 %v2441
  %v2534 = vunpack.c.h.b16 %v2441
  %v2535 = vunpack.c.l.b16 %v2442
  %v2536 = vunpack.c.h.b16 %v2442
  %v2537 = vunpack.c.l.b16 %v2443
  %v2538 = vunpack.c.h.b16 %v2443
  %v2539 = vunpack.c.l.b16 %v2444
  %v2540 = vunpack.c.h.b16 %v2444
  %v2541 = vpack.c.b16 %v2481, %v2477
  %v2542 = vpack.c.b16 %v2482, %v2478
  %v2543 = vpack.c.b16 %v2483, %v2479
  %v2544 = vpack.c.b16 %v2484, %v2480
  %v2545 = vpack.c.b16 %v2489, %v2485
  %v2546 = vpack.c.b16 %v2490, %v2486
  %v2547 = vpack.c.b16 %v2491, %v2487
  %v2548 = vpack.c.b16 %v2492, %v2488
  %v2549 = vpack.c.b16 %v2497, %v2493
  %v2550 = vpack.c.b16 %v2498, %v2494
  %v2551 = vpack.c.b16 %v2499, %v2495
  %v2552 = vpack.c.b16 %v2500, %v2496
  %v2553 = vpack.c.b16 %v2505, %v2501
  %v2554 = vpack.c.b16 %v2506, %v2502
  %v2555 = vpack.c.b16 %v2507, %v2503
  %v2556 = vpack.c.b16 %v2508, %v2504
  %v2557 = vpack.c.b16 %v2513, %v2509
  %v2558 = vpack.c.b16 %v2514, %v2510
  %v2559 = vpack.c.b16 %v2515, %v2511
  %v2560 = vpack.c.b16 %v2516, %v2512
  %v2561 = vpack.c.b16 %v2521, %v2517
  %v2562 = vpack.c.b16 %v2522, %v2518
  %v2563 = vpack.c.b16 %v2523, %v2519
  %v2564 = vpack.c.b16 %v2524, %v2520
  %v2565 = vpack.c.b16 %v2529, %v2525
  %v2566 = vpack.c.b16 %v2530, %v2526
  %v2567 = vpack.c.b16 %v2531, %v2527
  %v2568 = vpack.c.b16 %v2532, %v2528
  %v2569 = vpack.c.b16 %v2537, %v2533
  %v2570 = vpack.c.b16 %v2538, %v2534
  %v2571 = vpack.c.b16 %v2539, %v2535
  %v2572 = vpack.c.b16 %v2540, %v2536
  %2605 = vmatprep.subr.bf16.mxu0 %v2542
  %2606 = vmatpush1.bf16.msra.mxu0 %v2541
  %2607 = vmatprep.subr.bf16.mxu0 %v2546
  %2608 = vmatpush1.bf16.msra.mxu0 %v2545
  %2609 = vmatprep.subr.bf16.mxu0 %v2550
  %2610 = vmatpush1.bf16.msra.mxu0 %v2549
  %2611 = vmatprep.subr.bf16.mxu0 %v2554
  %2612 = vmatpush1.bf16.msra.mxu0 %v2553
  %2613 = vmatprep.subr.bf16.mxu0 %v2558
  %2614 = vmatpush1.bf16.msra.mxu0 %v2557
  %2615 = vmatprep.subr.bf16.mxu0 %v2562
  %2616 = vmatpush1.bf16.msra.mxu0 %v2561
  %2617 = vmatprep.subr.bf16.mxu0 %v2566
  %2618 = vmatpush1.bf16.msra.mxu0 %v2565
  %2619 = vmatprep.subr.bf16.mxu0 %v2570
  %2620 = vmatpush1.bf16.msra.mxu0 %v2569
  %2621 = vmatprep.subr.bf16.mxu0 0
  %2622 = vmatpush1.bf16.msra.mxu0 0
  %2623 = vmatprep.subr.bf16.mxu0 0
  %2624 = vmatpush1.bf16.msra.mxu0 0
  %2625 = vmatprep.subr.bf16.mxu0 0
  %2626 = vmatpush1.bf16.msra.mxu0 0
  %2627 = vmatprep.subr.bf16.mxu0 0
  %2628 = vmatpush1.bf16.msra.mxu0 0
  %2629 = vmatprep.subr.bf16.mxu0 0
  %2630 = vmatpush1.bf16.msra.mxu0 0
  %2631 = vmatprep.subr.bf16.mxu0 0
  %2632 = vmatpush1.bf16.msra.mxu0 0
  %2633 = vmatprep.subr.bf16.mxu0 0
  %2634 = vmatpush1.bf16.msra.mxu0 0
  %2635 = vmatprep.subr.bf16.mxu0 0
  %2636 = vmatpush1.bf16.msra.mxu0 0
  %2637 = vmatprep.mubr.bf16.mxu0 0
  %2638 = vmatmul.mubr.bf16.gmra.mrb[0].mxu0 %v2091
  %v2639 = vpop.f32.mrb[0].mxu0
  %v2640 = vadd.f32 0.0, %v2639
  %v2641 = vpop.f32.mrb[0].mxu0
  %v2642 = vadd.f32 0.0, %v2641
  %v2643 = vpop.f32.mrb[0].mxu0
  %v2644 = vadd.f32 0.0, %v2643
  %v2645 = vpop.f32.mrb[0].mxu0
  %v2646 = vadd.f32 0.0, %v2645
  %2647 = vdwg.mxu0
  %2648 = vmatprep.subr.bf16.mxu0 %v2544
  %2649 = vmatpush1.bf16.msra.mxu0 %v2543
  %2650 = vmatprep.subr.bf16.mxu0 %v2548
  %2651 = vmatpush1.bf16.msra.mxu0 %v2547
  %2652 = vmatprep.subr.bf16.mxu0 %v2552
  %2653 = vmatpush1.bf16.msra.mxu0 %v2551
  %2654 = vmatprep.subr.bf16.mxu0 %v2556
  %2655 = vmatpush1.bf16.msra.mxu0 %v2555
  %2656 = vmatprep.subr.bf16.mxu0 %v2560
  %2657 = vmatpush1.bf16.msra.mxu0 %v2559
  %2658 = vmatprep.subr.bf16.mxu0 %v2564
  %2659 = vmatpush1.bf16.msra.mxu0 %v2563
  %2660 = vmatprep.subr.bf16.mxu0 %v2568
  %2661 = vmatpush1.bf16.msra.mxu0 %v2567
  %2662 = vmatprep.subr.bf16.mxu0 %v2572
  %2663 = vmatpush1.bf16.msra.mxu0 %v2571
  %2664 = vmatprep.subr.bf16.mxu0 0
  %2665 = vmatpush1.bf16.msra.mxu0 0
  %2666 = vmatprep.subr.bf16.mxu0 0
  %2667 = vmatpush1.bf16.msra.mxu0 0
  %2668 = vmatprep.subr.bf16.mxu0 0
  %2669 = vmatpush1.bf16.msra.mxu0 0
  %2670 = vmatprep.subr.bf16.mxu0 0
  %2671 = vmatpush1.bf16.msra.mxu0 0
  %2672 = vmatprep.subr.bf16.mxu0 0
  %2673 = vmatpush1.bf16.msra.mxu0 0
  %2674 = vmatprep.subr.bf16.mxu0 0
  %2675 = vmatpush1.bf16.msra.mxu0 0
  %2676 = vmatprep.subr.bf16.mxu0 0
  %2677 = vmatpush1.bf16.msra.mxu0 0
  %2678 = vmatprep.subr.bf16.mxu0 0
  %2679 = vmatpush1.bf16.msra.mxu0 0
  %2680 = vmatprep.mubr.bf16.mxu0 0
  %2681 = vmatmul.mubr.bf16.gmra.mrb[0].mxu0 %v2091
  %v2682 = vpop.f32.mrb[0].mxu0
  %v2683 = vadd.f32 0.0, %v2682
  %v2684 = vpop.f32.mrb[0].mxu0
  %v2685 = vadd.f32 0.0, %v2684
  %v2686 = vpop.f32.mrb[0].mxu0
  %v2687 = vadd.f32 0.0, %v2686
  %v2688 = vpop.f32.mrb[0].mxu0
  %v2689 = vadd.f32 0.0, %v2688
  %2690 = vdwg.mxu0
  %v2691 = vadd.f32 %v2405, %v2640
  %v2692 = vadd.f32 %v2406, %v2642
  %v2693 = vadd.f32 %v2407, %v2683
  %v2694 = vadd.f32 %v2408, %v2685
  %v2695 = vadd.f32 %v2409, %v2644
  %v2696 = vadd.f32 %v2410, %v2646
  %v2697 = vadd.f32 %v2411, %v2687
  %v2698 = vadd.f32 %v2412, %v2689
  %v2699 = vmul.f32 %v2691, 0.5
  %v2700 = vmul.f32 %v2692, 0.5
  %v2701 = vmul.f32 %v2693, 0.5
  %v2702 = vmul.f32 %v2695, 0.5
  %v2703 = vmul.f32 %v2696, 0.5
  %v2704 = vmul.f32 %v2697, 0.5
  %v2705 = vtanh.pop %v2699
  %v2706 = vtanh.pop %v2700
  %v2707 = vtanh.pop %v2701
  %v2708 = vtanh.pop %v2702
  %v2709 = vtanh.pop %v2703
  %v2710 = vtanh.pop %v2704
  %v2711 = vmul.f32 %v2705, 0.5
  %v2712 = vmul.f32 %v2706, 0.5
  %v2713 = vmul.f32 %v2707, 0.5
  %v2714 = vmul.f32 %v2708, 0.5
  %v2715 = vmul.f32 %v2709, 0.5
  %v2716 = vmul.f32 %v2710, 0.5
  %v2717 = vadd.f32 %v2711, 0.5
  %v2718 = vadd.f32 %v2712, 0.5
  %v2719 = vadd.f32 %v2713, 0.5
  %v2720 = vadd.f32 %v2714, 0.5
  %v2721 = vadd.f32 %v2715, 0.5
  %v2722 = vadd.f32 %v2716, 0.5
  %v2723 = vtanh.pop %v2694
  %v2724 = vtanh.pop %v2698
  %v2725 = vmul.f32 %v2718, %v2085
  %v2726 = vmul.f32 %v2721, %v2086
  %v2727 = vmul.f32 %v2717, %v2723
  %v2728 = vmul.f32 %v2720, %v2724
  %v2729 = vadd.f32 %v2725, %v2727
  %v2730 = vadd.f32 %v2726, %v2728
  %v2731 = vtanh.pop %v2729
  %v2732 = vtanh.pop %v2730
  %v2733 = vmul.f32 %v2719, %v2731
  %v2734 = vmul.f32 %v2722, %v2732
  %v2735 = vpack.c.bf16 %v2734, %v2733
  %v2736 = vld [vmem:[%s4] sm:$0xff]
  %v2737 = vld [vmem:[%s4 + $0x8] sm:$0xff]
  %v2738 = vld [vmem:[%s4 + $0x10] sm:$0xff]
  %v2739 = vld [vmem:[%s4 + $0x18] sm:$0xff]
  %v2740 = vld [vmem:[%s4 + $0x20] sm:$0xff]
  %v2741 = vld [vmem:[%s4 + $0x28] sm:$0xff]
  %v2742 = vld [vmem:[%s4 + $0x30] sm:$0xff]
  %v2743 = vld [vmem:[%s4 + $0x38] sm:$0xff]
  %v2744 = vld [vmem:[%s4 + $0x40] sm:$0xff]
  %v2745 = vld [vmem:[%s4 + $0x48] sm:$0xff]
  %v2746 = vld [vmem:[%s4 + $0x50] sm:$0xff]
  %v2747 = vld [vmem:[%s4 + $0x58] sm:$0xff]
  %v2748 = vld [vmem:[%s4 + $0x60] sm:$0xff]
  %v2749 = vld [vmem:[%s4 + $0x68] sm:$0xff]
  %v2750 = vld [vmem:[%s4 + $0x70] sm:$0xff]
  %v2751 = vld [vmem:[%s4 + $0x78] sm:$0xff]
  %v2752 = vld [vmem:[%s4 + $0x80] sm:$0xff]
  %v2753 = vld [vmem:[%s4 + $0x88] sm:$0xff]
  %v2754 = vld [vmem:[%s4 + $0x90] sm:$0xff]
  %v2755 = vld [vmem:[%s4 + $0x98] sm:$0xff]
  %v2756 = vld [vmem:[%s4 + $0xa0] sm:$0xff]
  %v2757 = vld [vmem:[%s4 + $0xa8] sm:$0xff]
  %v2758 = vld [vmem:[%s4 + $0xb0] sm:$0xff]
  %v2759 = vld [vmem:[%s4 + $0xb8] sm:$0xff]
  %v2760 = vld [vmem:[%s4 + $0xc0] sm:$0xff]
  %v2761 = vld [vmem:[%s4 + $0xc8] sm:$0xff]
  %v2762 = vld [vmem:[%s4 + $0xd0] sm:$0xff]
  %v2763 = vld [vmem:[%s4 + $0xd8] sm:$0xff]
  %v2764 = vld [vmem:[%s4 + $0xe0] sm:$0xff]
  %v2765 = vld [vmem:[%s4 + $0xe8] sm:$0xff]
  %v2766 = vld [vmem:[%s4 + $0xf0] sm:$0xff]
  %v2767 = vld [vmem:[%s4 + $0xf8] sm:$0xff]
  %v2768 = vld [vmem:[%s6] sm:$0xf]
  %v2770 = vlaneseq
  %v2771 = vshrl.u32 %v2770, 7
  %v2772 = vsub.s32 0, %v2771
  %v2773 = vrot.slane %v2768, %v2772
  %v2774 = vlaneseq
  %v2775 = vshrl.u32 %v2774, 7
  %v2776 = vsub.s32 1, %v2775
  %v2777 = vrot.slane %v2768, %v2776
  %v2778 = vlaneseq
  %v2779 = vshrl.u32 %v2778, 7
  %v2780 = vsub.s32 2, %v2779
  %v2781 = vrot.slane %v2768, %v2780
  %v2782 = vlaneseq
  %v2783 = vshrl.u32 %v2782, 7
  %v2784 = vsub.s32 3, %v2783
  %v2785 = vrot.slane %v2768, %v2784
  %v2822 = vunpack.c.l.b16 %v2736
  %v2823 = vunpack.c.h.b16 %v2736
  %v2824 = vunpack.c.l.b16 %v2737
  %v2825 = vunpack.c.h.b16 %v2737
  %v2826 = vunpack.c.l.b16 %v2738
  %v2827 = vunpack.c.h.b16 %v2738
  %v2828 = vunpack.c.l.b16 %v2739
  %v2829 = vunpack.c.h.b16 %v2739
  %v2830 = vunpack.c.l.b16 %v2740
  %v2831 = vunpack.c.h.b16 %v2740
  %v2832 = vunpack.c.l.b16 %v2741
  %v2833 = vunpack.c.h.b16 %v2741
  %v2834 = vunpack.c.l.b16 %v2742
  %v2835 = vunpack.c.h.b16 %v2742
  %v2836 = vunpack.c.l.b16 %v2743
  %v2837 = vunpack.c.h.b16 %v2743
  %v2838 = vunpack.c.l.b16 %v2744
  %v2839 = vunpack.c.h.b16 %v2744
  %v2840 = vunpack.c.l.b16 %v2745
  %v2841 = vunpack.c.h.b16 %v2745
  %v2842 = vunpack.c.l.b16 %v2746
  %v2843 = vunpack.c.h.b16 %v2746
  %v2844 = vunpack.c.l.b16 %v2747
  %v2845 = vunpack.c.h.b16 %v2747
  %v2846 = vunpack.c.l.b16 %v2748
  %v2847 = vunpack.c.h.b16 %v2748
  %v2848 = vunpack.c.l.b16 %v2749
  %v2849 = vunpack.c.h.b16 %v2749
  %v2850 = vunpack.c.l.b16 %v2750
  %v2851 = vunpack.c.h.b16 %v2750
  %v2852 = vunpack.c.l.b16 %v2751
  %v2853 = vunpack.c.h.b16 %v2751
  %v2854 = vunpack.c.l.b16 %v2752
  %v2855 = vunpack.c.h.b16 %v2752
  %v2856 = vunpack.c.l.b16 %v2753
  %v2857 = vunpack.c.h.b16 %v2753
  %v2858 = vunpack.c.l.b16 %v2754
  %v2859 = vunpack.c.h.b16 %v2754
  %v2860 = vunpack.c.l.b16 %v2755
  %v2861 = vunpack.c.h.b16 %v2755
  %v2862 = vunpack.c.l.b16 %v2756
  %v2863 = vunpack.c.h.b16 %v2756
  %v2864 = vunpack.c.l.b16 %v2757
  %v2865 = vunpack.c.h.b16 %v2757
  %v2866 = vunpack.c.l.b16 %v2758
  %v2867 = vunpack.c.h.b16 %v2758
  %v2868 = vunpack.c.l.b16 %v2759
  %v2869 = vunpack.c.h.b16 %v2759
  %v2870 = vunpack.c.l.b16 %v2760
  %v2871 = vunpack.c.h.b16 %v2760
  %v2872 = vunpack.c.l.b16 %v2761
  %v2873 = vunpack.c.h.b16 %v2761
  %v2874 = vunpack.c.l.b16 %v2762
  %v2875 = vunpack.c.h.b16 %v2762
  %v2876 = vunpack.c.l.b16 %v2763
  %v2877 = vunpack.c.h.b16 %v2763
  %v2878 = vunpack.c.l.b16 %v2764
  %v2879 = vunpack.c.h.b16 %v2764
  %v2880 = vunpack.c.l.b16 %v2765
  %v2881 = vunpack.c.h.b16 %v2765
  %v2882 = vunpack.c.l.b16 %v2766
  %v2883 = vunpack.c.h.b16 %v2766
  %v2884 = vunpack.c.l.b16 %v2767
  %v2885 = vunpack.c.h.b16 %v2767
  %v2886 = vpack.c.b16 %v2826, %v2822
  %v2887 = vpack.c.b16 %v2827, %v2823
  %v2888 = vpack.c.b16 %v2828, %v2824
  %v2889 = vpack.c.b16 %v2829, %v2825
  %v2890 = vpack.c.b16 %v2834, %v2830
  %v2891 = vpack.c.b16 %v2835, %v2831
  %v2892 = vpack.c.b16 %v2836, %v2832
  %v2893 = vpack.c.b16 %v2837, %v2833
  %v2894 = vpack.c.b16 %v2842, %v2838
  %v2895 = vpack.c.b16 %v2843, %v2839
  %v2896 = vpack.c.b16 %v2844, %v2840
  %v2897 = vpack.c.b16 %v2845, %v2841
  %v2898 = vpack.c.b16 %v2850, %v2846
  %v2899 = vpack.c.b16 %v2851, %v2847
  %v2900 = vpack.c.b16 %v2852, %v2848
  %v2901 = vpack.c.b16 %v2853, %v2849
  %v2902 = vpack.c.b16 %v2858, %v2854
  %v2903 = vpack.c.b16 %v2859, %v2855
  %v2904 = vpack.c.b16 %v2860, %v2856
  %v2905 = vpack.c.b16 %v2861, %v2857
  %v2906 = vpack.c.b16 %v2866, %v2862
  %v2907 = vpack.c.b16 %v2867, %v2863
  %v2908 = vpack.c.b16 %v2868, %v2864
  %v2909 = vpack.c.b16 %v2869, %v2865
  %v2910 = vpack.c.b16 %v2874, %v2870
  %v2911 = vpack.c.b16 %v2875, %v2871
  %v2912 = vpack.c.b16 %v2876, %v2872
  %v2913 = vpack.c.b16 %v2877, %v2873
  %v2914 = vpack.c.b16 %v2882, %v2878
  %v2915 = vpack.c.b16 %v2883, %v2879
  %v2916 = vpack.c.b16 %v2884, %v2880
  %v2917 = vpack.c.b16 %v2885, %v2881
  %2950 = vmatprep.subr.bf16.mxu0 %v2887
  %2951 = vmatpush1.bf16.msra.mxu0 %v2886
  %2952 = vmatprep.subr.bf16.mxu0 %v2891
  %2953 = vmatpush1.bf16.msra.mxu0 %v2890
  %2954 = vmatprep.subr.bf16.mxu0 %v2895
  %2955 = vmatpush1.bf16.msra.mxu0 %v2894
  %2956 = vmatprep.subr.bf16.mxu0 %v2899
  %2957 = vmatpush1.bf16.msra.mxu0 %v2898
  %2958 = vmatprep.subr.bf16.mxu0 %v2903
  %2959 = vmatpush1.bf16.msra.mxu0 %v2902
  %2960 = vmatprep.subr.bf16.mxu0 %v2907
  %2961 = vmatpush1.bf16.msra.mxu0 %v2906
  %2962 = vmatprep.subr.bf16.mxu0 %v2911
  %2963 = vmatpush1.bf16.msra.mxu0 %v2910
  %2964 = vmatprep.subr.bf16.mxu0 %v2915
  %2965 = vmatpush1.bf16.msra.mxu0 %v2914
  %2966 = vmatprep.subr.bf16.mxu0 0
  %2967 = vmatpush1.bf16.msra.mxu0 0
  %2968 = vmatprep.subr.bf16.mxu0 0
  %2969 = vmatpush1.bf16.msra.mxu0 0
  %2970 = vmatprep.subr.bf16.mxu0 0
  %2971 = vmatpush1.bf16.msra.mxu0 0
  %2972 = vmatprep.subr.bf16.mxu0 0
  %2973 = vmatpush1.bf16.msra.mxu0 0
  %2974 = vmatprep.subr.bf16.mxu0 0
  %2975 = vmatpush1.bf16.msra.mxu0 0
  %2976 = vmatprep.subr.bf16.mxu0 0
  %2977 = vmatpush1.bf16.msra.mxu0 0
  %2978 = vmatprep.subr.bf16.mxu0 0
  %2979 = vmatpush1.bf16.msra.mxu0 0
  %2980 = vmatprep.subr.bf16.mxu0 0
  %2981 = vmatpush1.bf16.msra.mxu0 0
  %2982 = vmatprep.mubr.bf16.mxu0 0
  %2983 = vmatmul.mubr.bf16.gmra.mrb[0].mxu0 %v2735
  %v2984 = vpop.f32.mrb[0].mxu0
  %v2985 = vadd.f32 %v2773, %v2984
  %v2986 = vpop.f32.mrb[0].mxu0
  %v2987 = vadd.f32 %v2777, %v2986
  %v2988 = vpop.f32.mrb[0].mxu0
  %v2989 = vadd.f32 %v2773, %v2988
  %v2990 = vpop.f32.mrb[0].mxu0
  %v2991 = vadd.f32 %v2777, %v2990
  %2992 = vdwg.mxu0
  %2993 = vmatprep.subr.bf16.mxu0 %v2889
  %2994 = vmatpush1.bf16.msra.mxu0 %v2888
  %2995 = vmatprep.subr.bf16.mxu0 %v2893
  %2996 = vmatpush1.bf16.msra.mxu0 %v2892
  %2997 = vmatprep.subr.bf16.mxu0 %v2897
  %2998 = vmatpush1.bf16.msra.mxu0 %v2896
  %2999 = vmatprep.subr.bf16.mxu0 %v2901
  %3000 = vmatpush1.bf16.msra.mxu0 %v2900
  %3001 = vmatprep.subr.bf16.mxu0 %v2905
  %3002 = vmatpush1.bf16.msra.mxu0 %v2904
  %3003 = vmatprep.subr.bf16.mxu0 %v2909
  %3004 = vmatpush1.bf16.msra.mxu0 %v2908
  %3005 = vmatprep.subr.bf16.mxu0 %v2913
  %3006 = vmatpush1.bf16.msra.mxu0 %v2912
  %3007 = vmatprep.subr.bf16.mxu0 %v2917
  %3008 = vmatpush1.bf16.msra.mxu0 %v2916
  %3009 = vmatprep.subr.bf16.mxu0 0
  %3010 = vmatpush1.bf16.msra.mxu0 0
  %3011 = vmatprep.subr.bf16.mxu0 0
  %3012 = vmatpush1.bf16.msra.mxu0 0
  %3013 = vmatprep.subr.bf16.mxu0 0
  %3014 = vmatpush1.bf16.msra.mxu0 0
  %3015 = vmatprep.subr.bf16.mxu0 0
  %3016 = vmatpush1.bf16.msra.mxu0 0
  %3017 = vmatprep.subr.bf16.mxu0 0
  %3018 = vmatpush1.bf16.msra.mxu0 0
  %3019 = vmatprep.subr.bf16.mxu0 0
  %3020 = vmatpush1.bf16.msra.mxu0 0
  %3021 = vmatprep.subr.bf16.mxu0 0
  %3022 = vmatpush1.bf16.msra.mxu0 0
  %3023 = vmatprep.subr.bf16.mxu0 0
  %3024 = vmatpush1.bf16.msra.mxu0 0
  %3025 = vmatprep.mubr.bf16.mxu0 0
  %3026 = vmatmul.mubr.bf16.gmra.mrb[0].mxu0 %v2735
  %v3027 = vpop.f32.mrb[0].mxu0
  %v3028 = vadd.f32 %v2781, %v3027
  %v3029 = vpop.f32.mrb[0].mxu0
  %v3030 = vadd.f32 %v2785, %v3029
  %v3031 = vpop.f32.mrb[0].mxu0
  %v3032 = vadd.f32 %v2781, %v3031
  %v3033 = vpop.f32.mrb[0].mxu0
  %v3034 = vadd.f32 %v2785, %v3033
  %3035 = vdwg.mxu0
  %v3036 = vpack.c.bf16 %v2989, %v2985
  %v3037 = vpack.c.bf16 %v2991, %v2987
  %v3038 = vpack.c.bf16 %v3032, %v3028
  %v3039 = vpack.c.bf16 %v3034, %v3030
  %3040 = vst [vmem:[%s2400] sm:$0xff] %v3036
  %3041 = vst [vmem:[%s2400 + $0x8] sm:$0xff] %v3037
  %3042 = vst [vmem:[%s2400 + $0x10] sm:$0xff] %v3038
  %3043 = vst [vmem:[%s2400 + $0x18] sm:$0xff] %v3039
  %s3044 = scalar_lea.vmem [#allocation2], 128
  %v3045 = vld [vmem:[%s3044] sm:$0xff]
  %v3046 = vld [vmem:[%s3044 + $0x8] sm:$0xff]
  %v3047 = vld [vmem:[%s3044 + $0x10] sm:$0xff]
  %v3048 = vld [vmem:[%s3044 + $0x18] sm:$0xff]
  %v3049 = vunpack.c.l.bf16 %v3045
  %v3050 = vunpack.c.l.bf16 %v3046
  %v3051 = vunpack.c.l.bf16 %v3047
  %v3052 = vunpack.c.l.bf16 %v3048
  %v3053 = vunpack.c.h.bf16 %v3045
  %v3054 = vunpack.c.h.bf16 %v3046
  %v3055 = vunpack.c.h.bf16 %v3047
  %v3056 = vunpack.c.h.bf16 %v3048
  %v3057 = vld [vmem:[%s2] sm:$0xff]
  %v3058 = vld [vmem:[%s2 + $0x8] sm:$0xff]
  %v3059 = vld [vmem:[%s2 + $0x10] sm:$0xff]
  %v3060 = vld [vmem:[%s2 + $0x18] sm:$0xff]
  %v3061 = vld [vmem:[%s2 + $0x20] sm:$0xff]
  %v3062 = vld [vmem:[%s2 + $0x28] sm:$0xff]
  %v3063 = vld [vmem:[%s2 + $0x30] sm:$0xff]
  %v3064 = vld [vmem:[%s2 + $0x38] sm:$0xff]
  %v3065 = vld [vmem:[%s2 + $0x40] sm:$0xff]
  %v3066 = vld [vmem:[%s2 + $0x48] sm:$0xff]
  %v3067 = vld [vmem:[%s2 + $0x50] sm:$0xff]
  %v3068 = vld [vmem:[%s2 + $0x58] sm:$0xff]
  %v3069 = vld [vmem:[%s2 + $0x60] sm:$0xff]
  %v3070 = vld [vmem:[%s2 + $0x68] sm:$0xff]
  %v3071 = vld [vmem:[%s2 + $0x70] sm:$0xff]
  %v3072 = vld [vmem:[%s2 + $0x78] sm:$0xff]
  %v3073 = vld [vmem:[%s2 + $0x80] sm:$0xff]
  %v3074 = vld [vmem:[%s2 + $0x88] sm:$0xff]
  %v3075 = vld [vmem:[%s2 + $0x90] sm:$0xff]
  %v3076 = vld [vmem:[%s2 + $0x98] sm:$0xff]
  %v3077 = vld [vmem:[%s2 + $0xa0] sm:$0xff]
  %v3078 = vld [vmem:[%s2 + $0xa8] sm:$0xff]
  %v3079 = vld [vmem:[%s2 + $0xb0] sm:$0xff]
  %v3080 = vld [vmem:[%s2 + $0xb8] sm:$0xff]
  %v3081 = vld [vmem:[%s2 + $0xc0] sm:$0xff]
  %v3082 = vld [vmem:[%s2 + $0xc8] sm:$0xff]
  %v3083 = vld [vmem:[%s2 + $0xd0] sm:$0xff]
  %v3084 = vld [vmem:[%s2 + $0xd8] sm:$0xff]
  %v3085 = vld [vmem:[%s2 + $0xe0] sm:$0xff]
  %v3086 = vld [vmem:[%s2 + $0xe8] sm:$0xff]
  %v3087 = vld [vmem:[%s2 + $0xf0] sm:$0xff]
  %v3088 = vld [vmem:[%s2 + $0xf8] sm:$0xff]
  %v3121 = vunpack.c.l.b16 %v3057
  %v3122 = vunpack.c.h.b16 %v3057
  %v3123 = vunpack.c.l.b16 %v3058
  %v3124 = vunpack.c.h.b16 %v3058
  %v3125 = vunpack.c.l.b16 %v3059
  %v3126 = vunpack.c.h.b16 %v3059
  %v3127 = vunpack.c.l.b16 %v3060
  %v3128 = vunpack.c.h.b16 %v3060
  %v3129 = vunpack.c.l.b16 %v3061
  %v3130 = vunpack.c.h.b16 %v3061
  %v3131 = vunpack.c.l.b16 %v3062
  %v3132 = vunpack.c.h.b16 %v3062
  %v3133 = vunpack.c.l.b16 %v3063
  %v3134 = vunpack.c.h.b16 %v3063
  %v3135 = vunpack.c.l.b16 %v3064
  %v3136 = vunpack.c.h.b16 %v3064
  %v3137 = vunpack.c.l.b16 %v3065
  %v3138 = vunpack.c.h.b16 %v3065
  %v3139 = vunpack.c.l.b16 %v3066
  %v3140 = vunpack.c.h.b16 %v3066
  %v3141 = vunpack.c.l.b16 %v3067
  %v3142 = vunpack.c.h.b16 %v3067
  %v3143 = vunpack.c.l.b16 %v3068
  %v3144 = vunpack.c.h.b16 %v3068
  %v3145 = vunpack.c.l.b16 %v3069
  %v3146 = vunpack.c.h.b16 %v3069
  %v3147 = vunpack.c.l.b16 %v3070
  %v3148 = vunpack.c.h.b16 %v3070
  %v3149 = vunpack.c.l.b16 %v3071
  %v3150 = vunpack.c.h.b16 %v3071
  %v3151 = vunpack.c.l.b16 %v3072
  %v3152 = vunpack.c.h.b16 %v3072
  %v3153 = vunpack.c.l.b16 %v3073
  %v3154 = vunpack.c.h.b16 %v3073
  %v3155 = vunpack.c.l.b16 %v3074
  %v3156 = vunpack.c.h.b16 %v3074
  %v3157 = vunpack.c.l.b16 %v3075
  %v3158 = vunpack.c.h.b16 %v3075
  %v3159 = vunpack.c.l.b16 %v3076
  %v3160 = vunpack.c.h.b16 %v3076
  %v3161 = vunpack.c.l.b16 %v3077
  %v3162 = vunpack.c.h.b16 %v3077
  %v3163 = vunpack.c.l.b16 %v3078
  %v3164 = vunpack.c.h.b16 %v3078
  %v3165 = vunpack.c.l.b16 %v3079
  %v3166 = vunpack.c.h.b16 %v3079
  %v3167 = vunpack.c.l.b16 %v3080
  %v3168 = vunpack.c.h.b16 %v3080
  %v3169 = vunpack.c.l.b16 %v3081
  %v3170 = vunpack.c.h.b16 %v3081
  %v3171 = vunpack.c.l.b16 %v3082
  %v3172 = vunpack.c.h.b16 %v3082
  %v3173 = vunpack.c.l.b16 %v3083
  %v3174 = vunpack.c.h.b16 %v3083
  %v3175 = vunpack.c.l.b16 %v3084
  %v3176 = vunpack.c.h.b16 %v3084
  %v3177 = vunpack.c.l.b16 %v3085
  %v3178 = vunpack.c.h.b16 %v3085
  %v3179 = vunpack.c.l.b16 %v3086
  %v3180 = vunpack.c.h.b16 %v3086
  %v3181 = vunpack.c.l.b16 %v3087
  %v3182 = vunpack.c.h.b16 %v3087
  %v3183 = vunpack.c.l.b16 %v3088
  %v3184 = vunpack.c.h.b16 %v3088
  %v3185 = vpack.c.b16 %v3125, %v3121
  %v3186 = vpack.c.b16 %v3126, %v3122
  %v3187 = vpack.c.b16 %v3127, %v3123
  %v3188 = vpack.c.b16 %v3128, %v3124
  %v3189 = vpack.c.b16 %v3133, %v3129
  %v3190 = vpack.c.b16 %v3134, %v3130
  %v3191 = vpack.c.b16 %v3135, %v3131
  %v3192 = vpack.c.b16 %v3136, %v3132
  %v3193 = vpack.c.b16 %v3141, %v3137
  %v3194 = vpack.c.b16 %v3142, %v3138
  %v3195 = vpack.c.b16 %v3143, %v3139
  %v3196 = vpack.c.b16 %v3144, %v3140
  %v3197 = vpack.c.b16 %v3149, %v3145
  %v3198 = vpack.c.b16 %v3150, %v3146
  %v3199 = vpack.c.b16 %v3151, %v3147
  %v3200 = vpack.c.b16 %v3152, %v3148
  %v3201 = vpack.c.b16 %v3157, %v3153
  %v3202 = vpack.c.b16 %v3158, %v3154
  %v3203 = vpack.c.b16 %v3159, %v3155
  %v3204 = vpack.c.b16 %v3160, %v3156
  %v3205 = vpack.c.b16 %v3165, %v3161
  %v3206 = vpack.c.b16 %v3166, %v3162
  %v3207 = vpack.c.b16 %v3167, %v3163
  %v3208 = vpack.c.b16 %v3168, %v3164
  %v3209 = vpack.c.b16 %v3173, %v3169
  %v3210 = vpack.c.b16 %v3174, %v3170
  %v3211 = vpack.c.b16 %v3175, %v3171
  %v3212 = vpack.c.b16 %v3176, %v3172
  %v3213 = vpack.c.b16 %v3181, %v3177
  %v3214 = vpack.c.b16 %v3182, %v3178
  %v3215 = vpack.c.b16 %v3183, %v3179
  %v3216 = vpack.c.b16 %v3184, %v3180
  %3249 = vmatprep.subr.bf16.mxu0 %v3186
  %3250 = vmatpush1.bf16.msra.mxu0 %v3185
  %3251 = vmatprep.subr.bf16.mxu0 %v3190
  %3252 = vmatpush1.bf16.msra.mxu0 %v3189
  %3253 = vmatprep.subr.bf16.mxu0 %v3194
  %3254 = vmatpush1.bf16.msra.mxu0 %v3193
  %3255 = vmatprep.subr.bf16.mxu0 %v3198
  %3256 = vmatpush1.bf16.msra.mxu0 %v3197
  %3257 = vmatprep.subr.bf16.mxu0 %v3202
  %3258 = vmatpush1.bf16.msra.mxu0 %v3201
  %3259 = vmatprep.subr.bf16.mxu0 %v3206
  %3260 = vmatpush1.bf16.msra.mxu0 %v3205
  %3261 = vmatprep.subr.bf16.mxu0 %v3210
  %3262 = vmatpush1.bf16.msra.mxu0 %v3209
  %3263 = vmatprep.subr.bf16.mxu0 %v3214
  %3264 = vmatpush1.bf16.msra.mxu0 %v3213
  %3265 = vmatprep.subr.bf16.mxu0 0
  %3266 = vmatpush1.bf16.msra.mxu0 0
  %3267 = vmatprep.subr.bf16.mxu0 0
  %3268 = vmatpush1.bf16.msra.mxu0 0
  %3269 = vmatprep.subr.bf16.mxu0 0
  %3270 = vmatpush1.bf16.msra.mxu0 0
  %3271 = vmatprep.subr.bf16.mxu0 0
  %3272 = vmatpush1.bf16.msra.mxu0 0
  %3273 = vmatprep.subr.bf16.mxu0 0
  %3274 = vmatpush1.bf16.msra.mxu0 0
  %3275 = vmatprep.subr.bf16.mxu0 0
  %3276 = vmatpush1.bf16.msra.mxu0 0
  %3277 = vmatprep.subr.bf16.mxu0 0
  %3278 = vmatpush1.bf16.msra.mxu0 0
  %3279 = vmatprep.subr.bf16.mxu0 0
  %3280 = vmatpush1.bf16.msra.mxu0 0
  %3281 = vmatprep.mubr.bf16.mxu0 0
  %3282 = vmatmul.mubr.bf16.gmra.mrb[0].mxu0 %v2735
  %v3283 = vpop.f32.mrb[0].mxu0
  %v3284 = vadd.f32 0.0, %v3283
  %v3285 = vpop.f32.mrb[0].mxu0
  %v3286 = vadd.f32 0.0, %v3285
  %v3287 = vpop.f32.mrb[0].mxu0
  %v3288 = vadd.f32 0.0, %v3287
  %v3289 = vpop.f32.mrb[0].mxu0
  %v3290 = vadd.f32 0.0, %v3289
  %3291 = vdwg.mxu0
  %3292 = vmatprep.subr.bf16.mxu0 %v3188
  %3293 = vmatpush1.bf16.msra.mxu0 %v3187
  %3294 = vmatprep.subr.bf16.mxu0 %v3192
  %3295 = vmatpush1.bf16.msra.mxu0 %v3191
  %3296 = vmatprep.subr.bf16.mxu0 %v3196
  %3297 = vmatpush1.bf16.msra.mxu0 %v3195
  %3298 = vmatprep.subr.bf16.mxu0 %v3200
  %3299 = vmatpush1.bf16.msra.mxu0 %v3199
  %3300 = vmatprep.subr.bf16.mxu0 %v3204
  %3301 = vmatpush1.bf16.msra.mxu0 %v3203
  %3302 = vmatprep.subr.bf16.mxu0 %v3208
  %3303 = vmatpush1.bf16.msra.mxu0 %v3207
  %3304 = vmatprep.subr.bf16.mxu0 %v3212
  %3305 = vmatpush1.bf16.msra.mxu0 %v3211
  %3306 = vmatprep.subr.bf16.mxu0 %v3216
  %3307 = vmatpush1.bf16.msra.mxu0 %v3215
  %3308 = vmatprep.subr.bf16.mxu0 0
  %3309 = vmatpush1.bf16.msra.mxu0 0
  %3310 = vmatprep.subr.bf16.mxu0 0
  %3311 = vmatpush1.bf16.msra.mxu0 0
  %3312 = vmatprep.subr.bf16.mxu0 0
  %3313 = vmatpush1.bf16.msra.mxu0 0
  %3314 = vmatprep.subr.bf16.mxu0 0
  %3315 = vmatpush1.bf16.msra.mxu0 0
  %3316 = vmatprep.subr.bf16.mxu0 0
  %3317 = vmatpush1.bf16.msra.mxu0 0
  %3318 = vmatprep.subr.bf16.mxu0 0
  %3319 = vmatpush1.bf16.msra.mxu0 0
  %3320 = vmatprep.subr.bf16.mxu0 0
  %3321 = vmatpush1.bf16.msra.mxu0 0
  %3322 = vmatprep.subr.bf16.mxu0 0
  %3323 = vmatpush1.bf16.msra.mxu0 0
  %3324 = vmatprep.mubr.bf16.mxu0 0
  %3325 = vmatmul.mubr.bf16.gmra.mrb[0].mxu0 %v2735
  %v3326 = vpop.f32.mrb[0].mxu0
  %v3327 = vadd.f32 0.0, %v3326
  %v3328 = vpop.f32.mrb[0].mxu0
  %v3329 = vadd.f32 0.0, %v3328
  %v3330 = vpop.f32.mrb[0].mxu0
  %v3331 = vadd.f32 0.0, %v3330
  %v3332 = vpop.f32.mrb[0].mxu0
  %v3333 = vadd.f32 0.0, %v3332
  %3334 = vdwg.mxu0
  %v3335 = vadd.f32 %v3049, %v3284
  %v3336 = vadd.f32 %v3050, %v3286
  %v3337 = vadd.f32 %v3051, %v3327
  %v3338 = vadd.f32 %v3052, %v3329
  %v3339 = vadd.f32 %v3053, %v3288
  %v3340 = vadd.f32 %v3054, %v3290
  %v3341 = vadd.f32 %v3055, %v3331
  %v3342 = vadd.f32 %v3056, %v3333
  %v3343 = vmul.f32 %v3335, 0.5
  %v3344 = vmul.f32 %v3336, 0.5
  %v3345 = vmul.f32 %v3337, 0.5
  %v3346 = vmul.f32 %v3339, 0.5
  %v3347 = vmul.f32 %v3340, 0.5
  %v3348 = vmul.f32 %v3341, 0.5
  %v3349 = vtanh.pop %v3343
  %v3350 = vtanh.pop %v3344
  %v3351 = vtanh.pop %v3345
  %v3352 = vtanh.pop %v3346
  %v3353 = vtanh.pop %v3347
  %v3354 = vtanh.pop %v3348
  %v3355 = vmul.f32 %v3349, 0.5
  %v3356 = vmul.f32 %v3350, 0.5
  %v3357 = vmul.f32 %v3351, 0.5
  %v3358 = vmul.f32 %v3352, 0.5
  %v3359 = vmul.f32 %v3353, 0.5
  %v3360 = vmul.f32 %v3354, 0.5
  %v3361 = vadd.f32 %v3355, 0.5
  %v3362 = vadd.f32 %v3356, 0.5
  %v3363 = vadd.f32 %v3357, 0.5
  %v3364 = vadd.f32 %v3358, 0.5
  %v3365 = vadd.f32 %v3359, 0.5
  %v3366 = vadd.f32 %v3360, 0.5
  %v3367 = vtanh.pop %v3338
  %v3368 = vtanh.pop %v3342
  %v3369 = vmul.f32 %v3362, %v2729
  %v3370 = vmul.f32 %v3365, %v2730
  %v3371 = vmul.f32 %v3361, %v3367
  %v3372 = vmul.f32 %v3364, %v3368
  %v3373 = vadd.f32 %v3369, %v3371
  %v3374 = vadd.f32 %v3370, %v3372
  %v3375 = vtanh.pop %v3373
  %v3376 = vtanh.pop %v3374
  %v3377 = vmul.f32 %v3363, %v3375
  %v3378 = vmul.f32 %v3366, %v3376
  %v3379 = vpack.c.bf16 %v3378, %v3377
  %v3380 = vld [vmem:[%s4] sm:$0xff]
  %v3381 = vld [vmem:[%s4 + $0x8] sm:$0xff]
  %v3382 = vld [vmem:[%s4 + $0x10] sm:$0xff]
  %v3383 = vld [vmem:[%s4 + $0x18] sm:$0xff]
  %v3384 = vld [vmem:[%s4 + $0x20] sm:$0xff]
  %v3385 = vld [vmem:[%s4 + $0x28] sm:$0xff]
  %v3386 = vld [vmem:[%s4 + $0x30] sm:$0xff]
  %v3387 = vld [vmem:[%s4 + $0x38] sm:$0xff]
  %v3388 = vld [vmem:[%s4 + $0x40] sm:$0xff]
  %v3389 = vld [vmem:[%s4 + $0x48] sm:$0xff]
  %v3390 = vld [vmem:[%s4 + $0x50] sm:$0xff]
  %v3391 = vld [vmem:[%s4 + $0x58] sm:$0xff]
  %v3392 = vld [vmem:[%s4 + $0x60] sm:$0xff]
  %v3393 = vld [vmem:[%s4 + $0x68] sm:$0xff]
  %v3394 = vld [vmem:[%s4 + $0x70] sm:$0xff]
  %v3395 = vld [vmem:[%s4 + $0x78] sm:$0xff]
  %v3396 = vld [vmem:[%s4 + $0x80] sm:$0xff]
  %v3397 = vld [vmem:[%s4 + $0x88] sm:$0xff]
  %v3398 = vld [vmem:[%s4 + $0x90] sm:$0xff]
  %v3399 = vld [vmem:[%s4 + $0x98] sm:$0xff]
  %v3400 = vld [vmem:[%s4 + $0xa0] sm:$0xff]
  %v3401 = vld [vmem:[%s4 + $0xa8] sm:$0xff]
  %v3402 = vld [vmem:[%s4 + $0xb0] sm:$0xff]
  %v3403 = vld [vmem:[%s4 + $0xb8] sm:$0xff]
  %v3404 = vld [vmem:[%s4 + $0xc0] sm:$0xff]
  %v3405 = vld [vmem:[%s4 + $0xc8] sm:$0xff]
  %v3406 = vld [vmem:[%s4 + $0xd0] sm:$0xff]
  %v3407 = vld [vmem:[%s4 + $0xd8] sm:$0xff]
  %v3408 = vld [vmem:[%s4 + $0xe0] sm:$0xff]
  %v3409 = vld [vmem:[%s4 + $0xe8] sm:$0xff]
  %v3410 = vld [vmem:[%s4 + $0xf0] sm:$0xff]
  %v3411 = vld [vmem:[%s4 + $0xf8] sm:$0xff]
  %v3412 = vld [vmem:[%s6] sm:$0xf]
  %v3414 = vlaneseq
  %v3415 = vshrl.u32 %v3414, 7
  %v3416 = vsub.s32 0, %v3415
  %v3417 = vrot.slane %v3412, %v3416
  %v3418 = vlaneseq
  %v3419 = vshrl.u32 %v3418, 7
  %v3420 = vsub.s32 1, %v3419
  %v3421 = vrot.slane %v3412, %v3420
  %v3422 = vlaneseq
  %v3423 = vshrl.u32 %v3422, 7
  %v3424 = vsub.s32 2, %v3423
  %v3425 = vrot.slane %v3412, %v3424
  %v3426 = vlaneseq
  %v3427 = vshrl.u32 %v3426, 7
  %v3428 = vsub.s32 3, %v3427
  %v3429 = vrot.slane %v3412, %v3428
  %v3466 = vunpack.c.l.b16 %v3380
  %v3467 = vunpack.c.h.b16 %v3380
  %v3468 = vunpack.c.l.b16 %v3381
  %v3469 = vunpack.c.h.b16 %v3381
  %v3470 = vunpack.c.l.b16 %v3382
  %v3471 = vunpack.c.h.b16 %v3382
  %v3472 = vunpack.c.l.b16 %v3383
  %v3473 = vunpack.c.h.b16 %v3383
  %v3474 = vunpack.c.l.b16 %v3384
  %v3475 = vunpack.c.h.b16 %v3384
  %v3476 = vunpack.c.l.b16 %v3385
  %v3477 = vunpack.c.h.b16 %v3385
  %v3478 = vunpack.c.l.b16 %v3386
  %v3479 = vunpack.c.h.b16 %v3386
  %v3480 = vunpack.c.l.b16 %v3387
  %v3481 = vunpack.c.h.b16 %v3387
  %v3482 = vunpack.c.l.b16 %v3388
  %v3483 = vunpack.c.h.b16 %v3388
  %v3484 = vunpack.c.l.b16 %v3389
  %v3485 = vunpack.c.h.b16 %v3389
  %v3486 = vunpack.c.l.b16 %v3390
  %v3487 = vunpack.c.h.b16 %v3390
  %v3488 = vunpack.c.l.b16 %v3391
  %v3489 = vunpack.c.h.b16 %v3391
  %v3490 = vunpack.c.l.b16 %v3392
  %v3491 = vunpack.c.h.b16 %v3392
  %v3492 = vunpack.c.l.b16 %v3393
  %v3493 = vunpack.c.h.b16 %v3393
  %v3494 = vunpack.c.l.b16 %v3394
  %v3495 = vunpack.c.h.b16 %v3394
  %v3496 = vunpack.c.l.b16 %v3395
  %v3497 = vunpack.c.h.b16 %v3395
  %v3498 = vunpack.c.l.b16 %v3396
  %v3499 = vunpack.c.h.b16 %v3396
  %v3500 = vunpack.c.l.b16 %v3397
  %v3501 = vunpack.c.h.b16 %v3397
  %v3502 = vunpack.c.l.b16 %v3398
  %v3503 = vunpack.c.h.b16 %v3398
  %v3504 = vunpack.c.l.b16 %v3399
  %v3505 = vunpack.c.h.b16 %v3399
  %v3506 = vunpack.c.l.b16 %v3400
  %v3507 = vunpack.c.h.b16 %v3400
  %v3508 = vunpack.c.l.b16 %v3401
  %v3509 = vunpack.c.h.b16 %v3401
  %v3510 = vunpack.c.l.b16 %v3402
  %v3511 = vunpack.c.h.b16 %v3402
  %v3512 = vunpack.c.l.b16 %v3403
  %v3513 = vunpack.c.h.b16 %v3403
  %v3514 = vunpack.c.l.b16 %v3404
  %v3515 = vunpack.c.h.b16 %v3404
  %v3516 = vunpack.c.l.b16 %v3405
  %v3517 = vunpack.c.h.b16 %v3405
  %v3518 = vunpack.c.l.b16 %v3406
  %v3519 = vunpack.c.h.b16 %v3406
  %v3520 = vunpack.c.l.b16 %v3407
  %v3521 = vunpack.c.h.b16 %v3407
  %v3522 = vunpack.c.l.b16 %v3408
  %v3523 = vunpack.c.h.b16 %v3408
  %v3524 = vunpack.c.l.b16 %v3409
  %v3525 = vunpack.c.h.b16 %v3409
  %v3526 = vunpack.c.l.b16 %v3410
  %v3527 = vunpack.c.h.b16 %v3410
  %v3528 = vunpack.c.l.b16 %v3411
  %v3529 = vunpack.c.h.b16 %v3411
  %v3530 = vpack.c.b16 %v3470, %v3466
  %v3531 = vpack.c.b16 %v3471, %v3467
  %v3532 = vpack.c.b16 %v3472, %v3468
  %v3533 = vpack.c.b16 %v3473, %v3469
  %v3534 = vpack.c.b16 %v3478, %v3474
  %v3535 = vpack.c.b16 %v3479, %v3475
  %v3536 = vpack.c.b16 %v3480, %v3476
  %v3537 = vpack.c.b16 %v3481, %v3477
  %v3538 = vpack.c.b16 %v3486, %v3482
  %v3539 = vpack.c.b16 %v3487, %v3483
  %v3540 = vpack.c.b16 %v3488, %v3484
  %v3541 = vpack.c.b16 %v3489, %v3485
  %v3542 = vpack.c.b16 %v3494, %v3490
  %v3543 = vpack.c.b16 %v3495, %v3491
  %v3544 = vpack.c.b16 %v3496, %v3492
  %v3545 = vpack.c.b16 %v3497, %v3493
  %v3546 = vpack.c.b16 %v3502, %v3498
  %v3547 = vpack.c.b16 %v3503, %v3499
  %v3548 = vpack.c.b16 %v3504, %v3500
  %v3549 = vpack.c.b16 %v3505, %v3501
  %v3550 = vpack.c.b16 %v3510, %v3506
  %v3551 = vpack.c.b16 %v3511, %v3507
  %v3552 = vpack.c.b16 %v3512, %v3508
  %v3553 = vpack.c.b16 %v3513, %v3509
  %v3554 = vpack.c.b16 %v3518, %v3514
  %v3555 = vpack.c.b16 %v3519, %v3515
  %v3556 = vpack.c.b16 %v3520, %v3516
  %v3557 = vpack.c.b16 %v3521, %v3517
  %v3558 = vpack.c.b16 %v3526, %v3522
  %v3559 = vpack.c.b16 %v3527, %v3523
  %v3560 = vpack.c.b16 %v3528, %v3524
  %v3561 = vpack.c.b16 %v3529, %v3525
  %3594 = vmatprep.subr.bf16.mxu0 %v3531
  %3595 = vmatpush1.bf16.msra.mxu0 %v3530
  %3596 = vmatprep.subr.bf16.mxu0 %v3535
  %3597 = vmatpush1.bf16.msra.mxu0 %v3534
  %3598 = vmatprep.subr.bf16.mxu0 %v3539
  %3599 = vmatpush1.bf16.msra.mxu0 %v3538
  %3600 = vmatprep.subr.bf16.mxu0 %v3543
  %3601 = vmatpush1.bf16.msra.mxu0 %v3542
  %3602 = vmatprep.subr.bf16.mxu0 %v3547
  %3603 = vmatpush1.bf16.msra.mxu0 %v3546
  %3604 = vmatprep.subr.bf16.mxu0 %v3551
  %3605 = vmatpush1.bf16.msra.mxu0 %v3550
  %3606 = vmatprep.subr.bf16.mxu0 %v3555
  %3607 = vmatpush1.bf16.msra.mxu0 %v3554
  %3608 = vmatprep.subr.bf16.mxu0 %v3559
  %3609 = vmatpush1.bf16.msra.mxu0 %v3558
  %3610 = vmatprep.subr.bf16.mxu0 0
  %3611 = vmatpush1.bf16.msra.mxu0 0
  %3612 = vmatprep.subr.bf16.mxu0 0
  %3613 = vmatpush1.bf16.msra.mxu0 0
  %3614 = vmatprep.subr.bf16.mxu0 0
  %3615 = vmatpush1.bf16.msra.mxu0 0
  %3616 = vmatprep.subr.bf16.mxu0 0
  %3617 = vmatpush1.bf16.msra.mxu0 0
  %3618 = vmatprep.subr.bf16.mxu0 0
  %3619 = vmatpush1.bf16.msra.mxu0 0
  %3620 = vmatprep.subr.bf16.mxu0 0
  %3621 = vmatpush1.bf16.msra.mxu0 0
  %3622 = vmatprep.subr.bf16.mxu0 0
  %3623 = vmatpush1.bf16.msra.mxu0 0
  %3624 = vmatprep.subr.bf16.mxu0 0
  %3625 = vmatpush1.bf16.msra.mxu0 0
  %3626 = vmatprep.mubr.bf16.mxu0 0
  %3627 = vmatmul.mubr.bf16.gmra.mrb[0].mxu0 %v3379
  %v3628 = vpop.f32.mrb[0].mxu0
  %v3629 = vadd.f32 %v3417, %v3628
  %v3630 = vpop.f32.mrb[0].mxu0
  %v3631 = vadd.f32 %v3421, %v3630
  %v3632 = vpop.f32.mrb[0].mxu0
  %v3633 = vadd.f32 %v3417, %v3632
  %v3634 = vpop.f32.mrb[0].mxu0
  %v3635 = vadd.f32 %v3421, %v3634
  %3636 = vdwg.mxu0
  %3637 = vmatprep.subr.bf16.mxu0 %v3533
  %3638 = vmatpush1.bf16.msra.mxu0 %v3532
  %3639 = vmatprep.subr.bf16.mxu0 %v3537
  %3640 = vmatpush1.bf16.msra.mxu0 %v3536
  %3641 = vmatprep.subr.bf16.mxu0 %v3541
  %3642 = vmatpush1.bf16.msra.mxu0 %v3540
  %3643 = vmatprep.subr.bf16.mxu0 %v3545
  %3644 = vmatpush1.bf16.msra.mxu0 %v3544
  %3645 = vmatprep.subr.bf16.mxu0 %v3549
  %3646 = vmatpush1.bf16.msra.mxu0 %v3548
  %3647 = vmatprep.subr.bf16.mxu0 %v3553
  %3648 = vmatpush1.bf16.msra.mxu0 %v3552
  %3649 = vmatprep.subr.bf16.mxu0 %v3557
  %3650 = vmatpush1.bf16.msra.mxu0 %v3556
  %3651 = vmatprep.subr.bf16.mxu0 %v3561
  %3652 = vmatpush1.bf16.msra.mxu0 %v3560
  %3653 = vmatprep.subr.bf16.mxu0 0
  %3654 = vmatpush1.bf16.msra.mxu0 0
  %3655 = vmatprep.subr.bf16.mxu0 0
  %3656 = vmatpush1.bf16.msra.mxu0 0
  %3657 = vmatprep.subr.bf16.mxu0 0
  %3658 = vmatpush1.bf16.msra.mxu0 0
  %3659 = vmatprep.subr.bf16.mxu0 0
  %3660 = vmatpush1.bf16.msra.mxu0 0
  %3661 = vmatprep.subr.bf16.mxu0 0
  %3662 = vmatpush1.bf16.msra.mxu0 0
  %3663 = vmatprep.subr.bf16.mxu0 0
  %3664 = vmatpush1.bf16.msra.mxu0 0
  %3665 = vmatprep.subr.bf16.mxu0 0
  %3666 = vmatpush1.bf16.msra.mxu0 0
  %3667 = vmatprep.subr.bf16.mxu0 0
  %3668 = vmatpush1.bf16.msra.mxu0 0
  %3669 = vmatprep.mubr.bf16.mxu0 0
  %3670 = vmatmul.mubr.bf16.gmra.mrb[0].mxu0 %v3379
  %v3671 = vpop.f32.mrb[0].mxu0
  %v3672 = vadd.f32 %v3425, %v3671
  %v3673 = vpop.f32.mrb[0].mxu0
  %v3674 = vadd.f32 %v3429, %v3673
  %v3675 = vpop.f32.mrb[0].mxu0
  %v3676 = vadd.f32 %v3425, %v3675
  %v3677 = vpop.f32.mrb[0].mxu0
  %v3678 = vadd.f32 %v3429, %v3677
  %3679 = vdwg.mxu0
  %v3680 = vpack.c.bf16 %v3633, %v3629
  %v3681 = vpack.c.bf16 %v3635, %v3631
  %v3682 = vpack.c.bf16 %v3676, %v3672
  %v3683 = vpack.c.bf16 %v3678, %v3674
  %3684 = vst [vmem:[%s3044] sm:$0xff] %v3680
  %3685 = vst [vmem:[%s3044 + $0x8] sm:$0xff] %v3681
  %3686 = vst [vmem:[%s3044 + $0x10] sm:$0xff] %v3682
  %3687 = vst [vmem:[%s3044 + $0x18] sm:$0xff] %v3683
  %s3688 = scalar_lea.vmem [#allocation2], 160
  %v3689 = vld [vmem:[%s3688] sm:$0xff]
  %v3690 = vld [vmem:[%s3688 + $0x8] sm:$0xff]
  %v3691 = vld [vmem:[%s3688 + $0x10] sm:$0xff]
  %v3692 = vld [vmem:[%s3688 + $0x18] sm:$0xff]
  %v3693 = vunpack.c.l.bf16 %v3689
  %v3694 = vunpack.c.l.bf16 %v3690
  %v3695 = vunpack.c.l.bf16 %v3691
  %v3696 = vunpack.c.l.bf16 %v3692
  %v3697 = vunpack.c.h.bf16 %v3689
  %v3698 = vunpack.c.h.bf16 %v3690
  %v3699 = vunpack.c.h.bf16 %v3691
  %v3700 = vunpack.c.h.bf16 %v3692
  %v3701 = vld [vmem:[%s2] sm:$0xff]
  %v3702 = vld [vmem:[%s2 + $0x8] sm:$0xff]
  %v3703 = vld [vmem:[%s2 + $0x10] sm:$0xff]
  %v3704 = vld [vmem:[%s2 + $0x18] sm:$0xff]
  %v3705 = vld [vmem:[%s2 + $0x20] sm:$0xff]
  %v3706 = vld [vmem:[%s2 + $0x28] sm:$0xff]
  %v3707 = vld [vmem:[%s2 + $0x30] sm:$0xff]
  %v3708 = vld [vmem:[%s2 + $0x38] sm:$0xff]
  %v3709 = vld [vmem:[%s2 + $0x40] sm:$0xff]
  %v3710 = vld [vmem:[%s2 + $0x48] sm:$0xff]
  %v3711 = vld [vmem:[%s2 + $0x50] sm:$0xff]
  %v3712 = vld [vmem:[%s2 + $0x58] sm:$0xff]
  %v3713 = vld [vmem:[%s2 + $0x60] sm:$0xff]
  %v3714 = vld [vmem:[%s2 + $0x68] sm:$0xff]
  %v3715 = vld [vmem:[%s2 + $0x70] sm:$0xff]
  %v3716 = vld [vmem:[%s2 + $0x78] sm:$0xff]
  %v3717 = vld [vmem:[%s2 + $0x80] sm:$0xff]
  %v3718 = vld [vmem:[%s2 + $0x88] sm:$0xff]
  %v3719 = vld [vmem:[%s2 + $0x90] sm:$0xff]
  %v3720 = vld [vmem:[%s2 + $0x98] sm:$0xff]
  %v3721 = vld [vmem:[%s2 + $0xa0] sm:$0xff]
  %v3722 = vld [vmem:[%s2 + $0xa8] sm:$0xff]
  %v3723 = vld [vmem:[%s2 + $0xb0] sm:$0xff]
  %v3724 = vld [vmem:[%s2 + $0xb8] sm:$0xff]
  %v3725 = vld [vmem:[%s2 + $0xc0] sm:$0xff]
  %v3726 = vld [vmem:[%s2 + $0xc8] sm:$0xff]
  %v3727 = vld [vmem:[%s2 + $0xd0] sm:$0xff]
  %v3728 = vld [vmem:[%s2 + $0xd8] sm:$0xff]
  %v3729 = vld [vmem:[%s2 + $0xe0] sm:$0xff]
  %v3730 = vld [vmem:[%s2 + $0xe8] sm:$0xff]
  %v3731 = vld [vmem:[%s2 + $0xf0] sm:$0xff]
  %v3732 = vld [vmem:[%s2 + $0xf8] sm:$0xff]
  %v3765 = vunpack.c.l.b16 %v3701
  %v3766 = vunpack.c.h.b16 %v3701
  %v3767 = vunpack.c.l.b16 %v3702
  %v3768 = vunpack.c.h.b16 %v3702
  %v3769 = vunpack.c.l.b16 %v3703
  %v3770 = vunpack.c.h.b16 %v3703
  %v3771 = vunpack.c.l.b16 %v3704
  %v3772 = vunpack.c.h.b16 %v3704
  %v3773 = vunpack.c.l.b16 %v3705
  %v3774 = vunpack.c.h.b16 %v3705
  %v3775 = vunpack.c.l.b16 %v3706
  %v3776 = vunpack.c.h.b16 %v3706
  %v3777 = vunpack.c.l.b16 %v3707
  %v3778 = vunpack.c.h.b16 %v3707
  %v3779 = vunpack.c.l.b16 %v3708
  %v3780 = vunpack.c.h.b16 %v3708
  %v3781 = vunpack.c.l.b16 %v3709
  %v3782 = vunpack.c.h.b16 %v3709
  %v3783 = vunpack.c.l.b16 %v3710
  %v3784 = vunpack.c.h.b16 %v3710
  %v3785 = vunpack.c.l.b16 %v3711
  %v3786 = vunpack.c.h.b16 %v3711
  %v3787 = vunpack.c.l.b16 %v3712
  %v3788 = vunpack.c.h.b16 %v3712
  %v3789 = vunpack.c.l.b16 %v3713
  %v3790 = vunpack.c.h.b16 %v3713
  %v3791 = vunpack.c.l.b16 %v3714
  %v3792 = vunpack.c.h.b16 %v3714
  %v3793 = vunpack.c.l.b16 %v3715
  %v3794 = vunpack.c.h.b16 %v3715
  %v3795 = vunpack.c.l.b16 %v3716
  %v3796 = vunpack.c.h.b16 %v3716
  %v3797 = vunpack.c.l.b16 %v3717
  %v3798 = vunpack.c.h.b16 %v3717
  %v3799 = vunpack.c.l.b16 %v3718
  %v3800 = vunpack.c.h.b16 %v3718
  %v3801 = vunpack.c.l.b16 %v3719
  %v3802 = vunpack.c.h.b16 %v3719
  %v3803 = vunpack.c.l.b16 %v3720
  %v3804 = vunpack.c.h.b16 %v3720
  %v3805 = vunpack.c.l.b16 %v3721
  %v3806 = vunpack.c.h.b16 %v3721
  %v3807 = vunpack.c.l.b16 %v3722
  %v3808 = vunpack.c.h.b16 %v3722
  %v3809 = vunpack.c.l.b16 %v3723
  %v3810 = vunpack.c.h.b16 %v3723
  %v3811 = vunpack.c.l.b16 %v3724
  %v3812 = vunpack.c.h.b16 %v3724
  %v3813 = vunpack.c.l.b16 %v3725
  %v3814 = vunpack.c.h.b16 %v3725
  %v3815 = vunpack.c.l.b16 %v3726
  %v3816 = vunpack.c.h.b16 %v3726
  %v3817 = vunpack.c.l.b16 %v3727
  %v3818 = vunpack.c.h.b16 %v3727
  %v3819 = vunpack.c.l.b16 %v3728
  %v3820 = vunpack.c.h.b16 %v3728
  %v3821 = vunpack.c.l.b16 %v3729
  %v3822 = vunpack.c.h.b16 %v3729
  %v3823 = vunpack.c.l.b16 %v3730
  %v3824 = vunpack.c.h.b16 %v3730
  %v3825 = vunpack.c.l.b16 %v3731
  %v3826 = vunpack.c.h.b16 %v3731
  %v3827 = vunpack.c.l.b16 %v3732
  %v3828 = vunpack.c.h.b16 %v3732
  %v3829 = vpack.c.b16 %v3769, %v3765
  %v3830 = vpack.c.b16 %v3770, %v3766
  %v3831 = vpack.c.b16 %v3771, %v3767
  %v3832 = vpack.c.b16 %v3772, %v3768
  %v3833 = vpack.c.b16 %v3777, %v3773
  %v3834 = vpack.c.b16 %v3778, %v3774
  %v3835 = vpack.c.b16 %v3779, %v3775
  %v3836 = vpack.c.b16 %v3780, %v3776
  %v3837 = vpack.c.b16 %v3785, %v3781
  %v3838 = vpack.c.b16 %v3786, %v3782
  %v3839 = vpack.c.b16 %v3787, %v3783
  %v3840 = vpack.c.b16 %v3788, %v3784
  %v3841 = vpack.c.b16 %v3793, %v3789
  %v3842 = vpack.c.b16 %v3794, %v3790
  %v3843 = vpack.c.b16 %v3795, %v3791
  %v3844 = vpack.c.b16 %v3796, %v3792
  %v3845 = vpack.c.b16 %v3801, %v3797
  %v3846 = vpack.c.b16 %v3802, %v3798
  %v3847 = vpack.c.b16 %v3803, %v3799
  %v3848 = vpack.c.b16 %v3804, %v3800
  %v3849 = vpack.c.b16 %v3809, %v3805
  %v3850 = vpack.c.b16 %v3810, %v3806
  %v3851 = vpack.c.b16 %v3811, %v3807
  %v3852 = vpack.c.b16 %v3812, %v3808
  %v3853 = vpack.c.b16 %v3817, %v3813
  %v3854 = vpack.c.b16 %v3818, %v3814
  %v3855 = vpack.c.b16 %v3819, %v3815
  %v3856 = vpack.c.b16 %v3820, %v3816
  %v3857 = vpack.c.b16 %v3825, %v3821
  %v3858 = vpack.c.b16 %v3826, %v3822
  %v3859 = vpack.c.b16 %v3827, %v3823
  %v3860 = vpack.c.b16 %v3828, %v3824
  %3893 = vmatprep.subr.bf16.mxu0 %v3830
  %3894 = vmatpush1.bf16.msra.mxu0 %v3829
  %3895 = vmatprep.subr.bf16.mxu0 %v3834
  %3896 = vmatpush1.bf16.msra.mxu0 %v3833
  %3897 = vmatprep.subr.bf16.mxu0 %v3838
  %3898 = vmatpush1.bf16.msra.mxu0 %v3837
  %3899 = vmatprep.subr.bf16.mxu0 %v3842
  %3900 = vmatpush1.bf16.msra.mxu0 %v3841
  %3901 = vmatprep.subr.bf16.mxu0 %v3846
  %3902 = vmatpush1.bf16.msra.mxu0 %v3845
  %3903 = vmatprep.subr.bf16.mxu0 %v3850
  %3904 = vmatpush1.bf16.msra.mxu0 %v3849
  %3905 = vmatprep.subr.bf16.mxu0 %v3854
  %3906 = vmatpush1.bf16.msra.mxu0 %v3853
  %3907 = vmatprep.subr.bf16.mxu0 %v3858
  %3908 = vmatpush1.bf16.msra.mxu0 %v3857
  %3909 = vmatprep.subr.bf16.mxu0 0
  %3910 = vmatpush1.bf16.msra.mxu0 0
  %3911 = vmatprep.subr.bf16.mxu0 0
  %3912 = vmatpush1.bf16.msra.mxu0 0
  %3913 = vmatprep.subr.bf16.mxu0 0
  %3914 = vmatpush1.bf16.msra.mxu0 0
  %3915 = vmatprep.subr.bf16.mxu0 0
  %3916 = vmatpush1.bf16.msra.mxu0 0
  %3917 = vmatprep.subr.bf16.mxu0 0
  %3918 = vmatpush1.bf16.msra.mxu0 0
  %3919 = vmatprep.subr.bf16.mxu0 0
  %3920 = vmatpush1.bf16.msra.mxu0 0
  %3921 = vmatprep.subr.bf16.mxu0 0
  %3922 = vmatpush1.bf16.msra.mxu0 0
  %3923 = vmatprep.subr.bf16.mxu0 0
  %3924 = vmatpush1.bf16.msra.mxu0 0
  %3925 = vmatprep.mubr.bf16.mxu0 0
  %3926 = vmatmul.mubr.bf16.gmra.mrb[0].mxu0 %v3379
  %v3927 = vpop.f32.mrb[0].mxu0
  %v3928 = vadd.f32 0.0, %v3927
  %v3929 = vpop.f32.mrb[0].mxu0
  %v3930 = vadd.f32 0.0, %v3929
  %v3931 = vpop.f32.mrb[0].mxu0
  %v3932 = vadd.f32 0.0, %v3931
  %v3933 = vpop.f32.mrb[0].mxu0
  %v3934 = vadd.f32 0.0, %v3933
  %3935 = vdwg.mxu0
  %3936 = vmatprep.subr.bf16.mxu0 %v3832
  %3937 = vmatpush1.bf16.msra.mxu0 %v3831
  %3938 = vmatprep.subr.bf16.mxu0 %v3836
  %3939 = vmatpush1.bf16.msra.mxu0 %v3835
  %3940 = vmatprep.subr.bf16.mxu0 %v3840
  %3941 = vmatpush1.bf16.msra.mxu0 %v3839
  %3942 = vmatprep.subr.bf16.mxu0 %v3844
  %3943 = vmatpush1.bf16.msra.mxu0 %v3843
  %3944 = vmatprep.subr.bf16.mxu0 %v3848
  %3945 = vmatpush1.bf16.msra.mxu0 %v3847
  %3946 = vmatprep.subr.bf16.mxu0 %v3852
  %3947 = vmatpush1.bf16.msra.mxu0 %v3851
  %3948 = vmatprep.subr.bf16.mxu0 %v3856
  %3949 = vmatpush1.bf16.msra.mxu0 %v3855
  %3950 = vmatprep.subr.bf16.mxu0 %v3860
  %3951 = vmatpush1.bf16.msra.mxu0 %v3859
  %3952 = vmatprep.subr.bf16.mxu0 0
  %3953 = vmatpush1.bf16.msra.mxu0 0
  %3954 = vmatprep.subr.bf16.mxu0 0
  %3955 = vmatpush1.bf16.msra.mxu0 0
  %3956 = vmatprep.subr.bf16.mxu0 0
  %3957 = vmatpush1.bf16.msra.mxu0 0
  %3958 = vmatprep.subr.bf16.mxu0 0
  %3959 = vmatpush1.bf16.msra.mxu0 0
  %3960 = vmatprep.subr.bf16.mxu0 0
  %3961 = vmatpush1.bf16.msra.mxu0 0
  %3962 = vmatprep.subr.bf16.mxu0 0
  %3963 = vmatpush1.bf16.msra.mxu0 0
  %3964 = vmatprep.subr.bf16.mxu0 0
  %3965 = vmatpush1.bf16.msra.mxu0 0
  %3966 = vmatprep.subr.bf16.mxu0 0
  %3967 = vmatpush1.bf16.msra.mxu0 0
  %3968 = vmatprep.mubr.bf16.mxu0 0
  %3969 = vmatmul.mubr.bf16.gmra.mrb[0].mxu0 %v3379
  %v3970 = vpop.f32.mrb[0].mxu0
  %v3971 = vadd.f32 0.0, %v3970
  %v3972 = vpop.f32.mrb[0].mxu0
  %v3973 = vadd.f32 0.0, %v3972
  %v3974 = vpop.f32.mrb[0].mxu0
  %v3975 = vadd.f32 0.0, %v3974
  %v3976 = vpop.f32.mrb[0].mxu0
  %v3977 = vadd.f32 0.0, %v3976
  %3978 = vdwg.mxu0
  %v3979 = vadd.f32 %v3693, %v3928
  %v3980 = vadd.f32 %v3694, %v3930
  %v3981 = vadd.f32 %v3695, %v3971
  %v3982 = vadd.f32 %v3696, %v3973
  %v3983 = vadd.f32 %v3697, %v3932
  %v3984 = vadd.f32 %v3698, %v3934
  %v3985 = vadd.f32 %v3699, %v3975
  %v3986 = vadd.f32 %v3700, %v3977
  %v3987 = vmul.f32 %v3979, 0.5
  %v3988 = vmul.f32 %v3980, 0.5
  %v3989 = vmul.f32 %v3981, 0.5
  %v3990 = vmul.f32 %v3983, 0.5
  %v3991 = vmul.f32 %v3984, 0.5
  %v3992 = vmul.f32 %v3985, 0.5
  %v3993 = vtanh.pop %v3987
  %v3994 = vtanh.pop %v3988
  %v3995 = vtanh.pop %v3989
  %v3996 = vtanh.pop %v3990
  %v3997 = vtanh.pop %v3991
  %v3998 = vtanh.pop %v3992
  %v3999 = vmul.f32 %v3993, 0.5
  %v4000 = vmul.f32 %v3994, 0.5
  %v4001 = vmul.f32 %v3995, 0.5
  %v4002 = vmul.f32 %v3996, 0.5
  %v4003 = vmul.f32 %v3997, 0.5
  %v4004 = vmul.f32 %v3998, 0.5
  %v4005 = vadd.f32 %v3999, 0.5
  %v4006 = vadd.f32 %v4000, 0.5
  %v4007 = vadd.f32 %v4001, 0.5
  %v4008 = vadd.f32 %v4002, 0.5
  %v4009 = vadd.f32 %v4003, 0.5
  %v4010 = vadd.f32 %v4004, 0.5
  %v4011 = vtanh.pop %v3982
  %v4012 = vtanh.pop %v3986
  %v4013 = vmul.f32 %v4006, %v3373
  %v4014 = vmul.f32 %v4009, %v3374
  %v4015 = vmul.f32 %v4005, %v4011
  %v4016 = vmul.f32 %v4008, %v4012
  %v4017 = vadd.f32 %v4013, %v4015
  %v4018 = vadd.f32 %v4014, %v4016
  %v4019 = vtanh.pop %v4017
  %v4020 = vtanh.pop %v4018
  %v4021 = vmul.f32 %v4007, %v4019
  %v4022 = vmul.f32 %v4010, %v4020
  %v4023 = vpack.c.bf16 %v4022, %v4021
  %v4024 = vld [vmem:[%s4] sm:$0xff]
  %v4025 = vld [vmem:[%s4 + $0x8] sm:$0xff]
  %v4026 = vld [vmem:[%s4 + $0x10] sm:$0xff]
  %v4027 = vld [vmem:[%s4 + $0x18] sm:$0xff]
  %v4028 = vld [vmem:[%s4 + $0x20] sm:$0xff]
  %v4029 = vld [vmem:[%s4 + $0x28] sm:$0xff]
  %v4030 = vld [vmem:[%s4 + $0x30] sm:$0xff]
  %v4031 = vld [vmem:[%s4 + $0x38] sm:$0xff]
  %v4032 = vld [vmem:[%s4 + $0x40] sm:$0xff]
  %v4033 = vld [vmem:[%s4 + $0x48] sm:$0xff]
  %v4034 = vld [vmem:[%s4 + $0x50] sm:$0xff]
  %v4035 = vld [vmem:[%s4 + $0x58] sm:$0xff]
  %v4036 = vld [vmem:[%s4 + $0x60] sm:$0xff]
  %v4037 = vld [vmem:[%s4 + $0x68] sm:$0xff]
  %v4038 = vld [vmem:[%s4 + $0x70] sm:$0xff]
  %v4039 = vld [vmem:[%s4 + $0x78] sm:$0xff]
  %v4040 = vld [vmem:[%s4 + $0x80] sm:$0xff]
  %v4041 = vld [vmem:[%s4 + $0x88] sm:$0xff]
  %v4042 = vld [vmem:[%s4 + $0x90] sm:$0xff]
  %v4043 = vld [vmem:[%s4 + $0x98] sm:$0xff]
  %v4044 = vld [vmem:[%s4 + $0xa0] sm:$0xff]
  %v4045 = vld [vmem:[%s4 + $0xa8] sm:$0xff]
  %v4046 = vld [vmem:[%s4 + $0xb0] sm:$0xff]
  %v4047 = vld [vmem:[%s4 + $0xb8] sm:$0xff]
  %v4048 = vld [vmem:[%s4 + $0xc0] sm:$0xff]
  %v4049 = vld [vmem:[%s4 + $0xc8] sm:$0xff]
  %v4050 = vld [vmem:[%s4 + $0xd0] sm:$0xff]
  %v4051 = vld [vmem:[%s4 + $0xd8] sm:$0xff]
  %v4052 = vld [vmem:[%s4 + $0xe0] sm:$0xff]
  %v4053 = vld [vmem:[%s4 + $0xe8] sm:$0xff]
  %v4054 = vld [vmem:[%s4 + $0xf0] sm:$0xff]
  %v4055 = vld [vmem:[%s4 + $0xf8] sm:$0xff]
  %v4056 = vld [vmem:[%s6] sm:$0xf]
  %v4058 = vlaneseq
  %v4059 = vshrl.u32 %v4058, 7
  %v4060 = vsub.s32 0, %v4059
  %v4061 = vrot.slane %v4056, %v4060
  %v4062 = vlaneseq
  %v4063 = vshrl.u32 %v4062, 7
  %v4064 = vsub.s32 1, %v4063
  %v4065 = vrot.slane %v4056, %v4064
  %v4066 = vlaneseq
  %v4067 = vshrl.u32 %v4066, 7
  %v4068 = vsub.s32 2, %v4067
  %v4069 = vrot.slane %v4056, %v4068
  %v4070 = vlaneseq
  %v4071 = vshrl.u32 %v4070, 7
  %v4072 = vsub.s32 3, %v4071
  %v4073 = vrot.slane %v4056, %v4072
  %v4110 = vunpack.c.l.b16 %v4024
  %v4111 = vunpack.c.h.b16 %v4024
  %v4112 = vunpack.c.l.b16 %v4025
  %v4113 = vunpack.c.h.b16 %v4025
  %v4114 = vunpack.c.l.b16 %v4026
  %v4115 = vunpack.c.h.b16 %v4026
  %v4116 = vunpack.c.l.b16 %v4027
  %v4117 = vunpack.c.h.b16 %v4027
  %v4118 = vunpack.c.l.b16 %v4028
  %v4119 = vunpack.c.h.b16 %v4028
  %v4120 = vunpack.c.l.b16 %v4029
  %v4121 = vunpack.c.h.b16 %v4029
  %v4122 = vunpack.c.l.b16 %v4030
  %v4123 = vunpack.c.h.b16 %v4030
  %v4124 = vunpack.c.l.b16 %v4031
  %v4125 = vunpack.c.h.b16 %v4031
  %v4126 = vunpack.c.l.b16 %v4032
  %v4127 = vunpack.c.h.b16 %v4032
  %v4128 = vunpack.c.l.b16 %v4033
  %v4129 = vunpack.c.h.b16 %v4033
  %v4130 = vunpack.c.l.b16 %v4034
  %v4131 = vunpack.c.h.b16 %v4034
  %v4132 = vunpack.c.l.b16 %v4035
  %v4133 = vunpack.c.h.b16 %v4035
  %v4134 = vunpack.c.l.b16 %v4036
  %v4135 = vunpack.c.h.b16 %v4036
  %v4136 = vunpack.c.l.b16 %v4037
  %v4137 = vunpack.c.h.b16 %v4037
  %v4138 = vunpack.c.l.b16 %v4038
  %v4139 = vunpack.c.h.b16 %v4038
  %v4140 = vunpack.c.l.b16 %v4039
  %v4141 = vunpack.c.h.b16 %v4039
  %v4142 = vunpack.c.l.b16 %v4040
  %v4143 = vunpack.c.h.b16 %v4040
  %v4144 = vunpack.c.l.b16 %v4041
  %v4145 = vunpack.c.h.b16 %v4041
  %v4146 = vunpack.c.l.b16 %v4042
  %v4147 = vunpack.c.h.b16 %v4042
  %v4148 = vunpack.c.l.b16 %v4043
  %v4149 = vunpack.c.h.b16 %v4043
  %v4150 = vunpack.c.l.b16 %v4044
  %v4151 = vunpack.c.h.b16 %v4044
  %v4152 = vunpack.c.l.b16 %v4045
  %v4153 = vunpack.c.h.b16 %v4045
  %v4154 = vunpack.c.l.b16 %v4046
  %v4155 = vunpack.c.h.b16 %v4046
  %v4156 = vunpack.c.l.b16 %v4047
  %v4157 = vunpack.c.h.b16 %v4047
  %v4158 = vunpack.c.l.b16 %v4048
  %v4159 = vunpack.c.h.b16 %v4048
  %v4160 = vunpack.c.l.b16 %v4049
  %v4161 = vunpack.c.h.b16 %v4049
  %v4162 = vunpack.c.l.b16 %v4050
  %v4163 = vunpack.c.h.b16 %v4050
  %v4164 = vunpack.c.l.b16 %v4051
  %v4165 = vunpack.c.h.b16 %v4051
  %v4166 = vunpack.c.l.b16 %v4052
  %v4167 = vunpack.c.h.b16 %v4052
  %v4168 = vunpack.c.l.b16 %v4053
  %v4169 = vunpack.c.h.b16 %v4053
  %v4170 = vunpack.c.l.b16 %v4054
  %v4171 = vunpack.c.h.b16 %v4054
  %v4172 = vunpack.c.l.b16 %v4055
  %v4173 = vunpack.c.h.b16 %v4055
  %v4174 = vpack.c.b16 %v4114, %v4110
  %v4175 = vpack.c.b16 %v4115, %v4111
  %v4176 = vpack.c.b16 %v4116, %v4112
  %v4177 = vpack.c.b16 %v4117, %v4113
  %v4178 = vpack.c.b16 %v4122, %v4118
  %v4179 = vpack.c.b16 %v4123, %v4119
  %v4180 = vpack.c.b16 %v4124, %v4120
  %v4181 = vpack.c.b16 %v4125, %v4121
  %v4182 = vpack.c.b16 %v4130, %v4126
  %v4183 = vpack.c.b16 %v4131, %v4127
  %v4184 = vpack.c.b16 %v4132, %v4128
  %v4185 = vpack.c.b16 %v4133, %v4129
  %v4186 = vpack.c.b16 %v4138, %v4134
  %v4187 = vpack.c.b16 %v4139, %v4135
  %v4188 = vpack.c.b16 %v4140, %v4136
  %v4189 = vpack.c.b16 %v4141, %v4137
  %v4190 = vpack.c.b16 %v4146, %v4142
  %v4191 = vpack.c.b16 %v4147, %v4143
  %v4192 = vpack.c.b16 %v4148, %v4144
  %v4193 = vpack.c.b16 %v4149, %v4145
  %v4194 = vpack.c.b16 %v4154, %v4150
  %v4195 = vpack.c.b16 %v4155, %v4151
  %v4196 = vpack.c.b16 %v4156, %v4152
  %v4197 = vpack.c.b16 %v4157, %v4153
  %v4198 = vpack.c.b16 %v4162, %v4158
  %v4199 = vpack.c.b16 %v4163, %v4159
  %v4200 = vpack.c.b16 %v4164, %v4160
  %v4201 = vpack.c.b16 %v4165, %v4161
  %v4202 = vpack.c.b16 %v4170, %v4166
  %v4203 = vpack.c.b16 %v4171, %v4167
  %v4204 = vpack.c.b16 %v4172, %v4168
  %v4205 = vpack.c.b16 %v4173, %v4169
  %4238 = vmatprep.subr.bf16.mxu0 %v4175
  %4239 = vmatpush1.bf16.msra.mxu0 %v4174
  %4240 = vmatprep.subr.bf16.mxu0 %v4179
  %4241 = vmatpush1.bf16.msra.mxu0 %v4178
  %4242 = vmatprep.subr.bf16.mxu0 %v4183
  %4243 = vmatpush1.bf16.msra.mxu0 %v4182
  %4244 = vmatprep.subr.bf16.mxu0 %v4187
  %4245 = vmatpush1.bf16.msra.mxu0 %v4186
  %4246 = vmatprep.subr.bf16.mxu0 %v4191
  %4247 = vmatpush1.bf16.msra.mxu0 %v4190
  %4248 = vmatprep.subr.bf16.mxu0 %v4195
  %4249 = vmatpush1.bf16.msra.mxu0 %v4194
  %4250 = vmatprep.subr.bf16.mxu0 %v4199
  %4251 = vmatpush1.bf16.msra.mxu0 %v4198
  %4252 = vmatprep.subr.bf16.mxu0 %v4203
  %4253 = vmatpush1.bf16.msra.mxu0 %v4202
  %4254 = vmatprep.subr.bf16.mxu0 0
  %4255 = vmatpush1.bf16.msra.mxu0 0
  %4256 = vmatprep.subr.bf16.mxu0 0
  %4257 = vmatpush1.bf16.msra.mxu0 0
  %4258 = vmatprep.subr.bf16.mxu0 0
  %4259 = vmatpush1.bf16.msra.mxu0 0
  %4260 = vmatprep.subr.bf16.mxu0 0
  %4261 = vmatpush1.bf16.msra.mxu0 0
  %4262 = vmatprep.subr.bf16.mxu0 0
  %4263 = vmatpush1.bf16.msra.mxu0 0
  %4264 = vmatprep.subr.bf16.mxu0 0
  %4265 = vmatpush1.bf16.msra.mxu0 0
  %4266 = vmatprep.subr.bf16.mxu0 0
  %4267 = vmatpush1.bf16.msra.mxu0 0
  %4268 = vmatprep.subr.bf16.mxu0 0
  %4269 = vmatpush1.bf16.msra.mxu0 0
  %4270 = vmatprep.mubr.bf16.mxu0 0
  %4271 = vmatmul.mubr.bf16.gmra.mrb[0].mxu0 %v4023
  %v4272 = vpop.f32.mrb[0].mxu0
  %v4273 = vadd.f32 %v4061, %v4272
  %v4274 = vpop.f32.mrb[0].mxu0
  %v4275 = vadd.f32 %v4065, %v4274
  %v4276 = vpop.f32.mrb[0].mxu0
  %v4277 = vadd.f32 %v4061, %v4276
  %v4278 = vpop.f32.mrb[0].mxu0
  %v4279 = vadd.f32 %v4065, %v4278
  %4280 = vdwg.mxu0
  %4281 = vmatprep.subr.bf16.mxu0 %v4177
  %4282 = vmatpush1.bf16.msra.mxu0 %v4176
  %4283 = vmatprep.subr.bf16.mxu0 %v4181
  %4284 = vmatpush1.bf16.msra.mxu0 %v4180
  %4285 = vmatprep.subr.bf16.mxu0 %v4185
  %4286 = vmatpush1.bf16.msra.mxu0 %v4184
  %4287 = vmatprep.subr.bf16.mxu0 %v4189
  %4288 = vmatpush1.bf16.msra.mxu0 %v4188
  %4289 = vmatprep.subr.bf16.mxu0 %v4193
  %4290 = vmatpush1.bf16.msra.mxu0 %v4192
  %4291 = vmatprep.subr.bf16.mxu0 %v4197
  %4292 = vmatpush1.bf16.msra.mxu0 %v4196
  %4293 = vmatprep.subr.bf16.mxu0 %v4201
  %4294 = vmatpush1.bf16.msra.mxu0 %v4200
  %4295 = vmatprep.subr.bf16.mxu0 %v4205
  %4296 = vmatpush1.bf16.msra.mxu0 %v4204
  %4297 = vmatprep.subr.bf16.mxu0 0
  %4298 = vmatpush1.bf16.msra.mxu0 0
  %4299 = vmatprep.subr.bf16.mxu0 0
  %4300 = vmatpush1.bf16.msra.mxu0 0
  %4301 = vmatprep.subr.bf16.mxu0 0
  %4302 = vmatpush1.bf16.msra.mxu0 0
  %4303 = vmatprep.subr.bf16.mxu0 0
  %4304 = vmatpush1.bf16.msra.mxu0 0
  %4305 = vmatprep.subr.bf16.mxu0 0
  %4306 = vmatpush1.bf16.msra.mxu0 0
  %4307 = vmatprep.subr.bf16.mxu0 0
  %4308 = vmatpush1.bf16.msra.mxu0 0
  %4309 = vmatprep.subr.bf16.mxu0 0
  %4310 = vmatpush1.bf16.msra.mxu0 0
  %4311 = vmatprep.subr.bf16.mxu0 0
  %4312 = vmatpush1.bf16.msra.mxu0 0
  %4313 = vmatprep.mubr.bf16.mxu0 0
  %4314 = vmatmul.mubr.bf16.gmra.mrb[0].mxu0 %v4023
  %v4315 = vpop.f32.mrb[0].mxu0
  %v4316 = vadd.f32 %v4069, %v4315
  %v4317 = vpop.f32.mrb[0].mxu0
  %v4318 = vadd.f32 %v4073, %v4317
  %v4319 = vpop.f32.mrb[0].mxu0
  %v4320 = vadd.f32 %v4069, %v4319
  %v4321 = vpop.f32.mrb[0].mxu0
  %v4322 = vadd.f32 %v4073, %v4321
  %4323 = vdwg.mxu0
  %v4324 = vpack.c.bf16 %v4277, %v4273
  %v4325 = vpack.c.bf16 %v4279, %v4275
  %v4326 = vpack.c.bf16 %v4320, %v4316
  %v4327 = vpack.c.bf16 %v4322, %v4318
  %4328 = vst [vmem:[%s3688] sm:$0xff] %v4324
  %4329 = vst [vmem:[%s3688 + $0x8] sm:$0xff] %v4325
  %4330 = vst [vmem:[%s3688 + $0x10] sm:$0xff] %v4326
  %4331 = vst [vmem:[%s3688 + $0x18] sm:$0xff] %v4327
  %s4332 = scalar_lea.vmem [#allocation2], 192
  %v4333 = vld [vmem:[%s4332] sm:$0xff]
  %v4334 = vld [vmem:[%s4332 + $0x8] sm:$0xff]
  %v4335 = vld [vmem:[%s4332 + $0x10] sm:$0xff]
  %v4336 = vld [vmem:[%s4332 + $0x18] sm:$0xff]
  %v4337 = vunpack.c.l.bf16 %v4333
  %v4338 = vunpack.c.l.bf16 %v4334
  %v4339 = vunpack.c.l.bf16 %v4335
  %v4340 = vunpack.c.l.bf16 %v4336
  %v4341 = vunpack.c.h.bf16 %v4333
  %v4342 = vunpack.c.h.bf16 %v4334
  %v4343 = vunpack.c.h.bf16 %v4335
  %v4344 = vunpack.c.h.bf16 %v4336
  %v4345 = vld [vmem:[%s2] sm:$0xff]
  %v4346 = vld [vmem:[%s2 + $0x8] sm:$0xff]
  %v4347 = vld [vmem:[%s2 + $0x10] sm:$0xff]
  %v4348 = vld [vmem:[%s2 + $0x18] sm:$0xff]
  %v4349 = vld [vmem:[%s2 + $0x20] sm:$0xff]
  %v4350 = vld [vmem:[%s2 + $0x28] sm:$0xff]
  %v4351 = vld [vmem:[%s2 + $0x30] sm:$0xff]
  %v4352 = vld [vmem:[%s2 + $0x38] sm:$0xff]
  %v4353 = vld [vmem:[%s2 + $0x40] sm:$0xff]
  %v4354 = vld [vmem:[%s2 + $0x48] sm:$0xff]
  %v4355 = vld [vmem:[%s2 + $0x50] sm:$0xff]
  %v4356 = vld [vmem:[%s2 + $0x58] sm:$0xff]
  %v4357 = vld [vmem:[%s2 + $0x60] sm:$0xff]
  %v4358 = vld [vmem:[%s2 + $0x68] sm:$0xff]
  %v4359 = vld [vmem:[%s2 + $0x70] sm:$0xff]
  %v4360 = vld [vmem:[%s2 + $0x78] sm:$0xff]
  %v4361 = vld [vmem:[%s2 + $0x80] sm:$0xff]
  %v4362 = vld [vmem:[%s2 + $0x88] sm:$0xff]
  %v4363 = vld [vmem:[%s2 + $0x90] sm:$0xff]
  %v4364 = vld [vmem:[%s2 + $0x98] sm:$0xff]
  %v4365 = vld [vmem:[%s2 + $0xa0] sm:$0xff]
  %v4366 = vld [vmem:[%s2 + $0xa8] sm:$0xff]
  %v4367 = vld [vmem:[%s2 + $0xb0] sm:$0xff]
  %v4368 = vld [vmem:[%s2 + $0xb8] sm:$0xff]
  %v4369 = vld [vmem:[%s2 + $0xc0] sm:$0xff]
  %v4370 = vld [vmem:[%s2 + $0xc8] sm:$0xff]
  %v4371 = vld [vmem:[%s2 + $0xd0] sm:$0xff]
  %v4372 = vld [vmem:[%s2 + $0xd8] sm:$0xff]
  %v4373 = vld [vmem:[%s2 + $0xe0] sm:$0xff]
  %v4374 = vld [vmem:[%s2 + $0xe8] sm:$0xff]
  %v4375 = vld [vmem:[%s2 + $0xf0] sm:$0xff]
  %v4376 = vld [vmem:[%s2 + $0xf8] sm:$0xff]
  %v4409 = vunpack.c.l.b16 %v4345
  %v4410 = vunpack.c.h.b16 %v4345
  %v4411 = vunpack.c.l.b16 %v4346
  %v4412 = vunpack.c.h.b16 %v4346
  %v4413 = vunpack.c.l.b16 %v4347
  %v4414 = vunpack.c.h.b16 %v4347
  %v4415 = vunpack.c.l.b16 %v4348
  %v4416 = vunpack.c.h.b16 %v4348
  %v4417 = vunpack.c.l.b16 %v4349
  %v4418 = vunpack.c.h.b16 %v4349
  %v4419 = vunpack.c.l.b16 %v4350
  %v4420 = vunpack.c.h.b16 %v4350
  %v4421 = vunpack.c.l.b16 %v4351
  %v4422 = vunpack.c.h.b16 %v4351
  %v4423 = vunpack.c.l.b16 %v4352
  %v4424 = vunpack.c.h.b16 %v4352
  %v4425 = vunpack.c.l.b16 %v4353
  %v4426 = vunpack.c.h.b16 %v4353
  %v4427 = vunpack.c.l.b16 %v4354
  %v4428 = vunpack.c.h.b16 %v4354
  %v4429 = vunpack.c.l.b16 %v4355
  %v4430 = vunpack.c.h.b16 %v4355
  %v4431 = vunpack.c.l.b16 %v4356
  %v4432 = vunpack.c.h.b16 %v4356
  %v4433 = vunpack.c.l.b16 %v4357
  %v4434 = vunpack.c.h.b16 %v4357
  %v4435 = vunpack.c.l.b16 %v4358
  %v4436 = vunpack.c.h.b16 %v4358
  %v4437 = vunpack.c.l.b16 %v4359
  %v4438 = vunpack.c.h.b16 %v4359
  %v4439 = vunpack.c.l.b16 %v4360
  %v4440 = vunpack.c.h.b16 %v4360
  %v4441 = vunpack.c.l.b16 %v4361
  %v4442 = vunpack.c.h.b16 %v4361
  %v4443 = vunpack.c.l.b16 %v4362
  %v4444 = vunpack.c.h.b16 %v4362
  %v4445 = vunpack.c.l.b16 %v4363
  %v4446 = vunpack.c.h.b16 %v4363
  %v4447 = vunpack.c.l.b16 %v4364
  %v4448 = vunpack.c.h.b16 %v4364
  %v4449 = vunpack.c.l.b16 %v4365
  %v4450 = vunpack.c.h.b16 %v4365
  %v4451 = vunpack.c.l.b16 %v4366
  %v4452 = vunpack.c.h.b16 %v4366
  %v4453 = vunpack.c.l.b16 %v4367
  %v4454 = vunpack.c.h.b16 %v4367
  %v4455 = vunpack.c.l.b16 %v4368
  %v4456 = vunpack.c.h.b16 %v4368
  %v4457 = vunpack.c.l.b16 %v4369
  %v4458 = vunpack.c.h.b16 %v4369
  %v4459 = vunpack.c.l.b16 %v4370
  %v4460 = vunpack.c.h.b16 %v4370
  %v4461 = vunpack.c.l.b16 %v4371
  %v4462 = vunpack.c.h.b16 %v4371
  %v4463 = vunpack.c.l.b16 %v4372
  %v4464 = vunpack.c.h.b16 %v4372
  %v4465 = vunpack.c.l.b16 %v4373
  %v4466 = vunpack.c.h.b16 %v4373
  %v4467 = vunpack.c.l.b16 %v4374
  %v4468 = vunpack.c.h.b16 %v4374
  %v4469 = vunpack.c.l.b16 %v4375
  %v4470 = vunpack.c.h.b16 %v4375
  %v4471 = vunpack.c.l.b16 %v4376
  %v4472 = vunpack.c.h.b16 %v4376
  %v4473 = vpack.c.b16 %v4413, %v4409
  %v4474 = vpack.c.b16 %v4414, %v4410
  %v4475 = vpack.c.b16 %v4415, %v4411
  %v4476 = vpack.c.b16 %v4416, %v4412
  %v4477 = vpack.c.b16 %v4421, %v4417
  %v4478 = vpack.c.b16 %v4422, %v4418
  %v4479 = vpack.c.b16 %v4423, %v4419
  %v4480 = vpack.c.b16 %v4424, %v4420
  %v4481 = vpack.c.b16 %v4429, %v4425
  %v4482 = vpack.c.b16 %v4430, %v4426
  %v4483 = vpack.c.b16 %v4431, %v4427
  %v4484 = vpack.c.b16 %v4432, %v4428
  %v4485 = vpack.c.b16 %v4437, %v4433
  %v4486 = vpack.c.b16 %v4438, %v4434
  %v4487 = vpack.c.b16 %v4439, %v4435
  %v4488 = vpack.c.b16 %v4440, %v4436
  %v4489 = vpack.c.b16 %v4445, %v4441
  %v4490 = vpack.c.b16 %v4446, %v4442
  %v4491 = vpack.c.b16 %v4447, %v4443
  %v4492 = vpack.c.b16 %v4448, %v4444
  %v4493 = vpack.c.b16 %v4453, %v4449
  %v4494 = vpack.c.b16 %v4454, %v4450
  %v4495 = vpack.c.b16 %v4455, %v4451
  %v4496 = vpack.c.b16 %v4456, %v4452
  %v4497 = vpack.c.b16 %v4461, %v4457
  %v4498 = vpack.c.b16 %v4462, %v4458
  %v4499 = vpack.c.b16 %v4463, %v4459
  %v4500 = vpack.c.b16 %v4464, %v4460
  %v4501 = vpack.c.b16 %v4469, %v4465
  %v4502 = vpack.c.b16 %v4470, %v4466
  %v4503 = vpack.c.b16 %v4471, %v4467
  %v4504 = vpack.c.b16 %v4472, %v4468
  %4537 = vmatprep.subr.bf16.mxu0 %v4474
  %4538 = vmatpush1.bf16.msra.mxu0 %v4473
  %4539 = vmatprep.subr.bf16.mxu0 %v4478
  %4540 = vmatpush1.bf16.msra.mxu0 %v4477
  %4541 = vmatprep.subr.bf16.mxu0 %v4482
  %4542 = vmatpush1.bf16.msra.mxu0 %v4481
  %4543 = vmatprep.subr.bf16.mxu0 %v4486
  %4544 = vmatpush1.bf16.msra.mxu0 %v4485
  %4545 = vmatprep.subr.bf16.mxu0 %v4490
  %4546 = vmatpush1.bf16.msra.mxu0 %v4489
  %4547 = vmatprep.subr.bf16.mxu0 %v4494
  %4548 = vmatpush1.bf16.msra.mxu0 %v4493
  %4549 = vmatprep.subr.bf16.mxu0 %v4498
  %4550 = vmatpush1.bf16.msra.mxu0 %v4497
  %4551 = vmatprep.subr.bf16.mxu0 %v4502
  %4552 = vmatpush1.bf16.msra.mxu0 %v4501
  %4553 = vmatprep.subr.bf16.mxu0 0
  %4554 = vmatpush1.bf16.msra.mxu0 0
  %4555 = vmatprep.subr.bf16.mxu0 0
  %4556 = vmatpush1.bf16.msra.mxu0 0
  %4557 = vmatprep.subr.bf16.mxu0 0
  %4558 = vmatpush1.bf16.msra.mxu0 0
  %4559 = vmatprep.subr.bf16.mxu0 0
  %4560 = vmatpush1.bf16.msra.mxu0 0
  %4561 = vmatprep.subr.bf16.mxu0 0
  %4562 = vmatpush1.bf16.msra.mxu0 0
  %4563 = vmatprep.subr.bf16.mxu0 0
  %4564 = vmatpush1.bf16.msra.mxu0 0
  %4565 = vmatprep.subr.bf16.mxu0 0
  %4566 = vmatpush1.bf16.msra.mxu0 0
  %4567 = vmatprep.subr.bf16.mxu0 0
  %4568 = vmatpush1.bf16.msra.mxu0 0
  %4569 = vmatprep.mubr.bf16.mxu0 0
  %4570 = vmatmul.mubr.bf16.gmra.mrb[0].mxu0 %v4023
  %v4571 = vpop.f32.mrb[0].mxu0
  %v4572 = vadd.f32 0.0, %v4571
  %v4573 = vpop.f32.mrb[0].mxu0
  %v4574 = vadd.f32 0.0, %v4573
  %v4575 = vpop.f32.mrb[0].mxu0
  %v4576 = vadd.f32 0.0, %v4575
  %v4577 = vpop.f32.mrb[0].mxu0
  %v4578 = vadd.f32 0.0, %v4577
  %4579 = vdwg.mxu0
  %4580 = vmatprep.subr.bf16.mxu0 %v4476
  %4581 = vmatpush1.bf16.msra.mxu0 %v4475
  %4582 = vmatprep.subr.bf16.mxu0 %v4480
  %4583 = vmatpush1.bf16.msra.mxu0 %v4479
  %4584 = vmatprep.subr.bf16.mxu0 %v4484
  %4585 = vmatpush1.bf16.msra.mxu0 %v4483
  %4586 = vmatprep.subr.bf16.mxu0 %v4488
  %4587 = vmatpush1.bf16.msra.mxu0 %v4487
  %4588 = vmatprep.subr.bf16.mxu0 %v4492
  %4589 = vmatpush1.bf16.msra.mxu0 %v4491
  %4590 = vmatprep.subr.bf16.mxu0 %v4496
  %4591 = vmatpush1.bf16.msra.mxu0 %v4495
  %4592 = vmatprep.subr.bf16.mxu0 %v4500
  %4593 = vmatpush1.bf16.msra.mxu0 %v4499
  %4594 = vmatprep.subr.bf16.mxu0 %v4504
  %4595 = vmatpush1.bf16.msra.mxu0 %v4503
  %4596 = vmatprep.subr.bf16.mxu0 0
  %4597 = vmatpush1.bf16.msra.mxu0 0
  %4598 = vmatprep.subr.bf16.mxu0 0
  %4599 = vmatpush1.bf16.msra.mxu0 0
  %4600 = vmatprep.subr.bf16.mxu0 0
  %4601 = vmatpush1.bf16.msra.mxu0 0
  %4602 = vmatprep.subr.bf16.mxu0 0
  %4603 = vmatpush1.bf16.msra.mxu0 0
  %4604 = vmatprep.subr.bf16.mxu0 0
  %4605 = vmatpush1.bf16.msra.mxu0 0
  %4606 = vmatprep.subr.bf16.mxu0 0
  %4607 = vmatpush1.bf16.msra.mxu0 0
  %4608 = vmatprep.subr.bf16.mxu0 0
  %4609 = vmatpush1.bf16.msra.mxu0 0
  %4610 = vmatprep.subr.bf16.mxu0 0
  %4611 = vmatpush1.bf16.msra.mxu0 0
  %4612 = vmatprep.mubr.bf16.mxu0 0
  %4613 = vmatmul.mubr.bf16.gmra.mrb[0].mxu0 %v4023
  %v4614 = vpop.f32.mrb[0].mxu0
  %v4615 = vadd.f32 0.0, %v4614
  %v4616 = vpop.f32.mrb[0].mxu0
  %v4617 = vadd.f32 0.0, %v4616
  %v4618 = vpop.f32.mrb[0].mxu0
  %v4619 = vadd.f32 0.0, %v4618
  %v4620 = vpop.f32.mrb[0].mxu0
  %v4621 = vadd.f32 0.0, %v4620
  %4622 = vdwg.mxu0
  %v4623 = vadd.f32 %v4337, %v4572
  %v4624 = vadd.f32 %v4338, %v4574
  %v4625 = vadd.f32 %v4339, %v4615
  %v4626 = vadd.f32 %v4340, %v4617
  %v4627 = vadd.f32 %v4341, %v4576
  %v4628 = vadd.f32 %v4342, %v4578
  %v4629 = vadd.f32 %v4343, %v4619
  %v4630 = vadd.f32 %v4344, %v4621
  %v4631 = vmul.f32 %v4623, 0.5
  %v4632 = vmul.f32 %v4624, 0.5
  %v4633 = vmul.f32 %v4625, 0.5
  %v4634 = vmul.f32 %v4627, 0.5
  %v4635 = vmul.f32 %v4628, 0.5
  %v4636 = vmul.f32 %v4629, 0.5
  %v4637 = vtanh.pop %v4631
  %v4638 = vtanh.pop %v4632
  %v4639 = vtanh.pop %v4633
  %v4640 = vtanh.pop %v4634
  %v4641 = vtanh.pop %v4635
  %v4642 = vtanh.pop %v4636
  %v4643 = vmul.f32 %v4637, 0.5
  %v4644 = vmul.f32 %v4638, 0.5
  %v4645 = vmul.f32 %v4639, 0.5
  %v4646 = vmul.f32 %v4640, 0.5
  %v4647 = vmul.f32 %v4641, 0.5
  %v4648 = vmul.f32 %v4642, 0.5
  %v4649 = vadd.f32 %v4643, 0.5
  %v4650 = vadd.f32 %v4644, 0.5
  %v4651 = vadd.f32 %v4645, 0.5
  %v4652 = vadd.f32 %v4646, 0.5
  %v4653 = vadd.f32 %v4647, 0.5
  %v4654 = vadd.f32 %v4648, 0.5
  %v4655 = vtanh.pop %v4626
  %v4656 = vtanh.pop %v4630
  %v4657 = vmul.f32 %v4650, %v4017
  %v4658 = vmul.f32 %v4653, %v4018
  %v4659 = vmul.f32 %v4649, %v4655
  %v4660 = vmul.f32 %v4652, %v4656
  %v4661 = vadd.f32 %v4657, %v4659
  %v4662 = vadd.f32 %v4658, %v4660
  %v4663 = vtanh.pop %v4661
  %v4664 = vtanh.pop %v4662
  %v4665 = vmul.f32 %v4651, %v4663
  %v4666 = vmul.f32 %v4654, %v4664
  %v4667 = vpack.c.bf16 %v4666, %v4665
  %v4668 = vld [vmem:[%s4] sm:$0xff]
  %v4669 = vld [vmem:[%s4 + $0x8] sm:$0xff]
  %v4670 = vld [vmem:[%s4 + $0x10] sm:$0xff]
  %v4671 = vld [vmem:[%s4 + $0x18] sm:$0xff]
  %v4672 = vld [vmem:[%s4 + $0x20] sm:$0xff]
  %v4673 = vld [vmem:[%s4 + $0x28] sm:$0xff]
  %v4674 = vld [vmem:[%s4 + $0x30] sm:$0xff]
  %v4675 = vld [vmem:[%s4 + $0x38] sm:$0xff]
  %v4676 = vld [vmem:[%s4 + $0x40] sm:$0xff]
  %v4677 = vld [vmem:[%s4 + $0x48] sm:$0xff]
  %v4678 = vld [vmem:[%s4 + $0x50] sm:$0xff]
  %v4679 = vld [vmem:[%s4 + $0x58] sm:$0xff]
  %v4680 = vld [vmem:[%s4 + $0x60] sm:$0xff]
  %v4681 = vld [vmem:[%s4 + $0x68] sm:$0xff]
  %v4682 = vld [vmem:[%s4 + $0x70] sm:$0xff]
  %v4683 = vld [vmem:[%s4 + $0x78] sm:$0xff]
  %v4684 = vld [vmem:[%s4 + $0x80] sm:$0xff]
  %v4685 = vld [vmem:[%s4 + $0x88] sm:$0xff]
  %v4686 = vld [vmem:[%s4 + $0x90] sm:$0xff]
  %v4687 = vld [vmem:[%s4 + $0x98] sm:$0xff]
  %v4688 = vld [vmem:[%s4 + $0xa0] sm:$0xff]
  %v4689 = vld [vmem:[%s4 + $0xa8] sm:$0xff]
  %v4690 = vld [vmem:[%s4 + $0xb0] sm:$0xff]
  %v4691 = vld [vmem:[%s4 + $0xb8] sm:$0xff]
  %v4692 = vld [vmem:[%s4 + $0xc0] sm:$0xff]
  %v4693 = vld [vmem:[%s4 + $0xc8] sm:$0xff]
  %v4694 = vld [vmem:[%s4 + $0xd0] sm:$0xff]
  %v4695 = vld [vmem:[%s4 + $0xd8] sm:$0xff]
  %v4696 = vld [vmem:[%s4 + $0xe0] sm:$0xff]
  %v4697 = vld [vmem:[%s4 + $0xe8] sm:$0xff]
  %v4698 = vld [vmem:[%s4 + $0xf0] sm:$0xff]
  %v4699 = vld [vmem:[%s4 + $0xf8] sm:$0xff]
  %v4700 = vld [vmem:[%s6] sm:$0xf]
  %v4702 = vlaneseq
  %v4703 = vshrl.u32 %v4702, 7
  %v4704 = vsub.s32 0, %v4703
  %v4705 = vrot.slane %v4700, %v4704
  %v4706 = vlaneseq
  %v4707 = vshrl.u32 %v4706, 7
  %v4708 = vsub.s32 1, %v4707
  %v4709 = vrot.slane %v4700, %v4708
  %v4710 = vlaneseq
  %v4711 = vshrl.u32 %v4710, 7
  %v4712 = vsub.s32 2, %v4711
  %v4713 = vrot.slane %v4700, %v4712
  %v4714 = vlaneseq
  %v4715 = vshrl.u32 %v4714, 7
  %v4716 = vsub.s32 3, %v4715
  %v4717 = vrot.slane %v4700, %v4716
  %v4754 = vunpack.c.l.b16 %v4668
  %v4755 = vunpack.c.h.b16 %v4668
  %v4756 = vunpack.c.l.b16 %v4669
  %v4757 = vunpack.c.h.b16 %v4669
  %v4758 = vunpack.c.l.b16 %v4670
  %v4759 = vunpack.c.h.b16 %v4670
  %v4760 = vunpack.c.l.b16 %v4671
  %v4761 = vunpack.c.h.b16 %v4671
  %v4762 = vunpack.c.l.b16 %v4672
  %v4763 = vunpack.c.h.b16 %v4672
  %v4764 = vunpack.c.l.b16 %v4673
  %v4765 = vunpack.c.h.b16 %v4673
  %v4766 = vunpack.c.l.b16 %v4674
  %v4767 = vunpack.c.h.b16 %v4674
  %v4768 = vunpack.c.l.b16 %v4675
  %v4769 = vunpack.c.h.b16 %v4675
  %v4770 = vunpack.c.l.b16 %v4676
  %v4771 = vunpack.c.h.b16 %v4676
  %v4772 = vunpack.c.l.b16 %v4677
  %v4773 = vunpack.c.h.b16 %v4677
  %v4774 = vunpack.c.l.b16 %v4678
  %v4775 = vunpack.c.h.b16 %v4678
  %v4776 = vunpack.c.l.b16 %v4679
  %v4777 = vunpack.c.h.b16 %v4679
  %v4778 = vunpack.c.l.b16 %v4680
  %v4779 = vunpack.c.h.b16 %v4680
  %v4780 = vunpack.c.l.b16 %v4681
  %v4781 = vunpack.c.h.b16 %v4681
  %v4782 = vunpack.c.l.b16 %v4682
  %v4783 = vunpack.c.h.b16 %v4682
  %v4784 = vunpack.c.l.b16 %v4683
  %v4785 = vunpack.c.h.b16 %v4683
  %v4786 = vunpack.c.l.b16 %v4684
  %v4787 = vunpack.c.h.b16 %v4684
  %v4788 = vunpack.c.l.b16 %v4685
  %v4789 = vunpack.c.h.b16 %v4685
  %v4790 = vunpack.c.l.b16 %v4686
  %v4791 = vunpack.c.h.b16 %v4686
  %v4792 = vunpack.c.l.b16 %v4687
  %v4793 = vunpack.c.h.b16 %v4687
  %v4794 = vunpack.c.l.b16 %v4688
  %v4795 = vunpack.c.h.b16 %v4688
  %v4796 = vunpack.c.l.b16 %v4689
  %v4797 = vunpack.c.h.b16 %v4689
  %v4798 = vunpack.c.l.b16 %v4690
  %v4799 = vunpack.c.h.b16 %v4690
  %v4800 = vunpack.c.l.b16 %v4691
  %v4801 = vunpack.c.h.b16 %v4691
  %v4802 = vunpack.c.l.b16 %v4692
  %v4803 = vunpack.c.h.b16 %v4692
  %v4804 = vunpack.c.l.b16 %v4693
  %v4805 = vunpack.c.h.b16 %v4693
  %v4806 = vunpack.c.l.b16 %v4694
  %v4807 = vunpack.c.h.b16 %v4694
  %v4808 = vunpack.c.l.b16 %v4695
  %v4809 = vunpack.c.h.b16 %v4695
  %v4810 = vunpack.c.l.b16 %v4696
  %v4811 = vunpack.c.h.b16 %v4696
  %v4812 = vunpack.c.l.b16 %v4697
  %v4813 = vunpack.c.h.b16 %v4697
  %v4814 = vunpack.c.l.b16 %v4698
  %v4815 = vunpack.c.h.b16 %v4698
  %v4816 = vunpack.c.l.b16 %v4699
  %v4817 = vunpack.c.h.b16 %v4699
  %v4818 = vpack.c.b16 %v4758, %v4754
  %v4819 = vpack.c.b16 %v4759, %v4755
  %v4820 = vpack.c.b16 %v4760, %v4756
  %v4821 = vpack.c.b16 %v4761, %v4757
  %v4822 = vpack.c.b16 %v4766, %v4762
  %v4823 = vpack.c.b16 %v4767, %v4763
  %v4824 = vpack.c.b16 %v4768, %v4764
  %v4825 = vpack.c.b16 %v4769, %v4765
  %v4826 = vpack.c.b16 %v4774, %v4770
  %v4827 = vpack.c.b16 %v4775, %v4771
  %v4828 = vpack.c.b16 %v4776, %v4772
  %v4829 = vpack.c.b16 %v4777, %v4773
  %v4830 = vpack.c.b16 %v4782, %v4778
  %v4831 = vpack.c.b16 %v4783, %v4779
  %v4832 = vpack.c.b16 %v4784, %v4780
  %v4833 = vpack.c.b16 %v4785, %v4781
  %v4834 = vpack.c.b16 %v4790, %v4786
  %v4835 = vpack.c.b16 %v4791, %v4787
  %v4836 = vpack.c.b16 %v4792, %v4788
  %v4837 = vpack.c.b16 %v4793, %v4789
  %v4838 = vpack.c.b16 %v4798, %v4794
  %v4839 = vpack.c.b16 %v4799, %v4795
  %v4840 = vpack.c.b16 %v4800, %v4796
  %v4841 = vpack.c.b16 %v4801, %v4797
  %v4842 = vpack.c.b16 %v4806, %v4802
  %v4843 = vpack.c.b16 %v4807, %v4803
  %v4844 = vpack.c.b16 %v4808, %v4804
  %v4845 = vpack.c.b16 %v4809, %v4805
  %v4846 = vpack.c.b16 %v4814, %v4810
  %v4847 = vpack.c.b16 %v4815, %v4811
  %v4848 = vpack.c.b16 %v4816, %v4812
  %v4849 = vpack.c.b16 %v4817, %v4813
  %4882 = vmatprep.subr.bf16.mxu0 %v4819
  %4883 = vmatpush1.bf16.msra.mxu0 %v4818
  %4884 = vmatprep.subr.bf16.mxu0 %v4823
  %4885 = vmatpush1.bf16.msra.mxu0 %v4822
  %4886 = vmatprep.subr.bf16.mxu0 %v4827
  %4887 = vmatpush1.bf16.msra.mxu0 %v4826
  %4888 = vmatprep.subr.bf16.mxu0 %v4831
  %4889 = vmatpush1.bf16.msra.mxu0 %v4830
  %4890 = vmatprep.subr.bf16.mxu0 %v4835
  %4891 = vmatpush1.bf16.msra.mxu0 %v4834
  %4892 = vmatprep.subr.bf16.mxu0 %v4839
  %4893 = vmatpush1.bf16.msra.mxu0 %v4838
  %4894 = vmatprep.subr.bf16.mxu0 %v4843
  %4895 = vmatpush1.bf16.msra.mxu0 %v4842
  %4896 = vmatprep.subr.bf16.mxu0 %v4847
  %4897 = vmatpush1.bf16.msra.mxu0 %v4846
  %4898 = vmatprep.subr.bf16.mxu0 0
  %4899 = vmatpush1.bf16.msra.mxu0 0
  %4900 = vmatprep.subr.bf16.mxu0 0
  %4901 = vmatpush1.bf16.msra.mxu0 0
  %4902 = vmatprep.subr.bf16.mxu0 0
  %4903 = vmatpush1.bf16.msra.mxu0 0
  %4904 = vmatprep.subr.bf16.mxu0 0
  %4905 = vmatpush1.bf16.msra.mxu0 0
  %4906 = vmatprep.subr.bf16.mxu0 0
  %4907 = vmatpush1.bf16.msra.mxu0 0
  %4908 = vmatprep.subr.bf16.mxu0 0
  %4909 = vmatpush1.bf16.msra.mxu0 0
  %4910 = vmatprep.subr.bf16.mxu0 0
  %4911 = vmatpush1.bf16.msra.mxu0 0
  %4912 = vmatprep.subr.bf16.mxu0 0
  %4913 = vmatpush1.bf16.msra.mxu0 0
  %4914 = vmatprep.mubr.bf16.mxu0 0
  %4915 = vmatmul.mubr.bf16.gmra.mrb[0].mxu0 %v4667
  %v4916 = vpop.f32.mrb[0].mxu0
  %v4917 = vadd.f32 %v4705, %v4916
  %v4918 = vpop.f32.mrb[0].mxu0
  %v4919 = vadd.f32 %v4709, %v4918
  %v4920 = vpop.f32.mrb[0].mxu0
  %v4921 = vadd.f32 %v4705, %v4920
  %v4922 = vpop.f32.mrb[0].mxu0
  %v4923 = vadd.f32 %v4709, %v4922
  %4924 = vdwg.mxu0
  %4925 = vmatprep.subr.bf16.mxu0 %v4821
  %4926 = vmatpush1.bf16.msra.mxu0 %v4820
  %4927 = vmatprep.subr.bf16.mxu0 %v4825
  %4928 = vmatpush1.bf16.msra.mxu0 %v4824
  %4929 = vmatprep.subr.bf16.mxu0 %v4829
  %4930 = vmatpush1.bf16.msra.mxu0 %v4828
  %4931 = vmatprep.subr.bf16.mxu0 %v4833
  %4932 = vmatpush1.bf16.msra.mxu0 %v4832
  %4933 = vmatprep.subr.bf16.mxu0 %v4837
  %4934 = vmatpush1.bf16.msra.mxu0 %v4836
  %4935 = vmatprep.subr.bf16.mxu0 %v4841
  %4936 = vmatpush1.bf16.msra.mxu0 %v4840
  %4937 = vmatprep.subr.bf16.mxu0 %v4845
  %4938 = vmatpush1.bf16.msra.mxu0 %v4844
  %4939 = vmatprep.subr.bf16.mxu0 %v4849
  %4940 = vmatpush1.bf16.msra.mxu0 %v4848
  %4941 = vmatprep.subr.bf16.mxu0 0
  %4942 = vmatpush1.bf16.msra.mxu0 0
  %4943 = vmatprep.subr.bf16.mxu0 0
  %4944 = vmatpush1.bf16.msra.mxu0 0
  %4945 = vmatprep.subr.bf16.mxu0 0
  %4946 = vmatpush1.bf16.msra.mxu0 0
  %4947 = vmatprep.subr.bf16.mxu0 0
  %4948 = vmatpush1.bf16.msra.mxu0 0
  %4949 = vmatprep.subr.bf16.mxu0 0
  %4950 = vmatpush1.bf16.msra.mxu0 0
  %4951 = vmatprep.subr.bf16.mxu0 0
  %4952 = vmatpush1.bf16.msra.mxu0 0
  %4953 = vmatprep.subr.bf16.mxu0 0
  %4954 = vmatpush1.bf16.msra.mxu0 0
  %4955 = vmatprep.subr.bf16.mxu0 0
  %4956 = vmatpush1.bf16.msra.mxu0 0
  %4957 = vmatprep.mubr.bf16.mxu0 0
  %4958 = vmatmul.mubr.bf16.gmra.mrb[0].mxu0 %v4667
  %v4959 = vpop.f32.mrb[0].mxu0
  %v4960 = vadd.f32 %v4713, %v4959
  %v4961 = vpop.f32.mrb[0].mxu0
  %v4962 = vadd.f32 %v4717, %v4961
  %v4963 = vpop.f32.mrb[0].mxu0
  %v4964 = vadd.f32 %v4713, %v4963
  %v4965 = vpop.f32.mrb[0].mxu0
  %v4966 = vadd.f32 %v4717, %v4965
  %4967 = vdwg.mxu0
  %v4968 = vpack.c.bf16 %v4921, %v4917
  %v4969 = vpack.c.bf16 %v4923, %v4919
  %v4970 = vpack.c.bf16 %v4964, %v4960
  %v4971 = vpack.c.bf16 %v4966, %v4962
  %4972 = vst [vmem:[%s4332] sm:$0xff] %v4968
  %4973 = vst [vmem:[%s4332 + $0x8] sm:$0xff] %v4969
  %4974 = vst [vmem:[%s4332 + $0x10] sm:$0xff] %v4970
  %4975 = vst [vmem:[%s4332 + $0x18] sm:$0xff] %v4971
  %s4976 = scalar_lea.vmem [#allocation2], 224
  %v4977 = vld [vmem:[%s4976] sm:$0xff]
  %v4978 = vld [vmem:[%s4976 + $0x8] sm:$0xff]
  %v4979 = vld [vmem:[%s4976 + $0x10] sm:$0xff]
  %v4980 = vld [vmem:[%s4976 + $0x18] sm:$0xff]
  %v4981 = vunpack.c.l.bf16 %v4977
  %v4982 = vunpack.c.l.bf16 %v4978
  %v4983 = vunpack.c.l.bf16 %v4979
  %v4984 = vunpack.c.l.bf16 %v4980
  %v4985 = vunpack.c.h.bf16 %v4977
  %v4986 = vunpack.c.h.bf16 %v4978
  %v4987 = vunpack.c.h.bf16 %v4979
  %v4988 = vunpack.c.h.bf16 %v4980
  %v4989 = vld [vmem:[%s2] sm:$0xff]
  %v4990 = vld [vmem:[%s2 + $0x8] sm:$0xff]
  %v4991 = vld [vmem:[%s2 + $0x10] sm:$0xff]
  %v4992 = vld [vmem:[%s2 + $0x18] sm:$0xff]
  %v4993 = vld [vmem:[%s2 + $0x20] sm:$0xff]
  %v4994 = vld [vmem:[%s2 + $0x28] sm:$0xff]
  %v4995 = vld [vmem:[%s2 + $0x30] sm:$0xff]
  %v4996 = vld [vmem:[%s2 + $0x38] sm:$0xff]
  %v4997 = vld [vmem:[%s2 + $0x40] sm:$0xff]
  %v4998 = vld [vmem:[%s2 + $0x48] sm:$0xff]
  %v4999 = vld [vmem:[%s2 + $0x50] sm:$0xff]
  %v5000 = vld [vmem:[%s2 + $0x58] sm:$0xff]
  %v5001 = vld [vmem:[%s2 + $0x60] sm:$0xff]
  %v5002 = vld [vmem:[%s2 + $0x68] sm:$0xff]
  %v5003 = vld [vmem:[%s2 + $0x70] sm:$0xff]
  %v5004 = vld [vmem:[%s2 + $0x78] sm:$0xff]
  %v5005 = vld [vmem:[%s2 + $0x80] sm:$0xff]
  %v5006 = vld [vmem:[%s2 + $0x88] sm:$0xff]
  %v5007 = vld [vmem:[%s2 + $0x90] sm:$0xff]
  %v5008 = vld [vmem:[%s2 + $0x98] sm:$0xff]
  %v5009 = vld [vmem:[%s2 + $0xa0] sm:$0xff]
  %v5010 = vld [vmem:[%s2 + $0xa8] sm:$0xff]
  %v5011 = vld [vmem:[%s2 + $0xb0] sm:$0xff]
  %v5012 = vld [vmem:[%s2 + $0xb8] sm:$0xff]
  %v5013 = vld [vmem:[%s2 + $0xc0] sm:$0xff]
  %v5014 = vld [vmem:[%s2 + $0xc8] sm:$0xff]
  %v5015 = vld [vmem:[%s2 + $0xd0] sm:$0xff]
  %v5016 = vld [vmem:[%s2 + $0xd8] sm:$0xff]
  %v5017 = vld [vmem:[%s2 + $0xe0] sm:$0xff]
  %v5018 = vld [vmem:[%s2 + $0xe8] sm:$0xff]
  %v5019 = vld [vmem:[%s2 + $0xf0] sm:$0xff]
  %v5020 = vld [vmem:[%s2 + $0xf8] sm:$0xff]
  %v5053 = vunpack.c.l.b16 %v4989
  %v5054 = vunpack.c.h.b16 %v4989
  %v5055 = vunpack.c.l.b16 %v4990
  %v5056 = vunpack.c.h.b16 %v4990
  %v5057 = vunpack.c.l.b16 %v4991
  %v5058 = vunpack.c.h.b16 %v4991
  %v5059 = vunpack.c.l.b16 %v4992
  %v5060 = vunpack.c.h.b16 %v4992
  %v5061 = vunpack.c.l.b16 %v4993
  %v5062 = vunpack.c.h.b16 %v4993
  %v5063 = vunpack.c.l.b16 %v4994
  %v5064 = vunpack.c.h.b16 %v4994
  %v5065 = vunpack.c.l.b16 %v4995
  %v5066 = vunpack.c.h.b16 %v4995
  %v5067 = vunpack.c.l.b16 %v4996
  %v5068 = vunpack.c.h.b16 %v4996
  %v5069 = vunpack.c.l.b16 %v4997
  %v5070 = vunpack.c.h.b16 %v4997
  %v5071 = vunpack.c.l.b16 %v4998
  %v5072 = vunpack.c.h.b16 %v4998
  %v5073 = vunpack.c.l.b16 %v4999
  %v5074 = vunpack.c.h.b16 %v4999
  %v5075 = vunpack.c.l.b16 %v5000
  %v5076 = vunpack.c.h.b16 %v5000
  %v5077 = vunpack.c.l.b16 %v5001
  %v5078 = vunpack.c.h.b16 %v5001
  %v5079 = vunpack.c.l.b16 %v5002
  %v5080 = vunpack.c.h.b16 %v5002
  %v5081 = vunpack.c.l.b16 %v5003
  %v5082 = vunpack.c.h.b16 %v5003
  %v5083 = vunpack.c.l.b16 %v5004
  %v5084 = vunpack.c.h.b16 %v5004
  %v5085 = vunpack.c.l.b16 %v5005
  %v5086 = vunpack.c.h.b16 %v5005
  %v5087 = vunpack.c.l.b16 %v5006
  %v5088 = vunpack.c.h.b16 %v5006
  %v5089 = vunpack.c.l.b16 %v5007
  %v5090 = vunpack.c.h.b16 %v5007
  %v5091 = vunpack.c.l.b16 %v5008
  %v5092 = vunpack.c.h.b16 %v5008
  %v5093 = vunpack.c.l.b16 %v5009
  %v5094 = vunpack.c.h.b16 %v5009
  %v5095 = vunpack.c.l.b16 %v5010
  %v5096 = vunpack.c.h.b16 %v5010
  %v5097 = vunpack.c.l.b16 %v5011
  %v5098 = vunpack.c.h.b16 %v5011
  %v5099 = vunpack.c.l.b16 %v5012
  %v5100 = vunpack.c.h.b16 %v5012
  %v5101 = vunpack.c.l.b16 %v5013
  %v5102 = vunpack.c.h.b16 %v5013
  %v5103 = vunpack.c.l.b16 %v5014
  %v5104 = vunpack.c.h.b16 %v5014
  %v5105 = vunpack.c.l.b16 %v5015
  %v5106 = vunpack.c.h.b16 %v5015
  %v5107 = vunpack.c.l.b16 %v5016
  %v5108 = vunpack.c.h.b16 %v5016
  %v5109 = vunpack.c.l.b16 %v5017
  %v5110 = vunpack.c.h.b16 %v5017
  %v5111 = vunpack.c.l.b16 %v5018
  %v5112 = vunpack.c.h.b16 %v5018
  %v5113 = vunpack.c.l.b16 %v5019
  %v5114 = vunpack.c.h.b16 %v5019
  %v5115 = vunpack.c.l.b16 %v5020
  %v5116 = vunpack.c.h.b16 %v5020
  %v5117 = vpack.c.b16 %v5057, %v5053
  %v5118 = vpack.c.b16 %v5058, %v5054
  %v5119 = vpack.c.b16 %v5059, %v5055
  %v5120 = vpack.c.b16 %v5060, %v5056
  %v5121 = vpack.c.b16 %v5065, %v5061
  %v5122 = vpack.c.b16 %v5066, %v5062
  %v5123 = vpack.c.b16 %v5067, %v5063
  %v5124 = vpack.c.b16 %v5068, %v5064
  %v5125 = vpack.c.b16 %v5073, %v5069
  %v5126 = vpack.c.b16 %v5074, %v5070
  %v5127 = vpack.c.b16 %v5075, %v5071
  %v5128 = vpack.c.b16 %v5076, %v5072
  %v5129 = vpack.c.b16 %v5081, %v5077
  %v5130 = vpack.c.b16 %v5082, %v5078
  %v5131 = vpack.c.b16 %v5083, %v5079
  %v5132 = vpack.c.b16 %v5084, %v5080
  %v5133 = vpack.c.b16 %v5089, %v5085
  %v5134 = vpack.c.b16 %v5090, %v5086
  %v5135 = vpack.c.b16 %v5091, %v5087
  %v5136 = vpack.c.b16 %v5092, %v5088
  %v5137 = vpack.c.b16 %v5097, %v5093
  %v5138 = vpack.c.b16 %v5098, %v5094
  %v5139 = vpack.c.b16 %v5099, %v5095
  %v5140 = vpack.c.b16 %v5100, %v5096
  %v5141 = vpack.c.b16 %v5105, %v5101
  %v5142 = vpack.c.b16 %v5106, %v5102
  %v5143 = vpack.c.b16 %v5107, %v5103
  %v5144 = vpack.c.b16 %v5108, %v5104
  %v5145 = vpack.c.b16 %v5113, %v5109
  %v5146 = vpack.c.b16 %v5114, %v5110
  %v5147 = vpack.c.b16 %v5115, %v5111
  %v5148 = vpack.c.b16 %v5116, %v5112
  %5181 = vmatprep.subr.bf16.mxu0 %v5118
  %5182 = vmatpush1.bf16.msra.mxu0 %v5117
  %5183 = vmatprep.subr.bf16.mxu0 %v5122
  %5184 = vmatpush1.bf16.msra.mxu0 %v5121
  %5185 = vmatprep.subr.bf16.mxu0 %v5126
  %5186 = vmatpush1.bf16.msra.mxu0 %v5125
  %5187 = vmatprep.subr.bf16.mxu0 %v5130
  %5188 = vmatpush1.bf16.msra.mxu0 %v5129
  %5189 = vmatprep.subr.bf16.mxu0 %v5134
  %5190 = vmatpush1.bf16.msra.mxu0 %v5133
  %5191 = vmatprep.subr.bf16.mxu0 %v5138
  %5192 = vmatpush1.bf16.msra.mxu0 %v5137
  %5193 = vmatprep.subr.bf16.mxu0 %v5142
  %5194 = vmatpush1.bf16.msra.mxu0 %v5141
  %5195 = vmatprep.subr.bf16.mxu0 %v5146
  %5196 = vmatpush1.bf16.msra.mxu0 %v5145
  %5197 = vmatprep.subr.bf16.mxu0 0
  %5198 = vmatpush1.bf16.msra.mxu0 0
  %5199 = vmatprep.subr.bf16.mxu0 0
  %5200 = vmatpush1.bf16.msra.mxu0 0
  %5201 = vmatprep.subr.bf16.mxu0 0
  %5202 = vmatpush1.bf16.msra.mxu0 0
  %5203 = vmatprep.subr.bf16.mxu0 0
  %5204 = vmatpush1.bf16.msra.mxu0 0
  %5205 = vmatprep.subr.bf16.mxu0 0
  %5206 = vmatpush1.bf16.msra.mxu0 0
  %5207 = vmatprep.subr.bf16.mxu0 0
  %5208 = vmatpush1.bf16.msra.mxu0 0
  %5209 = vmatprep.subr.bf16.mxu0 0
  %5210 = vmatpush1.bf16.msra.mxu0 0
  %5211 = vmatprep.subr.bf16.mxu0 0
  %5212 = vmatpush1.bf16.msra.mxu0 0
  %5213 = vmatprep.mubr.bf16.mxu0 0
  %5214 = vmatmul.mubr.bf16.gmra.mrb[0].mxu0 %v4667
  %v5215 = vpop.f32.mrb[0].mxu0
  %v5216 = vadd.f32 0.0, %v5215
  %v5217 = vpop.f32.mrb[0].mxu0
  %v5218 = vadd.f32 0.0, %v5217
  %v5219 = vpop.f32.mrb[0].mxu0
  %v5220 = vadd.f32 0.0, %v5219
  %v5221 = vpop.f32.mrb[0].mxu0
  %v5222 = vadd.f32 0.0, %v5221
  %5223 = vdwg.mxu0
  %5224 = vmatprep.subr.bf16.mxu0 %v5120
  %5225 = vmatpush1.bf16.msra.mxu0 %v5119
  %5226 = vmatprep.subr.bf16.mxu0 %v5124
  %5227 = vmatpush1.bf16.msra.mxu0 %v5123
  %5228 = vmatprep.subr.bf16.mxu0 %v5128
  %5229 = vmatpush1.bf16.msra.mxu0 %v5127
  %5230 = vmatprep.subr.bf16.mxu0 %v5132
  %5231 = vmatpush1.bf16.msra.mxu0 %v5131
  %5232 = vmatprep.subr.bf16.mxu0 %v5136
  %5233 = vmatpush1.bf16.msra.mxu0 %v5135
  %5234 = vmatprep.subr.bf16.mxu0 %v5140
  %5235 = vmatpush1.bf16.msra.mxu0 %v5139
  %5236 = vmatprep.subr.bf16.mxu0 %v5144
  %5237 = vmatpush1.bf16.msra.mxu0 %v5143
  %5238 = vmatprep.subr.bf16.mxu0 %v5148
  %5239 = vmatpush1.bf16.msra.mxu0 %v5147
  %5240 = vmatprep.subr.bf16.mxu0 0
  %5241 = vmatpush1.bf16.msra.mxu0 0
  %5242 = vmatprep.subr.bf16.mxu0 0
  %5243 = vmatpush1.bf16.msra.mxu0 0
  %5244 = vmatprep.subr.bf16.mxu0 0
  %5245 = vmatpush1.bf16.msra.mxu0 0
  %5246 = vmatprep.subr.bf16.mxu0 0
  %5247 = vmatpush1.bf16.msra.mxu0 0
  %5248 = vmatprep.subr.bf16.mxu0 0
  %5249 = vmatpush1.bf16.msra.mxu0 0
  %5250 = vmatprep.subr.bf16.mxu0 0
  %5251 = vmatpush1.bf16.msra.mxu0 0
  %5252 = vmatprep.subr.bf16.mxu0 0
  %5253 = vmatpush1.bf16.msra.mxu0 0
  %5254 = vmatprep.subr.bf16.mxu0 0
  %5255 = vmatpush1.bf16.msra.mxu0 0
  %5256 = vmatprep.mubr.bf16.mxu0 0
  %5257 = vmatmul.mubr.bf16.gmra.mrb[0].mxu0 %v4667
  %v5258 = vpop.f32.mrb[0].mxu0
  %v5259 = vadd.f32 0.0, %v5258
  %v5260 = vpop.f32.mrb[0].mxu0
  %v5261 = vadd.f32 0.0, %v5260
  %v5262 = vpop.f32.mrb[0].mxu0
  %v5263 = vadd.f32 0.0, %v5262
  %v5264 = vpop.f32.mrb[0].mxu0
  %v5265 = vadd.f32 0.0, %v5264
  %5266 = vdwg.mxu0
  %v5267 = vadd.f32 %v4981, %v5216
  %v5268 = vadd.f32 %v4982, %v5218
  %v5269 = vadd.f32 %v4983, %v5259
  %v5270 = vadd.f32 %v4984, %v5261
  %v5271 = vadd.f32 %v4985, %v5220
  %v5272 = vadd.f32 %v4986, %v5222
  %v5273 = vadd.f32 %v4987, %v5263
  %v5274 = vadd.f32 %v4988, %v5265
  %v5275 = vmul.f32 %v5267, 0.5
  %v5276 = vmul.f32 %v5268, 0.5
  %v5277 = vmul.f32 %v5269, 0.5
  %v5278 = vmul.f32 %v5271, 0.5
  %v5279 = vmul.f32 %v5272, 0.5
  %v5280 = vmul.f32 %v5273, 0.5
  %v5281 = vtanh.pop %v5275
  %v5282 = vtanh.pop %v5276
  %v5283 = vtanh.pop %v5277
  %v5284 = vtanh.pop %v5278
  %v5285 = vtanh.pop %v5279
  %v5286 = vtanh.pop %v5280
  %v5287 = vmul.f32 %v5281, 0.5
  %v5288 = vmul.f32 %v5282, 0.5
  %v5289 = vmul.f32 %v5283, 0.5
  %v5290 = vmul.f32 %v5284, 0.5
  %v5291 = vmul.f32 %v5285, 0.5
  %v5292 = vmul.f32 %v5286, 0.5
  %v5293 = vadd.f32 %v5287, 0.5
  %v5294 = vadd.f32 %v5288, 0.5
  %v5295 = vadd.f32 %v5289, 0.5
  %v5296 = vadd.f32 %v5290, 0.5
  %v5297 = vadd.f32 %v5291, 0.5
  %v5298 = vadd.f32 %v5292, 0.5
  %v5299 = vtanh.pop %v5270
  %v5300 = vtanh.pop %v5274
  %v5301 = vmul.f32 %v5294, %v4661
  %v5302 = vmul.f32 %v5297, %v4662
  %v5303 = vmul.f32 %v5293, %v5299
  %v5304 = vmul.f32 %v5296, %v5300
  %v5305 = vadd.f32 %v5301, %v5303
  %v5306 = vadd.f32 %v5302, %v5304
  %v5307 = vtanh.pop %v5305
  %v5308 = vtanh.pop %v5306
  %v5309 = vmul.f32 %v5295, %v5307
  %v5310 = vmul.f32 %v5298, %v5308
  %v5311 = vpack.c.bf16 %v5310, %v5309
  %v5312 = vld [vmem:[%s4] sm:$0xff]
  %v5313 = vld [vmem:[%s4 + $0x8] sm:$0xff]
  %v5314 = vld [vmem:[%s4 + $0x10] sm:$0xff]
  %v5315 = vld [vmem:[%s4 + $0x18] sm:$0xff]
  %v5316 = vld [vmem:[%s4 + $0x20] sm:$0xff]
  %v5317 = vld [vmem:[%s4 + $0x28] sm:$0xff]
  %v5318 = vld [vmem:[%s4 + $0x30] sm:$0xff]
  %v5319 = vld [vmem:[%s4 + $0x38] sm:$0xff]
  %v5320 = vld [vmem:[%s4 + $0x40] sm:$0xff]
  %v5321 = vld [vmem:[%s4 + $0x48] sm:$0xff]
  %v5322 = vld [vmem:[%s4 + $0x50] sm:$0xff]
  %v5323 = vld [vmem:[%s4 + $0x58] sm:$0xff]
  %v5324 = vld [vmem:[%s4 + $0x60] sm:$0xff]
  %v5325 = vld [vmem:[%s4 + $0x68] sm:$0xff]
  %v5326 = vld [vmem:[%s4 + $0x70] sm:$0xff]
  %v5327 = vld [vmem:[%s4 + $0x78] sm:$0xff]
  %v5328 = vld [vmem:[%s4 + $0x80] sm:$0xff]
  %v5329 = vld [vmem:[%s4 + $0x88] sm:$0xff]
  %v5330 = vld [vmem:[%s4 + $0x90] sm:$0xff]
  %v5331 = vld [vmem:[%s4 + $0x98] sm:$0xff]
  %v5332 = vld [vmem:[%s4 + $0xa0] sm:$0xff]
  %v5333 = vld [vmem:[%s4 + $0xa8] sm:$0xff]
  %v5334 = vld [vmem:[%s4 + $0xb0] sm:$0xff]
  %v5335 = vld [vmem:[%s4 + $0xb8] sm:$0xff]
  %v5336 = vld [vmem:[%s4 + $0xc0] sm:$0xff]
  %v5337 = vld [vmem:[%s4 + $0xc8] sm:$0xff]
  %v5338 = vld [vmem:[%s4 + $0xd0] sm:$0xff]
  %v5339 = vld [vmem:[%s4 + $0xd8] sm:$0xff]
  %v5340 = vld [vmem:[%s4 + $0xe0] sm:$0xff]
  %v5341 = vld [vmem:[%s4 + $0xe8] sm:$0xff]
  %v5342 = vld [vmem:[%s4 + $0xf0] sm:$0xff]
  %v5343 = vld [vmem:[%s4 + $0xf8] sm:$0xff]
  %v5344 = vld [vmem:[%s6] sm:$0xf]
  %v5346 = vlaneseq
  %v5347 = vshrl.u32 %v5346, 7
  %v5348 = vsub.s32 0, %v5347
  %v5349 = vrot.slane %v5344, %v5348
  %v5350 = vlaneseq
  %v5351 = vshrl.u32 %v5350, 7
  %v5352 = vsub.s32 1, %v5351
  %v5353 = vrot.slane %v5344, %v5352
  %v5354 = vlaneseq
  %v5355 = vshrl.u32 %v5354, 7
  %v5356 = vsub.s32 2, %v5355
  %v5357 = vrot.slane %v5344, %v5356
  %v5358 = vlaneseq
  %v5359 = vshrl.u32 %v5358, 7
  %v5360 = vsub.s32 3, %v5359
  %v5361 = vrot.slane %v5344, %v5360
  %v5398 = vunpack.c.l.b16 %v5312
  %v5399 = vunpack.c.h.b16 %v5312
  %v5400 = vunpack.c.l.b16 %v5313
  %v5401 = vunpack.c.h.b16 %v5313
  %v5402 = vunpack.c.l.b16 %v5314
  %v5403 = vunpack.c.h.b16 %v5314
  %v5404 = vunpack.c.l.b16 %v5315
  %v5405 = vunpack.c.h.b16 %v5315
  %v5406 = vunpack.c.l.b16 %v5316
  %v5407 = vunpack.c.h.b16 %v5316
  %v5408 = vunpack.c.l.b16 %v5317
  %v5409 = vunpack.c.h.b16 %v5317
  %v5410 = vunpack.c.l.b16 %v5318
  %v5411 = vunpack.c.h.b16 %v5318
  %v5412 = vunpack.c.l.b16 %v5319
  %v5413 = vunpack.c.h.b16 %v5319
  %v5414 = vunpack.c.l.b16 %v5320
  %v5415 = vunpack.c.h.b16 %v5320
  %v5416 = vunpack.c.l.b16 %v5321
  %v5417 = vunpack.c.h.b16 %v5321
  %v5418 = vunpack.c.l.b16 %v5322
  %v5419 = vunpack.c.h.b16 %v5322
  %v5420 = vunpack.c.l.b16 %v5323
  %v5421 = vunpack.c.h.b16 %v5323
  %v5422 = vunpack.c.l.b16 %v5324
  %v5423 = vunpack.c.h.b16 %v5324
  %v5424 = vunpack.c.l.b16 %v5325
  %v5425 = vunpack.c.h.b16 %v5325
  %v5426 = vunpack.c.l.b16 %v5326
  %v5427 = vunpack.c.h.b16 %v5326
  %v5428 = vunpack.c.l.b16 %v5327
  %v5429 = vunpack.c.h.b16 %v5327
  %v5430 = vunpack.c.l.b16 %v5328
  %v5431 = vunpack.c.h.b16 %v5328
  %v5432 = vunpack.c.l.b16 %v5329
  %v5433 = vunpack.c.h.b16 %v5329
  %v5434 = vunpack.c.l.b16 %v5330
  %v5435 = vunpack.c.h.b16 %v5330
  %v5436 = vunpack.c.l.b16 %v5331
  %v5437 = vunpack.c.h.b16 %v5331
  %v5438 = vunpack.c.l.b16 %v5332
  %v5439 = vunpack.c.h.b16 %v5332
  %v5440 = vunpack.c.l.b16 %v5333
  %v5441 = vunpack.c.h.b16 %v5333
  %v5442 = vunpack.c.l.b16 %v5334
  %v5443 = vunpack.c.h.b16 %v5334
  %v5444 = vunpack.c.l.b16 %v5335
  %v5445 = vunpack.c.h.b16 %v5335
  %v5446 = vunpack.c.l.b16 %v5336
  %v5447 = vunpack.c.h.b16 %v5336
  %v5448 = vunpack.c.l.b16 %v5337
  %v5449 = vunpack.c.h.b16 %v5337
  %v5450 = vunpack.c.l.b16 %v5338
  %v5451 = vunpack.c.h.b16 %v5338
  %v5452 = vunpack.c.l.b16 %v5339
  %v5453 = vunpack.c.h.b16 %v5339
  %v5454 = vunpack.c.l.b16 %v5340
  %v5455 = vunpack.c.h.b16 %v5340
  %v5456 = vunpack.c.l.b16 %v5341
  %v5457 = vunpack.c.h.b16 %v5341
  %v5458 = vunpack.c.l.b16 %v5342
  %v5459 = vunpack.c.h.b16 %v5342
  %v5460 = vunpack.c.l.b16 %v5343
  %v5461 = vunpack.c.h.b16 %v5343
  %v5462 = vpack.c.b16 %v5402, %v5398
  %v5463 = vpack.c.b16 %v5403, %v5399
  %v5464 = vpack.c.b16 %v5404, %v5400
  %v5465 = vpack.c.b16 %v5405, %v5401
  %v5466 = vpack.c.b16 %v5410, %v5406
  %v5467 = vpack.c.b16 %v5411, %v5407
  %v5468 = vpack.c.b16 %v5412, %v5408
  %v5469 = vpack.c.b16 %v5413, %v5409
  %v5470 = vpack.c.b16 %v5418, %v5414
  %v5471 = vpack.c.b16 %v5419, %v5415
  %v5472 = vpack.c.b16 %v5420, %v5416
  %v5473 = vpack.c.b16 %v5421, %v5417
  %v5474 = vpack.c.b16 %v5426, %v5422
  %v5475 = vpack.c.b16 %v5427, %v5423
  %v5476 = vpack.c.b16 %v5428, %v5424
  %v5477 = vpack.c.b16 %v5429, %v5425
  %v5478 = vpack.c.b16 %v5434, %v5430
  %v5479 = vpack.c.b16 %v5435, %v5431
  %v5480 = vpack.c.b16 %v5436, %v5432
  %v5481 = vpack.c.b16 %v5437, %v5433
  %v5482 = vpack.c.b16 %v5442, %v5438
  %v5483 = vpack.c.b16 %v5443, %v5439
  %v5484 = vpack.c.b16 %v5444, %v5440
  %v5485 = vpack.c.b16 %v5445, %v5441
  %v5486 = vpack.c.b16 %v5450, %v5446
  %v5487 = vpack.c.b16 %v5451, %v5447
  %v5488 = vpack.c.b16 %v5452, %v5448
  %v5489 = vpack.c.b16 %v5453, %v5449
  %v5490 = vpack.c.b16 %v5458, %v5454
  %v5491 = vpack.c.b16 %v5459, %v5455
  %v5492 = vpack.c.b16 %v5460, %v5456
  %v5493 = vpack.c.b16 %v5461, %v5457
  %5526 = vmatprep.subr.bf16.mxu0 %v5463
  %5527 = vmatpush1.bf16.msra.mxu0 %v5462
  %5528 = vmatprep.subr.bf16.mxu0 %v5467
  %5529 = vmatpush1.bf16.msra.mxu0 %v5466
  %5530 = vmatprep.subr.bf16.mxu0 %v5471
  %5531 = vmatpush1.bf16.msra.mxu0 %v5470
  %5532 = vmatprep.subr.bf16.mxu0 %v5475
  %5533 = vmatpush1.bf16.msra.mxu0 %v5474
  %5534 = vmatprep.subr.bf16.mxu0 %v5479
  %5535 = vmatpush1.bf16.msra.mxu0 %v5478
  %5536 = vmatprep.subr.bf16.mxu0 %v5483
  %5537 = vmatpush1.bf16.msra.mxu0 %v5482
  %5538 = vmatprep.subr.bf16.mxu0 %v5487
  %5539 = vmatpush1.bf16.msra.mxu0 %v5486
  %5540 = vmatprep.subr.bf16.mxu0 %v5491
  %5541 = vmatpush1.bf16.msra.mxu0 %v5490
  %5542 = vmatprep.subr.bf16.mxu0 0
  %5543 = vmatpush1.bf16.msra.mxu0 0
  %5544 = vmatprep.subr.bf16.mxu0 0
  %5545 = vmatpush1.bf16.msra.mxu0 0
  %5546 = vmatprep.subr.bf16.mxu0 0
  %5547 = vmatpush1.bf16.msra.mxu0 0
  %5548 = vmatprep.subr.bf16.mxu0 0
  %5549 = vmatpush1.bf16.msra.mxu0 0
  %5550 = vmatprep.subr.bf16.mxu0 0
  %5551 = vmatpush1.bf16.msra.mxu0 0
  %5552 = vmatprep.subr.bf16.mxu0 0
  %5553 = vmatpush1.bf16.msra.mxu0 0
  %5554 = vmatprep.subr.bf16.mxu0 0
  %5555 = vmatpush1.bf16.msra.mxu0 0
  %5556 = vmatprep.subr.bf16.mxu0 0
  %5557 = vmatpush1.bf16.msra.mxu0 0
  %5558 = vmatprep.mubr.bf16.mxu0 0
  %5559 = vmatmul.mubr.bf16.gmra.mrb[0].mxu0 %v5311
  %v5560 = vpop.f32.mrb[0].mxu0
  %v5561 = vadd.f32 %v5349, %v5560
  %v5562 = vpop.f32.mrb[0].mxu0
  %v5563 = vadd.f32 %v5353, %v5562
  %v5564 = vpop.f32.mrb[0].mxu0
  %v5565 = vadd.f32 %v5349, %v5564
  %v5566 = vpop.f32.mrb[0].mxu0
  %v5567 = vadd.f32 %v5353, %v5566
  %5568 = vdwg.mxu0
  %5569 = vmatprep.subr.bf16.mxu0 %v5465
  %5570 = vmatpush1.bf16.msra.mxu0 %v5464
  %5571 = vmatprep.subr.bf16.mxu0 %v5469
  %5572 = vmatpush1.bf16.msra.mxu0 %v5468
  %5573 = vmatprep.subr.bf16.mxu0 %v5473
  %5574 = vmatpush1.bf16.msra.mxu0 %v5472
  %5575 = vmatprep.subr.bf16.mxu0 %v5477
  %5576 = vmatpush1.bf16.msra.mxu0 %v5476
  %5577 = vmatprep.subr.bf16.mxu0 %v5481
  %5578 = vmatpush1.bf16.msra.mxu0 %v5480
  %5579 = vmatprep.subr.bf16.mxu0 %v5485
  %5580 = vmatpush1.bf16.msra.mxu0 %v5484
  %5581 = vmatprep.subr.bf16.mxu0 %v5489
  %5582 = vmatpush1.bf16.msra.mxu0 %v5488
  %5583 = vmatprep.subr.bf16.mxu0 %v5493
  %5584 = vmatpush1.bf16.msra.mxu0 %v5492
  %5585 = vmatprep.subr.bf16.mxu0 0
  %5586 = vmatpush1.bf16.msra.mxu0 0
  %5587 = vmatprep.subr.bf16.mxu0 0
  %5588 = vmatpush1.bf16.msra.mxu0 0
  %5589 = vmatprep.subr.bf16.mxu0 0
  %5590 = vmatpush1.bf16.msra.mxu0 0
  %5591 = vmatprep.subr.bf16.mxu0 0
  %5592 = vmatpush1.bf16.msra.mxu0 0
  %5593 = vmatprep.subr.bf16.mxu0 0
  %5594 = vmatpush1.bf16.msra.mxu0 0
  %5595 = vmatprep.subr.bf16.mxu0 0
  %5596 = vmatpush1.bf16.msra.mxu0 0
  %5597 = vmatprep.subr.bf16.mxu0 0
  %5598 = vmatpush1.bf16.msra.mxu0 0
  %5599 = vmatprep.subr.bf16.mxu0 0
  %5600 = vmatpush1.bf16.msra.mxu0 0
  %5601 = vmatprep.mubr.bf16.mxu0 0
  %5602 = vmatmul.mubr.bf16.gmra.mrb[0].mxu0 %v5311
  %v5603 = vpop.f32.mrb[0].mxu0
  %v5604 = vadd.f32 %v5357, %v5603
  %v5605 = vpop.f32.mrb[0].mxu0
  %v5606 = vadd.f32 %v5361, %v5605
  %v5607 = vpop.f32.mrb[0].mxu0
  %v5608 = vadd.f32 %v5357, %v5607
  %v5609 = vpop.f32.mrb[0].mxu0
  %v5610 = vadd.f32 %v5361, %v5609
  %5611 = vdwg.mxu0
  %v5612 = vpack.c.bf16 %v5565, %v5561
  %v5613 = vpack.c.bf16 %v5567, %v5563
  %v5614 = vpack.c.bf16 %v5608, %v5604
  %v5615 = vpack.c.bf16 %v5610, %v5606
  %5616 = vst [vmem:[%s4976] sm:$0xff] %v5612
  %5617 = vst [vmem:[%s4976 + $0x8] sm:$0xff] %v5613
  %5618 = vst [vmem:[%s4976 + $0x10] sm:$0xff] %v5614
  %5619 = vst [vmem:[%s4976 + $0x18] sm:$0xff] %v5615
  %v5620 = vld [vmem:[#allocation2] sm:$0xff]
  %v5621 = vld [vmem:[#allocation2 + $0x8] sm:$0xff]
  %v5622 = vld [vmem:[#allocation2 + $0x10] sm:$0xff]
  %v5623 = vld [vmem:[#allocation2 + $0x18] sm:$0xff]
  %v5624 = vunpack.c.l.bf16 %v5620
  %v5625 = vunpack.c.l.bf16 %v5621
  %v5626 = vunpack.c.l.bf16 %v5622
  %v5627 = vunpack.c.l.bf16 %v5623
  %v5628 = vunpack.c.h.bf16 %v5620
  %v5629 = vunpack.c.h.bf16 %v5621
  %v5630 = vunpack.c.h.bf16 %v5622
  %v5631 = vunpack.c.h.bf16 %v5623
  %v5632 = vld [vmem:[%s5] sm:$0xff]
  %v5633 = vld [vmem:[%s5 + $0x8] sm:$0xff]
  %v5634 = vld [vmem:[%s5 + $0x10] sm:$0xff]
  %v5635 = vld [vmem:[%s5 + $0x18] sm:$0xff]
  %v5636 = vld [vmem:[%s5 + $0x20] sm:$0xff]
  %v5637 = vld [vmem:[%s5 + $0x28] sm:$0xff]
  %v5638 = vld [vmem:[%s5 + $0x30] sm:$0xff]
  %v5639 = vld [vmem:[%s5 + $0x38] sm:$0xff]
  %v5640 = vld [vmem:[%s5 + $0x40] sm:$0xff]
  %v5641 = vld [vmem:[%s5 + $0x48] sm:$0xff]
  %v5642 = vld [vmem:[%s5 + $0x50] sm:$0xff]
  %v5643 = vld [vmem:[%s5 + $0x58] sm:$0xff]
  %v5644 = vld [vmem:[%s5 + $0x60] sm:$0xff]
  %v5645 = vld [vmem:[%s5 + $0x68] sm:$0xff]
  %v5646 = vld [vmem:[%s5 + $0x70] sm:$0xff]
  %v5647 = vld [vmem:[%s5 + $0x78] sm:$0xff]
  %v5648 = vld [vmem:[%s5 + $0x80] sm:$0xff]
  %v5649 = vld [vmem:[%s5 + $0x88] sm:$0xff]
  %v5650 = vld [vmem:[%s5 + $0x90] sm:$0xff]
  %v5651 = vld [vmem:[%s5 + $0x98] sm:$0xff]
  %v5652 = vld [vmem:[%s5 + $0xa0] sm:$0xff]
  %v5653 = vld [vmem:[%s5 + $0xa8] sm:$0xff]
  %v5654 = vld [vmem:[%s5 + $0xb0] sm:$0xff]
  %v5655 = vld [vmem:[%s5 + $0xb8] sm:$0xff]
  %v5656 = vld [vmem:[%s5 + $0xc0] sm:$0xff]
  %v5657 = vld [vmem:[%s5 + $0xc8] sm:$0xff]
  %v5658 = vld [vmem:[%s5 + $0xd0] sm:$0xff]
  %v5659 = vld [vmem:[%s5 + $0xd8] sm:$0xff]
  %v5660 = vld [vmem:[%s5 + $0xe0] sm:$0xff]
  %v5661 = vld [vmem:[%s5 + $0xe8] sm:$0xff]
  %v5662 = vld [vmem:[%s5 + $0xf0] sm:$0xff]
  %v5663 = vld [vmem:[%s5 + $0xf8] sm:$0xff]
  %v5696 = vunpack.c.l.b16 %v5632
  %v5697 = vunpack.c.h.b16 %v5632
  %v5698 = vunpack.c.l.b16 %v5633
  %v5699 = vunpack.c.h.b16 %v5633
  %v5700 = vunpack.c.l.b16 %v5634
  %v5701 = vunpack.c.h.b16 %v5634
  %v5702 = vunpack.c.l.b16 %v5635
  %v5703 = vunpack.c.h.b16 %v5635
  %v5704 = vunpack.c.l.b16 %v5636
  %v5705 = vunpack.c.h.b16 %v5636
  %v5706 = vunpack.c.l.b16 %v5637
  %v5707 = vunpack.c.h.b16 %v5637
  %v5708 = vunpack.c.l.b16 %v5638
  %v5709 = vunpack.c.h.b16 %v5638
  %v5710 = vunpack.c.l.b16 %v5639
  %v5711 = vunpack.c.h.b16 %v5639
  %v5712 = vunpack.c.l.b16 %v5640
  %v5713 = vunpack.c.h.b16 %v5640
  %v5714 = vunpack.c.l.b16 %v5641
  %v5715 = vunpack.c.h.b16 %v5641
  %v5716 = vunpack.c.l.b16 %v5642
  %v5717 = vunpack.c.h.b16 %v5642
  %v5718 = vunpack.c.l.b16 %v5643
  %v5719 = vunpack.c.h.b16 %v5643
  %v5720 = vunpack.c.l.b16 %v5644
  %v5721 = vunpack.c.h.b16 %v5644
  %v5722 = vunpack.c.l.b16 %v5645
  %v5723 = vunpack.c.h.b16 %v5645
  %v5724 = vunpack.c.l.b16 %v5646
  %v5725 = vunpack.c.h.b16 %v5646
  %v5726 = vunpack.c.l.b16 %v5647
  %v5727 = vunpack.c.h.b16 %v5647
  %v5728 = vunpack.c.l.b16 %v5648
  %v5729 = vunpack.c.h.b16 %v5648
  %v5730 = vunpack.c.l.b16 %v5649
  %v5731 = vunpack.c.h.b16 %v5649
  %v5732 = vunpack.c.l.b16 %v5650
  %v5733 = vunpack.c.h.b16 %v5650
  %v5734 = vunpack.c.l.b16 %v5651
  %v5735 = vunpack.c.h.b16 %v5651
  %v5736 = vunpack.c.l.b16 %v5652
  %v5737 = vunpack.c.h.b16 %v5652
  %v5738 = vunpack.c.l.b16 %v5653
  %v5739 = vunpack.c.h.b16 %v5653
  %v5740 = vunpack.c.l.b16 %v5654
  %v5741 = vunpack.c.h.b16 %v5654
  %v5742 = vunpack.c.l.b16 %v5655
  %v5743 = vunpack.c.h.b16 %v5655
  %v5744 = vunpack.c.l.b16 %v5656
  %v5745 = vunpack.c.h.b16 %v5656
  %v5746 = vunpack.c.l.b16 %v5657
  %v5747 = vunpack.c.h.b16 %v5657
  %v5748 = vunpack.c.l.b16 %v5658
  %v5749 = vunpack.c.h.b16 %v5658
  %v5750 = vunpack.c.l.b16 %v5659
  %v5751 = vunpack.c.h.b16 %v5659
  %v5752 = vunpack.c.l.b16 %v5660
  %v5753 = vunpack.c.h.b16 %v5660
  %v5754 = vunpack.c.l.b16 %v5661
  %v5755 = vunpack.c.h.b16 %v5661
  %v5756 = vunpack.c.l.b16 %v5662
  %v5757 = vunpack.c.h.b16 %v5662
  %v5758 = vunpack.c.l.b16 %v5663
  %v5759 = vunpack.c.h.b16 %v5663
  %v5760 = vpack.c.b16 %v5700, %v5696
  %v5761 = vpack.c.b16 %v5701, %v5697
  %v5762 = vpack.c.b16 %v5702, %v5698
  %v5763 = vpack.c.b16 %v5703, %v5699
  %v5764 = vpack.c.b16 %v5708, %v5704
  %v5765 = vpack.c.b16 %v5709, %v5705
  %v5766 = vpack.c.b16 %v5710, %v5706
  %v5767 = vpack.c.b16 %v5711, %v5707
  %v5768 = vpack.c.b16 %v5716, %v5712
  %v5769 = vpack.c.b16 %v5717, %v5713
  %v5770 = vpack.c.b16 %v5718, %v5714
  %v5771 = vpack.c.b16 %v5719, %v5715
  %v5772 = vpack.c.b16 %v5724, %v5720
  %v5773 = vpack.c.b16 %v5725, %v5721
  %v5774 = vpack.c.b16 %v5726, %v5722
  %v5775 = vpack.c.b16 %v5727, %v5723
  %v5776 = vpack.c.b16 %v5732, %v5728
  %v5777 = vpack.c.b16 %v5733, %v5729
  %v5778 = vpack.c.b16 %v5734, %v5730
  %v5779 = vpack.c.b16 %v5735, %v5731
  %v5780 = vpack.c.b16 %v5740, %v5736
  %v5781 = vpack.c.b16 %v5741, %v5737
  %v5782 = vpack.c.b16 %v5742, %v5738
  %v5783 = vpack.c.b16 %v5743, %v5739
  %v5784 = vpack.c.b16 %v5748, %v5744
  %v5785 = vpack.c.b16 %v5749, %v5745
  %v5786 = vpack.c.b16 %v5750, %v5746
  %v5787 = vpack.c.b16 %v5751, %v5747
  %v5788 = vpack.c.b16 %v5756, %v5752
  %v5789 = vpack.c.b16 %v5757, %v5753
  %v5790 = vpack.c.b16 %v5758, %v5754
  %v5791 = vpack.c.b16 %v5759, %v5755
  %5824 = vmatprep.subr.bf16.mxu0 %v5761
  %5825 = vmatpush1.bf16.msra.mxu0 %v5760
  %5826 = vmatprep.subr.bf16.mxu0 %v5765
  %5827 = vmatpush1.bf16.msra.mxu0 %v5764
  %5828 = vmatprep.subr.bf16.mxu0 %v5769
  %5829 = vmatpush1.bf16.msra.mxu0 %v5768
  %5830 = vmatprep.subr.bf16.mxu0 %v5773
  %5831 = vmatpush1.bf16.msra.mxu0 %v5772
  %5832 = vmatprep.subr.bf16.mxu0 %v5777
  %5833 = vmatpush1.bf16.msra.mxu0 %v5776
  %5834 = vmatprep.subr.bf16.mxu0 %v5781
  %5835 = vmatpush1.bf16.msra.mxu0 %v5780
  %5836 = vmatprep.subr.bf16.mxu0 %v5785
  %5837 = vmatpush1.bf16.msra.mxu0 %v5784
  %5838 = vmatprep.subr.bf16.mxu0 %v5789
  %5839 = vmatpush1.bf16.msra.mxu0 %v5788
  %5840 = vmatprep.subr.bf16.mxu0 0
  %5841 = vmatpush1.bf16.msra.mxu0 0
  %5842 = vmatprep.subr.bf16.mxu0 0
  %5843 = vmatpush1.bf16.msra.mxu0 0
  %5844 = vmatprep.subr.bf16.mxu0 0
  %5845 = vmatpush1.bf16.msra.mxu0 0
  %5846 = vmatprep.subr.bf16.mxu0 0
  %5847 = vmatpush1.bf16.msra.mxu0 0
  %5848 = vmatprep.subr.bf16.mxu0 0
  %5849 = vmatpush1.bf16.msra.mxu0 0
  %5850 = vmatprep.subr.bf16.mxu0 0
  %5851 = vmatpush1.bf16.msra.mxu0 0
  %5852 = vmatprep.subr.bf16.mxu0 0
  %5853 = vmatpush1.bf16.msra.mxu0 0
  %5854 = vmatprep.subr.bf16.mxu0 0
  %5855 = vmatpush1.bf16.msra.mxu0 0
  %5856 = vmatprep.mubr.bf16.mxu0 0
  %5857 = vmatmul.mubr.bf16.gmra.mrb[0].mxu0 0
  %v5858 = vpop.f32.mrb[0].mxu0
  %v5859 = vadd.f32 0.0, %v5858
  %v5860 = vpop.f32.mrb[0].mxu0
  %v5861 = vadd.f32 0.0, %v5860
  %v5862 = vpop.f32.mrb[0].mxu0
  %v5863 = vadd.f32 0.0, %v5862
  %v5864 = vpop.f32.mrb[0].mxu0
  %v5865 = vadd.f32 0.0, %v5864
  %5866 = vdwg.mxu0
  %5867 = vmatprep.subr.bf16.mxu0 %v5763
  %5868 = vmatpush1.bf16.msra.mxu0 %v5762
  %5869 = vmatprep.subr.bf16.mxu0 %v5767
  %5870 = vmatpush1.bf16.msra.mxu0 %v5766
  %5871 = vmatprep.subr.bf16.mxu0 %v5771
  %5872 = vmatpush1.bf16.msra.mxu0 %v5770
  %5873 = vmatprep.subr.bf16.mxu0 %v5775
  %5874 = vmatpush1.bf16.msra.mxu0 %v5774
  %5875 = vmatprep.subr.bf16.mxu0 %v5779
  %5876 = vmatpush1.bf16.msra.mxu0 %v5778
  %5877 = vmatprep.subr.bf16.mxu0 %v5783
  %5878 = vmatpush1.bf16.msra.mxu0 %v5782
  %5879 = vmatprep.subr.bf16.mxu0 %v5787
  %5880 = vmatpush1.bf16.msra.mxu0 %v5786
  %5881 = vmatprep.subr.bf16.mxu0 %v5791
  %5882 = vmatpush1.bf16.msra.mxu0 %v5790
  %5883 = vmatprep.subr.bf16.mxu0 0
  %5884 = vmatpush1.bf16.msra.mxu0 0
  %5885 = vmatprep.subr.bf16.mxu0 0
  %5886 = vmatpush1.bf16.msra.mxu0 0
  %5887 = vmatprep.subr.bf16.mxu0 0
  %5888 = vmatpush1.bf16.msra.mxu0 0
  %5889 = vmatprep.subr.bf16.mxu0 0
  %5890 = vmatpush1.bf16.msra.mxu0 0
  %5891 = vmatprep.subr.bf16.mxu0 0
  %5892 = vmatpush1.bf16.msra.mxu0 0
  %5893 = vmatprep.subr.bf16.mxu0 0
  %5894 = vmatpush1.bf16.msra.mxu0 0
  %5895 = vmatprep.subr.bf16.mxu0 0
  %5896 = vmatpush1.bf16.msra.mxu0 0
  %5897 = vmatprep.subr.bf16.mxu0 0
  %5898 = vmatpush1.bf16.msra.mxu0 0
  %5899 = vmatprep.mubr.bf16.mxu0 0
  %5900 = vmatmul.mubr.bf16.gmra.mrb[0].mxu0 0
  %v5901 = vpop.f32.mrb[0].mxu0
  %v5902 = vadd.f32 0.0, %v5901
  %v5903 = vpop.f32.mrb[0].mxu0
  %v5904 = vadd.f32 0.0, %v5903
  %v5905 = vpop.f32.mrb[0].mxu0
  %v5906 = vadd.f32 0.0, %v5905
  %v5907 = vpop.f32.mrb[0].mxu0
  %v5908 = vadd.f32 0.0, %v5907
  %5909 = vdwg.mxu0
  %v5910 = vadd.f32 %v5624, %v5859
  %v5911 = vadd.f32 %v5625, %v5861
  %v5912 = vadd.f32 %v5626, %v5902
  %v5913 = vadd.f32 %v5627, %v5904
  %v5914 = vadd.f32 %v5628, %v5863
  %v5915 = vadd.f32 %v5629, %v5865
  %v5916 = vadd.f32 %v5630, %v5906
  %v5917 = vadd.f32 %v5631, %v5908
  %v5918 = vmul.f32 %v5910, 0.5
  %v5919 = vmul.f32 %v5911, 0.5
  %v5920 = vmul.f32 %v5912, 0.5
  %v5921 = vmul.f32 %v5914, 0.5
  %v5922 = vmul.f32 %v5915, 0.5
  %v5923 = vmul.f32 %v5916, 0.5
  %v5924 = vtanh.pop %v5918
  %v5925 = vtanh.pop %v5919
  %v5926 = vtanh.pop %v5920
  %v5927 = vtanh.pop %v5921
  %v5928 = vtanh.pop %v5922
  %v5929 = vtanh.pop %v5923
  %v5930 = vmul.f32 %v5924, 0.5
  %v5931 = vmul.f32 %v5925, 0.5
  %v5932 = vmul.f32 %v5926, 0.5
  %v5933 = vmul.f32 %v5927, 0.5
  %v5934 = vmul.f32 %v5928, 0.5
  %v5935 = vmul.f32 %v5929, 0.5
  %v5936 = vadd.f32 %v5930, 0.5
  %v5937 = vadd.f32 %v5931, 0.5
  %v5938 = vadd.f32 %v5932, 0.5
  %v5939 = vadd.f32 %v5933, 0.5
  %v5940 = vadd.f32 %v5934, 0.5
  %v5941 = vadd.f32 %v5935, 0.5
  %v5942 = vtanh.pop %v5913
  %v5943 = vtanh.pop %v5917
  %v5944 = vmul.f32 %v5937, 0.0
  %v5945 = vmul.f32 %v5940, 0.0
  %v5946 = vmul.f32 %v5936, %v5942
  %v5947 = vmul.f32 %v5939, %v5943
  %v5948 = vadd.f32 %v5944, %v5946
  %v5949 = vadd.f32 %v5945, %v5947
  %v5950 = vtanh.pop %v5948
  %v5951 = vtanh.pop %v5949
  %v5952 = vmul.f32 %v5938, %v5950
  %v5953 = vmul.f32 %v5941, %v5951
  %v5954 = vpack.c.bf16 %v5953, %v5952
  %v5955 = vld [vmem:[%s7] sm:$0xff]
  %v5956 = vld [vmem:[%s7 + $0x8] sm:$0xff]
  %v5957 = vld [vmem:[%s7 + $0x10] sm:$0xff]
  %v5958 = vld [vmem:[%s7 + $0x18] sm:$0xff]
  %v5959 = vld [vmem:[%s7 + $0x20] sm:$0xff]
  %v5960 = vld [vmem:[%s7 + $0x28] sm:$0xff]
  %v5961 = vld [vmem:[%s7 + $0x30] sm:$0xff]
  %v5962 = vld [vmem:[%s7 + $0x38] sm:$0xff]
  %v5963 = vld [vmem:[%s7 + $0x40] sm:$0xff]
  %v5964 = vld [vmem:[%s7 + $0x48] sm:$0xff]
  %v5965 = vld [vmem:[%s7 + $0x50] sm:$0xff]
  %v5966 = vld [vmem:[%s7 + $0x58] sm:$0xff]
  %v5967 = vld [vmem:[%s7 + $0x60] sm:$0xff]
  %v5968 = vld [vmem:[%s7 + $0x68] sm:$0xff]
  %v5969 = vld [vmem:[%s7 + $0x70] sm:$0xff]
  %v5970 = vld [vmem:[%s7 + $0x78] sm:$0xff]
  %v5971 = vld [vmem:[%s7 + $0x80] sm:$0xff]
  %v5972 = vld [vmem:[%s7 + $0x88] sm:$0xff]
  %v5973 = vld [vmem:[%s7 + $0x90] sm:$0xff]
  %v5974 = vld [vmem:[%s7 + $0x98] sm:$0xff]
  %v5975 = vld [vmem:[%s7 + $0xa0] sm:$0xff]
  %v5976 = vld [vmem:[%s7 + $0xa8] sm:$0xff]
  %v5977 = vld [vmem:[%s7 + $0xb0] sm:$0xff]
  %v5978 = vld [vmem:[%s7 + $0xb8] sm:$0xff]
  %v5979 = vld [vmem:[%s7 + $0xc0] sm:$0xff]
  %v5980 = vld [vmem:[%s7 + $0xc8] sm:$0xff]
  %v5981 = vld [vmem:[%s7 + $0xd0] sm:$0xff]
  %v5982 = vld [vmem:[%s7 + $0xd8] sm:$0xff]
  %v5983 = vld [vmem:[%s7 + $0xe0] sm:$0xff]
  %v5984 = vld [vmem:[%s7 + $0xe8] sm:$0xff]
  %v5985 = vld [vmem:[%s7 + $0xf0] sm:$0xff]
  %v5986 = vld [vmem:[%s7 + $0xf8] sm:$0xff]
  %v5987 = vld [vmem:[%s9] sm:$0xf]
  %v5989 = vlaneseq
  %v5990 = vshrl.u32 %v5989, 7
  %v5991 = vsub.s32 0, %v5990
  %v5992 = vrot.slane %v5987, %v5991
  %v5993 = vlaneseq
  %v5994 = vshrl.u32 %v5993, 7
  %v5995 = vsub.s32 1, %v5994
  %v5996 = vrot.slane %v5987, %v5995
  %v5997 = vlaneseq
  %v5998 = vshrl.u32 %v5997, 7
  %v5999 = vsub.s32 2, %v5998
  %v6000 = vrot.slane %v5987, %v5999
  %v6001 = vlaneseq
  %v6002 = vshrl.u32 %v6001, 7
  %v6003 = vsub.s32 3, %v6002
  %v6004 = vrot.slane %v5987, %v6003
  %v6041 = vunpack.c.l.b16 %v5955
  %v6042 = vunpack.c.h.b16 %v5955
  %v6043 = vunpack.c.l.b16 %v5956
  %v6044 = vunpack.c.h.b16 %v5956
  %v6045 = vunpack.c.l.b16 %v5957
  %v6046 = vunpack.c.h.b16 %v5957
  %v6047 = vunpack.c.l.b16 %v5958
  %v6048 = vunpack.c.h.b16 %v5958
  %v6049 = vunpack.c.l.b16 %v5959
  %v6050 = vunpack.c.h.b16 %v5959
  %v6051 = vunpack.c.l.b16 %v5960
  %v6052 = vunpack.c.h.b16 %v5960
  %v6053 = vunpack.c.l.b16 %v5961
  %v6054 = vunpack.c.h.b16 %v5961
  %v6055 = vunpack.c.l.b16 %v5962
  %v6056 = vunpack.c.h.b16 %v5962
  %v6057 = vunpack.c.l.b16 %v5963
  %v6058 = vunpack.c.h.b16 %v5963
  %v6059 = vunpack.c.l.b16 %v5964
  %v6060 = vunpack.c.h.b16 %v5964
  %v6061 = vunpack.c.l.b16 %v5965
  %v6062 = vunpack.c.h.b16 %v5965
  %v6063 = vunpack.c.l.b16 %v5966
  %v6064 = vunpack.c.h.b16 %v5966
  %v6065 = vunpack.c.l.b16 %v5967
  %v6066 = vunpack.c.h.b16 %v5967
  %v6067 = vunpack.c.l.b16 %v5968
  %v6068 = vunpack.c.h.b16 %v5968
  %v6069 = vunpack.c.l.b16 %v5969
  %v6070 = vunpack.c.h.b16 %v5969
  %v6071 = vunpack.c.l.b16 %v5970
  %v6072 = vunpack.c.h.b16 %v5970
  %v6073 = vunpack.c.l.b16 %v5971
  %v6074 = vunpack.c.h.b16 %v5971
  %v6075 = vunpack.c.l.b16 %v5972
  %v6076 = vunpack.c.h.b16 %v5972
  %v6077 = vunpack.c.l.b16 %v5973
  %v6078 = vunpack.c.h.b16 %v5973
  %v6079 = vunpack.c.l.b16 %v5974
  %v6080 = vunpack.c.h.b16 %v5974
  %v6081 = vunpack.c.l.b16 %v5975
  %v6082 = vunpack.c.h.b16 %v5975
  %v6083 = vunpack.c.l.b16 %v5976
  %v6084 = vunpack.c.h.b16 %v5976
  %v6085 = vunpack.c.l.b16 %v5977
  %v6086 = vunpack.c.h.b16 %v5977
  %v6087 = vunpack.c.l.b16 %v5978
  %v6088 = vunpack.c.h.b16 %v5978
  %v6089 = vunpack.c.l.b16 %v5979
  %v6090 = vunpack.c.h.b16 %v5979
  %v6091 = vunpack.c.l.b16 %v5980
  %v6092 = vunpack.c.h.b16 %v5980
  %v6093 = vunpack.c.l.b16 %v5981
  %v6094 = vunpack.c.h.b16 %v5981
  %v6095 = vunpack.c.l.b16 %v5982
  %v6096 = vunpack.c.h.b16 %v5982
  %v6097 = vunpack.c.l.b16 %v5983
  %v6098 = vunpack.c.h.b16 %v5983
  %v6099 = vunpack.c.l.b16 %v5984
  %v6100 = vunpack.c.h.b16 %v5984
  %v6101 = vunpack.c.l.b16 %v5985
  %v6102 = vunpack.c.h.b16 %v5985
  %v6103 = vunpack.c.l.b16 %v5986
  %v6104 = vunpack.c.h.b16 %v5986
  %v6105 = vpack.c.b16 %v6045, %v6041
  %v6106 = vpack.c.b16 %v6046, %v6042
  %v6107 = vpack.c.b16 %v6047, %v6043
  %v6108 = vpack.c.b16 %v6048, %v6044
  %v6109 = vpack.c.b16 %v6053, %v6049
  %v6110 = vpack.c.b16 %v6054, %v6050
  %v6111 = vpack.c.b16 %v6055, %v6051
  %v6112 = vpack.c.b16 %v6056, %v6052
  %v6113 = vpack.c.b16 %v6061, %v6057
  %v6114 = vpack.c.b16 %v6062, %v6058
  %v6115 = vpack.c.b16 %v6063, %v6059
  %v6116 = vpack.c.b16 %v6064, %v6060
  %v6117 = vpack.c.b16 %v6069, %v6065
  %v6118 = vpack.c.b16 %v6070, %v6066
  %v6119 = vpack.c.b16 %v6071, %v6067
  %v6120 = vpack.c.b16 %v6072, %v6068
  %v6121 = vpack.c.b16 %v6077, %v6073
  %v6122 = vpack.c.b16 %v6078, %v6074
  %v6123 = vpack.c.b16 %v6079, %v6075
  %v6124 = vpack.c.b16 %v6080, %v6076
  %v6125 = vpack.c.b16 %v6085, %v6081
  %v6126 = vpack.c.b16 %v6086, %v6082
  %v6127 = vpack.c.b16 %v6087, %v6083
  %v6128 = vpack.c.b16 %v6088, %v6084
  %v6129 = vpack.c.b16 %v6093, %v6089
  %v6130 = vpack.c.b16 %v6094, %v6090
  %v6131 = vpack.c.b16 %v6095, %v6091
  %v6132 = vpack.c.b16 %v6096, %v6092
  %v6133 = vpack.c.b16 %v6101, %v6097
  %v6134 = vpack.c.b16 %v6102, %v6098
  %v6135 = vpack.c.b16 %v6103, %v6099
  %v6136 = vpack.c.b16 %v6104, %v6100
  %6169 = vmatprep.subr.bf16.mxu0 %v6106
  %6170 = vmatpush1.bf16.msra.mxu0 %v6105
  %6171 = vmatprep.subr.bf16.mxu0 %v6110
  %6172 = vmatpush1.bf16.msra.mxu0 %v6109
  %6173 = vmatprep.subr.bf16.mxu0 %v6114
  %6174 = vmatpush1.bf16.msra.mxu0 %v6113
  %6175 = vmatprep.subr.bf16.mxu0 %v6118
  %6176 = vmatpush1.bf16.msra.mxu0 %v6117
  %6177 = vmatprep.subr.bf16.mxu0 %v6122
  %6178 = vmatpush1.bf16.msra.mxu0 %v6121
  %6179 = vmatprep.subr.bf16.mxu0 %v6126
  %6180 = vmatpush1.bf16.msra.mxu0 %v6125
  %6181 = vmatprep.subr.bf16.mxu0 %v6130
  %6182 = vmatpush1.bf16.msra.mxu0 %v6129
  %6183 = vmatprep.subr.bf16.mxu0 %v6134
  %6184 = vmatpush1.bf16.msra.mxu0 %v6133
  %6185 = vmatprep.subr.bf16.mxu0 0
  %6186 = vmatpush1.bf16.msra.mxu0 0
  %6187 = vmatprep.subr.bf16.mxu0 0
  %6188 = vmatpush1.bf16.msra.mxu0 0
  %6189 = vmatprep.subr.bf16.mxu0 0
  %6190 = vmatpush1.bf16.msra.mxu0 0
  %6191 = vmatprep.subr.bf16.mxu0 0
  %6192 = vmatpush1.bf16.msra.mxu0 0
  %6193 = vmatprep.subr.bf16.mxu0 0
  %6194 = vmatpush1.bf16.msra.mxu0 0
  %6195 = vmatprep.subr.bf16.mxu0 0
  %6196 = vmatpush1.bf16.msra.mxu0 0
  %6197 = vmatprep.subr.bf16.mxu0 0
  %6198 = vmatpush1.bf16.msra.mxu0 0
  %6199 = vmatprep.subr.bf16.mxu0 0
  %6200 = vmatpush1.bf16.msra.mxu0 0
  %6201 = vmatprep.mubr.bf16.mxu0 0
  %6202 = vmatmul.mubr.bf16.gmra.mrb[0].mxu0 %v5954
  %v6203 = vpop.f32.mrb[0].mxu0
  %v6204 = vadd.f32 %v5992, %v6203
  %v6205 = vpop.f32.mrb[0].mxu0
  %v6206 = vadd.f32 %v5996, %v6205
  %v6207 = vpop.f32.mrb[0].mxu0
  %v6208 = vadd.f32 %v5992, %v6207
  %v6209 = vpop.f32.mrb[0].mxu0
  %v6210 = vadd.f32 %v5996, %v6209
  %6211 = vdwg.mxu0
  %6212 = vmatprep.subr.bf16.mxu0 %v6108
  %6213 = vmatpush1.bf16.msra.mxu0 %v6107
  %6214 = vmatprep.subr.bf16.mxu0 %v6112
  %6215 = vmatpush1.bf16.msra.mxu0 %v6111
  %6216 = vmatprep.subr.bf16.mxu0 %v6116
  %6217 = vmatpush1.bf16.msra.mxu0 %v6115
  %6218 = vmatprep.subr.bf16.mxu0 %v6120
  %6219 = vmatpush1.bf16.msra.mxu0 %v6119
  %6220 = vmatprep.subr.bf16.mxu0 %v6124
  %6221 = vmatpush1.bf16.msra.mxu0 %v6123
  %6222 = vmatprep.subr.bf16.mxu0 %v6128
  %6223 = vmatpush1.bf16.msra.mxu0 %v6127
  %6224 = vmatprep.subr.bf16.mxu0 %v6132
  %6225 = vmatpush1.bf16.msra.mxu0 %v6131
  %6226 = vmatprep.subr.bf16.mxu0 %v6136
  %6227 = vmatpush1.bf16.msra.mxu0 %v6135
  %6228 = vmatprep.subr.bf16.mxu0 0
  %6229 = vmatpush1.bf16.msra.mxu0 0
  %6230 = vmatprep.subr.bf16.mxu0 0
  %6231 = vmatpush1.bf16.msra.mxu0 0
  %6232 = vmatprep.subr.bf16.mxu0 0
  %6233 = vmatpush1.bf16.msra.mxu0 0
  %6234 = vmatprep.subr.bf16.mxu0 0
  %6235 = vmatpush1.bf16.msra.mxu0 0
  %6236 = vmatprep.subr.bf16.mxu0 0
  %6237 = vmatpush1.bf16.msra.mxu0 0
  %6238 = vmatprep.subr.bf16.mxu0 0
  %6239 = vmatpush1.bf16.msra.mxu0 0
  %6240 = vmatprep.subr.bf16.mxu0 0
  %6241 = vmatpush1.bf16.msra.mxu0 0
  %6242 = vmatprep.subr.bf16.mxu0 0
  %6243 = vmatpush1.bf16.msra.mxu0 0
  %6244 = vmatprep.mubr.bf16.mxu0 0
  %6245 = vmatmul.mubr.bf16.gmra.mrb[0].mxu0 %v5954
  %v6246 = vpop.f32.mrb[0].mxu0
  %v6247 = vadd.f32 %v6000, %v6246
  %v6248 = vpop.f32.mrb[0].mxu0
  %v6249 = vadd.f32 %v6004, %v6248
  %v6250 = vpop.f32.mrb[0].mxu0
  %v6251 = vadd.f32 %v6000, %v6250
  %v6252 = vpop.f32.mrb[0].mxu0
  %v6253 = vadd.f32 %v6004, %v6252
  %6254 = vdwg.mxu0
  %v6255 = vpack.c.bf16 %v6208, %v6204
  %v6256 = vpack.c.bf16 %v6210, %v6206
  %v6257 = vpack.c.bf16 %v6251, %v6247
  %v6258 = vpack.c.bf16 %v6253, %v6249
  %6259 = vst [vmem:[#allocation2] sm:$0xff] %v6255
  %6260 = vst [vmem:[#allocation2 + $0x8] sm:$0xff] %v6256
  %6261 = vst [vmem:[#allocation2 + $0x10] sm:$0xff] %v6257
  %6262 = vst [vmem:[#allocation2 + $0x18] sm:$0xff] %v6258
  %v6263 = vld [vmem:[%s1112] sm:$0xff]
  %v6264 = vld [vmem:[%s1112 + $0x8] sm:$0xff]
  %v6265 = vld [vmem:[%s1112 + $0x10] sm:$0xff]
  %v6266 = vld [vmem:[%s1112 + $0x18] sm:$0xff]
  %v6267 = vunpack.c.l.bf16 %v6263
  %v6268 = vunpack.c.l.bf16 %v6264
  %v6269 = vunpack.c.l.bf16 %v6265
  %v6270 = vunpack.c.l.bf16 %v6266
  %v6271 = vunpack.c.h.bf16 %v6263
  %v6272 = vunpack.c.h.bf16 %v6264
  %v6273 = vunpack.c.h.bf16 %v6265
  %v6274 = vunpack.c.h.bf16 %v6266
  %v6275 = vld [vmem:[%s5] sm:$0xff]
  %v6276 = vld [vmem:[%s5 + $0x8] sm:$0xff]
  %v6277 = vld [vmem:[%s5 + $0x10] sm:$0xff]
  %v6278 = vld [vmem:[%s5 + $0x18] sm:$0xff]
  %v6279 = vld [vmem:[%s5 + $0x20] sm:$0xff]
  %v6280 = vld [vmem:[%s5 + $0x28] sm:$0xff]
  %v6281 = vld [vmem:[%s5 + $0x30] sm:$0xff]
  %v6282 = vld [vmem:[%s5 + $0x38] sm:$0xff]
  %v6283 = vld [vmem:[%s5 + $0x40] sm:$0xff]
  %v6284 = vld [vmem:[%s5 + $0x48] sm:$0xff]
  %v6285 = vld [vmem:[%s5 + $0x50] sm:$0xff]
  %v6286 = vld [vmem:[%s5 + $0x58] sm:$0xff]
  %v6287 = vld [vmem:[%s5 + $0x60] sm:$0xff]
  %v6288 = vld [vmem:[%s5 + $0x68] sm:$0xff]
  %v6289 = vld [vmem:[%s5 + $0x70] sm:$0xff]
  %v6290 = vld [vmem:[%s5 + $0x78] sm:$0xff]
  %v6291 = vld [vmem:[%s5 + $0x80] sm:$0xff]
  %v6292 = vld [vmem:[%s5 + $0x88] sm:$0xff]
  %v6293 = vld [vmem:[%s5 + $0x90] sm:$0xff]
  %v6294 = vld [vmem:[%s5 + $0x98] sm:$0xff]
  %v6295 = vld [vmem:[%s5 + $0xa0] sm:$0xff]
  %v6296 = vld [vmem:[%s5 + $0xa8] sm:$0xff]
  %v6297 = vld [vmem:[%s5 + $0xb0] sm:$0xff]
  %v6298 = vld [vmem:[%s5 + $0xb8] sm:$0xff]
  %v6299 = vld [vmem:[%s5 + $0xc0] sm:$0xff]
  %v6300 = vld [vmem:[%s5 + $0xc8] sm:$0xff]
  %v6301 = vld [vmem:[%s5 + $0xd0] sm:$0xff]
  %v6302 = vld [vmem:[%s5 + $0xd8] sm:$0xff]
  %v6303 = vld [vmem:[%s5 + $0xe0] sm:$0xff]
  %v6304 = vld [vmem:[%s5 + $0xe8] sm:$0xff]
  %v6305 = vld [vmem:[%s5 + $0xf0] sm:$0xff]
  %v6306 = vld [vmem:[%s5 + $0xf8] sm:$0xff]
  %v6339 = vunpack.c.l.b16 %v6275
  %v6340 = vunpack.c.h.b16 %v6275
  %v6341 = vunpack.c.l.b16 %v6276
  %v6342 = vunpack.c.h.b16 %v6276
  %v6343 = vunpack.c.l.b16 %v6277
  %v6344 = vunpack.c.h.b16 %v6277
  %v6345 = vunpack.c.l.b16 %v6278
  %v6346 = vunpack.c.h.b16 %v6278
  %v6347 = vunpack.c.l.b16 %v6279
  %v6348 = vunpack.c.h.b16 %v6279
  %v6349 = vunpack.c.l.b16 %v6280
  %v6350 = vunpack.c.h.b16 %v6280
  %v6351 = vunpack.c.l.b16 %v6281
  %v6352 = vunpack.c.h.b16 %v6281
  %v6353 = vunpack.c.l.b16 %v6282
  %v6354 = vunpack.c.h.b16 %v6282
  %v6355 = vunpack.c.l.b16 %v6283
  %v6356 = vunpack.c.h.b16 %v6283
  %v6357 = vunpack.c.l.b16 %v6284
  %v6358 = vunpack.c.h.b16 %v6284
  %v6359 = vunpack.c.l.b16 %v6285
  %v6360 = vunpack.c.h.b16 %v6285
  %v6361 = vunpack.c.l.b16 %v6286
  %v6362 = vunpack.c.h.b16 %v6286
  %v6363 = vunpack.c.l.b16 %v6287
  %v6364 = vunpack.c.h.b16 %v6287
  %v6365 = vunpack.c.l.b16 %v6288
  %v6366 = vunpack.c.h.b16 %v6288
  %v6367 = vunpack.c.l.b16 %v6289
  %v6368 = vunpack.c.h.b16 %v6289
  %v6369 = vunpack.c.l.b16 %v6290
  %v6370 = vunpack.c.h.b16 %v6290
  %v6371 = vunpack.c.l.b16 %v6291
  %v6372 = vunpack.c.h.b16 %v6291
  %v6373 = vunpack.c.l.b16 %v6292
  %v6374 = vunpack.c.h.b16 %v6292
  %v6375 = vunpack.c.l.b16 %v6293
  %v6376 = vunpack.c.h.b16 %v6293
  %v6377 = vunpack.c.l.b16 %v6294
  %v6378 = vunpack.c.h.b16 %v6294
  %v6379 = vunpack.c.l.b16 %v6295
  %v6380 = vunpack.c.h.b16 %v6295
  %v6381 = vunpack.c.l.b16 %v6296
  %v6382 = vunpack.c.h.b16 %v6296
  %v6383 = vunpack.c.l.b16 %v6297
  %v6384 = vunpack.c.h.b16 %v6297
  %v6385 = vunpack.c.l.b16 %v6298
  %v6386 = vunpack.c.h.b16 %v6298
  %v6387 = vunpack.c.l.b16 %v6299
  %v6388 = vunpack.c.h.b16 %v6299
  %v6389 = vunpack.c.l.b16 %v6300
  %v6390 = vunpack.c.h.b16 %v6300
  %v6391 = vunpack.c.l.b16 %v6301
  %v6392 = vunpack.c.h.b16 %v6301
  %v6393 = vunpack.c.l.b16 %v6302
  %v6394 = vunpack.c.h.b16 %v6302
  %v6395 = vunpack.c.l.b16 %v6303
  %v6396 = vunpack.c.h.b16 %v6303
  %v6397 = vunpack.c.l.b16 %v6304
  %v6398 = vunpack.c.h.b16 %v6304
  %v6399 = vunpack.c.l.b16 %v6305
  %v6400 = vunpack.c.h.b16 %v6305
  %v6401 = vunpack.c.l.b16 %v6306
  %v6402 = vunpack.c.h.b16 %v6306
  %v6403 = vpack.c.b16 %v6343, %v6339
  %v6404 = vpack.c.b16 %v6344, %v6340
  %v6405 = vpack.c.b16 %v6345, %v6341
  %v6406 = vpack.c.b16 %v6346, %v6342
  %v6407 = vpack.c.b16 %v6351, %v6347
  %v6408 = vpack.c.b16 %v6352, %v6348
  %v6409 = vpack.c.b16 %v6353, %v6349
  %v6410 = vpack.c.b16 %v6354, %v6350
  %v6411 = vpack.c.b16 %v6359, %v6355
  %v6412 = vpack.c.b16 %v6360, %v6356
  %v6413 = vpack.c.b16 %v6361, %v6357
  %v6414 = vpack.c.b16 %v6362, %v6358
  %v6415 = vpack.c.b16 %v6367, %v6363
  %v6416 = vpack.c.b16 %v6368, %v6364
  %v6417 = vpack.c.b16 %v6369, %v6365
  %v6418 = vpack.c.b16 %v6370, %v6366
  %v6419 = vpack.c.b16 %v6375, %v6371
  %v6420 = vpack.c.b16 %v6376, %v6372
  %v6421 = vpack.c.b16 %v6377, %v6373
  %v6422 = vpack.c.b16 %v6378, %v6374
  %v6423 = vpack.c.b16 %v6383, %v6379
  %v6424 = vpack.c.b16 %v6384, %v6380
  %v6425 = vpack.c.b16 %v6385, %v6381
  %v6426 = vpack.c.b16 %v6386, %v6382
  %v6427 = vpack.c.b16 %v6391, %v6387
  %v6428 = vpack.c.b16 %v6392, %v6388
  %v6429 = vpack.c.b16 %v6393, %v6389
  %v6430 = vpack.c.b16 %v6394, %v6390
  %v6431 = vpack.c.b16 %v6399, %v6395
  %v6432 = vpack.c.b16 %v6400, %v6396
  %v6433 = vpack.c.b16 %v6401, %v6397
  %v6434 = vpack.c.b16 %v6402, %v6398
  %6467 = vmatprep.subr.bf16.mxu0 %v6404
  %6468 = vmatpush1.bf16.msra.mxu0 %v6403
  %6469 = vmatprep.subr.bf16.mxu0 %v6408
  %6470 = vmatpush1.bf16.msra.mxu0 %v6407
  %6471 = vmatprep.subr.bf16.mxu0 %v6412
  %6472 = vmatpush1.bf16.msra.mxu0 %v6411
  %6473 = vmatprep.subr.bf16.mxu0 %v6416
  %6474 = vmatpush1.bf16.msra.mxu0 %v6415
  %6475 = vmatprep.subr.bf16.mxu0 %v6420
  %6476 = vmatpush1.bf16.msra.mxu0 %v6419
  %6477 = vmatprep.subr.bf16.mxu0 %v6424
  %6478 = vmatpush1.bf16.msra.mxu0 %v6423
  %6479 = vmatprep.subr.bf16.mxu0 %v6428
  %6480 = vmatpush1.bf16.msra.mxu0 %v6427
  %6481 = vmatprep.subr.bf16.mxu0 %v6432
  %6482 = vmatpush1.bf16.msra.mxu0 %v6431
  %6483 = vmatprep.subr.bf16.mxu0 0
  %6484 = vmatpush1.bf16.msra.mxu0 0
  %6485 = vmatprep.subr.bf16.mxu0 0
  %6486 = vmatpush1.bf16.msra.mxu0 0
  %6487 = vmatprep.subr.bf16.mxu0 0
  %6488 = vmatpush1.bf16.msra.mxu0 0
  %6489 = vmatprep.subr.bf16.mxu0 0
  %6490 = vmatpush1.bf16.msra.mxu0 0
  %6491 = vmatprep.subr.bf16.mxu0 0
  %6492 = vmatpush1.bf16.msra.mxu0 0
  %6493 = vmatprep.subr.bf16.mxu0 0
  %6494 = vmatpush1.bf16.msra.mxu0 0
  %6495 = vmatprep.subr.bf16.mxu0 0
  %6496 = vmatpush1.bf16.msra.mxu0 0
  %6497 = vmatprep.subr.bf16.mxu0 0
  %6498 = vmatpush1.bf16.msra.mxu0 0
  %6499 = vmatprep.mubr.bf16.mxu0 0
  %6500 = vmatmul.mubr.bf16.gmra.mrb[0].mxu0 %v5954
  %v6501 = vpop.f32.mrb[0].mxu0
  %v6502 = vadd.f32 0.0, %v6501
  %v6503 = vpop.f32.mrb[0].mxu0
  %v6504 = vadd.f32 0.0, %v6503
  %v6505 = vpop.f32.mrb[0].mxu0
  %v6506 = vadd.f32 0.0, %v6505
  %v6507 = vpop.f32.mrb[0].mxu0
  %v6508 = vadd.f32 0.0, %v6507
  %6509 = vdwg.mxu0
  %6510 = vmatprep.subr.bf16.mxu0 %v6406
  %6511 = vmatpush1.bf16.msra.mxu0 %v6405
  %6512 = vmatprep.subr.bf16.mxu0 %v6410
  %6513 = vmatpush1.bf16.msra.mxu0 %v6409
  %6514 = vmatprep.subr.bf16.mxu0 %v6414
  %6515 = vmatpush1.bf16.msra.mxu0 %v6413
  %6516 = vmatprep.subr.bf16.mxu0 %v6418
  %6517 = vmatpush1.bf16.msra.mxu0 %v6417
  %6518 = vmatprep.subr.bf16.mxu0 %v6422
  %6519 = vmatpush1.bf16.msra.mxu0 %v6421
  %6520 = vmatprep.subr.bf16.mxu0 %v6426
  %6521 = vmatpush1.bf16.msra.mxu0 %v6425
  %6522 = vmatprep.subr.bf16.mxu0 %v6430
  %6523 = vmatpush1.bf16.msra.mxu0 %v6429
  %6524 = vmatprep.subr.bf16.mxu0 %v6434
  %6525 = vmatpush1.bf16.msra.mxu0 %v6433
  %6526 = vmatprep.subr.bf16.mxu0 0
  %6527 = vmatpush1.bf16.msra.mxu0 0
  %6528 = vmatprep.subr.bf16.mxu0 0
  %6529 = vmatpush1.bf16.msra.mxu0 0
  %6530 = vmatprep.subr.bf16.mxu0 0
  %6531 = vmatpush1.bf16.msra.mxu0 0
  %6532 = vmatprep.subr.bf16.mxu0 0
  %6533 = vmatpush1.bf16.msra.mxu0 0
  %6534 = vmatprep.subr.bf16.mxu0 0
  %6535 = vmatpush1.bf16.msra.mxu0 0
  %6536 = vmatprep.subr.bf16.mxu0 0
  %6537 = vmatpush1.bf16.msra.mxu0 0
  %6538 = vmatprep.subr.bf16.mxu0 0
  %6539 = vmatpush1.bf16.msra.mxu0 0
  %6540 = vmatprep.subr.bf16.mxu0 0
  %6541 = vmatpush1.bf16.msra.mxu0 0
  %6542 = vmatprep.mubr.bf16.mxu0 0
  %6543 = vmatmul.mubr.bf16.gmra.mrb[0].mxu0 %v5954
  %v6544 = vpop.f32.mrb[0].mxu0
  %v6545 = vadd.f32 0.0, %v6544
  %v6546 = vpop.f32.mrb[0].mxu0
  %v6547 = vadd.f32 0.0, %v6546
  %v6548 = vpop.f32.mrb[0].mxu0
  %v6549 = vadd.f32 0.0, %v6548
  %v6550 = vpop.f32.mrb[0].mxu0
  %v6551 = vadd.f32 0.0, %v6550
  %6552 = vdwg.mxu0
  %v6553 = vadd.f32 %v6267, %v6502
  %v6554 = vadd.f32 %v6268, %v6504
  %v6555 = vadd.f32 %v6269, %v6545
  %v6556 = vadd.f32 %v6270, %v6547
  %v6557 = vadd.f32 %v6271, %v6506
  %v6558 = vadd.f32 %v6272, %v6508
  %v6559 = vadd.f32 %v6273, %v6549
  %v6560 = vadd.f32 %v6274, %v6551
  %v6561 = vmul.f32 %v6553, 0.5
  %v6562 = vmul.f32 %v6554, 0.5
  %v6563 = vmul.f32 %v6555, 0.5
  %v6564 = vmul.f32 %v6557, 0.5
  %v6565 = vmul.f32 %v6558, 0.5
  %v6566 = vmul.f32 %v6559, 0.5
  %v6567 = vtanh.pop %v6561
  %v6568 = vtanh.pop %v6562
  %v6569 = vtanh.pop %v6563
  %v6570 = vtanh.pop %v6564
  %v6571 = vtanh.pop %v6565
  %v6572 = vtanh.pop %v6566
  %v6573 = vmul.f32 %v6567, 0.5
  %v6574 = vmul.f32 %v6568, 0.5
  %v6575 = vmul.f32 %v6569, 0.5
  %v6576 = vmul.f32 %v6570, 0.5
  %v6577 = vmul.f32 %v6571, 0.5
  %v6578 = vmul.f32 %v6572, 0.5
  %v6579 = vadd.f32 %v6573, 0.5
  %v6580 = vadd.f32 %v6574, 0.5
  %v6581 = vadd.f32 %v6575, 0.5
  %v6582 = vadd.f32 %v6576, 0.5
  %v6583 = vadd.f32 %v6577, 0.5
  %v6584 = vadd.f32 %v6578, 0.5
  %v6585 = vtanh.pop %v6556
  %v6586 = vtanh.pop %v6560
  %v6587 = vmul.f32 %v6580, %v5948
  %v6588 = vmul.f32 %v6583, %v5949
  %v6589 = vmul.f32 %v6579, %v6585
  %v6590 = vmul.f32 %v6582, %v6586
  %v6591 = vadd.f32 %v6587, %v6589
  %v6592 = vadd.f32 %v6588, %v6590
  %v6593 = vtanh.pop %v6591
  %v6594 = vtanh.pop %v6592
  %v6595 = vmul.f32 %v6581, %v6593
  %v6596 = vmul.f32 %v6584, %v6594
  %v6597 = vpack.c.bf16 %v6596, %v6595
  %v6598 = vld [vmem:[%s7] sm:$0xff]
  %v6599 = vld [vmem:[%s7 + $0x8] sm:$0xff]
  %v6600 = vld [vmem:[%s7 + $0x10] sm:$0xff]
  %v6601 = vld [vmem:[%s7 + $0x18] sm:$0xff]
  %v6602 = vld [vmem:[%s7 + $0x20] sm:$0xff]
  %v6603 = vld [vmem:[%s7 + $0x28] sm:$0xff]
  %v6604 = vld [vmem:[%s7 + $0x30] sm:$0xff]
  %v6605 = vld [vmem:[%s7 + $0x38] sm:$0xff]
  %v6606 = vld [vmem:[%s7 + $0x40] sm:$0xff]
  %v6607 = vld [vmem:[%s7 + $0x48] sm:$0xff]
  %v6608 = vld [vmem:[%s7 + $0x50] sm:$0xff]
  %v6609 = vld [vmem:[%s7 + $0x58] sm:$0xff]
  %v6610 = vld [vmem:[%s7 + $0x60] sm:$0xff]
  %v6611 = vld [vmem:[%s7 + $0x68] sm:$0xff]
  %v6612 = vld [vmem:[%s7 + $0x70] sm:$0xff]
  %v6613 = vld [vmem:[%s7 + $0x78] sm:$0xff]
  %v6614 = vld [vmem:[%s7 + $0x80] sm:$0xff]
  %v6615 = vld [vmem:[%s7 + $0x88] sm:$0xff]
  %v6616 = vld [vmem:[%s7 + $0x90] sm:$0xff]
  %v6617 = vld [vmem:[%s7 + $0x98] sm:$0xff]
  %v6618 = vld [vmem:[%s7 + $0xa0] sm:$0xff]
  %v6619 = vld [vmem:[%s7 + $0xa8] sm:$0xff]
  %v6620 = vld [vmem:[%s7 + $0xb0] sm:$0xff]
  %v6621 = vld [vmem:[%s7 + $0xb8] sm:$0xff]
  %v6622 = vld [vmem:[%s7 + $0xc0] sm:$0xff]
  %v6623 = vld [vmem:[%s7 + $0xc8] sm:$0xff]
  %v6624 = vld [vmem:[%s7 + $0xd0] sm:$0xff]
  %v6625 = vld [vmem:[%s7 + $0xd8] sm:$0xff]
  %v6626 = vld [vmem:[%s7 + $0xe0] sm:$0xff]
  %v6627 = vld [vmem:[%s7 + $0xe8] sm:$0xff]
  %v6628 = vld [vmem:[%s7 + $0xf0] sm:$0xff]
  %v6629 = vld [vmem:[%s7 + $0xf8] sm:$0xff]
  %v6630 = vld [vmem:[%s9] sm:$0xf]
  %v6632 = vlaneseq
  %v6633 = vshrl.u32 %v6632, 7
  %v6634 = vsub.s32 0, %v6633
  %v6635 = vrot.slane %v6630, %v6634
  %v6636 = vlaneseq
  %v6637 = vshrl.u32 %v6636, 7
  %v6638 = vsub.s32 1, %v6637
  %v6639 = vrot.slane %v6630, %v6638
  %v6640 = vlaneseq
  %v6641 = vshrl.u32 %v6640, 7
  %v6642 = vsub.s32 2, %v6641
  %v6643 = vrot.slane %v6630, %v6642
  %v6644 = vlaneseq
  %v6645 = vshrl.u32 %v6644, 7
  %v6646 = vsub.s32 3, %v6645
  %v6647 = vrot.slane %v6630, %v6646
  %v6684 = vunpack.c.l.b16 %v6598
  %v6685 = vunpack.c.h.b16 %v6598
  %v6686 = vunpack.c.l.b16 %v6599
  %v6687 = vunpack.c.h.b16 %v6599
  %v6688 = vunpack.c.l.b16 %v6600
  %v6689 = vunpack.c.h.b16 %v6600
  %v6690 = vunpack.c.l.b16 %v6601
  %v6691 = vunpack.c.h.b16 %v6601
  %v6692 = vunpack.c.l.b16 %v6602
  %v6693 = vunpack.c.h.b16 %v6602
  %v6694 = vunpack.c.l.b16 %v6603
  %v6695 = vunpack.c.h.b16 %v6603
  %v6696 = vunpack.c.l.b16 %v6604
  %v6697 = vunpack.c.h.b16 %v6604
  %v6698 = vunpack.c.l.b16 %v6605
  %v6699 = vunpack.c.h.b16 %v6605
  %v6700 = vunpack.c.l.b16 %v6606
  %v6701 = vunpack.c.h.b16 %v6606
  %v6702 = vunpack.c.l.b16 %v6607
  %v6703 = vunpack.c.h.b16 %v6607
  %v6704 = vunpack.c.l.b16 %v6608
  %v6705 = vunpack.c.h.b16 %v6608
  %v6706 = vunpack.c.l.b16 %v6609
  %v6707 = vunpack.c.h.b16 %v6609
  %v6708 = vunpack.c.l.b16 %v6610
  %v6709 = vunpack.c.h.b16 %v6610
  %v6710 = vunpack.c.l.b16 %v6611
  %v6711 = vunpack.c.h.b16 %v6611
  %v6712 = vunpack.c.l.b16 %v6612
  %v6713 = vunpack.c.h.b16 %v6612
  %v6714 = vunpack.c.l.b16 %v6613
  %v6715 = vunpack.c.h.b16 %v6613
  %v6716 = vunpack.c.l.b16 %v6614
  %v6717 = vunpack.c.h.b16 %v6614
  %v6718 = vunpack.c.l.b16 %v6615
  %v6719 = vunpack.c.h.b16 %v6615
  %v6720 = vunpack.c.l.b16 %v6616
  %v6721 = vunpack.c.h.b16 %v6616
  %v6722 = vunpack.c.l.b16 %v6617
  %v6723 = vunpack.c.h.b16 %v6617
  %v6724 = vunpack.c.l.b16 %v6618
  %v6725 = vunpack.c.h.b16 %v6618
  %v6726 = vunpack.c.l.b16 %v6619
  %v6727 = vunpack.c.h.b16 %v6619
  %v6728 = vunpack.c.l.b16 %v6620
  %v6729 = vunpack.c.h.b16 %v6620
  %v6730 = vunpack.c.l.b16 %v6621
  %v6731 = vunpack.c.h.b16 %v6621
  %v6732 = vunpack.c.l.b16 %v6622
  %v6733 = vunpack.c.h.b16 %v6622
  %v6734 = vunpack.c.l.b16 %v6623
  %v6735 = vunpack.c.h.b16 %v6623
  %v6736 = vunpack.c.l.b16 %v6624
  %v6737 = vunpack.c.h.b16 %v6624
  %v6738 = vunpack.c.l.b16 %v6625
  %v6739 = vunpack.c.h.b16 %v6625
  %v6740 = vunpack.c.l.b16 %v6626
  %v6741 = vunpack.c.h.b16 %v6626
  %v6742 = vunpack.c.l.b16 %v6627
  %v6743 = vunpack.c.h.b16 %v6627
  %v6744 = vunpack.c.l.b16 %v6628
  %v6745 = vunpack.c.h.b16 %v6628
  %v6746 = vunpack.c.l.b16 %v6629
  %v6747 = vunpack.c.h.b16 %v6629
  %v6748 = vpack.c.b16 %v6688, %v6684
  %v6749 = vpack.c.b16 %v6689, %v6685
  %v6750 = vpack.c.b16 %v6690, %v6686
  %v6751 = vpack.c.b16 %v6691, %v6687
  %v6752 = vpack.c.b16 %v6696, %v6692
  %v6753 = vpack.c.b16 %v6697, %v6693
  %v6754 = vpack.c.b16 %v6698, %v6694
  %v6755 = vpack.c.b16 %v6699, %v6695
  %v6756 = vpack.c.b16 %v6704, %v6700
  %v6757 = vpack.c.b16 %v6705, %v6701
  %v6758 = vpack.c.b16 %v6706, %v6702
  %v6759 = vpack.c.b16 %v6707, %v6703
  %v6760 = vpack.c.b16 %v6712, %v6708
  %v6761 = vpack.c.b16 %v6713, %v6709
  %v6762 = vpack.c.b16 %v6714, %v6710
  %v6763 = vpack.c.b16 %v6715, %v6711
  %v6764 = vpack.c.b16 %v6720, %v6716
  %v6765 = vpack.c.b16 %v6721, %v6717
  %v6766 = vpack.c.b16 %v6722, %v6718
  %v6767 = vpack.c.b16 %v6723, %v6719
  %v6768 = vpack.c.b16 %v6728, %v6724
  %v6769 = vpack.c.b16 %v6729, %v6725
  %v6770 = vpack.c.b16 %v6730, %v6726
  %v6771 = vpack.c.b16 %v6731, %v6727
  %v6772 = vpack.c.b16 %v6736, %v6732
  %v6773 = vpack.c.b16 %v6737, %v6733
  %v6774 = vpack.c.b16 %v6738, %v6734
  %v6775 = vpack.c.b16 %v6739, %v6735
  %v6776 = vpack.c.b16 %v6744, %v6740
  %v6777 = vpack.c.b16 %v6745, %v6741
  %v6778 = vpack.c.b16 %v6746, %v6742
  %v6779 = vpack.c.b16 %v6747, %v6743
  %6812 = vmatprep.subr.bf16.mxu0 %v6749
  %6813 = vmatpush1.bf16.msra.mxu0 %v6748
  %6814 = vmatprep.subr.bf16.mxu0 %v6753
  %6815 = vmatpush1.bf16.msra.mxu0 %v6752
  %6816 = vmatprep.subr.bf16.mxu0 %v6757
  %6817 = vmatpush1.bf16.msra.mxu0 %v6756
  %6818 = vmatprep.subr.bf16.mxu0 %v6761
  %6819 = vmatpush1.bf16.msra.mxu0 %v6760
  %6820 = vmatprep.subr.bf16.mxu0 %v6765
  %6821 = vmatpush1.bf16.msra.mxu0 %v6764
  %6822 = vmatprep.subr.bf16.mxu0 %v6769
  %6823 = vmatpush1.bf16.msra.mxu0 %v6768
  %6824 = vmatprep.subr.bf16.mxu0 %v6773
  %6825 = vmatpush1.bf16.msra.mxu0 %v6772
  %6826 = vmatprep.subr.bf16.mxu0 %v6777
  %6827 = vmatpush1.bf16.msra.mxu0 %v6776
  %6828 = vmatprep.subr.bf16.mxu0 0
  %6829 = vmatpush1.bf16.msra.mxu0 0
  %6830 = vmatprep.subr.bf16.mxu0 0
  %6831 = vmatpush1.bf16.msra.mxu0 0
  %6832 = vmatprep.subr.bf16.mxu0 0
  %6833 = vmatpush1.bf16.msra.mxu0 0
  %6834 = vmatprep.subr.bf16.mxu0 0
  %6835 = vmatpush1.bf16.msra.mxu0 0
  %6836 = vmatprep.subr.bf16.mxu0 0
  %6837 = vmatpush1.bf16.msra.mxu0 0
  %6838 = vmatprep.subr.bf16.mxu0 0
  %6839 = vmatpush1.bf16.msra.mxu0 0
  %6840 = vmatprep.subr.bf16.mxu0 0
  %6841 = vmatpush1.bf16.msra.mxu0 0
  %6842 = vmatprep.subr.bf16.mxu0 0
  %6843 = vmatpush1.bf16.msra.mxu0 0
  %6844 = vmatprep.mubr.bf16.mxu0 0
  %6845 = vmatmul.mubr.bf16.gmra.mrb[0].mxu0 %v6597
  %v6846 = vpop.f32.mrb[0].mxu0
  %v6847 = vadd.f32 %v6635, %v6846
  %v6848 = vpop.f32.mrb[0].mxu0
  %v6849 = vadd.f32 %v6639, %v6848
  %v6850 = vpop.f32.mrb[0].mxu0
  %v6851 = vadd.f32 %v6635, %v6850
  %v6852 = vpop.f32.mrb[0].mxu0
  %v6853 = vadd.f32 %v6639, %v6852
  %6854 = vdwg.mxu0
  %6855 = vmatprep.subr.bf16.mxu0 %v6751
  %6856 = vmatpush1.bf16.msra.mxu0 %v6750
  %6857 = vmatprep.subr.bf16.mxu0 %v6755
  %6858 = vmatpush1.bf16.msra.mxu0 %v6754
  %6859 = vmatprep.subr.bf16.mxu0 %v6759
  %6860 = vmatpush1.bf16.msra.mxu0 %v6758
  %6861 = vmatprep.subr.bf16.mxu0 %v6763
  %6862 = vmatpush1.bf16.msra.mxu0 %v6762
  %6863 = vmatprep.subr.bf16.mxu0 %v6767
  %6864 = vmatpush1.bf16.msra.mxu0 %v6766
  %6865 = vmatprep.subr.bf16.mxu0 %v6771
  %6866 = vmatpush1.bf16.msra.mxu0 %v6770
  %6867 = vmatprep.subr.bf16.mxu0 %v6775
  %6868 = vmatpush1.bf16.msra.mxu0 %v6774
  %6869 = vmatprep.subr.bf16.mxu0 %v6779
  %6870 = vmatpush1.bf16.msra.mxu0 %v6778
  %6871 = vmatprep.subr.bf16.mxu0 0
  %6872 = vmatpush1.bf16.msra.mxu0 0
  %6873 = vmatprep.subr.bf16.mxu0 0
  %6874 = vmatpush1.bf16.msra.mxu0 0
  %6875 = vmatprep.subr.bf16.mxu0 0
  %6876 = vmatpush1.bf16.msra.mxu0 0
  %6877 = vmatprep.subr.bf16.mxu0 0
  %6878 = vmatpush1.bf16.msra.mxu0 0
  %6879 = vmatprep.subr.bf16.mxu0 0
  %6880 = vmatpush1.bf16.msra.mxu0 0
  %6881 = vmatprep.subr.bf16.mxu0 0
  %6882 = vmatpush1.bf16.msra.mxu0 0
  %6883 = vmatprep.subr.bf16.mxu0 0
  %6884 = vmatpush1.bf16.msra.mxu0 0
  %6885 = vmatprep.subr.bf16.mxu0 0
  %6886 = vmatpush1.bf16.msra.mxu0 0
  %6887 = vmatprep.mubr.bf16.mxu0 0
  %6888 = vmatmul.mubr.bf16.gmra.mrb[0].mxu0 %v6597
  %v6889 = vpop.f32.mrb[0].mxu0
  %v6890 = vadd.f32 %v6643, %v6889
  %v6891 = vpop.f32.mrb[0].mxu0
  %v6892 = vadd.f32 %v6647, %v6891
  %v6893 = vpop.f32.mrb[0].mxu0
  %v6894 = vadd.f32 %v6643, %v6893
  %v6895 = vpop.f32.mrb[0].mxu0
  %v6896 = vadd.f32 %v6647, %v6895
  %6897 = vdwg.mxu0
  %v6898 = vpack.c.bf16 %v6851, %v6847
  %v6899 = vpack.c.bf16 %v6853, %v6849
  %v6900 = vpack.c.bf16 %v6894, %v6890
  %v6901 = vpack.c.bf16 %v6896, %v6892
  %6902 = vst [vmem:[%s1112] sm:$0xff] %v6898
  %6903 = vst [vmem:[%s1112 + $0x8] sm:$0xff] %v6899
  %6904 = vst [vmem:[%s1112 + $0x10] sm:$0xff] %v6900
  %6905 = vst [vmem:[%s1112 + $0x18] sm:$0xff] %v6901
  %v6906 = vld [vmem:[%s1756] sm:$0xff]
  %v6907 = vld [vmem:[%s1756 + $0x8] sm:$0xff]
  %v6908 = vld [vmem:[%s1756 + $0x10] sm:$0xff]
  %v6909 = vld [vmem:[%s1756 + $0x18] sm:$0xff]
  %v6910 = vunpack.c.l.bf16 %v6906
  %v6911 = vunpack.c.l.bf16 %v6907
  %v6912 = vunpack.c.l.bf16 %v6908
  %v6913 = vunpack.c.l.bf16 %v6909
  %v6914 = vunpack.c.h.bf16 %v6906
  %v6915 = vunpack.c.h.bf16 %v6907
  %v6916 = vunpack.c.h.bf16 %v6908
  %v6917 = vunpack.c.h.bf16 %v6909
  %v6918 = vld [vmem:[%s5] sm:$0xff]
  %v6919 = vld [vmem:[%s5 + $0x8] sm:$0xff]
  %v6920 = vld [vmem:[%s5 + $0x10] sm:$0xff]
  %v6921 = vld [vmem:[%s5 + $0x18] sm:$0xff]
  %v6922 = vld [vmem:[%s5 + $0x20] sm:$0xff]
  %v6923 = vld [vmem:[%s5 + $0x28] sm:$0xff]
  %v6924 = vld [vmem:[%s5 + $0x30] sm:$0xff]
  %v6925 = vld [vmem:[%s5 + $0x38] sm:$0xff]
  %v6926 = vld [vmem:[%s5 + $0x40] sm:$0xff]
  %v6927 = vld [vmem:[%s5 + $0x48] sm:$0xff]
  %v6928 = vld [vmem:[%s5 + $0x50] sm:$0xff]
  %v6929 = vld [vmem:[%s5 + $0x58] sm:$0xff]
  %v6930 = vld [vmem:[%s5 + $0x60] sm:$0xff]
  %v6931 = vld [vmem:[%s5 + $0x68] sm:$0xff]
  %v6932 = vld [vmem:[%s5 + $0x70] sm:$0xff]
  %v6933 = vld [vmem:[%s5 + $0x78] sm:$0xff]
  %v6934 = vld [vmem:[%s5 + $0x80] sm:$0xff]
  %v6935 = vld [vmem:[%s5 + $0x88] sm:$0xff]
  %v6936 = vld [vmem:[%s5 + $0x90] sm:$0xff]
  %v6937 = vld [vmem:[%s5 + $0x98] sm:$0xff]
  %v6938 = vld [vmem:[%s5 + $0xa0] sm:$0xff]
  %v6939 = vld [vmem:[%s5 + $0xa8] sm:$0xff]
  %v6940 = vld [vmem:[%s5 + $0xb0] sm:$0xff]
  %v6941 = vld [vmem:[%s5 + $0xb8] sm:$0xff]
  %v6942 = vld [vmem:[%s5 + $0xc0] sm:$0xff]
  %v6943 = vld [vmem:[%s5 + $0xc8] sm:$0xff]
  %v6944 = vld [vmem:[%s5 + $0xd0] sm:$0xff]
  %v6945 = vld [vmem:[%s5 + $0xd8] sm:$0xff]
  %v6946 = vld [vmem:[%s5 + $0xe0] sm:$0xff]
  %v6947 = vld [vmem:[%s5 + $0xe8] sm:$0xff]
  %v6948 = vld [vmem:[%s5 + $0xf0] sm:$0xff]
  %v6949 = vld [vmem:[%s5 + $0xf8] sm:$0xff]
  %v6982 = vunpack.c.l.b16 %v6918
  %v6983 = vunpack.c.h.b16 %v6918
  %v6984 = vunpack.c.l.b16 %v6919
  %v6985 = vunpack.c.h.b16 %v6919
  %v6986 = vunpack.c.l.b16 %v6920
  %v6987 = vunpack.c.h.b16 %v6920
  %v6988 = vunpack.c.l.b16 %v6921
  %v6989 = vunpack.c.h.b16 %v6921
  %v6990 = vunpack.c.l.b16 %v6922
  %v6991 = vunpack.c.h.b16 %v6922
  %v6992 = vunpack.c.l.b16 %v6923
  %v6993 = vunpack.c.h.b16 %v6923
  %v6994 = vunpack.c.l.b16 %v6924
  %v6995 = vunpack.c.h.b16 %v6924
  %v6996 = vunpack.c.l.b16 %v6925
  %v6997 = vunpack.c.h.b16 %v6925
  %v6998 = vunpack.c.l.b16 %v6926
  %v6999 = vunpack.c.h.b16 %v6926
  %v7000 = vunpack.c.l.b16 %v6927
  %v7001 = vunpack.c.h.b16 %v6927
  %v7002 = vunpack.c.l.b16 %v6928
  %v7003 = vunpack.c.h.b16 %v6928
  %v7004 = vunpack.c.l.b16 %v6929
  %v7005 = vunpack.c.h.b16 %v6929
  %v7006 = vunpack.c.l.b16 %v6930
  %v7007 = vunpack.c.h.b16 %v6930
  %v7008 = vunpack.c.l.b16 %v6931
  %v7009 = vunpack.c.h.b16 %v6931
  %v7010 = vunpack.c.l.b16 %v6932
  %v7011 = vunpack.c.h.b16 %v6932
  %v7012 = vunpack.c.l.b16 %v6933
  %v7013 = vunpack.c.h.b16 %v6933
  %v7014 = vunpack.c.l.b16 %v6934
  %v7015 = vunpack.c.h.b16 %v6934
  %v7016 = vunpack.c.l.b16 %v6935
  %v7017 = vunpack.c.h.b16 %v6935
  %v7018 = vunpack.c.l.b16 %v6936
  %v7019 = vunpack.c.h.b16 %v6936
  %v7020 = vunpack.c.l.b16 %v6937
  %v7021 = vunpack.c.h.b16 %v6937
  %v7022 = vunpack.c.l.b16 %v6938
  %v7023 = vunpack.c.h.b16 %v6938
  %v7024 = vunpack.c.l.b16 %v6939
  %v7025 = vunpack.c.h.b16 %v6939
  %v7026 = vunpack.c.l.b16 %v6940
  %v7027 = vunpack.c.h.b16 %v6940
  %v7028 = vunpack.c.l.b16 %v6941
  %v7029 = vunpack.c.h.b16 %v6941
  %v7030 = vunpack.c.l.b16 %v6942
  %v7031 = vunpack.c.h.b16 %v6942
  %v7032 = vunpack.c.l.b16 %v6943
  %v7033 = vunpack.c.h.b16 %v6943
  %v7034 = vunpack.c.l.b16 %v6944
  %v7035 = vunpack.c.h.b16 %v6944
  %v7036 = vunpack.c.l.b16 %v6945
  %v7037 = vunpack.c.h.b16 %v6945
  %v7038 = vunpack.c.l.b16 %v6946
  %v7039 = vunpack.c.h.b16 %v6946
  %v7040 = vunpack.c.l.b16 %v6947
  %v7041 = vunpack.c.h.b16 %v6947
  %v7042 = vunpack.c.l.b16 %v6948
  %v7043 = vunpack.c.h.b16 %v6948
  %v7044 = vunpack.c.l.b16 %v6949
  %v7045 = vunpack.c.h.b16 %v6949
  %v7046 = vpack.c.b16 %v6986, %v6982
  %v7047 = vpack.c.b16 %v6987, %v6983
  %v7048 = vpack.c.b16 %v6988, %v6984
  %v7049 = vpack.c.b16 %v6989, %v6985
  %v7050 = vpack.c.b16 %v6994, %v6990
  %v7051 = vpack.c.b16 %v6995, %v6991
  %v7052 = vpack.c.b16 %v6996, %v6992
  %v7053 = vpack.c.b16 %v6997, %v6993
  %v7054 = vpack.c.b16 %v7002, %v6998
  %v7055 = vpack.c.b16 %v7003, %v6999
  %v7056 = vpack.c.b16 %v7004, %v7000
  %v7057 = vpack.c.b16 %v7005, %v7001
  %v7058 = vpack.c.b16 %v7010, %v7006
  %v7059 = vpack.c.b16 %v7011, %v7007
  %v7060 = vpack.c.b16 %v7012, %v7008
  %v7061 = vpack.c.b16 %v7013, %v7009
  %v7062 = vpack.c.b16 %v7018, %v7014
  %v7063 = vpack.c.b16 %v7019, %v7015
  %v7064 = vpack.c.b16 %v7020, %v7016
  %v7065 = vpack.c.b16 %v7021, %v7017
  %v7066 = vpack.c.b16 %v7026, %v7022
  %v7067 = vpack.c.b16 %v7027, %v7023
  %v7068 = vpack.c.b16 %v7028, %v7024
  %v7069 = vpack.c.b16 %v7029, %v7025
  %v7070 = vpack.c.b16 %v7034, %v7030
  %v7071 = vpack.c.b16 %v7035, %v7031
  %v7072 = vpack.c.b16 %v7036, %v7032
  %v7073 = vpack.c.b16 %v7037, %v7033
  %v7074 = vpack.c.b16 %v7042, %v7038
  %v7075 = vpack.c.b16 %v7043, %v7039
  %v7076 = vpack.c.b16 %v7044, %v7040
  %v7077 = vpack.c.b16 %v7045, %v7041
  %7110 = vmatprep.subr.bf16.mxu0 %v7047
  %7111 = vmatpush1.bf16.msra.mxu0 %v7046
  %7112 = vmatprep.subr.bf16.mxu0 %v7051
  %7113 = vmatpush1.bf16.msra.mxu0 %v7050
  %7114 = vmatprep.subr.bf16.mxu0 %v7055
  %7115 = vmatpush1.bf16.msra.mxu0 %v7054
  %7116 = vmatprep.subr.bf16.mxu0 %v7059
  %7117 = vmatpush1.bf16.msra.mxu0 %v7058
  %7118 = vmatprep.subr.bf16.mxu0 %v7063
  %7119 = vmatpush1.bf16.msra.mxu0 %v7062
  %7120 = vmatprep.subr.bf16.mxu0 %v7067
  %7121 = vmatpush1.bf16.msra.mxu0 %v7066
  %7122 = vmatprep.subr.bf16.mxu0 %v7071
  %7123 = vmatpush1.bf16.msra.mxu0 %v7070
  %7124 = vmatprep.subr.bf16.mxu0 %v7075
  %7125 = vmatpush1.bf16.msra.mxu0 %v7074
  %7126 = vmatprep.subr.bf16.mxu0 0
  %7127 = vmatpush1.bf16.msra.mxu0 0
  %7128 = vmatprep.subr.bf16.mxu0 0
  %7129 = vmatpush1.bf16.msra.mxu0 0
  %7130 = vmatprep.subr.bf16.mxu0 0
  %7131 = vmatpush1.bf16.msra.mxu0 0
  %7132 = vmatprep.subr.bf16.mxu0 0
  %7133 = vmatpush1.bf16.msra.mxu0 0
  %7134 = vmatprep.subr.bf16.mxu0 0
  %7135 = vmatpush1.bf16.msra.mxu0 0
  %7136 = vmatprep.subr.bf16.mxu0 0
  %7137 = vmatpush1.bf16.msra.mxu0 0
  %7138 = vmatprep.subr.bf16.mxu0 0
  %7139 = vmatpush1.bf16.msra.mxu0 0
  %7140 = vmatprep.subr.bf16.mxu0 0
  %7141 = vmatpush1.bf16.msra.mxu0 0
  %7142 = vmatprep.mubr.bf16.mxu0 0
  %7143 = vmatmul.mubr.bf16.gmra.mrb[0].mxu0 %v6597
  %v7144 = vpop.f32.mrb[0].mxu0
  %v7145 = vadd.f32 0.0, %v7144
  %v7146 = vpop.f32.mrb[0].mxu0
  %v7147 = vadd.f32 0.0, %v7146
  %v7148 = vpop.f32.mrb[0].mxu0
  %v7149 = vadd.f32 0.0, %v7148
  %v7150 = vpop.f32.mrb[0].mxu0
  %v7151 = vadd.f32 0.0, %v7150
  %7152 = vdwg.mxu0
  %7153 = vmatprep.subr.bf16.mxu0 %v7049
  %7154 = vmatpush1.bf16.msra.mxu0 %v7048
  %7155 = vmatprep.subr.bf16.mxu0 %v7053
  %7156 = vmatpush1.bf16.msra.mxu0 %v7052
  %7157 = vmatprep.subr.bf16.mxu0 %v7057
  %7158 = vmatpush1.bf16.msra.mxu0 %v7056
  %7159 = vmatprep.subr.bf16.mxu0 %v7061
  %7160 = vmatpush1.bf16.msra.mxu0 %v7060
  %7161 = vmatprep.subr.bf16.mxu0 %v7065
  %7162 = vmatpush1.bf16.msra.mxu0 %v7064
  %7163 = vmatprep.subr.bf16.mxu0 %v7069
  %7164 = vmatpush1.bf16.msra.mxu0 %v7068
  %7165 = vmatprep.subr.bf16.mxu0 %v7073
  %7166 = vmatpush1.bf16.msra.mxu0 %v7072
  %7167 = vmatprep.subr.bf16.mxu0 %v7077
  %7168 = vmatpush1.bf16.msra.mxu0 %v7076
  %7169 = vmatprep.subr.bf16.mxu0 0
  %7170 = vmatpush1.bf16.msra.mxu0 0
  %7171 = vmatprep.subr.bf16.mxu0 0
  %7172 = vmatpush1.bf16.msra.mxu0 0
  %7173 = vmatprep.subr.bf16.mxu0 0
  %7174 = vmatpush1.bf16.msra.mxu0 0
  %7175 = vmatprep.subr.bf16.mxu0 0
  %7176 = vmatpush1.bf16.msra.mxu0 0
  %7177 = vmatprep.subr.bf16.mxu0 0
  %7178 = vmatpush1.bf16.msra.mxu0 0
  %7179 = vmatprep.subr.bf16.mxu0 0
  %7180 = vmatpush1.bf16.msra.mxu0 0
  %7181 = vmatprep.subr.bf16.mxu0 0
  %7182 = vmatpush1.bf16.msra.mxu0 0
  %7183 = vmatprep.subr.bf16.mxu0 0
  %7184 = vmatpush1.bf16.msra.mxu0 0
  %7185 = vmatprep.mubr.bf16.mxu0 0
  %7186 = vmatmul.mubr.bf16.gmra.mrb[0].mxu0 %v6597
  %v7187 = vpop.f32.mrb[0].mxu0
  %v7188 = vadd.f32 0.0, %v7187
  %v7189 = vpop.f32.mrb[0].mxu0
  %v7190 = vadd.f32 0.0, %v7189
  %v7191 = vpop.f32.mrb[0].mxu0
  %v7192 = vadd.f32 0.0, %v7191
  %v7193 = vpop.f32.mrb[0].mxu0
  %v7194 = vadd.f32 0.0, %v7193
  %7195 = vdwg.mxu0
  %v7196 = vadd.f32 %v6910, %v7145
  %v7197 = vadd.f32 %v6911, %v7147
  %v7198 = vadd.f32 %v6912, %v7188
  %v7199 = vadd.f32 %v6913, %v7190
  %v7200 = vadd.f32 %v6914, %v7149
  %v7201 = vadd.f32 %v6915, %v7151
  %v7202 = vadd.f32 %v6916, %v7192
  %v7203 = vadd.f32 %v6917, %v7194
  %v7204 = vmul.f32 %v7196, 0.5
  %v7205 = vmul.f32 %v7197, 0.5
  %v7206 = vmul.f32 %v7198, 0.5
  %v7207 = vmul.f32 %v7200, 0.5
  %v7208 = vmul.f32 %v7201, 0.5
  %v7209 = vmul.f32 %v7202, 0.5
  %v7210 = vtanh.pop %v7204
  %v7211 = vtanh.pop %v7205
  %v7212 = vtanh.pop %v7206
  %v7213 = vtanh.pop %v7207
  %v7214 = vtanh.pop %v7208
  %v7215 = vtanh.pop %v7209
  %v7216 = vmul.f32 %v7210, 0.5
  %v7217 = vmul.f32 %v7211, 0.5
  %v7218 = vmul.f32 %v7212, 0.5
  %v7219 = vmul.f32 %v7213, 0.5
  %v7220 = vmul.f32 %v7214, 0.5
  %v7221 = vmul.f32 %v7215, 0.5
  %v7222 = vadd.f32 %v7216, 0.5
  %v7223 = vadd.f32 %v7217, 0.5
  %v7224 = vadd.f32 %v7218, 0.5
  %v7225 = vadd.f32 %v7219, 0.5
  %v7226 = vadd.f32 %v7220, 0.5
  %v7227 = vadd.f32 %v7221, 0.5
  %v7228 = vtanh.pop %v7199
  %v7229 = vtanh.pop %v7203
  %v7230 = vmul.f32 %v7223, %v6591
  %v7231 = vmul.f32 %v7226, %v6592
  %v7232 = vmul.f32 %v7222, %v7228
  %v7233 = vmul.f32 %v7225, %v7229
  %v7234 = vadd.f32 %v7230, %v7232
  %v7235 = vadd.f32 %v7231, %v7233
  %v7236 = vtanh.pop %v7234
  %v7237 = vtanh.pop %v7235
  %v7238 = vmul.f32 %v7224, %v7236
  %v7239 = vmul.f32 %v7227, %v7237
  %v7240 = vpack.c.bf16 %v7239, %v7238
  %v7241 = vld [vmem:[%s7] sm:$0xff]
  %v7242 = vld [vmem:[%s7 + $0x8] sm:$0xff]
  %v7243 = vld [vmem:[%s7 + $0x10] sm:$0xff]
  %v7244 = vld [vmem:[%s7 + $0x18] sm:$0xff]
  %v7245 = vld [vmem:[%s7 + $0x20] sm:$0xff]
  %v7246 = vld [vmem:[%s7 + $0x28] sm:$0xff]
  %v7247 = vld [vmem:[%s7 + $0x30] sm:$0xff]
  %v7248 = vld [vmem:[%s7 + $0x38] sm:$0xff]
  %v7249 = vld [vmem:[%s7 + $0x40] sm:$0xff]
  %v7250 = vld [vmem:[%s7 + $0x48] sm:$0xff]
  %v7251 = vld [vmem:[%s7 + $0x50] sm:$0xff]
  %v7252 = vld [vmem:[%s7 + $0x58] sm:$0xff]
  %v7253 = vld [vmem:[%s7 + $0x60] sm:$0xff]
  %v7254 = vld [vmem:[%s7 + $0x68] sm:$0xff]
  %v7255 = vld [vmem:[%s7 + $0x70] sm:$0xff]
  %v7256 = vld [vmem:[%s7 + $0x78] sm:$0xff]
  %v7257 = vld [vmem:[%s7 + $0x80] sm:$0xff]
  %v7258 = vld [vmem:[%s7 + $0x88] sm:$0xff]
  %v7259 = vld [vmem:[%s7 + $0x90] sm:$0xff]
  %v7260 = vld [vmem:[%s7 + $0x98] sm:$0xff]
  %v7261 = vld [vmem:[%s7 + $0xa0] sm:$0xff]
  %v7262 = vld [vmem:[%s7 + $0xa8] sm:$0xff]
  %v7263 = vld [vmem:[%s7 + $0xb0] sm:$0xff]
  %v7264 = vld [vmem:[%s7 + $0xb8] sm:$0xff]
  %v7265 = vld [vmem:[%s7 + $0xc0] sm:$0xff]
  %v7266 = vld [vmem:[%s7 + $0xc8] sm:$0xff]
  %v7267 = vld [vmem:[%s7 + $0xd0] sm:$0xff]
  %v7268 = vld [vmem:[%s7 + $0xd8] sm:$0xff]
  %v7269 = vld [vmem:[%s7 + $0xe0] sm:$0xff]
  %v7270 = vld [vmem:[%s7 + $0xe8] sm:$0xff]
  %v7271 = vld [vmem:[%s7 + $0xf0] sm:$0xff]
  %v7272 = vld [vmem:[%s7 + $0xf8] sm:$0xff]
  %v7273 = vld [vmem:[%s9] sm:$0xf]
  %v7275 = vlaneseq
  %v7276 = vshrl.u32 %v7275, 7
  %v7277 = vsub.s32 0, %v7276
  %v7278 = vrot.slane %v7273, %v7277
  %v7279 = vlaneseq
  %v7280 = vshrl.u32 %v7279, 7
  %v7281 = vsub.s32 1, %v7280
  %v7282 = vrot.slane %v7273, %v7281
  %v7283 = vlaneseq
  %v7284 = vshrl.u32 %v7283, 7
  %v7285 = vsub.s32 2, %v7284
  %v7286 = vrot.slane %v7273, %v7285
  %v7287 = vlaneseq
  %v7288 = vshrl.u32 %v7287, 7
  %v7289 = vsub.s32 3, %v7288
  %v7290 = vrot.slane %v7273, %v7289
  %v7327 = vunpack.c.l.b16 %v7241
  %v7328 = vunpack.c.h.b16 %v7241
  %v7329 = vunpack.c.l.b16 %v7242
  %v7330 = vunpack.c.h.b16 %v7242
  %v7331 = vunpack.c.l.b16 %v7243
  %v7332 = vunpack.c.h.b16 %v7243
  %v7333 = vunpack.c.l.b16 %v7244
  %v7334 = vunpack.c.h.b16 %v7244
  %v7335 = vunpack.c.l.b16 %v7245
  %v7336 = vunpack.c.h.b16 %v7245
  %v7337 = vunpack.c.l.b16 %v7246
  %v7338 = vunpack.c.h.b16 %v7246
  %v7339 = vunpack.c.l.b16 %v7247
  %v7340 = vunpack.c.h.b16 %v7247
  %v7341 = vunpack.c.l.b16 %v7248
  %v7342 = vunpack.c.h.b16 %v7248
  %v7343 = vunpack.c.l.b16 %v7249
  %v7344 = vunpack.c.h.b16 %v7249
  %v7345 = vunpack.c.l.b16 %v7250
  %v7346 = vunpack.c.h.b16 %v7250
  %v7347 = vunpack.c.l.b16 %v7251
  %v7348 = vunpack.c.h.b16 %v7251
  %v7349 = vunpack.c.l.b16 %v7252
  %v7350 = vunpack.c.h.b16 %v7252
  %v7351 = vunpack.c.l.b16 %v7253
  %v7352 = vunpack.c.h.b16 %v7253
  %v7353 = vunpack.c.l.b16 %v7254
  %v7354 = vunpack.c.h.b16 %v7254
  %v7355 = vunpack.c.l.b16 %v7255
  %v7356 = vunpack.c.h.b16 %v7255
  %v7357 = vunpack.c.l.b16 %v7256
  %v7358 = vunpack.c.h.b16 %v7256
  %v7359 = vunpack.c.l.b16 %v7257
  %v7360 = vunpack.c.h.b16 %v7257
  %v7361 = vunpack.c.l.b16 %v7258
  %v7362 = vunpack.c.h.b16 %v7258
  %v7363 = vunpack.c.l.b16 %v7259
  %v7364 = vunpack.c.h.b16 %v7259
  %v7365 = vunpack.c.l.b16 %v7260
  %v7366 = vunpack.c.h.b16 %v7260
  %v7367 = vunpack.c.l.b16 %v7261
  %v7368 = vunpack.c.h.b16 %v7261
  %v7369 = vunpack.c.l.b16 %v7262
  %v7370 = vunpack.c.h.b16 %v7262
  %v7371 = vunpack.c.l.b16 %v7263
  %v7372 = vunpack.c.h.b16 %v7263
  %v7373 = vunpack.c.l.b16 %v7264
  %v7374 = vunpack.c.h.b16 %v7264
  %v7375 = vunpack.c.l.b16 %v7265
  %v7376 = vunpack.c.h.b16 %v7265
  %v7377 = vunpack.c.l.b16 %v7266
  %v7378 = vunpack.c.h.b16 %v7266
  %v7379 = vunpack.c.l.b16 %v7267
  %v7380 = vunpack.c.h.b16 %v7267
  %v7381 = vunpack.c.l.b16 %v7268
  %v7382 = vunpack.c.h.b16 %v7268
  %v7383 = vunpack.c.l.b16 %v7269
  %v7384 = vunpack.c.h.b16 %v7269
  %v7385 = vunpack.c.l.b16 %v7270
  %v7386 = vunpack.c.h.b16 %v7270
  %v7387 = vunpack.c.l.b16 %v7271
  %v7388 = vunpack.c.h.b16 %v7271
  %v7389 = vunpack.c.l.b16 %v7272
  %v7390 = vunpack.c.h.b16 %v7272
  %v7391 = vpack.c.b16 %v7331, %v7327
  %v7392 = vpack.c.b16 %v7332, %v7328
  %v7393 = vpack.c.b16 %v7333, %v7329
  %v7394 = vpack.c.b16 %v7334, %v7330
  %v7395 = vpack.c.b16 %v7339, %v7335
  %v7396 = vpack.c.b16 %v7340, %v7336
  %v7397 = vpack.c.b16 %v7341, %v7337
  %v7398 = vpack.c.b16 %v7342, %v7338
  %v7399 = vpack.c.b16 %v7347, %v7343
  %v7400 = vpack.c.b16 %v7348, %v7344
  %v7401 = vpack.c.b16 %v7349, %v7345
  %v7402 = vpack.c.b16 %v7350, %v7346
  %v7403 = vpack.c.b16 %v7355, %v7351
  %v7404 = vpack.c.b16 %v7356, %v7352
  %v7405 = vpack.c.b16 %v7357, %v7353
  %v7406 = vpack.c.b16 %v7358, %v7354
  %v7407 = vpack.c.b16 %v7363, %v7359
  %v7408 = vpack.c.b16 %v7364, %v7360
  %v7409 = vpack.c.b16 %v7365, %v7361
  %v7410 = vpack.c.b16 %v7366, %v7362
  %v7411 = vpack.c.b16 %v7371, %v7367
  %v7412 = vpack.c.b16 %v7372, %v7368
  %v7413 = vpack.c.b16 %v7373, %v7369
  %v7414 = vpack.c.b16 %v7374, %v7370
  %v7415 = vpack.c.b16 %v7379, %v7375
  %v7416 = vpack.c.b16 %v7380, %v7376
  %v7417 = vpack.c.b16 %v7381, %v7377
  %v7418 = vpack.c.b16 %v7382, %v7378
  %v7419 = vpack.c.b16 %v7387, %v7383
  %v7420 = vpack.c.b16 %v7388, %v7384
  %v7421 = vpack.c.b16 %v7389, %v7385
  %v7422 = vpack.c.b16 %v7390, %v7386
  %7455 = vmatprep.subr.bf16.mxu0 %v7392
  %7456 = vmatpush1.bf16.msra.mxu0 %v7391
  %7457 = vmatprep.subr.bf16.mxu0 %v7396
  %7458 = vmatpush1.bf16.msra.mxu0 %v7395
  %7459 = vmatprep.subr.bf16.mxu0 %v7400
  %7460 = vmatpush1.bf16.msra.mxu0 %v7399
  %7461 = vmatprep.subr.bf16.mxu0 %v7404
  %7462 = vmatpush1.bf16.msra.mxu0 %v7403
  %7463 = vmatprep.subr.bf16.mxu0 %v7408
  %7464 = vmatpush1.bf16.msra.mxu0 %v7407
  %7465 = vmatprep.subr.bf16.mxu0 %v7412
  %7466 = vmatpush1.bf16.msra.mxu0 %v7411
  %7467 = vmatprep.subr.bf16.mxu0 %v7416
  %7468 = vmatpush1.bf16.msra.mxu0 %v7415
  %7469 = vmatprep.subr.bf16.mxu0 %v7420
  %7470 = vmatpush1.bf16.msra.mxu0 %v7419
  %7471 = vmatprep.subr.bf16.mxu0 0
  %7472 = vmatpush1.bf16.msra.mxu0 0
  %7473 = vmatprep.subr.bf16.mxu0 0
  %7474 = vmatpush1.bf16.msra.mxu0 0
  %7475 = vmatprep.subr.bf16.mxu0 0
  %7476 = vmatpush1.bf16.msra.mxu0 0
  %7477 = vmatprep.subr.bf16.mxu0 0
  %7478 = vmatpush1.bf16.msra.mxu0 0
  %7479 = vmatprep.subr.bf16.mxu0 0
  %7480 = vmatpush1.bf16.msra.mxu0 0
  %7481 = vmatprep.subr.bf16.mxu0 0
  %7482 = vmatpush1.bf16.msra.mxu0 0
  %7483 = vmatprep.subr.bf16.mxu0 0
  %7484 = vmatpush1.bf16.msra.mxu0 0
  %7485 = vmatprep.subr.bf16.mxu0 0
  %7486 = vmatpush1.bf16.msra.mxu0 0
  %7487 = vmatprep.mubr.bf16.mxu0 0
  %7488 = vmatmul.mubr.bf16.gmra.mrb[0].mxu0 %v7240
  %v7489 = vpop.f32.mrb[0].mxu0
  %v7490 = vadd.f32 %v7278, %v7489
  %v7491 = vpop.f32.mrb[0].mxu0
  %v7492 = vadd.f32 %v7282, %v7491
  %v7493 = vpop.f32.mrb[0].mxu0
  %v7494 = vadd.f32 %v7278, %v7493
  %v7495 = vpop.f32.mrb[0].mxu0
  %v7496 = vadd.f32 %v7282, %v7495
  %7497 = vdwg.mxu0
  %7498 = vmatprep.subr.bf16.mxu0 %v7394
  %7499 = vmatpush1.bf16.msra.mxu0 %v7393
  %7500 = vmatprep.subr.bf16.mxu0 %v7398
  %7501 = vmatpush1.bf16.msra.mxu0 %v7397
  %7502 = vmatprep.subr.bf16.mxu0 %v7402
  %7503 = vmatpush1.bf16.msra.mxu0 %v7401
  %7504 = vmatprep.subr.bf16.mxu0 %v7406
  %7505 = vmatpush1.bf16.msra.mxu0 %v7405
  %7506 = vmatprep.subr.bf16.mxu0 %v7410
  %7507 = vmatpush1.bf16.msra.mxu0 %v7409
  %7508 = vmatprep.subr.bf16.mxu0 %v7414
  %7509 = vmatpush1.bf16.msra.mxu0 %v7413
  %7510 = vmatprep.subr.bf16.mxu0 %v7418
  %7511 = vmatpush1.bf16.msra.mxu0 %v7417
  %7512 = vmatprep.subr.bf16.mxu0 %v7422
  %7513 = vmatpush1.bf16.msra.mxu0 %v7421
  %7514 = vmatprep.subr.bf16.mxu0 0
  %7515 = vmatpush1.bf16.msra.mxu0 0
  %7516 = vmatprep.subr.bf16.mxu0 0
  %7517 = vmatpush1.bf16.msra.mxu0 0
  %7518 = vmatprep.subr.bf16.mxu0 0
  %7519 = vmatpush1.bf16.msra.mxu0 0
  %7520 = vmatprep.subr.bf16.mxu0 0
  %7521 = vmatpush1.bf16.msra.mxu0 0
  %7522 = vmatprep.subr.bf16.mxu0 0
  %7523 = vmatpush1.bf16.msra.mxu0 0
  %7524 = vmatprep.subr.bf16.mxu0 0
  %7525 = vmatpush1.bf16.msra.mxu0 0
  %7526 = vmatprep.subr.bf16.mxu0 0
  %7527 = vmatpush1.bf16.msra.mxu0 0
  %7528 = vmatprep.subr.bf16.mxu0 0
  %7529 = vmatpush1.bf16.msra.mxu0 0
  %7530 = vmatprep.mubr.bf16.mxu0 0
  %7531 = vmatmul.mubr.bf16.gmra.mrb[0].mxu0 %v7240
  %v7532 = vpop.f32.mrb[0].mxu0
  %v7533 = vadd.f32 %v7286, %v7532
  %v7534 = vpop.f32.mrb[0].mxu0
  %v7535 = vadd.f32 %v7290, %v7534
  %v7536 = vpop.f32.mrb[0].mxu0
  %v7537 = vadd.f32 %v7286, %v7536
  %v7538 = vpop.f32.mrb[0].mxu0
  %v7539 = vadd.f32 %v7290, %v7538
  %7540 = vdwg.mxu0
  %v7541 = vpack.c.bf16 %v7494, %v7490
  %v7542 = vpack.c.bf16 %v7496, %v7492
  %v7543 = vpack.c.bf16 %v7537, %v7533
  %v7544 = vpack.c.bf16 %v7539, %v7535
  %7545 = vst [vmem:[%s1756] sm:$0xff] %v7541
  %7546 = vst [vmem:[%s1756 + $0x8] sm:$0xff] %v7542
  %7547 = vst [vmem:[%s1756 + $0x10] sm:$0xff] %v7543
  %7548 = vst [vmem:[%s1756 + $0x18] sm:$0xff] %v7544
  %v7549 = vld [vmem:[%s2400] sm:$0xff]
  %v7550 = vld [vmem:[%s2400 + $0x8] sm:$0xff]
  %v7551 = vld [vmem:[%s2400 + $0x10] sm:$0xff]
  %v7552 = vld [vmem:[%s2400 + $0x18] sm:$0xff]
  %v7553 = vunpack.c.l.bf16 %v7549
  %v7554 = vunpack.c.l.bf16 %v7550
  %v7555 = vunpack.c.l.bf16 %v7551
  %v7556 = vunpack.c.l.bf16 %v7552
  %v7557 = vunpack.c.h.bf16 %v7549
  %v7558 = vunpack.c.h.bf16 %v7550
  %v7559 = vunpack.c.h.bf16 %v7551
  %v7560 = vunpack.c.h.bf16 %v7552
  %v7561 = vld [vmem:[%s5] sm:$0xff]
  %v7562 = vld [vmem:[%s5 + $0x8] sm:$0xff]
  %v7563 = vld [vmem:[%s5 + $0x10] sm:$0xff]
  %v7564 = vld [vmem:[%s5 + $0x18] sm:$0xff]
  %v7565 = vld [vmem:[%s5 + $0x20] sm:$0xff]
  %v7566 = vld [vmem:[%s5 + $0x28] sm:$0xff]
  %v7567 = vld [vmem:[%s5 + $0x30] sm:$0xff]
  %v7568 = vld [vmem:[%s5 + $0x38] sm:$0xff]
  %v7569 = vld [vmem:[%s5 + $0x40] sm:$0xff]
  %v7570 = vld [vmem:[%s5 + $0x48] sm:$0xff]
  %v7571 = vld [vmem:[%s5 + $0x50] sm:$0xff]
  %v7572 = vld [vmem:[%s5 + $0x58] sm:$0xff]
  %v7573 = vld [vmem:[%s5 + $0x60] sm:$0xff]
  %v7574 = vld [vmem:[%s5 + $0x68] sm:$0xff]
  %v7575 = vld [vmem:[%s5 + $0x70] sm:$0xff]
  %v7576 = vld [vmem:[%s5 + $0x78] sm:$0xff]
  %v7577 = vld [vmem:[%s5 + $0x80] sm:$0xff]
  %v7578 = vld [vmem:[%s5 + $0x88] sm:$0xff]
  %v7579 = vld [vmem:[%s5 + $0x90] sm:$0xff]
  %v7580 = vld [vmem:[%s5 + $0x98] sm:$0xff]
  %v7581 = vld [vmem:[%s5 + $0xa0] sm:$0xff]
  %v7582 = vld [vmem:[%s5 + $0xa8] sm:$0xff]
  %v7583 = vld [vmem:[%s5 + $0xb0] sm:$0xff]
  %v7584 = vld [vmem:[%s5 + $0xb8] sm:$0xff]
  %v7585 = vld [vmem:[%s5 + $0xc0] sm:$0xff]
  %v7586 = vld [vmem:[%s5 + $0xc8] sm:$0xff]
  %v7587 = vld [vmem:[%s5 + $0xd0] sm:$0xff]
  %v7588 = vld [vmem:[%s5 + $0xd8] sm:$0xff]
  %v7589 = vld [vmem:[%s5 + $0xe0] sm:$0xff]
  %v7590 = vld [vmem:[%s5 + $0xe8] sm:$0xff]
  %v7591 = vld [vmem:[%s5 + $0xf0] sm:$0xff]
  %v7592 = vld [vmem:[%s5 + $0xf8] sm:$0xff]
  %v7625 = vunpack.c.l.b16 %v7561
  %v7626 = vunpack.c.h.b16 %v7561
  %v7627 = vunpack.c.l.b16 %v7562
  %v7628 = vunpack.c.h.b16 %v7562
  %v7629 = vunpack.c.l.b16 %v7563
  %v7630 = vunpack.c.h.b16 %v7563
  %v7631 = vunpack.c.l.b16 %v7564
  %v7632 = vunpack.c.h.b16 %v7564
  %v7633 = vunpack.c.l.b16 %v7565
  %v7634 = vunpack.c.h.b16 %v7565
  %v7635 = vunpack.c.l.b16 %v7566
  %v7636 = vunpack.c.h.b16 %v7566
  %v7637 = vunpack.c.l.b16 %v7567
  %v7638 = vunpack.c.h.b16 %v7567
  %v7639 = vunpack.c.l.b16 %v7568
  %v7640 = vunpack.c.h.b16 %v7568
  %v7641 = vunpack.c.l.b16 %v7569
  %v7642 = vunpack.c.h.b16 %v7569
  %v7643 = vunpack.c.l.b16 %v7570
  %v7644 = vunpack.c.h.b16 %v7570
  %v7645 = vunpack.c.l.b16 %v7571
  %v7646 = vunpack.c.h.b16 %v7571
  %v7647 = vunpack.c.l.b16 %v7572
  %v7648 = vunpack.c.h.b16 %v7572
  %v7649 = vunpack.c.l.b16 %v7573
  %v7650 = vunpack.c.h.b16 %v7573
  %v7651 = vunpack.c.l.b16 %v7574
  %v7652 = vunpack.c.h.b16 %v7574
  %v7653 = vunpack.c.l.b16 %v7575
  %v7654 = vunpack.c.h.b16 %v7575
  %v7655 = vunpack.c.l.b16 %v7576
  %v7656 = vunpack.c.h.b16 %v7576
  %v7657 = vunpack.c.l.b16 %v7577
  %v7658 = vunpack.c.h.b16 %v7577
  %v7659 = vunpack.c.l.b16 %v7578
  %v7660 = vunpack.c.h.b16 %v7578
  %v7661 = vunpack.c.l.b16 %v7579
  %v7662 = vunpack.c.h.b16 %v7579
  %v7663 = vunpack.c.l.b16 %v7580
  %v7664 = vunpack.c.h.b16 %v7580
  %v7665 = vunpack.c.l.b16 %v7581
  %v7666 = vunpack.c.h.b16 %v7581
  %v7667 = vunpack.c.l.b16 %v7582
  %v7668 = vunpack.c.h.b16 %v7582
  %v7669 = vunpack.c.l.b16 %v7583
  %v7670 = vunpack.c.h.b16 %v7583
  %v7671 = vunpack.c.l.b16 %v7584
  %v7672 = vunpack.c.h.b16 %v7584
  %v7673 = vunpack.c.l.b16 %v7585
  %v7674 = vunpack.c.h.b16 %v7585
  %v7675 = vunpack.c.l.b16 %v7586
  %v7676 = vunpack.c.h.b16 %v7586
  %v7677 = vunpack.c.l.b16 %v7587
  %v7678 = vunpack.c.h.b16 %v7587
  %v7679 = vunpack.c.l.b16 %v7588
  %v7680 = vunpack.c.h.b16 %v7588
  %v7681 = vunpack.c.l.b16 %v7589
  %v7682 = vunpack.c.h.b16 %v7589
  %v7683 = vunpack.c.l.b16 %v7590
  %v7684 = vunpack.c.h.b16 %v7590
  %v7685 = vunpack.c.l.b16 %v7591
  %v7686 = vunpack.c.h.b16 %v7591
  %v7687 = vunpack.c.l.b16 %v7592
  %v7688 = vunpack.c.h.b16 %v7592
  %v7689 = vpack.c.b16 %v7629, %v7625
  %v7690 = vpack.c.b16 %v7630, %v7626
  %v7691 = vpack.c.b16 %v7631, %v7627
  %v7692 = vpack.c.b16 %v7632, %v7628
  %v7693 = vpack.c.b16 %v7637, %v7633
  %v7694 = vpack.c.b16 %v7638, %v7634
  %v7695 = vpack.c.b16 %v7639, %v7635
  %v7696 = vpack.c.b16 %v7640, %v7636
  %v7697 = vpack.c.b16 %v7645, %v7641
  %v7698 = vpack.c.b16 %v7646, %v7642
  %v7699 = vpack.c.b16 %v7647, %v7643
  %v7700 = vpack.c.b16 %v7648, %v7644
  %v7701 = vpack.c.b16 %v7653, %v7649
  %v7702 = vpack.c.b16 %v7654, %v7650
  %v7703 = vpack.c.b16 %v7655, %v7651
  %v7704 = vpack.c.b16 %v7656, %v7652
  %v7705 = vpack.c.b16 %v7661, %v7657
  %v7706 = vpack.c.b16 %v7662, %v7658
  %v7707 = vpack.c.b16 %v7663, %v7659
  %v7708 = vpack.c.b16 %v7664, %v7660
  %v7709 = vpack.c.b16 %v7669, %v7665
  %v7710 = vpack.c.b16 %v7670, %v7666
  %v7711 = vpack.c.b16 %v7671, %v7667
  %v7712 = vpack.c.b16 %v7672, %v7668
  %v7713 = vpack.c.b16 %v7677, %v7673
  %v7714 = vpack.c.b16 %v7678, %v7674
  %v7715 = vpack.c.b16 %v7679, %v7675
  %v7716 = vpack.c.b16 %v7680, %v7676
  %v7717 = vpack.c.b16 %v7685, %v7681
  %v7718 = vpack.c.b16 %v7686, %v7682
  %v7719 = vpack.c.b16 %v7687, %v7683
  %v7720 = vpack.c.b16 %v7688, %v7684
  %7753 = vmatprep.subr.bf16.mxu0 %v7690
  %7754 = vmatpush1.bf16.msra.mxu0 %v7689
  %7755 = vmatprep.subr.bf16.mxu0 %v7694
  %7756 = vmatpush1.bf16.msra.mxu0 %v7693
  %7757 = vmatprep.subr.bf16.mxu0 %v7698
  %7758 = vmatpush1.bf16.msra.mxu0 %v7697
  %7759 = vmatprep.subr.bf16.mxu0 %v7702
  %7760 = vmatpush1.bf16.msra.mxu0 %v7701
  %7761 = vmatprep.subr.bf16.mxu0 %v7706
  %7762 = vmatpush1.bf16.msra.mxu0 %v7705
  %7763 = vmatprep.subr.bf16.mxu0 %v7710
  %7764 = vmatpush1.bf16.msra.mxu0 %v7709
  %7765 = vmatprep.subr.bf16.mxu0 %v7714
  %7766 = vmatpush1.bf16.msra.mxu0 %v7713
  %7767 = vmatprep.subr.bf16.mxu0 %v7718
  %7768 = vmatpush1.bf16.msra.mxu0 %v7717
  %7769 = vmatprep.subr.bf16.mxu0 0
  %7770 = vmatpush1.bf16.msra.mxu0 0
  %7771 = vmatprep.subr.bf16.mxu0 0
  %7772 = vmatpush1.bf16.msra.mxu0 0
  %7773 = vmatprep.subr.bf16.mxu0 0
  %7774 = vmatpush1.bf16.msra.mxu0 0
  %7775 = vmatprep.subr.bf16.mxu0 0
  %7776 = vmatpush1.bf16.msra.mxu0 0
  %7777 = vmatprep.subr.bf16.mxu0 0
  %7778 = vmatpush1.bf16.msra.mxu0 0
  %7779 = vmatprep.subr.bf16.mxu0 0
  %7780 = vmatpush1.bf16.msra.mxu0 0
  %7781 = vmatprep.subr.bf16.mxu0 0
  %7782 = vmatpush1.bf16.msra.mxu0 0
  %7783 = vmatprep.subr.bf16.mxu0 0
  %7784 = vmatpush1.bf16.msra.mxu0 0
  %7785 = vmatprep.mubr.bf16.mxu0 0
  %7786 = vmatmul.mubr.bf16.gmra.mrb[0].mxu0 %v7240
  %v7787 = vpop.f32.mrb[0].mxu0
  %v7788 = vadd.f32 0.0, %v7787
  %v7789 = vpop.f32.mrb[0].mxu0
  %v7790 = vadd.f32 0.0, %v7789
  %v7791 = vpop.f32.mrb[0].mxu0
  %v7792 = vadd.f32 0.0, %v7791
  %v7793 = vpop.f32.mrb[0].mxu0
  %v7794 = vadd.f32 0.0, %v7793
  %7795 = vdwg.mxu0
  %7796 = vmatprep.subr.bf16.mxu0 %v7692
  %7797 = vmatpush1.bf16.msra.mxu0 %v7691
  %7798 = vmatprep.subr.bf16.mxu0 %v7696
  %7799 = vmatpush1.bf16.msra.mxu0 %v7695
  %7800 = vmatprep.subr.bf16.mxu0 %v7700
  %7801 = vmatpush1.bf16.msra.mxu0 %v7699
  %7802 = vmatprep.subr.bf16.mxu0 %v7704
  %7803 = vmatpush1.bf16.msra.mxu0 %v7703
  %7804 = vmatprep.subr.bf16.mxu0 %v7708
  %7805 = vmatpush1.bf16.msra.mxu0 %v7707
  %7806 = vmatprep.subr.bf16.mxu0 %v7712
  %7807 = vmatpush1.bf16.msra.mxu0 %v7711
  %7808 = vmatprep.subr.bf16.mxu0 %v7716
  %7809 = vmatpush1.bf16.msra.mxu0 %v7715
  %7810 = vmatprep.subr.bf16.mxu0 %v7720
  %7811 = vmatpush1.bf16.msra.mxu0 %v7719
  %7812 = vmatprep.subr.bf16.mxu0 0
  %7813 = vmatpush1.bf16.msra.mxu0 0
  %7814 = vmatprep.subr.bf16.mxu0 0
  %7815 = vmatpush1.bf16.msra.mxu0 0
  %7816 = vmatprep.subr.bf16.mxu0 0
  %7817 = vmatpush1.bf16.msra.mxu0 0
  %7818 = vmatprep.subr.bf16.mxu0 0
  %7819 = vmatpush1.bf16.msra.mxu0 0
  %7820 = vmatprep.subr.bf16.mxu0 0
  %7821 = vmatpush1.bf16.msra.mxu0 0
  %7822 = vmatprep.subr.bf16.mxu0 0
  %7823 = vmatpush1.bf16.msra.mxu0 0
  %7824 = vmatprep.subr.bf16.mxu0 0
  %7825 = vmatpush1.bf16.msra.mxu0 0
  %7826 = vmatprep.subr.bf16.mxu0 0
  %7827 = vmatpush1.bf16.msra.mxu0 0
  %7828 = vmatprep.mubr.bf16.mxu0 0
  %7829 = vmatmul.mubr.bf16.gmra.mrb[0].mxu0 %v7240
  %v7830 = vpop.f32.mrb[0].mxu0
  %v7831 = vadd.f32 0.0, %v7830
  %v7832 = vpop.f32.mrb[0].mxu0
  %v7833 = vadd.f32 0.0, %v7832
  %v7834 = vpop.f32.mrb[0].mxu0
  %v7835 = vadd.f32 0.0, %v7834
  %v7836 = vpop.f32.mrb[0].mxu0
  %v7837 = vadd.f32 0.0, %v7836
  %7838 = vdwg.mxu0
  %v7839 = vadd.f32 %v7553, %v7788
  %v7840 = vadd.f32 %v7554, %v7790
  %v7841 = vadd.f32 %v7555, %v7831
  %v7842 = vadd.f32 %v7556, %v7833
  %v7843 = vadd.f32 %v7557, %v7792
  %v7844 = vadd.f32 %v7558, %v7794
  %v7845 = vadd.f32 %v7559, %v7835
  %v7846 = vadd.f32 %v7560, %v7837
  %v7847 = vmul.f32 %v7839, 0.5
  %v7848 = vmul.f32 %v7840, 0.5
  %v7849 = vmul.f32 %v7841, 0.5
  %v7850 = vmul.f32 %v7843, 0.5
  %v7851 = vmul.f32 %v7844, 0.5
  %v7852 = vmul.f32 %v7845, 0.5
  %v7853 = vtanh.pop %v7847
  %v7854 = vtanh.pop %v7848
  %v7855 = vtanh.pop %v7849
  %v7856 = vtanh.pop %v7850
  %v7857 = vtanh.pop %v7851
  %v7858 = vtanh.pop %v7852
  %v7859 = vmul.f32 %v7853, 0.5
  %v7860 = vmul.f32 %v7854, 0.5
  %v7861 = vmul.f32 %v7855, 0.5
  %v7862 = vmul.f32 %v7856, 0.5
  %v7863 = vmul.f32 %v7857, 0.5
  %v7864 = vmul.f32 %v7858, 0.5
  %v7865 = vadd.f32 %v7859, 0.5
  %v7866 = vadd.f32 %v7860, 0.5
  %v7867 = vadd.f32 %v7861, 0.5
  %v7868 = vadd.f32 %v7862, 0.5
  %v7869 = vadd.f32 %v7863, 0.5
  %v7870 = vadd.f32 %v7864, 0.5
  %v7871 = vtanh.pop %v7842
  %v7872 = vtanh.pop %v7846
  %v7873 = vmul.f32 %v7866, %v7234
  %v7874 = vmul.f32 %v7869, %v7235
  %v7875 = vmul.f32 %v7865, %v7871
  %v7876 = vmul.f32 %v7868, %v7872
  %v7877 = vadd.f32 %v7873, %v7875
  %v7878 = vadd.f32 %v7874, %v7876
  %v7879 = vtanh.pop %v7877
  %v7880 = vtanh.pop %v7878
  %v7881 = vmul.f32 %v7867, %v7879
  %v7882 = vmul.f32 %v7870, %v7880
  %v7883 = vpack.c.bf16 %v7882, %v7881
  %v7884 = vld [vmem:[%s7] sm:$0xff]
  %v7885 = vld [vmem:[%s7 + $0x8] sm:$0xff]
  %v7886 = vld [vmem:[%s7 + $0x10] sm:$0xff]
  %v7887 = vld [vmem:[%s7 + $0x18] sm:$0xff]
  %v7888 = vld [vmem:[%s7 + $0x20] sm:$0xff]
  %v7889 = vld [vmem:[%s7 + $0x28] sm:$0xff]
  %v7890 = vld [vmem:[%s7 + $0x30] sm:$0xff]
  %v7891 = vld [vmem:[%s7 + $0x38] sm:$0xff]
  %v7892 = vld [vmem:[%s7 + $0x40] sm:$0xff]
  %v7893 = vld [vmem:[%s7 + $0x48] sm:$0xff]
  %v7894 = vld [vmem:[%s7 + $0x50] sm:$0xff]
  %v7895 = vld [vmem:[%s7 + $0x58] sm:$0xff]
  %v7896 = vld [vmem:[%s7 + $0x60] sm:$0xff]
  %v7897 = vld [vmem:[%s7 + $0x68] sm:$0xff]
  %v7898 = vld [vmem:[%s7 + $0x70] sm:$0xff]
  %v7899 = vld [vmem:[%s7 + $0x78] sm:$0xff]
  %v7900 = vld [vmem:[%s7 + $0x80] sm:$0xff]
  %v7901 = vld [vmem:[%s7 + $0x88] sm:$0xff]
  %v7902 = vld [vmem:[%s7 + $0x90] sm:$0xff]
  %v7903 = vld [vmem:[%s7 + $0x98] sm:$0xff]
  %v7904 = vld [vmem:[%s7 + $0xa0] sm:$0xff]
  %v7905 = vld [vmem:[%s7 + $0xa8] sm:$0xff]
  %v7906 = vld [vmem:[%s7 + $0xb0] sm:$0xff]
  %v7907 = vld [vmem:[%s7 + $0xb8] sm:$0xff]
  %v7908 = vld [vmem:[%s7 + $0xc0] sm:$0xff]
  %v7909 = vld [vmem:[%s7 + $0xc8] sm:$0xff]
  %v7910 = vld [vmem:[%s7 + $0xd0] sm:$0xff]
  %v7911 = vld [vmem:[%s7 + $0xd8] sm:$0xff]
  %v7912 = vld [vmem:[%s7 + $0xe0] sm:$0xff]
  %v7913 = vld [vmem:[%s7 + $0xe8] sm:$0xff]
  %v7914 = vld [vmem:[%s7 + $0xf0] sm:$0xff]
  %v7915 = vld [vmem:[%s7 + $0xf8] sm:$0xff]
  %v7916 = vld [vmem:[%s9] sm:$0xf]
  %v7918 = vlaneseq
  %v7919 = vshrl.u32 %v7918, 7
  %v7920 = vsub.s32 0, %v7919
  %v7921 = vrot.slane %v7916, %v7920
  %v7922 = vlaneseq
  %v7923 = vshrl.u32 %v7922, 7
  %v7924 = vsub.s32 1, %v7923
  %v7925 = vrot.slane %v7916, %v7924
  %v7926 = vlaneseq
  %v7927 = vshrl.u32 %v7926, 7
  %v7928 = vsub.s32 2, %v7927
  %v7929 = vrot.slane %v7916, %v7928
  %v7930 = vlaneseq
  %v7931 = vshrl.u32 %v7930, 7
  %v7932 = vsub.s32 3, %v7931
  %v7933 = vrot.slane %v7916, %v7932
  %v7970 = vunpack.c.l.b16 %v7884
  %v7971 = vunpack.c.h.b16 %v7884
  %v7972 = vunpack.c.l.b16 %v7885
  %v7973 = vunpack.c.h.b16 %v7885
  %v7974 = vunpack.c.l.b16 %v7886
  %v7975 = vunpack.c.h.b16 %v7886
  %v7976 = vunpack.c.l.b16 %v7887
  %v7977 = vunpack.c.h.b16 %v7887
  %v7978 = vunpack.c.l.b16 %v7888
  %v7979 = vunpack.c.h.b16 %v7888
  %v7980 = vunpack.c.l.b16 %v7889
  %v7981 = vunpack.c.h.b16 %v7889
  %v7982 = vunpack.c.l.b16 %v7890
  %v7983 = vunpack.c.h.b16 %v7890
  %v7984 = vunpack.c.l.b16 %v7891
  %v7985 = vunpack.c.h.b16 %v7891
  %v7986 = vunpack.c.l.b16 %v7892
  %v7987 = vunpack.c.h.b16 %v7892
  %v7988 = vunpack.c.l.b16 %v7893
  %v7989 = vunpack.c.h.b16 %v7893
  %v7990 = vunpack.c.l.b16 %v7894
  %v7991 = vunpack.c.h.b16 %v7894
  %v7992 = vunpack.c.l.b16 %v7895
  %v7993 = vunpack.c.h.b16 %v7895
  %v7994 = vunpack.c.l.b16 %v7896
  %v7995 = vunpack.c.h.b16 %v7896
  %v7996 = vunpack.c.l.b16 %v7897
  %v7997 = vunpack.c.h.b16 %v7897
  %v7998 = vunpack.c.l.b16 %v7898
  %v7999 = vunpack.c.h.b16 %v7898
  %v8000 = vunpack.c.l.b16 %v7899
  %v8001 = vunpack.c.h.b16 %v7899
  %v8002 = vunpack.c.l.b16 %v7900
  %v8003 = vunpack.c.h.b16 %v7900
  %v8004 = vunpack.c.l.b16 %v7901
  %v8005 = vunpack.c.h.b16 %v7901
  %v8006 = vunpack.c.l.b16 %v7902
  %v8007 = vunpack.c.h.b16 %v7902
  %v8008 = vunpack.c.l.b16 %v7903
  %v8009 = vunpack.c.h.b16 %v7903
  %v8010 = vunpack.c.l.b16 %v7904
  %v8011 = vunpack.c.h.b16 %v7904
  %v8012 = vunpack.c.l.b16 %v7905
  %v8013 = vunpack.c.h.b16 %v7905
  %v8014 = vunpack.c.l.b16 %v7906
  %v8015 = vunpack.c.h.b16 %v7906
  %v8016 = vunpack.c.l.b16 %v7907
  %v8017 = vunpack.c.h.b16 %v7907
  %v8018 = vunpack.c.l.b16 %v7908
  %v8019 = vunpack.c.h.b16 %v7908
  %v8020 = vunpack.c.l.b16 %v7909
  %v8021 = vunpack.c.h.b16 %v7909
  %v8022 = vunpack.c.l.b16 %v7910
  %v8023 = vunpack.c.h.b16 %v7910
  %v8024 = vunpack.c.l.b16 %v7911
  %v8025 = vunpack.c.h.b16 %v7911
  %v8026 = vunpack.c.l.b16 %v7912
  %v8027 = vunpack.c.h.b16 %v7912
  %v8028 = vunpack.c.l.b16 %v7913
  %v8029 = vunpack.c.h.b16 %v7913
  %v8030 = vunpack.c.l.b16 %v7914
  %v8031 = vunpack.c.h.b16 %v7914
  %v8032 = vunpack.c.l.b16 %v7915
  %v8033 = vunpack.c.h.b16 %v7915
  %v8034 = vpack.c.b16 %v7974, %v7970
  %v8035 = vpack.c.b16 %v7975, %v7971
  %v8036 = vpack.c.b16 %v7976, %v7972
  %v8037 = vpack.c.b16 %v7977, %v7973
  %v8038 = vpack.c.b16 %v7982, %v7978
  %v8039 = vpack.c.b16 %v7983, %v7979
  %v8040 = vpack.c.b16 %v7984, %v7980
  %v8041 = vpack.c.b16 %v7985, %v7981
  %v8042 = vpack.c.b16 %v7990, %v7986
  %v8043 = vpack.c.b16 %v7991, %v7987
  %v8044 = vpack.c.b16 %v7992, %v7988
  %v8045 = vpack.c.b16 %v7993, %v7989
  %v8046 = vpack.c.b16 %v7998, %v7994
  %v8047 = vpack.c.b16 %v7999, %v7995
  %v8048 = vpack.c.b16 %v8000, %v7996
  %v8049 = vpack.c.b16 %v8001, %v7997
  %v8050 = vpack.c.b16 %v8006, %v8002
  %v8051 = vpack.c.b16 %v8007, %v8003
  %v8052 = vpack.c.b16 %v8008, %v8004
  %v8053 = vpack.c.b16 %v8009, %v8005
  %v8054 = vpack.c.b16 %v8014, %v8010
  %v8055 = vpack.c.b16 %v8015, %v8011
  %v8056 = vpack.c.b16 %v8016, %v8012
  %v8057 = vpack.c.b16 %v8017, %v8013
  %v8058 = vpack.c.b16 %v8022, %v8018
  %v8059 = vpack.c.b16 %v8023, %v8019
  %v8060 = vpack.c.b16 %v8024, %v8020
  %v8061 = vpack.c.b16 %v8025, %v8021
  %v8062 = vpack.c.b16 %v8030, %v8026
  %v8063 = vpack.c.b16 %v8031, %v8027
  %v8064 = vpack.c.b16 %v8032, %v8028
  %v8065 = vpack.c.b16 %v8033, %v8029
  %8098 = vmatprep.subr.bf16.mxu0 %v8035
  %8099 = vmatpush1.bf16.msra.mxu0 %v8034
  %8100 = vmatprep.subr.bf16.mxu0 %v8039
  %8101 = vmatpush1.bf16.msra.mxu0 %v8038
  %8102 = vmatprep.subr.bf16.mxu0 %v8043
  %8103 = vmatpush1.bf16.msra.mxu0 %v8042
  %8104 = vmatprep.subr.bf16.mxu0 %v8047
  %8105 = vmatpush1.bf16.msra.mxu0 %v8046
  %8106 = vmatprep.subr.bf16.mxu0 %v8051
  %8107 = vmatpush1.bf16.msra.mxu0 %v8050
  %8108 = vmatprep.subr.bf16.mxu0 %v8055
  %8109 = vmatpush1.bf16.msra.mxu0 %v8054
  %8110 = vmatprep.subr.bf16.mxu0 %v8059
  %8111 = vmatpush1.bf16.msra.mxu0 %v8058
  %8112 = vmatprep.subr.bf16.mxu0 %v8063
  %8113 = vmatpush1.bf16.msra.mxu0 %v8062
  %8114 = vmatprep.subr.bf16.mxu0 0
  %8115 = vmatpush1.bf16.msra.mxu0 0
  %8116 = vmatprep.subr.bf16.mxu0 0
  %8117 = vmatpush1.bf16.msra.mxu0 0
  %8118 = vmatprep.subr.bf16.mxu0 0
  %8119 = vmatpush1.bf16.msra.mxu0 0
  %8120 = vmatprep.subr.bf16.mxu0 0
  %8121 = vmatpush1.bf16.msra.mxu0 0
  %8122 = vmatprep.subr.bf16.mxu0 0
  %8123 = vmatpush1.bf16.msra.mxu0 0
  %8124 = vmatprep.subr.bf16.mxu0 0
  %8125 = vmatpush1.bf16.msra.mxu0 0
  %8126 = vmatprep.subr.bf16.mxu0 0
  %8127 = vmatpush1.bf16.msra.mxu0 0
  %8128 = vmatprep.subr.bf16.mxu0 0
  %8129 = vmatpush1.bf16.msra.mxu0 0
  %8130 = vmatprep.mubr.bf16.mxu0 0
  %8131 = vmatmul.mubr.bf16.gmra.mrb[0].mxu0 %v7883
  %v8132 = vpop.f32.mrb[0].mxu0
  %v8133 = vadd.f32 %v7921, %v8132
  %v8134 = vpop.f32.mrb[0].mxu0
  %v8135 = vadd.f32 %v7925, %v8134
  %v8136 = vpop.f32.mrb[0].mxu0
  %v8137 = vadd.f32 %v7921, %v8136
  %v8138 = vpop.f32.mrb[0].mxu0
  %v8139 = vadd.f32 %v7925, %v8138
  %8140 = vdwg.mxu0
  %8141 = vmatprep.subr.bf16.mxu0 %v8037
  %8142 = vmatpush1.bf16.msra.mxu0 %v8036
  %8143 = vmatprep.subr.bf16.mxu0 %v8041
  %8144 = vmatpush1.bf16.msra.mxu0 %v8040
  %8145 = vmatprep.subr.bf16.mxu0 %v8045
  %8146 = vmatpush1.bf16.msra.mxu0 %v8044
  %8147 = vmatprep.subr.bf16.mxu0 %v8049
  %8148 = vmatpush1.bf16.msra.mxu0 %v8048
  %8149 = vmatprep.subr.bf16.mxu0 %v8053
  %8150 = vmatpush1.bf16.msra.mxu0 %v8052
  %8151 = vmatprep.subr.bf16.mxu0 %v8057
  %8152 = vmatpush1.bf16.msra.mxu0 %v8056
  %8153 = vmatprep.subr.bf16.mxu0 %v8061
  %8154 = vmatpush1.bf16.msra.mxu0 %v8060
  %8155 = vmatprep.subr.bf16.mxu0 %v8065
  %8156 = vmatpush1.bf16.msra.mxu0 %v8064
  %8157 = vmatprep.subr.bf16.mxu0 0
  %8158 = vmatpush1.bf16.msra.mxu0 0
  %8159 = vmatprep.subr.bf16.mxu0 0
  %8160 = vmatpush1.bf16.msra.mxu0 0
  %8161 = vmatprep.subr.bf16.mxu0 0
  %8162 = vmatpush1.bf16.msra.mxu0 0
  %8163 = vmatprep.subr.bf16.mxu0 0
  %8164 = vmatpush1.bf16.msra.mxu0 0
  %8165 = vmatprep.subr.bf16.mxu0 0
  %8166 = vmatpush1.bf16.msra.mxu0 0
  %8167 = vmatprep.subr.bf16.mxu0 0
  %8168 = vmatpush1.bf16.msra.mxu0 0
  %8169 = vmatprep.subr.bf16.mxu0 0
  %8170 = vmatpush1.bf16.msra.mxu0 0
  %8171 = vmatprep.subr.bf16.mxu0 0
  %8172 = vmatpush1.bf16.msra.mxu0 0
  %8173 = vmatprep.mubr.bf16.mxu0 0
  %8174 = vmatmul.mubr.bf16.gmra.mrb[0].mxu0 %v7883
  %v8175 = vpop.f32.mrb[0].mxu0
  %v8176 = vadd.f32 %v7929, %v8175
  %v8177 = vpop.f32.mrb[0].mxu0
  %v8178 = vadd.f32 %v7933, %v8177
  %v8179 = vpop.f32.mrb[0].mxu0
  %v8180 = vadd.f32 %v7929, %v8179
  %v8181 = vpop.f32.mrb[0].mxu0
  %v8182 = vadd.f32 %v7933, %v8181
  %8183 = vdwg.mxu0
  %v8184 = vpack.c.bf16 %v8137, %v8133
  %v8185 = vpack.c.bf16 %v8139, %v8135
  %v8186 = vpack.c.bf16 %v8180, %v8176
  %v8187 = vpack.c.bf16 %v8182, %v8178
  %8188 = vst [vmem:[%s2400] sm:$0xff] %v8184
  %8189 = vst [vmem:[%s2400 + $0x8] sm:$0xff] %v8185
  %8190 = vst [vmem:[%s2400 + $0x10] sm:$0xff] %v8186
  %8191 = vst [vmem:[%s2400 + $0x18] sm:$0xff] %v8187
  %v8192 = vld [vmem:[%s3044] sm:$0xff]
  %v8193 = vld [vmem:[%s3044 + $0x8] sm:$0xff]
  %v8194 = vld [vmem:[%s3044 + $0x10] sm:$0xff]
  %v8195 = vld [vmem:[%s3044 + $0x18] sm:$0xff]
  %v8196 = vunpack.c.l.bf16 %v8192
  %v8197 = vunpack.c.l.bf16 %v8193
  %v8198 = vunpack.c.l.bf16 %v8194
  %v8199 = vunpack.c.l.bf16 %v8195
  %v8200 = vunpack.c.h.bf16 %v8192
  %v8201 = vunpack.c.h.bf16 %v8193
  %v8202 = vunpack.c.h.bf16 %v8194
  %v8203 = vunpack.c.h.bf16 %v8195
  %v8204 = vld [vmem:[%s5] sm:$0xff]
  %v8205 = vld [vmem:[%s5 + $0x8] sm:$0xff]
  %v8206 = vld [vmem:[%s5 + $0x10] sm:$0xff]
  %v8207 = vld [vmem:[%s5 + $0x18] sm:$0xff]
  %v8208 = vld [vmem:[%s5 + $0x20] sm:$0xff]
  %v8209 = vld [vmem:[%s5 + $0x28] sm:$0xff]
  %v8210 = vld [vmem:[%s5 + $0x30] sm:$0xff]
  %v8211 = vld [vmem:[%s5 + $0x38] sm:$0xff]
  %v8212 = vld [vmem:[%s5 + $0x40] sm:$0xff]
  %v8213 = vld [vmem:[%s5 + $0x48] sm:$0xff]
  %v8214 = vld [vmem:[%s5 + $0x50] sm:$0xff]
  %v8215 = vld [vmem:[%s5 + $0x58] sm:$0xff]
  %v8216 = vld [vmem:[%s5 + $0x60] sm:$0xff]
  %v8217 = vld [vmem:[%s5 + $0x68] sm:$0xff]
  %v8218 = vld [vmem:[%s5 + $0x70] sm:$0xff]
  %v8219 = vld [vmem:[%s5 + $0x78] sm:$0xff]
  %v8220 = vld [vmem:[%s5 + $0x80] sm:$0xff]
  %v8221 = vld [vmem:[%s5 + $0x88] sm:$0xff]
  %v8222 = vld [vmem:[%s5 + $0x90] sm:$0xff]
  %v8223 = vld [vmem:[%s5 + $0x98] sm:$0xff]
  %v8224 = vld [vmem:[%s5 + $0xa0] sm:$0xff]
  %v8225 = vld [vmem:[%s5 + $0xa8] sm:$0xff]
  %v8226 = vld [vmem:[%s5 + $0xb0] sm:$0xff]
  %v8227 = vld [vmem:[%s5 + $0xb8] sm:$0xff]
  %v8228 = vld [vmem:[%s5 + $0xc0] sm:$0xff]
  %v8229 = vld [vmem:[%s5 + $0xc8] sm:$0xff]
  %v8230 = vld [vmem:[%s5 + $0xd0] sm:$0xff]
  %v8231 = vld [vmem:[%s5 + $0xd8] sm:$0xff]
  %v8232 = vld [vmem:[%s5 + $0xe0] sm:$0xff]
  %v8233 = vld [vmem:[%s5 + $0xe8] sm:$0xff]
  %v8234 = vld [vmem:[%s5 + $0xf0] sm:$0xff]
  %v8235 = vld [vmem:[%s5 + $0xf8] sm:$0xff]
  %v8268 = vunpack.c.l.b16 %v8204
  %v8269 = vunpack.c.h.b16 %v8204
  %v8270 = vunpack.c.l.b16 %v8205
  %v8271 = vunpack.c.h.b16 %v8205
  %v8272 = vunpack.c.l.b16 %v8206
  %v8273 = vunpack.c.h.b16 %v8206
  %v8274 = vunpack.c.l.b16 %v8207
  %v8275 = vunpack.c.h.b16 %v8207
  %v8276 = vunpack.c.l.b16 %v8208
  %v8277 = vunpack.c.h.b16 %v8208
  %v8278 = vunpack.c.l.b16 %v8209
  %v8279 = vunpack.c.h.b16 %v8209
  %v8280 = vunpack.c.l.b16 %v8210
  %v8281 = vunpack.c.h.b16 %v8210
  %v8282 = vunpack.c.l.b16 %v8211
  %v8283 = vunpack.c.h.b16 %v8211
  %v8284 = vunpack.c.l.b16 %v8212
  %v8285 = vunpack.c.h.b16 %v8212
  %v8286 = vunpack.c.l.b16 %v8213
  %v8287 = vunpack.c.h.b16 %v8213
  %v8288 = vunpack.c.l.b16 %v8214
  %v8289 = vunpack.c.h.b16 %v8214
  %v8290 = vunpack.c.l.b16 %v8215
  %v8291 = vunpack.c.h.b16 %v8215
  %v8292 = vunpack.c.l.b16 %v8216
  %v8293 = vunpack.c.h.b16 %v8216
  %v8294 = vunpack.c.l.b16 %v8217
  %v8295 = vunpack.c.h.b16 %v8217
  %v8296 = vunpack.c.l.b16 %v8218
  %v8297 = vunpack.c.h.b16 %v8218
  %v8298 = vunpack.c.l.b16 %v8219
  %v8299 = vunpack.c.h.b16 %v8219
  %v8300 = vunpack.c.l.b16 %v8220
  %v8301 = vunpack.c.h.b16 %v8220
  %v8302 = vunpack.c.l.b16 %v8221
  %v8303 = vunpack.c.h.b16 %v8221
  %v8304 = vunpack.c.l.b16 %v8222
  %v8305 = vunpack.c.h.b16 %v8222
  %v8306 = vunpack.c.l.b16 %v8223
  %v8307 = vunpack.c.h.b16 %v8223
  %v8308 = vunpack.c.l.b16 %v8224
  %v8309 = vunpack.c.h.b16 %v8224
  %v8310 = vunpack.c.l.b16 %v8225
  %v8311 = vunpack.c.h.b16 %v8225
  %v8312 = vunpack.c.l.b16 %v8226
  %v8313 = vunpack.c.h.b16 %v8226
  %v8314 = vunpack.c.l.b16 %v8227
  %v8315 = vunpack.c.h.b16 %v8227
  %v8316 = vunpack.c.l.b16 %v8228
  %v8317 = vunpack.c.h.b16 %v8228
  %v8318 = vunpack.c.l.b16 %v8229
  %v8319 = vunpack.c.h.b16 %v8229
  %v8320 = vunpack.c.l.b16 %v8230
  %v8321 = vunpack.c.h.b16 %v8230
  %v8322 = vunpack.c.l.b16 %v8231
  %v8323 = vunpack.c.h.b16 %v8231
  %v8324 = vunpack.c.l.b16 %v8232
  %v8325 = vunpack.c.h.b16 %v8232
  %v8326 = vunpack.c.l.b16 %v8233
  %v8327 = vunpack.c.h.b16 %v8233
  %v8328 = vunpack.c.l.b16 %v8234
  %v8329 = vunpack.c.h.b16 %v8234
  %v8330 = vunpack.c.l.b16 %v8235
  %v8331 = vunpack.c.h.b16 %v8235
  %v8332 = vpack.c.b16 %v8272, %v8268
  %v8333 = vpack.c.b16 %v8273, %v8269
  %v8334 = vpack.c.b16 %v8274, %v8270
  %v8335 = vpack.c.b16 %v8275, %v8271
  %v8336 = vpack.c.b16 %v8280, %v8276
  %v8337 = vpack.c.b16 %v8281, %v8277
  %v8338 = vpack.c.b16 %v8282, %v8278
  %v8339 = vpack.c.b16 %v8283, %v8279
  %v8340 = vpack.c.b16 %v8288, %v8284
  %v8341 = vpack.c.b16 %v8289, %v8285
  %v8342 = vpack.c.b16 %v8290, %v8286
  %v8343 = vpack.c.b16 %v8291, %v8287
  %v8344 = vpack.c.b16 %v8296, %v8292
  %v8345 = vpack.c.b16 %v8297, %v8293
  %v8346 = vpack.c.b16 %v8298, %v8294
  %v8347 = vpack.c.b16 %v8299, %v8295
  %v8348 = vpack.c.b16 %v8304, %v8300
  %v8349 = vpack.c.b16 %v8305, %v8301
  %v8350 = vpack.c.b16 %v8306, %v8302
  %v8351 = vpack.c.b16 %v8307, %v8303
  %v8352 = vpack.c.b16 %v8312, %v8308
  %v8353 = vpack.c.b16 %v8313, %v8309
  %v8354 = vpack.c.b16 %v8314, %v8310
  %v8355 = vpack.c.b16 %v8315, %v8311
  %v8356 = vpack.c.b16 %v8320, %v8316
  %v8357 = vpack.c.b16 %v8321, %v8317
  %v8358 = vpack.c.b16 %v8322, %v8318
  %v8359 = vpack.c.b16 %v8323, %v8319
  %v8360 = vpack.c.b16 %v8328, %v8324
  %v8361 = vpack.c.b16 %v8329, %v8325
  %v8362 = vpack.c.b16 %v8330, %v8326
  %v8363 = vpack.c.b16 %v8331, %v8327
  %8396 = vmatprep.subr.bf16.mxu0 %v8333
  %8397 = vmatpush1.bf16.msra.mxu0 %v8332
  %8398 = vmatprep.subr.bf16.mxu0 %v8337
  %8399 = vmatpush1.bf16.msra.mxu0 %v8336
  %8400 = vmatprep.subr.bf16.mxu0 %v8341
  %8401 = vmatpush1.bf16.msra.mxu0 %v8340
  %8402 = vmatprep.subr.bf16.mxu0 %v8345
  %8403 = vmatpush1.bf16.msra.mxu0 %v8344
  %8404 = vmatprep.subr.bf16.mxu0 %v8349
  %8405 = vmatpush1.bf16.msra.mxu0 %v8348
  %8406 = vmatprep.subr.bf16.mxu0 %v8353
  %8407 = vmatpush1.bf16.msra.mxu0 %v8352
  %8408 = vmatprep.subr.bf16.mxu0 %v8357
  %8409 = vmatpush1.bf16.msra.mxu0 %v8356
  %8410 = vmatprep.subr.bf16.mxu0 %v8361
  %8411 = vmatpush1.bf16.msra.mxu0 %v8360
  %8412 = vmatprep.subr.bf16.mxu0 0
  %8413 = vmatpush1.bf16.msra.mxu0 0
  %8414 = vmatprep.subr.bf16.mxu0 0
  %8415 = vmatpush1.bf16.msra.mxu0 0
  %8416 = vmatprep.subr.bf16.mxu0 0
  %8417 = vmatpush1.bf16.msra.mxu0 0
  %8418 = vmatprep.subr.bf16.mxu0 0
  %8419 = vmatpush1.bf16.msra.mxu0 0
  %8420 = vmatprep.subr.bf16.mxu0 0
  %8421 = vmatpush1.bf16.msra.mxu0 0
  %8422 = vmatprep.subr.bf16.mxu0 0
  %8423 = vmatpush1.bf16.msra.mxu0 0
  %8424 = vmatprep.subr.bf16.mxu0 0
  %8425 = vmatpush1.bf16.msra.mxu0 0
  %8426 = vmatprep.subr.bf16.mxu0 0
  %8427 = vmatpush1.bf16.msra.mxu0 0
  %8428 = vmatprep.mubr.bf16.mxu0 0
  %8429 = vmatmul.mubr.bf16.gmra.mrb[0].mxu0 %v7883
  %v8430 = vpop.f32.mrb[0].mxu0
  %v8431 = vadd.f32 0.0, %v8430
  %v8432 = vpop.f32.mrb[0].mxu0
  %v8433 = vadd.f32 0.0, %v8432
  %v8434 = vpop.f32.mrb[0].mxu0
  %v8435 = vadd.f32 0.0, %v8434
  %v8436 = vpop.f32.mrb[0].mxu0
  %v8437 = vadd.f32 0.0, %v8436
  %8438 = vdwg.mxu0
  %8439 = vmatprep.subr.bf16.mxu0 %v8335
  %8440 = vmatpush1.bf16.msra.mxu0 %v8334
  %8441 = vmatprep.subr.bf16.mxu0 %v8339
  %8442 = vmatpush1.bf16.msra.mxu0 %v8338
  %8443 = vmatprep.subr.bf16.mxu0 %v8343
  %8444 = vmatpush1.bf16.msra.mxu0 %v8342
  %8445 = vmatprep.subr.bf16.mxu0 %v8347
  %8446 = vmatpush1.bf16.msra.mxu0 %v8346
  %8447 = vmatprep.subr.bf16.mxu0 %v8351
  %8448 = vmatpush1.bf16.msra.mxu0 %v8350
  %8449 = vmatprep.subr.bf16.mxu0 %v8355
  %8450 = vmatpush1.bf16.msra.mxu0 %v8354
  %8451 = vmatprep.subr.bf16.mxu0 %v8359
  %8452 = vmatpush1.bf16.msra.mxu0 %v8358
  %8453 = vmatprep.subr.bf16.mxu0 %v8363
  %8454 = vmatpush1.bf16.msra.mxu0 %v8362
  %8455 = vmatprep.subr.bf16.mxu0 0
  %8456 = vmatpush1.bf16.msra.mxu0 0
  %8457 = vmatprep.subr.bf16.mxu0 0
  %8458 = vmatpush1.bf16.msra.mxu0 0
  %8459 = vmatprep.subr.bf16.mxu0 0
  %8460 = vmatpush1.bf16.msra.mxu0 0
  %8461 = vmatprep.subr.bf16.mxu0 0
  %8462 = vmatpush1.bf16.msra.mxu0 0
  %8463 = vmatprep.subr.bf16.mxu0 0
  %8464 = vmatpush1.bf16.msra.mxu0 0
  %8465 = vmatprep.subr.bf16.mxu0 0
  %8466 = vmatpush1.bf16.msra.mxu0 0
  %8467 = vmatprep.subr.bf16.mxu0 0
  %8468 = vmatpush1.bf16.msra.mxu0 0
  %8469 = vmatprep.subr.bf16.mxu0 0
  %8470 = vmatpush1.bf16.msra.mxu0 0
  %8471 = vmatprep.mubr.bf16.mxu0 0
  %8472 = vmatmul.mubr.bf16.gmra.mrb[0].mxu0 %v7883
  %v8473 = vpop.f32.mrb[0].mxu0
  %v8474 = vadd.f32 0.0, %v8473
  %v8475 = vpop.f32.mrb[0].mxu0
  %v8476 = vadd.f32 0.0, %v8475
  %v8477 = vpop.f32.mrb[0].mxu0
  %v8478 = vadd.f32 0.0, %v8477
  %v8479 = vpop.f32.mrb[0].mxu0
  %v8480 = vadd.f32 0.0, %v8479
  %8481 = vdwg.mxu0
  %v8482 = vadd.f32 %v8196, %v8431
  %v8483 = vadd.f32 %v8197, %v8433
  %v8484 = vadd.f32 %v8198, %v8474
  %v8485 = vadd.f32 %v8199, %v8476
  %v8486 = vadd.f32 %v8200, %v8435
  %v8487 = vadd.f32 %v8201, %v8437
  %v8488 = vadd.f32 %v8202, %v8478
  %v8489 = vadd.f32 %v8203, %v8480
  %v8490 = vmul.f32 %v8482, 0.5
  %v8491 = vmul.f32 %v8483, 0.5
  %v8492 = vmul.f32 %v8484, 0.5
  %v8493 = vmul.f32 %v8486, 0.5
  %v8494 = vmul.f32 %v8487, 0.5
  %v8495 = vmul.f32 %v8488, 0.5
  %v8496 = vtanh.pop %v8490
  %v8497 = vtanh.pop %v8491
  %v8498 = vtanh.pop %v8492
  %v8499 = vtanh.pop %v8493
  %v8500 = vtanh.pop %v8494
  %v8501 = vtanh.pop %v8495
  %v8502 = vmul.f32 %v8496, 0.5
  %v8503 = vmul.f32 %v8497, 0.5
  %v8504 = vmul.f32 %v8498, 0.5
  %v8505 = vmul.f32 %v8499, 0.5
  %v8506 = vmul.f32 %v8500, 0.5
  %v8507 = vmul.f32 %v8501, 0.5
  %v8508 = vadd.f32 %v8502, 0.5
  %v8509 = vadd.f32 %v8503, 0.5
  %v8510 = vadd.f32 %v8504, 0.5
  %v8511 = vadd.f32 %v8505, 0.5
  %v8512 = vadd.f32 %v8506, 0.5
  %v8513 = vadd.f32 %v8507, 0.5
  %v8514 = vtanh.pop %v8485
  %v8515 = vtanh.pop %v8489
  %v8516 = vmul.f32 %v8509, %v7877
  %v8517 = vmul.f32 %v8512, %v7878
  %v8518 = vmul.f32 %v8508, %v8514
  %v8519 = vmul.f32 %v8511, %v8515
  %v8520 = vadd.f32 %v8516, %v8518
  %v8521 = vadd.f32 %v8517, %v8519
  %v8522 = vtanh.pop %v8520
  %v8523 = vtanh.pop %v8521
  %v8524 = vmul.f32 %v8510, %v8522
  %v8525 = vmul.f32 %v8513, %v8523
  %v8526 = vpack.c.bf16 %v8525, %v8524
  %v8527 = vld [vmem:[%s7] sm:$0xff]
  %v8528 = vld [vmem:[%s7 + $0x8] sm:$0xff]
  %v8529 = vld [vmem:[%s7 + $0x10] sm:$0xff]
  %v8530 = vld [vmem:[%s7 + $0x18] sm:$0xff]
  %v8531 = vld [vmem:[%s7 + $0x20] sm:$0xff]
  %v8532 = vld [vmem:[%s7 + $0x28] sm:$0xff]
  %v8533 = vld [vmem:[%s7 + $0x30] sm:$0xff]
  %v8534 = vld [vmem:[%s7 + $0x38] sm:$0xff]
  %v8535 = vld [vmem:[%s7 + $0x40] sm:$0xff]
  %v8536 = vld [vmem:[%s7 + $0x48] sm:$0xff]
  %v8537 = vld [vmem:[%s7 + $0x50] sm:$0xff]
  %v8538 = vld [vmem:[%s7 + $0x58] sm:$0xff]
  %v8539 = vld [vmem:[%s7 + $0x60] sm:$0xff]
  %v8540 = vld [vmem:[%s7 + $0x68] sm:$0xff]
  %v8541 = vld [vmem:[%s7 + $0x70] sm:$0xff]
  %v8542 = vld [vmem:[%s7 + $0x78] sm:$0xff]
  %v8543 = vld [vmem:[%s7 + $0x80] sm:$0xff]
  %v8544 = vld [vmem:[%s7 + $0x88] sm:$0xff]
  %v8545 = vld [vmem:[%s7 + $0x90] sm:$0xff]
  %v8546 = vld [vmem:[%s7 + $0x98] sm:$0xff]
  %v8547 = vld [vmem:[%s7 + $0xa0] sm:$0xff]
  %v8548 = vld [vmem:[%s7 + $0xa8] sm:$0xff]
  %v8549 = vld [vmem:[%s7 + $0xb0] sm:$0xff]
  %v8550 = vld [vmem:[%s7 + $0xb8] sm:$0xff]
  %v8551 = vld [vmem:[%s7 + $0xc0] sm:$0xff]
  %v8552 = vld [vmem:[%s7 + $0xc8] sm:$0xff]
  %v8553 = vld [vmem:[%s7 + $0xd0] sm:$0xff]
  %v8554 = vld [vmem:[%s7 + $0xd8] sm:$0xff]
  %v8555 = vld [vmem:[%s7 + $0xe0] sm:$0xff]
  %v8556 = vld [vmem:[%s7 + $0xe8] sm:$0xff]
  %v8557 = vld [vmem:[%s7 + $0xf0] sm:$0xff]
  %v8558 = vld [vmem:[%s7 + $0xf8] sm:$0xff]
  %v8559 = vld [vmem:[%s9] sm:$0xf]
  %v8561 = vlaneseq
  %v8562 = vshrl.u32 %v8561, 7
  %v8563 = vsub.s32 0, %v8562
  %v8564 = vrot.slane %v8559, %v8563
  %v8565 = vlaneseq
  %v8566 = vshrl.u32 %v8565, 7
  %v8567 = vsub.s32 1, %v8566
  %v8568 = vrot.slane %v8559, %v8567
  %v8569 = vlaneseq
  %v8570 = vshrl.u32 %v8569, 7
  %v8571 = vsub.s32 2, %v8570
  %v8572 = vrot.slane %v8559, %v8571
  %v8573 = vlaneseq
  %v8574 = vshrl.u32 %v8573, 7
  %v8575 = vsub.s32 3, %v8574
  %v8576 = vrot.slane %v8559, %v8575
  %v8613 = vunpack.c.l.b16 %v8527
  %v8614 = vunpack.c.h.b16 %v8527
  %v8615 = vunpack.c.l.b16 %v8528
  %v8616 = vunpack.c.h.b16 %v8528
  %v8617 = vunpack.c.l.b16 %v8529
  %v8618 = vunpack.c.h.b16 %v8529
  %v8619 = vunpack.c.l.b16 %v8530
  %v8620 = vunpack.c.h.b16 %v8530
  %v8621 = vunpack.c.l.b16 %v8531
  %v8622 = vunpack.c.h.b16 %v8531
  %v8623 = vunpack.c.l.b16 %v8532
  %v8624 = vunpack.c.h.b16 %v8532
  %v8625 = vunpack.c.l.b16 %v8533
  %v8626 = vunpack.c.h.b16 %v8533
  %v8627 = vunpack.c.l.b16 %v8534
  %v8628 = vunpack.c.h.b16 %v8534
  %v8629 = vunpack.c.l.b16 %v8535
  %v8630 = vunpack.c.h.b16 %v8535
  %v8631 = vunpack.c.l.b16 %v8536
  %v8632 = vunpack.c.h.b16 %v8536
  %v8633 = vunpack.c.l.b16 %v8537
  %v8634 = vunpack.c.h.b16 %v8537
  %v8635 = vunpack.c.l.b16 %v8538
  %v8636 = vunpack.c.h.b16 %v8538
  %v8637 = vunpack.c.l.b16 %v8539
  %v8638 = vunpack.c.h.b16 %v8539
  %v8639 = vunpack.c.l.b16 %v8540
  %v8640 = vunpack.c.h.b16 %v8540
  %v8641 = vunpack.c.l.b16 %v8541
  %v8642 = vunpack.c.h.b16 %v8541
  %v8643 = vunpack.c.l.b16 %v8542
  %v8644 = vunpack.c.h.b16 %v8542
  %v8645 = vunpack.c.l.b16 %v8543
  %v8646 = vunpack.c.h.b16 %v8543
  %v8647 = vunpack.c.l.b16 %v8544
  %v8648 = vunpack.c.h.b16 %v8544
  %v8649 = vunpack.c.l.b16 %v8545
  %v8650 = vunpack.c.h.b16 %v8545
  %v8651 = vunpack.c.l.b16 %v8546
  %v8652 = vunpack.c.h.b16 %v8546
  %v8653 = vunpack.c.l.b16 %v8547
  %v8654 = vunpack.c.h.b16 %v8547
  %v8655 = vunpack.c.l.b16 %v8548
  %v8656 = vunpack.c.h.b16 %v8548
  %v8657 = vunpack.c.l.b16 %v8549
  %v8658 = vunpack.c.h.b16 %v8549
  %v8659 = vunpack.c.l.b16 %v8550
  %v8660 = vunpack.c.h.b16 %v8550
  %v8661 = vunpack.c.l.b16 %v8551
  %v8662 = vunpack.c.h.b16 %v8551
  %v8663 = vunpack.c.l.b16 %v8552
  %v8664 = vunpack.c.h.b16 %v8552
  %v8665 = vunpack.c.l.b16 %v8553
  %v8666 = vunpack.c.h.b16 %v8553
  %v8667 = vunpack.c.l.b16 %v8554
  %v8668 = vunpack.c.h.b16 %v8554
  %v8669 = vunpack.c.l.b16 %v8555
  %v8670 = vunpack.c.h.b16 %v8555
  %v8671 = vunpack.c.l.b16 %v8556
  %v8672 = vunpack.c.h.b16 %v8556
  %v8673 = vunpack.c.l.b16 %v8557
  %v8674 = vunpack.c.h.b16 %v8557
  %v8675 = vunpack.c.l.b16 %v8558
  %v8676 = vunpack.c.h.b16 %v8558
  %v8677 = vpack.c.b16 %v8617, %v8613
  %v8678 = vpack.c.b16 %v8618, %v8614
  %v8679 = vpack.c.b16 %v8619, %v8615
  %v8680 = vpack.c.b16 %v8620, %v8616
  %v8681 = vpack.c.b16 %v8625, %v8621
  %v8682 = vpack.c.b16 %v8626, %v8622
  %v8683 = vpack.c.b16 %v8627, %v8623
  %v8684 = vpack.c.b16 %v8628, %v8624
  %v8685 = vpack.c.b16 %v8633, %v8629
  %v8686 = vpack.c.b16 %v8634, %v8630
  %v8687 = vpack.c.b16 %v8635, %v8631
  %v8688 = vpack.c.b16 %v8636, %v8632
  %v8689 = vpack.c.b16 %v8641, %v8637
  %v8690 = vpack.c.b16 %v8642, %v8638
  %v8691 = vpack.c.b16 %v8643, %v8639
  %v8692 = vpack.c.b16 %v8644, %v8640
  %v8693 = vpack.c.b16 %v8649, %v8645
  %v8694 = vpack.c.b16 %v8650, %v8646
  %v8695 = vpack.c.b16 %v8651, %v8647
  %v8696 = vpack.c.b16 %v8652, %v8648
  %v8697 = vpack.c.b16 %v8657, %v8653
  %v8698 = vpack.c.b16 %v8658, %v8654
  %v8699 = vpack.c.b16 %v8659, %v8655
  %v8700 = vpack.c.b16 %v8660, %v8656
  %v8701 = vpack.c.b16 %v8665, %v8661
  %v8702 = vpack.c.b16 %v8666, %v8662
  %v8703 = vpack.c.b16 %v8667, %v8663
  %v8704 = vpack.c.b16 %v8668, %v8664
  %v8705 = vpack.c.b16 %v8673, %v8669
  %v8706 = vpack.c.b16 %v8674, %v8670
  %v8707 = vpack.c.b16 %v8675, %v8671
  %v8708 = vpack.c.b16 %v8676, %v8672
  %8741 = vmatprep.subr.bf16.mxu0 %v8678
  %8742 = vmatpush1.bf16.msra.mxu0 %v8677
  %8743 = vmatprep.subr.bf16.mxu0 %v8682
  %8744 = vmatpush1.bf16.msra.mxu0 %v8681
  %8745 = vmatprep.subr.bf16.mxu0 %v8686
  %8746 = vmatpush1.bf16.msra.mxu0 %v8685
  %8747 = vmatprep.subr.bf16.mxu0 %v8690
  %8748 = vmatpush1.bf16.msra.mxu0 %v8689
  %8749 = vmatprep.subr.bf16.mxu0 %v8694
  %8750 = vmatpush1.bf16.msra.mxu0 %v8693
  %8751 = vmatprep.subr.bf16.mxu0 %v8698
  %8752 = vmatpush1.bf16.msra.mxu0 %v8697
  %8753 = vmatprep.subr.bf16.mxu0 %v8702
  %8754 = vmatpush1.bf16.msra.mxu0 %v8701
  %8755 = vmatprep.subr.bf16.mxu0 %v8706
  %8756 = vmatpush1.bf16.msra.mxu0 %v8705
  %8757 = vmatprep.subr.bf16.mxu0 0
  %8758 = vmatpush1.bf16.msra.mxu0 0
  %8759 = vmatprep.subr.bf16.mxu0 0
  %8760 = vmatpush1.bf16.msra.mxu0 0
  %8761 = vmatprep.subr.bf16.mxu0 0
  %8762 = vmatpush1.bf16.msra.mxu0 0
  %8763 = vmatprep.subr.bf16.mxu0 0
  %8764 = vmatpush1.bf16.msra.mxu0 0
  %8765 = vmatprep.subr.bf16.mxu0 0
  %8766 = vmatpush1.bf16.msra.mxu0 0
  %8767 = vmatprep.subr.bf16.mxu0 0
  %8768 = vmatpush1.bf16.msra.mxu0 0
  %8769 = vmatprep.subr.bf16.mxu0 0
  %8770 = vmatpush1.bf16.msra.mxu0 0
  %8771 = vmatprep.subr.bf16.mxu0 0
  %8772 = vmatpush1.bf16.msra.mxu0 0
  %8773 = vmatprep.mubr.bf16.mxu0 0
  %8774 = vmatmul.mubr.bf16.gmra.mrb[0].mxu0 %v8526
  %v8775 = vpop.f32.mrb[0].mxu0
  %v8776 = vadd.f32 %v8564, %v8775
  %v8777 = vpop.f32.mrb[0].mxu0
  %v8778 = vadd.f32 %v8568, %v8777
  %v8779 = vpop.f32.mrb[0].mxu0
  %v8780 = vadd.f32 %v8564, %v8779
  %v8781 = vpop.f32.mrb[0].mxu0
  %v8782 = vadd.f32 %v8568, %v8781
  %8783 = vdwg.mxu0
  %8784 = vmatprep.subr.bf16.mxu0 %v8680
  %8785 = vmatpush1.bf16.msra.mxu0 %v8679
  %8786 = vmatprep.subr.bf16.mxu0 %v8684
  %8787 = vmatpush1.bf16.msra.mxu0 %v8683
  %8788 = vmatprep.subr.bf16.mxu0 %v8688
  %8789 = vmatpush1.bf16.msra.mxu0 %v8687
  %8790 = vmatprep.subr.bf16.mxu0 %v8692
  %8791 = vmatpush1.bf16.msra.mxu0 %v8691
  %8792 = vmatprep.subr.bf16.mxu0 %v8696
  %8793 = vmatpush1.bf16.msra.mxu0 %v8695
  %8794 = vmatprep.subr.bf16.mxu0 %v8700
  %8795 = vmatpush1.bf16.msra.mxu0 %v8699
  %8796 = vmatprep.subr.bf16.mxu0 %v8704
  %8797 = vmatpush1.bf16.msra.mxu0 %v8703
  %8798 = vmatprep.subr.bf16.mxu0 %v8708
  %8799 = vmatpush1.bf16.msra.mxu0 %v8707
  %8800 = vmatprep.subr.bf16.mxu0 0
  %8801 = vmatpush1.bf16.msra.mxu0 0
  %8802 = vmatprep.subr.bf16.mxu0 0
  %8803 = vmatpush1.bf16.msra.mxu0 0
  %8804 = vmatprep.subr.bf16.mxu0 0
  %8805 = vmatpush1.bf16.msra.mxu0 0
  %8806 = vmatprep.subr.bf16.mxu0 0
  %8807 = vmatpush1.bf16.msra.mxu0 0
  %8808 = vmatprep.subr.bf16.mxu0 0
  %8809 = vmatpush1.bf16.msra.mxu0 0
  %8810 = vmatprep.subr.bf16.mxu0 0
  %8811 = vmatpush1.bf16.msra.mxu0 0
  %8812 = vmatprep.subr.bf16.mxu0 0
  %8813 = vmatpush1.bf16.msra.mxu0 0
  %8814 = vmatprep.subr.bf16.mxu0 0
  %8815 = vmatpush1.bf16.msra.mxu0 0
  %8816 = vmatprep.mubr.bf16.mxu0 0
  %8817 = vmatmul.mubr.bf16.gmra.mrb[0].mxu0 %v8526
  %v8818 = vpop.f32.mrb[0].mxu0
  %v8819 = vadd.f32 %v8572, %v8818
  %v8820 = vpop.f32.mrb[0].mxu0
  %v8821 = vadd.f32 %v8576, %v8820
  %v8822 = vpop.f32.mrb[0].mxu0
  %v8823 = vadd.f32 %v8572, %v8822
  %v8824 = vpop.f32.mrb[0].mxu0
  %v8825 = vadd.f32 %v8576, %v8824
  %8826 = vdwg.mxu0
  %v8827 = vpack.c.bf16 %v8780, %v8776
  %v8828 = vpack.c.bf16 %v8782, %v8778
  %v8829 = vpack.c.bf16 %v8823, %v8819
  %v8830 = vpack.c.bf16 %v8825, %v8821
  %8831 = vst [vmem:[%s3044] sm:$0xff] %v8827
  %8832 = vst [vmem:[%s3044 + $0x8] sm:$0xff] %v8828
  %8833 = vst [vmem:[%s3044 + $0x10] sm:$0xff] %v8829
  %8834 = vst [vmem:[%s3044 + $0x18] sm:$0xff] %v8830
  %v8835 = vld [vmem:[%s3688] sm:$0xff]
  %v8836 = vld [vmem:[%s3688 + $0x8] sm:$0xff]
  %v8837 = vld [vmem:[%s3688 + $0x10] sm:$0xff]
  %v8838 = vld [vmem:[%s3688 + $0x18] sm:$0xff]
  %v8839 = vunpack.c.l.bf16 %v8835
  %v8840 = vunpack.c.l.bf16 %v8836
  %v8841 = vunpack.c.l.bf16 %v8837
  %v8842 = vunpack.c.l.bf16 %v8838
  %v8843 = vunpack.c.h.bf16 %v8835
  %v8844 = vunpack.c.h.bf16 %v8836
  %v8845 = vunpack.c.h.bf16 %v8837
  %v8846 = vunpack.c.h.bf16 %v8838
  %v8847 = vld [vmem:[%s5] sm:$0xff]
  %v8848 = vld [vmem:[%s5 + $0x8] sm:$0xff]
  %v8849 = vld [vmem:[%s5 + $0x10] sm:$0xff]
  %v8850 = vld [vmem:[%s5 + $0x18] sm:$0xff]
  %v8851 = vld [vmem:[%s5 + $0x20] sm:$0xff]
  %v8852 = vld [vmem:[%s5 + $0x28] sm:$0xff]
  %v8853 = vld [vmem:[%s5 + $0x30] sm:$0xff]
  %v8854 = vld [vmem:[%s5 + $0x38] sm:$0xff]
  %v8855 = vld [vmem:[%s5 + $0x40] sm:$0xff]
  %v8856 = vld [vmem:[%s5 + $0x48] sm:$0xff]
  %v8857 = vld [vmem:[%s5 + $0x50] sm:$0xff]
  %v8858 = vld [vmem:[%s5 + $0x58] sm:$0xff]
  %v8859 = vld [vmem:[%s5 + $0x60] sm:$0xff]
  %v8860 = vld [vmem:[%s5 + $0x68] sm:$0xff]
  %v8861 = vld [vmem:[%s5 + $0x70] sm:$0xff]
  %v8862 = vld [vmem:[%s5 + $0x78] sm:$0xff]
  %v8863 = vld [vmem:[%s5 + $0x80] sm:$0xff]
  %v8864 = vld [vmem:[%s5 + $0x88] sm:$0xff]
  %v8865 = vld [vmem:[%s5 + $0x90] sm:$0xff]
  %v8866 = vld [vmem:[%s5 + $0x98] sm:$0xff]
  %v8867 = vld [vmem:[%s5 + $0xa0] sm:$0xff]
  %v8868 = vld [vmem:[%s5 + $0xa8] sm:$0xff]
  %v8869 = vld [vmem:[%s5 + $0xb0] sm:$0xff]
  %v8870 = vld [vmem:[%s5 + $0xb8] sm:$0xff]
  %v8871 = vld [vmem:[%s5 + $0xc0] sm:$0xff]
  %v8872 = vld [vmem:[%s5 + $0xc8] sm:$0xff]
  %v8873 = vld [vmem:[%s5 + $0xd0] sm:$0xff]
  %v8874 = vld [vmem:[%s5 + $0xd8] sm:$0xff]
  %v8875 = vld [vmem:[%s5 + $0xe0] sm:$0xff]
  %v8876 = vld [vmem:[%s5 + $0xe8] sm:$0xff]
  %v8877 = vld [vmem:[%s5 + $0xf0] sm:$0xff]
  %v8878 = vld [vmem:[%s5 + $0xf8] sm:$0xff]
  %v8911 = vunpack.c.l.b16 %v8847
  %v8912 = vunpack.c.h.b16 %v8847
  %v8913 = vunpack.c.l.b16 %v8848
  %v8914 = vunpack.c.h.b16 %v8848
  %v8915 = vunpack.c.l.b16 %v8849
  %v8916 = vunpack.c.h.b16 %v8849
  %v8917 = vunpack.c.l.b16 %v8850
  %v8918 = vunpack.c.h.b16 %v8850
  %v8919 = vunpack.c.l.b16 %v8851
  %v8920 = vunpack.c.h.b16 %v8851
  %v8921 = vunpack.c.l.b16 %v8852
  %v8922 = vunpack.c.h.b16 %v8852
  %v8923 = vunpack.c.l.b16 %v8853
  %v8924 = vunpack.c.h.b16 %v8853
  %v8925 = vunpack.c.l.b16 %v8854
  %v8926 = vunpack.c.h.b16 %v8854
  %v8927 = vunpack.c.l.b16 %v8855
  %v8928 = vunpack.c.h.b16 %v8855
  %v8929 = vunpack.c.l.b16 %v8856
  %v8930 = vunpack.c.h.b16 %v8856
  %v8931 = vunpack.c.l.b16 %v8857
  %v8932 = vunpack.c.h.b16 %v8857
  %v8933 = vunpack.c.l.b16 %v8858
  %v8934 = vunpack.c.h.b16 %v8858
  %v8935 = vunpack.c.l.b16 %v8859
  %v8936 = vunpack.c.h.b16 %v8859
  %v8937 = vunpack.c.l.b16 %v8860
  %v8938 = vunpack.c.h.b16 %v8860
  %v8939 = vunpack.c.l.b16 %v8861
  %v8940 = vunpack.c.h.b16 %v8861
  %v8941 = vunpack.c.l.b16 %v8862
  %v8942 = vunpack.c.h.b16 %v8862
  %v8943 = vunpack.c.l.b16 %v8863
  %v8944 = vunpack.c.h.b16 %v8863
  %v8945 = vunpack.c.l.b16 %v8864
  %v8946 = vunpack.c.h.b16 %v8864
  %v8947 = vunpack.c.l.b16 %v8865
  %v8948 = vunpack.c.h.b16 %v8865
  %v8949 = vunpack.c.l.b16 %v8866
  %v8950 = vunpack.c.h.b16 %v8866
  %v8951 = vunpack.c.l.b16 %v8867
  %v8952 = vunpack.c.h.b16 %v8867
  %v8953 = vunpack.c.l.b16 %v8868
  %v8954 = vunpack.c.h.b16 %v8868
  %v8955 = vunpack.c.l.b16 %v8869
  %v8956 = vunpack.c.h.b16 %v8869
  %v8957 = vunpack.c.l.b16 %v8870
  %v8958 = vunpack.c.h.b16 %v8870
  %v8959 = vunpack.c.l.b16 %v8871
  %v8960 = vunpack.c.h.b16 %v8871
  %v8961 = vunpack.c.l.b16 %v8872
  %v8962 = vunpack.c.h.b16 %v8872
  %v8963 = vunpack.c.l.b16 %v8873
  %v8964 = vunpack.c.h.b16 %v8873
  %v8965 = vunpack.c.l.b16 %v8874
  %v8966 = vunpack.c.h.b16 %v8874
  %v8967 = vunpack.c.l.b16 %v8875
  %v8968 = vunpack.c.h.b16 %v8875
  %v8969 = vunpack.c.l.b16 %v8876
  %v8970 = vunpack.c.h.b16 %v8876
  %v8971 = vunpack.c.l.b16 %v8877
  %v8972 = vunpack.c.h.b16 %v8877
  %v8973 = vunpack.c.l.b16 %v8878
  %v8974 = vunpack.c.h.b16 %v8878
  %v8975 = vpack.c.b16 %v8915, %v8911
  %v8976 = vpack.c.b16 %v8916, %v8912
  %v8977 = vpack.c.b16 %v8917, %v8913
  %v8978 = vpack.c.b16 %v8918, %v8914
  %v8979 = vpack.c.b16 %v8923, %v8919
  %v8980 = vpack.c.b16 %v8924, %v8920
  %v8981 = vpack.c.b16 %v8925, %v8921
  %v8982 = vpack.c.b16 %v8926, %v8922
  %v8983 = vpack.c.b16 %v8931, %v8927
  %v8984 = vpack.c.b16 %v8932, %v8928
  %v8985 = vpack.c.b16 %v8933, %v8929
  %v8986 = vpack.c.b16 %v8934, %v8930
  %v8987 = vpack.c.b16 %v8939, %v8935
  %v8988 = vpack.c.b16 %v8940, %v8936
  %v8989 = vpack.c.b16 %v8941, %v8937
  %v8990 = vpack.c.b16 %v8942, %v8938
  %v8991 = vpack.c.b16 %v8947, %v8943
  %v8992 = vpack.c.b16 %v8948, %v8944
  %v8993 = vpack.c.b16 %v8949, %v8945
  %v8994 = vpack.c.b16 %v8950, %v8946
  %v8995 = vpack.c.b16 %v8955, %v8951
  %v8996 = vpack.c.b16 %v8956, %v8952
  %v8997 = vpack.c.b16 %v8957, %v8953
  %v8998 = vpack.c.b16 %v8958, %v8954
  %v8999 = vpack.c.b16 %v8963, %v8959
  %v9000 = vpack.c.b16 %v8964, %v8960
  %v9001 = vpack.c.b16 %v8965, %v8961
  %v9002 = vpack.c.b16 %v8966, %v8962
  %v9003 = vpack.c.b16 %v8971, %v8967
  %v9004 = vpack.c.b16 %v8972, %v8968
  %v9005 = vpack.c.b16 %v8973, %v8969
  %v9006 = vpack.c.b16 %v8974, %v8970
  %9039 = vmatprep.subr.bf16.mxu0 %v8976
  %9040 = vmatpush1.bf16.msra.mxu0 %v8975
  %9041 = vmatprep.subr.bf16.mxu0 %v8980
  %9042 = vmatpush1.bf16.msra.mxu0 %v8979
  %9043 = vmatprep.subr.bf16.mxu0 %v8984
  %9044 = vmatpush1.bf16.msra.mxu0 %v8983
  %9045 = vmatprep.subr.bf16.mxu0 %v8988
  %9046 = vmatpush1.bf16.msra.mxu0 %v8987
  %9047 = vmatprep.subr.bf16.mxu0 %v8992
  %9048 = vmatpush1.bf16.msra.mxu0 %v8991
  %9049 = vmatprep.subr.bf16.mxu0 %v8996
  %9050 = vmatpush1.bf16.msra.mxu0 %v8995
  %9051 = vmatprep.subr.bf16.mxu0 %v9000
  %9052 = vmatpush1.bf16.msra.mxu0 %v8999
  %9053 = vmatprep.subr.bf16.mxu0 %v9004
  %9054 = vmatpush1.bf16.msra.mxu0 %v9003
  %9055 = vmatprep.subr.bf16.mxu0 0
  %9056 = vmatpush1.bf16.msra.mxu0 0
  %9057 = vmatprep.subr.bf16.mxu0 0
  %9058 = vmatpush1.bf16.msra.mxu0 0
  %9059 = vmatprep.subr.bf16.mxu0 0
  %9060 = vmatpush1.bf16.msra.mxu0 0
  %9061 = vmatprep.subr.bf16.mxu0 0
  %9062 = vmatpush1.bf16.msra.mxu0 0
  %9063 = vmatprep.subr.bf16.mxu0 0
  %9064 = vmatpush1.bf16.msra.mxu0 0
  %9065 = vmatprep.subr.bf16.mxu0 0
  %9066 = vmatpush1.bf16.msra.mxu0 0
  %9067 = vmatprep.subr.bf16.mxu0 0
  %9068 = vmatpush1.bf16.msra.mxu0 0
  %9069 = vmatprep.subr.bf16.mxu0 0
  %9070 = vmatpush1.bf16.msra.mxu0 0
  %9071 = vmatprep.mubr.bf16.mxu0 0
  %9072 = vmatmul.mubr.bf16.gmra.mrb[0].mxu0 %v8526
  %v9073 = vpop.f32.mrb[0].mxu0
  %v9074 = vadd.f32 0.0, %v9073
  %v9075 = vpop.f32.mrb[0].mxu0
  %v9076 = vadd.f32 0.0, %v9075
  %v9077 = vpop.f32.mrb[0].mxu0
  %v9078 = vadd.f32 0.0, %v9077
  %v9079 = vpop.f32.mrb[0].mxu0
  %v9080 = vadd.f32 0.0, %v9079
  %9081 = vdwg.mxu0
  %9082 = vmatprep.subr.bf16.mxu0 %v8978
  %9083 = vmatpush1.bf16.msra.mxu0 %v8977
  %9084 = vmatprep.subr.bf16.mxu0 %v8982
  %9085 = vmatpush1.bf16.msra.mxu0 %v8981
  %9086 = vmatprep.subr.bf16.mxu0 %v8986
  %9087 = vmatpush1.bf16.msra.mxu0 %v8985
  %9088 = vmatprep.subr.bf16.mxu0 %v8990
  %9089 = vmatpush1.bf16.msra.mxu0 %v8989
  %9090 = vmatprep.subr.bf16.mxu0 %v8994
  %9091 = vmatpush1.bf16.msra.mxu0 %v8993
  %9092 = vmatprep.subr.bf16.mxu0 %v8998
  %9093 = vmatpush1.bf16.msra.mxu0 %v8997
  %9094 = vmatprep.subr.bf16.mxu0 %v9002
  %9095 = vmatpush1.bf16.msra.mxu0 %v9001
  %9096 = vmatprep.subr.bf16.mxu0 %v9006
  %9097 = vmatpush1.bf16.msra.mxu0 %v9005
  %9098 = vmatprep.subr.bf16.mxu0 0
  %9099 = vmatpush1.bf16.msra.mxu0 0
  %9100 = vmatprep.subr.bf16.mxu0 0
  %9101 = vmatpush1.bf16.msra.mxu0 0
  %9102 = vmatprep.subr.bf16.mxu0 0
  %9103 = vmatpush1.bf16.msra.mxu0 0
  %9104 = vmatprep.subr.bf16.mxu0 0
  %9105 = vmatpush1.bf16.msra.mxu0 0
  %9106 = vmatprep.subr.bf16.mxu0 0
  %9107 = vmatpush1.bf16.msra.mxu0 0
  %9108 = vmatprep.subr.bf16.mxu0 0
  %9109 = vmatpush1.bf16.msra.mxu0 0
  %9110 = vmatprep.subr.bf16.mxu0 0
  %9111 = vmatpush1.bf16.msra.mxu0 0
  %9112 = vmatprep.subr.bf16.mxu0 0
  %9113 = vmatpush1.bf16.msra.mxu0 0
  %9114 = vmatprep.mubr.bf16.mxu0 0
  %9115 = vmatmul.mubr.bf16.gmra.mrb[0].mxu0 %v8526
  %v9116 = vpop.f32.mrb[0].mxu0
  %v9117 = vadd.f32 0.0, %v9116
  %v9118 = vpop.f32.mrb[0].mxu0
  %v9119 = vadd.f32 0.0, %v9118
  %v9120 = vpop.f32.mrb[0].mxu0
  %v9121 = vadd.f32 0.0, %v9120
  %v9122 = vpop.f32.mrb[0].mxu0
  %v9123 = vadd.f32 0.0, %v9122
  %9124 = vdwg.mxu0
  %v9125 = vadd.f32 %v8839, %v9074
  %v9126 = vadd.f32 %v8840, %v9076
  %v9127 = vadd.f32 %v8841, %v9117
  %v9128 = vadd.f32 %v8842, %v9119
  %v9129 = vadd.f32 %v8843, %v9078
  %v9130 = vadd.f32 %v8844, %v9080
  %v9131 = vadd.f32 %v8845, %v9121
  %v9132 = vadd.f32 %v8846, %v9123
  %v9133 = vmul.f32 %v9125, 0.5
  %v9134 = vmul.f32 %v9126, 0.5
  %v9135 = vmul.f32 %v9127, 0.5
  %v9136 = vmul.f32 %v9129, 0.5
  %v9137 = vmul.f32 %v9130, 0.5
  %v9138 = vmul.f32 %v9131, 0.5
  %v9139 = vtanh.pop %v9133
  %v9140 = vtanh.pop %v9134
  %v9141 = vtanh.pop %v9135
  %v9142 = vtanh.pop %v9136
  %v9143 = vtanh.pop %v9137
  %v9144 = vtanh.pop %v9138
  %v9145 = vmul.f32 %v9139, 0.5
  %v9146 = vmul.f32 %v9140, 0.5
  %v9147 = vmul.f32 %v9141, 0.5
  %v9148 = vmul.f32 %v9142, 0.5
  %v9149 = vmul.f32 %v9143, 0.5
  %v9150 = vmul.f32 %v9144, 0.5
  %v9151 = vadd.f32 %v9145, 0.5
  %v9152 = vadd.f32 %v9146, 0.5
  %v9153 = vadd.f32 %v9147, 0.5
  %v9154 = vadd.f32 %v9148, 0.5
  %v9155 = vadd.f32 %v9149, 0.5
  %v9156 = vadd.f32 %v9150, 0.5
  %v9157 = vtanh.pop %v9128
  %v9158 = vtanh.pop %v9132
  %v9159 = vmul.f32 %v9152, %v8520
  %v9160 = vmul.f32 %v9155, %v8521
  %v9161 = vmul.f32 %v9151, %v9157
  %v9162 = vmul.f32 %v9154, %v9158
  %v9163 = vadd.f32 %v9159, %v9161
  %v9164 = vadd.f32 %v9160, %v9162
  %v9165 = vtanh.pop %v9163
  %v9166 = vtanh.pop %v9164
  %v9167 = vmul.f32 %v9153, %v9165
  %v9168 = vmul.f32 %v9156, %v9166
  %v9169 = vpack.c.bf16 %v9168, %v9167
  %v9170 = vld [vmem:[%s7] sm:$0xff]
  %v9171 = vld [vmem:[%s7 + $0x8] sm:$0xff]
  %v9172 = vld [vmem:[%s7 + $0x10] sm:$0xff]
  %v9173 = vld [vmem:[%s7 + $0x18] sm:$0xff]
  %v9174 = vld [vmem:[%s7 + $0x20] sm:$0xff]
  %v9175 = vld [vmem:[%s7 + $0x28] sm:$0xff]
  %v9176 = vld [vmem:[%s7 + $0x30] sm:$0xff]
  %v9177 = vld [vmem:[%s7 + $0x38] sm:$0xff]
  %v9178 = vld [vmem:[%s7 + $0x40] sm:$0xff]
  %v9179 = vld [vmem:[%s7 + $0x48] sm:$0xff]
  %v9180 = vld [vmem:[%s7 + $0x50] sm:$0xff]
  %v9181 = vld [vmem:[%s7 + $0x58] sm:$0xff]
  %v9182 = vld [vmem:[%s7 + $0x60] sm:$0xff]
  %v9183 = vld [vmem:[%s7 + $0x68] sm:$0xff]
  %v9184 = vld [vmem:[%s7 + $0x70] sm:$0xff]
  %v9185 = vld [vmem:[%s7 + $0x78] sm:$0xff]
  %v9186 = vld [vmem:[%s7 + $0x80] sm:$0xff]
  %v9187 = vld [vmem:[%s7 + $0x88] sm:$0xff]
  %v9188 = vld [vmem:[%s7 + $0x90] sm:$0xff]
  %v9189 = vld [vmem:[%s7 + $0x98] sm:$0xff]
  %v9190 = vld [vmem:[%s7 + $0xa0] sm:$0xff]
  %v9191 = vld [vmem:[%s7 + $0xa8] sm:$0xff]
  %v9192 = vld [vmem:[%s7 + $0xb0] sm:$0xff]
  %v9193 = vld [vmem:[%s7 + $0xb8] sm:$0xff]
  %v9194 = vld [vmem:[%s7 + $0xc0] sm:$0xff]
  %v9195 = vld [vmem:[%s7 + $0xc8] sm:$0xff]
  %v9196 = vld [vmem:[%s7 + $0xd0] sm:$0xff]
  %v9197 = vld [vmem:[%s7 + $0xd8] sm:$0xff]
  %v9198 = vld [vmem:[%s7 + $0xe0] sm:$0xff]
  %v9199 = vld [vmem:[%s7 + $0xe8] sm:$0xff]
  %v9200 = vld [vmem:[%s7 + $0xf0] sm:$0xff]
  %v9201 = vld [vmem:[%s7 + $0xf8] sm:$0xff]
  %v9202 = vld [vmem:[%s9] sm:$0xf]
  %v9204 = vlaneseq
  %v9205 = vshrl.u32 %v9204, 7
  %v9206 = vsub.s32 0, %v9205
  %v9207 = vrot.slane %v9202, %v9206
  %v9208 = vlaneseq
  %v9209 = vshrl.u32 %v9208, 7
  %v9210 = vsub.s32 1, %v9209
  %v9211 = vrot.slane %v9202, %v9210
  %v9212 = vlaneseq
  %v9213 = vshrl.u32 %v9212, 7
  %v9214 = vsub.s32 2, %v9213
  %v9215 = vrot.slane %v9202, %v9214
  %v9216 = vlaneseq
  %v9217 = vshrl.u32 %v9216, 7
  %v9218 = vsub.s32 3, %v9217
  %v9219 = vrot.slane %v9202, %v9218
  %v9256 = vunpack.c.l.b16 %v9170
  %v9257 = vunpack.c.h.b16 %v9170
  %v9258 = vunpack.c.l.b16 %v9171
  %v9259 = vunpack.c.h.b16 %v9171
  %v9260 = vunpack.c.l.b16 %v9172
  %v9261 = vunpack.c.h.b16 %v9172
  %v9262 = vunpack.c.l.b16 %v9173
  %v9263 = vunpack.c.h.b16 %v9173
  %v9264 = vunpack.c.l.b16 %v9174
  %v9265 = vunpack.c.h.b16 %v9174
  %v9266 = vunpack.c.l.b16 %v9175
  %v9267 = vunpack.c.h.b16 %v9175
  %v9268 = vunpack.c.l.b16 %v9176
  %v9269 = vunpack.c.h.b16 %v9176
  %v9270 = vunpack.c.l.b16 %v9177
  %v9271 = vunpack.c.h.b16 %v9177
  %v9272 = vunpack.c.l.b16 %v9178
  %v9273 = vunpack.c.h.b16 %v9178
  %v9274 = vunpack.c.l.b16 %v9179
  %v9275 = vunpack.c.h.b16 %v9179
  %v9276 = vunpack.c.l.b16 %v9180
  %v9277 = vunpack.c.h.b16 %v9180
  %v9278 = vunpack.c.l.b16 %v9181
  %v9279 = vunpack.c.h.b16 %v9181
  %v9280 = vunpack.c.l.b16 %v9182
  %v9281 = vunpack.c.h.b16 %v9182
  %v9282 = vunpack.c.l.b16 %v9183
  %v9283 = vunpack.c.h.b16 %v9183
  %v9284 = vunpack.c.l.b16 %v9184
  %v9285 = vunpack.c.h.b16 %v9184
  %v9286 = vunpack.c.l.b16 %v9185
  %v9287 = vunpack.c.h.b16 %v9185
  %v9288 = vunpack.c.l.b16 %v9186
  %v9289 = vunpack.c.h.b16 %v9186
  %v9290 = vunpack.c.l.b16 %v9187
  %v9291 = vunpack.c.h.b16 %v9187
  %v9292 = vunpack.c.l.b16 %v9188
  %v9293 = vunpack.c.h.b16 %v9188
  %v9294 = vunpack.c.l.b16 %v9189
  %v9295 = vunpack.c.h.b16 %v9189
  %v9296 = vunpack.c.l.b16 %v9190
  %v9297 = vunpack.c.h.b16 %v9190
  %v9298 = vunpack.c.l.b16 %v9191
  %v9299 = vunpack.c.h.b16 %v9191
  %v9300 = vunpack.c.l.b16 %v9192
  %v9301 = vunpack.c.h.b16 %v9192
  %v9302 = vunpack.c.l.b16 %v9193
  %v9303 = vunpack.c.h.b16 %v9193
  %v9304 = vunpack.c.l.b16 %v9194
  %v9305 = vunpack.c.h.b16 %v9194
  %v9306 = vunpack.c.l.b16 %v9195
  %v9307 = vunpack.c.h.b16 %v9195
  %v9308 = vunpack.c.l.b16 %v9196
  %v9309 = vunpack.c.h.b16 %v9196
  %v9310 = vunpack.c.l.b16 %v9197
  %v9311 = vunpack.c.h.b16 %v9197
  %v9312 = vunpack.c.l.b16 %v9198
  %v9313 = vunpack.c.h.b16 %v9198
  %v9314 = vunpack.c.l.b16 %v9199
  %v9315 = vunpack.c.h.b16 %v9199
  %v9316 = vunpack.c.l.b16 %v9200
  %v9317 = vunpack.c.h.b16 %v9200
  %v9318 = vunpack.c.l.b16 %v9201
  %v9319 = vunpack.c.h.b16 %v9201
  %v9320 = vpack.c.b16 %v9260, %v9256
  %v9321 = vpack.c.b16 %v9261, %v9257
  %v9322 = vpack.c.b16 %v9262, %v9258
  %v9323 = vpack.c.b16 %v9263, %v9259
  %v9324 = vpack.c.b16 %v9268, %v9264
  %v9325 = vpack.c.b16 %v9269, %v9265
  %v9326 = vpack.c.b16 %v9270, %v9266
  %v9327 = vpack.c.b16 %v9271, %v9267
  %v9328 = vpack.c.b16 %v9276, %v9272
  %v9329 = vpack.c.b16 %v9277, %v9273
  %v9330 = vpack.c.b16 %v9278, %v9274
  %v9331 = vpack.c.b16 %v9279, %v9275
  %v9332 = vpack.c.b16 %v9284, %v9280
  %v9333 = vpack.c.b16 %v9285, %v9281
  %v9334 = vpack.c.b16 %v9286, %v9282
  %v9335 = vpack.c.b16 %v9287, %v9283
  %v9336 = vpack.c.b16 %v9292, %v9288
  %v9337 = vpack.c.b16 %v9293, %v9289
  %v9338 = vpack.c.b16 %v9294, %v9290
  %v9339 = vpack.c.b16 %v9295, %v9291
  %v9340 = vpack.c.b16 %v9300, %v9296
  %v9341 = vpack.c.b16 %v9301, %v9297
  %v9342 = vpack.c.b16 %v9302, %v9298
  %v9343 = vpack.c.b16 %v9303, %v9299
  %v9344 = vpack.c.b16 %v9308, %v9304
  %v9345 = vpack.c.b16 %v9309, %v9305
  %v9346 = vpack.c.b16 %v9310, %v9306
  %v9347 = vpack.c.b16 %v9311, %v9307
  %v9348 = vpack.c.b16 %v9316, %v9312
  %v9349 = vpack.c.b16 %v9317, %v9313
  %v9350 = vpack.c.b16 %v9318, %v9314
  %v9351 = vpack.c.b16 %v9319, %v9315
  %9384 = vmatprep.subr.bf16.mxu0 %v9321
  %9385 = vmatpush1.bf16.msra.mxu0 %v9320
  %9386 = vmatprep.subr.bf16.mxu0 %v9325
  %9387 = vmatpush1.bf16.msra.mxu0 %v9324
  %9388 = vmatprep.subr.bf16.mxu0 %v9329
  %9389 = vmatpush1.bf16.msra.mxu0 %v9328
  %9390 = vmatprep.subr.bf16.mxu0 %v9333
  %9391 = vmatpush1.bf16.msra.mxu0 %v9332
  %9392 = vmatprep.subr.bf16.mxu0 %v9337
  %9393 = vmatpush1.bf16.msra.mxu0 %v9336
  %9394 = vmatprep.subr.bf16.mxu0 %v9341
  %9395 = vmatpush1.bf16.msra.mxu0 %v9340
  %9396 = vmatprep.subr.bf16.mxu0 %v9345
  %9397 = vmatpush1.bf16.msra.mxu0 %v9344
  %9398 = vmatprep.subr.bf16.mxu0 %v9349
  %9399 = vmatpush1.bf16.msra.mxu0 %v9348
  %9400 = vmatprep.subr.bf16.mxu0 0
  %9401 = vmatpush1.bf16.msra.mxu0 0
  %9402 = vmatprep.subr.bf16.mxu0 0
  %9403 = vmatpush1.bf16.msra.mxu0 0
  %9404 = vmatprep.subr.bf16.mxu0 0
  %9405 = vmatpush1.bf16.msra.mxu0 0
  %9406 = vmatprep.subr.bf16.mxu0 0
  %9407 = vmatpush1.bf16.msra.mxu0 0
  %9408 = vmatprep.subr.bf16.mxu0 0
  %9409 = vmatpush1.bf16.msra.mxu0 0
  %9410 = vmatprep.subr.bf16.mxu0 0
  %9411 = vmatpush1.bf16.msra.mxu0 0
  %9412 = vmatprep.subr.bf16.mxu0 0
  %9413 = vmatpush1.bf16.msra.mxu0 0
  %9414 = vmatprep.subr.bf16.mxu0 0
  %9415 = vmatpush1.bf16.msra.mxu0 0
  %9416 = vmatprep.mubr.bf16.mxu0 0
  %9417 = vmatmul.mubr.bf16.gmra.mrb[0].mxu0 %v9169
  %v9418 = vpop.f32.mrb[0].mxu0
  %v9419 = vadd.f32 %v9207, %v9418
  %v9420 = vpop.f32.mrb[0].mxu0
  %v9421 = vadd.f32 %v9211, %v9420
  %v9422 = vpop.f32.mrb[0].mxu0
  %v9423 = vadd.f32 %v9207, %v9422
  %v9424 = vpop.f32.mrb[0].mxu0
  %v9425 = vadd.f32 %v9211, %v9424
  %9426 = vdwg.mxu0
  %9427 = vmatprep.subr.bf16.mxu0 %v9323
  %9428 = vmatpush1.bf16.msra.mxu0 %v9322
  %9429 = vmatprep.subr.bf16.mxu0 %v9327
  %9430 = vmatpush1.bf16.msra.mxu0 %v9326
  %9431 = vmatprep.subr.bf16.mxu0 %v9331
  %9432 = vmatpush1.bf16.msra.mxu0 %v9330
  %9433 = vmatprep.subr.bf16.mxu0 %v9335
  %9434 = vmatpush1.bf16.msra.mxu0 %v9334
  %9435 = vmatprep.subr.bf16.mxu0 %v9339
  %9436 = vmatpush1.bf16.msra.mxu0 %v9338
  %9437 = vmatprep.subr.bf16.mxu0 %v9343
  %9438 = vmatpush1.bf16.msra.mxu0 %v9342
  %9439 = vmatprep.subr.bf16.mxu0 %v9347
  %9440 = vmatpush1.bf16.msra.mxu0 %v9346
  %9441 = vmatprep.subr.bf16.mxu0 %v9351
  %9442 = vmatpush1.bf16.msra.mxu0 %v9350
  %9443 = vmatprep.subr.bf16.mxu0 0
  %9444 = vmatpush1.bf16.msra.mxu0 0
  %9445 = vmatprep.subr.bf16.mxu0 0
  %9446 = vmatpush1.bf16.msra.mxu0 0
  %9447 = vmatprep.subr.bf16.mxu0 0
  %9448 = vmatpush1.bf16.msra.mxu0 0
  %9449 = vmatprep.subr.bf16.mxu0 0
  %9450 = vmatpush1.bf16.msra.mxu0 0
  %9451 = vmatprep.subr.bf16.mxu0 0
  %9452 = vmatpush1.bf16.msra.mxu0 0
  %9453 = vmatprep.subr.bf16.mxu0 0
  %9454 = vmatpush1.bf16.msra.mxu0 0
  %9455 = vmatprep.subr.bf16.mxu0 0
  %9456 = vmatpush1.bf16.msra.mxu0 0
  %9457 = vmatprep.subr.bf16.mxu0 0
  %9458 = vmatpush1.bf16.msra.mxu0 0
  %9459 = vmatprep.mubr.bf16.mxu0 0
  %9460 = vmatmul.mubr.bf16.gmra.mrb[0].mxu0 %v9169
  %v9461 = vpop.f32.mrb[0].mxu0
  %v9462 = vadd.f32 %v9215, %v9461
  %v9463 = vpop.f32.mrb[0].mxu0
  %v9464 = vadd.f32 %v9219, %v9463
  %v9465 = vpop.f32.mrb[0].mxu0
  %v9466 = vadd.f32 %v9215, %v9465
  %v9467 = vpop.f32.mrb[0].mxu0
  %v9468 = vadd.f32 %v9219, %v9467
  %9469 = vdwg.mxu0
  %v9470 = vpack.c.bf16 %v9423, %v9419
  %v9471 = vpack.c.bf16 %v9425, %v9421
  %v9472 = vpack.c.bf16 %v9466, %v9462
  %v9473 = vpack.c.bf16 %v9468, %v9464
  %9474 = vst [vmem:[%s3688] sm:$0xff] %v9470
  %9475 = vst [vmem:[%s3688 + $0x8] sm:$0xff] %v9471
  %9476 = vst [vmem:[%s3688 + $0x10] sm:$0xff] %v9472
  %9477 = vst [vmem:[%s3688 + $0x18] sm:$0xff] %v9473
  %v9478 = vld [vmem:[%s4332] sm:$0xff]
  %v9479 = vld [vmem:[%s4332 + $0x8] sm:$0xff]
  %v9480 = vld [vmem:[%s4332 + $0x10] sm:$0xff]
  %v9481 = vld [vmem:[%s4332 + $0x18] sm:$0xff]
  %v9482 = vunpack.c.l.bf16 %v9478
  %v9483 = vunpack.c.l.bf16 %v9479
  %v9484 = vunpack.c.l.bf16 %v9480
  %v9485 = vunpack.c.l.bf16 %v9481
  %v9486 = vunpack.c.h.bf16 %v9478
  %v9487 = vunpack.c.h.bf16 %v9479
  %v9488 = vunpack.c.h.bf16 %v9480
  %v9489 = vunpack.c.h.bf16 %v9481
  %v9490 = vld [vmem:[%s5] sm:$0xff]
  %v9491 = vld [vmem:[%s5 + $0x8] sm:$0xff]
  %v9492 = vld [vmem:[%s5 + $0x10] sm:$0xff]
  %v9493 = vld [vmem:[%s5 + $0x18] sm:$0xff]
  %v9494 = vld [vmem:[%s5 + $0x20] sm:$0xff]
  %v9495 = vld [vmem:[%s5 + $0x28] sm:$0xff]
  %v9496 = vld [vmem:[%s5 + $0x30] sm:$0xff]
  %v9497 = vld [vmem:[%s5 + $0x38] sm:$0xff]
  %v9498 = vld [vmem:[%s5 + $0x40] sm:$0xff]
  %v9499 = vld [vmem:[%s5 + $0x48] sm:$0xff]
  %v9500 = vld [vmem:[%s5 + $0x50] sm:$0xff]
  %v9501 = vld [vmem:[%s5 + $0x58] sm:$0xff]
  %v9502 = vld [vmem:[%s5 + $0x60] sm:$0xff]
  %v9503 = vld [vmem:[%s5 + $0x68] sm:$0xff]
  %v9504 = vld [vmem:[%s5 + $0x70] sm:$0xff]
  %v9505 = vld [vmem:[%s5 + $0x78] sm:$0xff]
  %v9506 = vld [vmem:[%s5 + $0x80] sm:$0xff]
  %v9507 = vld [vmem:[%s5 + $0x88] sm:$0xff]
  %v9508 = vld [vmem:[%s5 + $0x90] sm:$0xff]
  %v9509 = vld [vmem:[%s5 + $0x98] sm:$0xff]
  %v9510 = vld [vmem:[%s5 + $0xa0] sm:$0xff]
  %v9511 = vld [vmem:[%s5 + $0xa8] sm:$0xff]
  %v9512 = vld [vmem:[%s5 + $0xb0] sm:$0xff]
  %v9513 = vld [vmem:[%s5 + $0xb8] sm:$0xff]
  %v9514 = vld [vmem:[%s5 + $0xc0] sm:$0xff]
  %v9515 = vld [vmem:[%s5 + $0xc8] sm:$0xff]
  %v9516 = vld [vmem:[%s5 + $0xd0] sm:$0xff]
  %v9517 = vld [vmem:[%s5 + $0xd8] sm:$0xff]
  %v9518 = vld [vmem:[%s5 + $0xe0] sm:$0xff]
  %v9519 = vld [vmem:[%s5 + $0xe8] sm:$0xff]
  %v9520 = vld [vmem:[%s5 + $0xf0] sm:$0xff]
  %v9521 = vld [vmem:[%s5 + $0xf8] sm:$0xff]
  %v9554 = vunpack.c.l.b16 %v9490
  %v9555 = vunpack.c.h.b16 %v9490
  %v9556 = vunpack.c.l.b16 %v9491
  %v9557 = vunpack.c.h.b16 %v9491
  %v9558 = vunpack.c.l.b16 %v9492
  %v9559 = vunpack.c.h.b16 %v9492
  %v9560 = vunpack.c.l.b16 %v9493
  %v9561 = vunpack.c.h.b16 %v9493
  %v9562 = vunpack.c.l.b16 %v9494
  %v9563 = vunpack.c.h.b16 %v9494
  %v9564 = vunpack.c.l.b16 %v9495
  %v9565 = vunpack.c.h.b16 %v9495
  %v9566 = vunpack.c.l.b16 %v9496
  %v9567 = vunpack.c.h.b16 %v9496
  %v9568 = vunpack.c.l.b16 %v9497
  %v9569 = vunpack.c.h.b16 %v9497
  %v9570 = vunpack.c.l.b16 %v9498
  %v9571 = vunpack.c.h.b16 %v9498
  %v9572 = vunpack.c.l.b16 %v9499
  %v9573 = vunpack.c.h.b16 %v9499
  %v9574 = vunpack.c.l.b16 %v9500
  %v9575 = vunpack.c.h.b16 %v9500
  %v9576 = vunpack.c.l.b16 %v9501
  %v9577 = vunpack.c.h.b16 %v9501
  %v9578 = vunpack.c.l.b16 %v9502
  %v9579 = vunpack.c.h.b16 %v9502
  %v9580 = vunpack.c.l.b16 %v9503
  %v9581 = vunpack.c.h.b16 %v9503
  %v9582 = vunpack.c.l.b16 %v9504
  %v9583 = vunpack.c.h.b16 %v9504
  %v9584 = vunpack.c.l.b16 %v9505
  %v9585 = vunpack.c.h.b16 %v9505
  %v9586 = vunpack.c.l.b16 %v9506
  %v9587 = vunpack.c.h.b16 %v9506
  %v9588 = vunpack.c.l.b16 %v9507
  %v9589 = vunpack.c.h.b16 %v9507
  %v9590 = vunpack.c.l.b16 %v9508
  %v9591 = vunpack.c.h.b16 %v9508
  %v9592 = vunpack.c.l.b16 %v9509
  %v9593 = vunpack.c.h.b16 %v9509
  %v9594 = vunpack.c.l.b16 %v9510
  %v9595 = vunpack.c.h.b16 %v9510
  %v9596 = vunpack.c.l.b16 %v9511
  %v9597 = vunpack.c.h.b16 %v9511
  %v9598 = vunpack.c.l.b16 %v9512
  %v9599 = vunpack.c.h.b16 %v9512
  %v9600 = vunpack.c.l.b16 %v9513
  %v9601 = vunpack.c.h.b16 %v9513
  %v9602 = vunpack.c.l.b16 %v9514
  %v9603 = vunpack.c.h.b16 %v9514
  %v9604 = vunpack.c.l.b16 %v9515
  %v9605 = vunpack.c.h.b16 %v9515
  %v9606 = vunpack.c.l.b16 %v9516
  %v9607 = vunpack.c.h.b16 %v9516
  %v9608 = vunpack.c.l.b16 %v9517
  %v9609 = vunpack.c.h.b16 %v9517
  %v9610 = vunpack.c.l.b16 %v9518
  %v9611 = vunpack.c.h.b16 %v9518
  %v9612 = vunpack.c.l.b16 %v9519
  %v9613 = vunpack.c.h.b16 %v9519
  %v9614 = vunpack.c.l.b16 %v9520
  %v9615 = vunpack.c.h.b16 %v9520
  %v9616 = vunpack.c.l.b16 %v9521
  %v9617 = vunpack.c.h.b16 %v9521
  %v9618 = vpack.c.b16 %v9558, %v9554
  %v9619 = vpack.c.b16 %v9559, %v9555
  %v9620 = vpack.c.b16 %v9560, %v9556
  %v9621 = vpack.c.b16 %v9561, %v9557
  %v9622 = vpack.c.b16 %v9566, %v9562
  %v9623 = vpack.c.b16 %v9567, %v9563
  %v9624 = vpack.c.b16 %v9568, %v9564
  %v9625 = vpack.c.b16 %v9569, %v9565
  %v9626 = vpack.c.b16 %v9574, %v9570
  %v9627 = vpack.c.b16 %v9575, %v9571
  %v9628 = vpack.c.b16 %v9576, %v9572
  %v9629 = vpack.c.b16 %v9577, %v9573
  %v9630 = vpack.c.b16 %v9582, %v9578
  %v9631 = vpack.c.b16 %v9583, %v9579
  %v9632 = vpack.c.b16 %v9584, %v9580
  %v9633 = vpack.c.b16 %v9585, %v9581
  %v9634 = vpack.c.b16 %v9590, %v9586
  %v9635 = vpack.c.b16 %v9591, %v9587
  %v9636 = vpack.c.b16 %v9592, %v9588
  %v9637 = vpack.c.b16 %v9593, %v9589
  %v9638 = vpack.c.b16 %v9598, %v9594
  %v9639 = vpack.c.b16 %v9599, %v9595
  %v9640 = vpack.c.b16 %v9600, %v9596
  %v9641 = vpack.c.b16 %v9601, %v9597
  %v9642 = vpack.c.b16 %v9606, %v9602
  %v9643 = vpack.c.b16 %v9607, %v9603
  %v9644 = vpack.c.b16 %v9608, %v9604
  %v9645 = vpack.c.b16 %v9609, %v9605
  %v9646 = vpack.c.b16 %v9614, %v9610
  %v9647 = vpack.c.b16 %v9615, %v9611
  %v9648 = vpack.c.b16 %v9616, %v9612
  %v9649 = vpack.c.b16 %v9617, %v9613
  %9682 = vmatprep.subr.bf16.mxu0 %v9619
  %9683 = vmatpush1.bf16.msra.mxu0 %v9618
  %9684 = vmatprep.subr.bf16.mxu0 %v9623
  %9685 = vmatpush1.bf16.msra.mxu0 %v9622
  %9686 = vmatprep.subr.bf16.mxu0 %v9627
  %9687 = vmatpush1.bf16.msra.mxu0 %v9626
  %9688 = vmatprep.subr.bf16.mxu0 %v9631
  %9689 = vmatpush1.bf16.msra.mxu0 %v9630
  %9690 = vmatprep.subr.bf16.mxu0 %v9635
  %9691 = vmatpush1.bf16.msra.mxu0 %v9634
  %9692 = vmatprep.subr.bf16.mxu0 %v9639
  %9693 = vmatpush1.bf16.msra.mxu0 %v9638
  %9694 = vmatprep.subr.bf16.mxu0 %v9643
  %9695 = vmatpush1.bf16.msra.mxu0 %v9642
  %9696 = vmatprep.subr.bf16.mxu0 %v9647
  %9697 = vmatpush1.bf16.msra.mxu0 %v9646
  %9698 = vmatprep.subr.bf16.mxu0 0
  %9699 = vmatpush1.bf16.msra.mxu0 0
  %9700 = vmatprep.subr.bf16.mxu0 0
  %9701 = vmatpush1.bf16.msra.mxu0 0
  %9702 = vmatprep.subr.bf16.mxu0 0
  %9703 = vmatpush1.bf16.msra.mxu0 0
  %9704 = vmatprep.subr.bf16.mxu0 0
  %9705 = vmatpush1.bf16.msra.mxu0 0
  %9706 = vmatprep.subr.bf16.mxu0 0
  %9707 = vmatpush1.bf16.msra.mxu0 0
  %9708 = vmatprep.subr.bf16.mxu0 0
  %9709 = vmatpush1.bf16.msra.mxu0 0
  %9710 = vmatprep.subr.bf16.mxu0 0
  %9711 = vmatpush1.bf16.msra.mxu0 0
  %9712 = vmatprep.subr.bf16.mxu0 0
  %9713 = vmatpush1.bf16.msra.mxu0 0
  %9714 = vmatprep.mubr.bf16.mxu0 0
  %9715 = vmatmul.mubr.bf16.gmra.mrb[0].mxu0 %v9169
  %v9716 = vpop.f32.mrb[0].mxu0
  %v9717 = vadd.f32 0.0, %v9716
  %v9718 = vpop.f32.mrb[0].mxu0
  %v9719 = vadd.f32 0.0, %v9718
  %v9720 = vpop.f32.mrb[0].mxu0
  %v9721 = vadd.f32 0.0, %v9720
  %v9722 = vpop.f32.mrb[0].mxu0
  %v9723 = vadd.f32 0.0, %v9722
  %9724 = vdwg.mxu0
  %9725 = vmatprep.subr.bf16.mxu0 %v9621
  %9726 = vmatpush1.bf16.msra.mxu0 %v9620
  %9727 = vmatprep.subr.bf16.mxu0 %v9625
  %9728 = vmatpush1.bf16.msra.mxu0 %v9624
  %9729 = vmatprep.subr.bf16.mxu0 %v9629
  %9730 = vmatpush1.bf16.msra.mxu0 %v9628
  %9731 = vmatprep.subr.bf16.mxu0 %v9633
  %9732 = vmatpush1.bf16.msra.mxu0 %v9632
  %9733 = vmatprep.subr.bf16.mxu0 %v9637
  %9734 = vmatpush1.bf16.msra.mxu0 %v9636
  %9735 = vmatprep.subr.bf16.mxu0 %v9641
  %9736 = vmatpush1.bf16.msra.mxu0 %v9640
  %9737 = vmatprep.subr.bf16.mxu0 %v9645
  %9738 = vmatpush1.bf16.msra.mxu0 %v9644
  %9739 = vmatprep.subr.bf16.mxu0 %v9649
  %9740 = vmatpush1.bf16.msra.mxu0 %v9648
  %9741 = vmatprep.subr.bf16.mxu0 0
  %9742 = vmatpush1.bf16.msra.mxu0 0
  %9743 = vmatprep.subr.bf16.mxu0 0
  %9744 = vmatpush1.bf16.msra.mxu0 0
  %9745 = vmatprep.subr.bf16.mxu0 0
  %9746 = vmatpush1.bf16.msra.mxu0 0
  %9747 = vmatprep.subr.bf16.mxu0 0
  %9748 = vmatpush1.bf16.msra.mxu0 0
  %9749 = vmatprep.subr.bf16.mxu0 0
  %9750 = vmatpush1.bf16.msra.mxu0 0
  %9751 = vmatprep.subr.bf16.mxu0 0
  %9752 = vmatpush1.bf16.msra.mxu0 0
  %9753 = vmatprep.subr.bf16.mxu0 0
  %9754 = vmatpush1.bf16.msra.mxu0 0
  %9755 = vmatprep.subr.bf16.mxu0 0
  %9756 = vmatpush1.bf16.msra.mxu0 0
  %9757 = vmatprep.mubr.bf16.mxu0 0
  %9758 = vmatmul.mubr.bf16.gmra.mrb[0].mxu0 %v9169
  %v9759 = vpop.f32.mrb[0].mxu0
  %v9760 = vadd.f32 0.0, %v9759
  %v9761 = vpop.f32.mrb[0].mxu0
  %v9762 = vadd.f32 0.0, %v9761
  %v9763 = vpop.f32.mrb[0].mxu0
  %v9764 = vadd.f32 0.0, %v9763
  %v9765 = vpop.f32.mrb[0].mxu0
  %v9766 = vadd.f32 0.0, %v9765
  %9767 = vdwg.mxu0
  %v9768 = vadd.f32 %v9482, %v9717
  %v9769 = vadd.f32 %v9483, %v9719
  %v9770 = vadd.f32 %v9484, %v9760
  %v9771 = vadd.f32 %v9485, %v9762
  %v9772 = vadd.f32 %v9486, %v9721
  %v9773 = vadd.f32 %v9487, %v9723
  %v9774 = vadd.f32 %v9488, %v9764
  %v9775 = vadd.f32 %v9489, %v9766
  %v9776 = vmul.f32 %v9768, 0.5
  %v9777 = vmul.f32 %v9769, 0.5
  %v9778 = vmul.f32 %v9770, 0.5
  %v9779 = vmul.f32 %v9772, 0.5
  %v9780 = vmul.f32 %v9773, 0.5
  %v9781 = vmul.f32 %v9774, 0.5
  %v9782 = vtanh.pop %v9776
  %v9783 = vtanh.pop %v9777
  %v9784 = vtanh.pop %v9778
  %v9785 = vtanh.pop %v9779
  %v9786 = vtanh.pop %v9780
  %v9787 = vtanh.pop %v9781
  %v9788 = vmul.f32 %v9782, 0.5
  %v9789 = vmul.f32 %v9783, 0.5
  %v9790 = vmul.f32 %v9784, 0.5
  %v9791 = vmul.f32 %v9785, 0.5
  %v9792 = vmul.f32 %v9786, 0.5
  %v9793 = vmul.f32 %v9787, 0.5
  %v9794 = vadd.f32 %v9788, 0.5
  %v9795 = vadd.f32 %v9789, 0.5
  %v9796 = vadd.f32 %v9790, 0.5
  %v9797 = vadd.f32 %v9791, 0.5
  %v9798 = vadd.f32 %v9792, 0.5
  %v9799 = vadd.f32 %v9793, 0.5
  %v9800 = vtanh.pop %v9771
  %v9801 = vtanh.pop %v9775
  %v9802 = vmul.f32 %v9795, %v9163
  %v9803 = vmul.f32 %v9798, %v9164
  %v9804 = vmul.f32 %v9794, %v9800
  %v9805 = vmul.f32 %v9797, %v9801
  %v9806 = vadd.f32 %v9802, %v9804
  %v9807 = vadd.f32 %v9803, %v9805
  %v9808 = vtanh.pop %v9806
  %v9809 = vtanh.pop %v9807
  %v9810 = vmul.f32 %v9796, %v9808
  %v9811 = vmul.f32 %v9799, %v9809
  %v9812 = vpack.c.bf16 %v9811, %v9810
  %v9813 = vld [vmem:[%s7] sm:$0xff]
  %v9814 = vld [vmem:[%s7 + $0x8] sm:$0xff]
  %v9815 = vld [vmem:[%s7 + $0x10] sm:$0xff]
  %v9816 = vld [vmem:[%s7 + $0x18] sm:$0xff]
  %v9817 = vld [vmem:[%s7 + $0x20] sm:$0xff]
  %v9818 = vld [vmem:[%s7 + $0x28] sm:$0xff]
  %v9819 = vld [vmem:[%s7 + $0x30] sm:$0xff]
  %v9820 = vld [vmem:[%s7 + $0x38] sm:$0xff]
  %v9821 = vld [vmem:[%s7 + $0x40] sm:$0xff]
  %v9822 = vld [vmem:[%s7 + $0x48] sm:$0xff]
  %v9823 = vld [vmem:[%s7 + $0x50] sm:$0xff]
  %v9824 = vld [vmem:[%s7 + $0x58] sm:$0xff]
  %v9825 = vld [vmem:[%s7 + $0x60] sm:$0xff]
  %v9826 = vld [vmem:[%s7 + $0x68] sm:$0xff]
  %v9827 = vld [vmem:[%s7 + $0x70] sm:$0xff]
  %v9828 = vld [vmem:[%s7 + $0x78] sm:$0xff]
  %v9829 = vld [vmem:[%s7 + $0x80] sm:$0xff]
  %v9830 = vld [vmem:[%s7 + $0x88] sm:$0xff]
  %v9831 = vld [vmem:[%s7 + $0x90] sm:$0xff]
  %v9832 = vld [vmem:[%s7 + $0x98] sm:$0xff]
  %v9833 = vld [vmem:[%s7 + $0xa0] sm:$0xff]
  %v9834 = vld [vmem:[%s7 + $0xa8] sm:$0xff]
  %v9835 = vld [vmem:[%s7 + $0xb0] sm:$0xff]
  %v9836 = vld [vmem:[%s7 + $0xb8] sm:$0xff]
  %v9837 = vld [vmem:[%s7 + $0xc0] sm:$0xff]
  %v9838 = vld [vmem:[%s7 + $0xc8] sm:$0xff]
  %v9839 = vld [vmem:[%s7 + $0xd0] sm:$0xff]
  %v9840 = vld [vmem:[%s7 + $0xd8] sm:$0xff]
  %v9841 = vld [vmem:[%s7 + $0xe0] sm:$0xff]
  %v9842 = vld [vmem:[%s7 + $0xe8] sm:$0xff]
  %v9843 = vld [vmem:[%s7 + $0xf0] sm:$0xff]
  %v9844 = vld [vmem:[%s7 + $0xf8] sm:$0xff]
  %v9845 = vld [vmem:[%s9] sm:$0xf]
  %v9847 = vlaneseq
  %v9848 = vshrl.u32 %v9847, 7
  %v9849 = vsub.s32 0, %v9848
  %v9850 = vrot.slane %v9845, %v9849
  %v9851 = vlaneseq
  %v9852 = vshrl.u32 %v9851, 7
  %v9853 = vsub.s32 1, %v9852
  %v9854 = vrot.slane %v9845, %v9853
  %v9855 = vlaneseq
  %v9856 = vshrl.u32 %v9855, 7
  %v9857 = vsub.s32 2, %v9856
  %v9858 = vrot.slane %v9845, %v9857
  %v9859 = vlaneseq
  %v9860 = vshrl.u32 %v9859, 7
  %v9861 = vsub.s32 3, %v9860
  %v9862 = vrot.slane %v9845, %v9861
  %v9899 = vunpack.c.l.b16 %v9813
  %v9900 = vunpack.c.h.b16 %v9813
  %v9901 = vunpack.c.l.b16 %v9814
  %v9902 = vunpack.c.h.b16 %v9814
  %v9903 = vunpack.c.l.b16 %v9815
  %v9904 = vunpack.c.h.b16 %v9815
  %v9905 = vunpack.c.l.b16 %v9816
  %v9906 = vunpack.c.h.b16 %v9816
  %v9907 = vunpack.c.l.b16 %v9817
  %v9908 = vunpack.c.h.b16 %v9817
  %v9909 = vunpack.c.l.b16 %v9818
  %v9910 = vunpack.c.h.b16 %v9818
  %v9911 = vunpack.c.l.b16 %v9819
  %v9912 = vunpack.c.h.b16 %v9819
  %v9913 = vunpack.c.l.b16 %v9820
  %v9914 = vunpack.c.h.b16 %v9820
  %v9915 = vunpack.c.l.b16 %v9821
  %v9916 = vunpack.c.h.b16 %v9821
  %v9917 = vunpack.c.l.b16 %v9822
  %v9918 = vunpack.c.h.b16 %v9822
  %v9919 = vunpack.c.l.b16 %v9823
  %v9920 = vunpack.c.h.b16 %v9823
  %v9921 = vunpack.c.l.b16 %v9824
  %v9922 = vunpack.c.h.b16 %v9824
  %v9923 = vunpack.c.l.b16 %v9825
  %v9924 = vunpack.c.h.b16 %v9825
  %v9925 = vunpack.c.l.b16 %v9826
  %v9926 = vunpack.c.h.b16 %v9826
  %v9927 = vunpack.c.l.b16 %v9827
  %v9928 = vunpack.c.h.b16 %v9827
  %v9929 = vunpack.c.l.b16 %v9828
  %v9930 = vunpack.c.h.b16 %v9828
  %v9931 = vunpack.c.l.b16 %v9829
  %v9932 = vunpack.c.h.b16 %v9829
  %v9933 = vunpack.c.l.b16 %v9830
  %v9934 = vunpack.c.h.b16 %v9830
  %v9935 = vunpack.c.l.b16 %v9831
  %v9936 = vunpack.c.h.b16 %v9831
  %v9937 = vunpack.c.l.b16 %v9832
  %v9938 = vunpack.c.h.b16 %v9832
  %v9939 = vunpack.c.l.b16 %v9833
  %v9940 = vunpack.c.h.b16 %v9833
  %v9941 = vunpack.c.l.b16 %v9834
  %v9942 = vunpack.c.h.b16 %v9834
  %v9943 = vunpack.c.l.b16 %v9835
  %v9944 = vunpack.c.h.b16 %v9835
  %v9945 = vunpack.c.l.b16 %v9836
  %v9946 = vunpack.c.h.b16 %v9836
  %v9947 = vunpack.c.l.b16 %v9837
  %v9948 = vunpack.c.h.b16 %v9837
  %v9949 = vunpack.c.l.b16 %v9838
  %v9950 = vunpack.c.h.b16 %v9838
  %v9951 = vunpack.c.l.b16 %v9839
  %v9952 = vunpack.c.h.b16 %v9839
  %v9953 = vunpack.c.l.b16 %v9840
  %v9954 = vunpack.c.h.b16 %v9840
  %v9955 = vunpack.c.l.b16 %v9841
  %v9956 = vunpack.c.h.b16 %v9841
  %v9957 = vunpack.c.l.b16 %v9842
  %v9958 = vunpack.c.h.b16 %v9842
  %v9959 = vunpack.c.l.b16 %v9843
  %v9960 = vunpack.c.h.b16 %v9843
  %v9961 = vunpack.c.l.b16 %v9844
  %v9962 = vunpack.c.h.b16 %v9844
  %v9963 = vpack.c.b16 %v9903, %v9899
  %v9964 = vpack.c.b16 %v9904, %v9900
  %v9965 = vpack.c.b16 %v9905, %v9901
  %v9966 = vpack.c.b16 %v9906, %v9902
  %v9967 = vpack.c.b16 %v9911, %v9907
  %v9968 = vpack.c.b16 %v9912, %v9908
  %v9969 = vpack.c.b16 %v9913, %v9909
  %v9970 = vpack.c.b16 %v9914, %v9910
  %v9971 = vpack.c.b16 %v9919, %v9915
  %v9972 = vpack.c.b16 %v9920, %v9916
  %v9973 = vpack.c.b16 %v9921, %v9917
  %v9974 = vpack.c.b16 %v9922, %v9918
  %v9975 = vpack.c.b16 %v9927, %v9923
  %v9976 = vpack.c.b16 %v9928, %v9924
  %v9977 = vpack.c.b16 %v9929, %v9925
  %v9978 = vpack.c.b16 %v9930, %v9926
  %v9979 = vpack.c.b16 %v9935, %v9931
  %v9980 = vpack.c.b16 %v9936, %v9932
  %v9981 = vpack.c.b16 %v9937, %v9933
  %v9982 = vpack.c.b16 %v9938, %v9934
  %v9983 = vpack.c.b16 %v9943, %v9939
  %v9984 = vpack.c.b16 %v9944, %v9940
  %v9985 = vpack.c.b16 %v9945, %v9941
  %v9986 = vpack.c.b16 %v9946, %v9942
  %v9987 = vpack.c.b16 %v9951, %v9947
  %v9988 = vpack.c.b16 %v9952, %v9948
  %v9989 = vpack.c.b16 %v9953, %v9949
  %v9990 = vpack.c.b16 %v9954, %v9950
  %v9991 = vpack.c.b16 %v9959, %v9955
  %v9992 = vpack.c.b16 %v9960, %v9956
  %v9993 = vpack.c.b16 %v9961, %v9957
  %v9994 = vpack.c.b16 %v9962, %v9958
  %10027 = vmatprep.subr.bf16.mxu0 %v9964
  %10028 = vmatpush1.bf16.msra.mxu0 %v9963
  %10029 = vmatprep.subr.bf16.mxu0 %v9968
  %10030 = vmatpush1.bf16.msra.mxu0 %v9967
  %10031 = vmatprep.subr.bf16.mxu0 %v9972
  %10032 = vmatpush1.bf16.msra.mxu0 %v9971
  %10033 = vmatprep.subr.bf16.mxu0 %v9976
  %10034 = vmatpush1.bf16.msra.mxu0 %v9975
  %10035 = vmatprep.subr.bf16.mxu0 %v9980
  %10036 = vmatpush1.bf16.msra.mxu0 %v9979
  %10037 = vmatprep.subr.bf16.mxu0 %v9984
  %10038 = vmatpush1.bf16.msra.mxu0 %v9983
  %10039 = vmatprep.subr.bf16.mxu0 %v9988
  %10040 = vmatpush1.bf16.msra.mxu0 %v9987
  %10041 = vmatprep.subr.bf16.mxu0 %v9992
  %10042 = vmatpush1.bf16.msra.mxu0 %v9991
  %10043 = vmatprep.subr.bf16.mxu0 0
  %10044 = vmatpush1.bf16.msra.mxu0 0
  %10045 = vmatprep.subr.bf16.mxu0 0
  %10046 = vmatpush1.bf16.msra.mxu0 0
  %10047 = vmatprep.subr.bf16.mxu0 0
  %10048 = vmatpush1.bf16.msra.mxu0 0
  %10049 = vmatprep.subr.bf16.mxu0 0
  %10050 = vmatpush1.bf16.msra.mxu0 0
  %10051 = vmatprep.subr.bf16.mxu0 0
  %10052 = vmatpush1.bf16.msra.mxu0 0
  %10053 = vmatprep.subr.bf16.mxu0 0
  %10054 = vmatpush1.bf16.msra.mxu0 0
  %10055 = vmatprep.subr.bf16.mxu0 0
  %10056 = vmatpush1.bf16.msra.mxu0 0
  %10057 = vmatprep.subr.bf16.mxu0 0
  %10058 = vmatpush1.bf16.msra.mxu0 0
  %10059 = vmatprep.mubr.bf16.mxu0 0
  %10060 = vmatmul.mubr.bf16.gmra.mrb[0].mxu0 %v9812
  %v10061 = vpop.f32.mrb[0].mxu0
  %v10062 = vadd.f32 %v9850, %v10061
  %v10063 = vpop.f32.mrb[0].mxu0
  %v10064 = vadd.f32 %v9854, %v10063
  %v10065 = vpop.f32.mrb[0].mxu0
  %v10066 = vadd.f32 %v9850, %v10065
  %v10067 = vpop.f32.mrb[0].mxu0
  %v10068 = vadd.f32 %v9854, %v10067
  %10069 = vdwg.mxu0
  %10070 = vmatprep.subr.bf16.mxu0 %v9966
  %10071 = vmatpush1.bf16.msra.mxu0 %v9965
  %10072 = vmatprep.subr.bf16.mxu0 %v9970
  %10073 = vmatpush1.bf16.msra.mxu0 %v9969
  %10074 = vmatprep.subr.bf16.mxu0 %v9974
  %10075 = vmatpush1.bf16.msra.mxu0 %v9973
  %10076 = vmatprep.subr.bf16.mxu0 %v9978
  %10077 = vmatpush1.bf16.msra.mxu0 %v9977
  %10078 = vmatprep.subr.bf16.mxu0 %v9982
  %10079 = vmatpush1.bf16.msra.mxu0 %v9981
  %10080 = vmatprep.subr.bf16.mxu0 %v9986
  %10081 = vmatpush1.bf16.msra.mxu0 %v9985
  %10082 = vmatprep.subr.bf16.mxu0 %v9990
  %10083 = vmatpush1.bf16.msra.mxu0 %v9989
  %10084 = vmatprep.subr.bf16.mxu0 %v9994
  %10085 = vmatpush1.bf16.msra.mxu0 %v9993
  %10086 = vmatprep.subr.bf16.mxu0 0
  %10087 = vmatpush1.bf16.msra.mxu0 0
  %10088 = vmatprep.subr.bf16.mxu0 0
  %10089 = vmatpush1.bf16.msra.mxu0 0
  %10090 = vmatprep.subr.bf16.mxu0 0
  %10091 = vmatpush1.bf16.msra.mxu0 0
  %10092 = vmatprep.subr.bf16.mxu0 0
  %10093 = vmatpush1.bf16.msra.mxu0 0
  %10094 = vmatprep.subr.bf16.mxu0 0
  %10095 = vmatpush1.bf16.msra.mxu0 0
  %10096 = vmatprep.subr.bf16.mxu0 0
  %10097 = vmatpush1.bf16.msra.mxu0 0
  %10098 = vmatprep.subr.bf16.mxu0 0
  %10099 = vmatpush1.bf16.msra.mxu0 0
  %10100 = vmatprep.subr.bf16.mxu0 0
  %10101 = vmatpush1.bf16.msra.mxu0 0
  %10102 = vmatprep.mubr.bf16.mxu0 0
  %10103 = vmatmul.mubr.bf16.gmra.mrb[0].mxu0 %v9812
  %v10104 = vpop.f32.mrb[0].mxu0
  %v10105 = vadd.f32 %v9858, %v10104
  %v10106 = vpop.f32.mrb[0].mxu0
  %v10107 = vadd.f32 %v9862, %v10106
  %v10108 = vpop.f32.mrb[0].mxu0
  %v10109 = vadd.f32 %v9858, %v10108
  %v10110 = vpop.f32.mrb[0].mxu0
  %v10111 = vadd.f32 %v9862, %v10110
  %10112 = vdwg.mxu0
  %v10113 = vpack.c.bf16 %v10066, %v10062
  %v10114 = vpack.c.bf16 %v10068, %v10064
  %v10115 = vpack.c.bf16 %v10109, %v10105
  %v10116 = vpack.c.bf16 %v10111, %v10107
  %10117 = vst [vmem:[%s4332] sm:$0xff] %v10113
  %10118 = vst [vmem:[%s4332 + $0x8] sm:$0xff] %v10114
  %10119 = vst [vmem:[%s4332 + $0x10] sm:$0xff] %v10115
  %10120 = vst [vmem:[%s4332 + $0x18] sm:$0xff] %v10116
  %v10121 = vld [vmem:[%s4976] sm:$0xff]
  %v10122 = vld [vmem:[%s4976 + $0x8] sm:$0xff]
  %v10123 = vld [vmem:[%s4976 + $0x10] sm:$0xff]
  %v10124 = vld [vmem:[%s4976 + $0x18] sm:$0xff]
  %v10125 = vunpack.c.l.bf16 %v10121
  %v10126 = vunpack.c.l.bf16 %v10122
  %v10127 = vunpack.c.l.bf16 %v10123
  %v10128 = vunpack.c.l.bf16 %v10124
  %v10129 = vunpack.c.h.bf16 %v10121
  %v10130 = vunpack.c.h.bf16 %v10122
  %v10131 = vunpack.c.h.bf16 %v10123
  %v10132 = vunpack.c.h.bf16 %v10124
  %v10133 = vld [vmem:[%s5] sm:$0xff]
  %v10134 = vld [vmem:[%s5 + $0x8] sm:$0xff]
  %v10135 = vld [vmem:[%s5 + $0x10] sm:$0xff]
  %v10136 = vld [vmem:[%s5 + $0x18] sm:$0xff]
  %v10137 = vld [vmem:[%s5 + $0x20] sm:$0xff]
  %v10138 = vld [vmem:[%s5 + $0x28] sm:$0xff]
  %v10139 = vld [vmem:[%s5 + $0x30] sm:$0xff]
  %v10140 = vld [vmem:[%s5 + $0x38] sm:$0xff]
  %v10141 = vld [vmem:[%s5 + $0x40] sm:$0xff]
  %v10142 = vld [vmem:[%s5 + $0x48] sm:$0xff]
  %v10143 = vld [vmem:[%s5 + $0x50] sm:$0xff]
  %v10144 = vld [vmem:[%s5 + $0x58] sm:$0xff]
  %v10145 = vld [vmem:[%s5 + $0x60] sm:$0xff]
  %v10146 = vld [vmem:[%s5 + $0x68] sm:$0xff]
  %v10147 = vld [vmem:[%s5 + $0x70] sm:$0xff]
  %v10148 = vld [vmem:[%s5 + $0x78] sm:$0xff]
  %v10149 = vld [vmem:[%s5 + $0x80] sm:$0xff]
  %v10150 = vld [vmem:[%s5 + $0x88] sm:$0xff]
  %v10151 = vld [vmem:[%s5 + $0x90] sm:$0xff]
  %v10152 = vld [vmem:[%s5 + $0x98] sm:$0xff]
  %v10153 = vld [vmem:[%s5 + $0xa0] sm:$0xff]
  %v10154 = vld [vmem:[%s5 + $0xa8] sm:$0xff]
  %v10155 = vld [vmem:[%s5 + $0xb0] sm:$0xff]
  %v10156 = vld [vmem:[%s5 + $0xb8] sm:$0xff]
  %v10157 = vld [vmem:[%s5 + $0xc0] sm:$0xff]
  %v10158 = vld [vmem:[%s5 + $0xc8] sm:$0xff]
  %v10159 = vld [vmem:[%s5 + $0xd0] sm:$0xff]
  %v10160 = vld [vmem:[%s5 + $0xd8] sm:$0xff]
  %v10161 = vld [vmem:[%s5 + $0xe0] sm:$0xff]
  %v10162 = vld [vmem:[%s5 + $0xe8] sm:$0xff]
  %v10163 = vld [vmem:[%s5 + $0xf0] sm:$0xff]
  %v10164 = vld [vmem:[%s5 + $0xf8] sm:$0xff]
  %v10197 = vunpack.c.l.b16 %v10133
  %v10198 = vunpack.c.h.b16 %v10133
  %v10199 = vunpack.c.l.b16 %v10134
  %v10200 = vunpack.c.h.b16 %v10134
  %v10201 = vunpack.c.l.b16 %v10135
  %v10202 = vunpack.c.h.b16 %v10135
  %v10203 = vunpack.c.l.b16 %v10136
  %v10204 = vunpack.c.h.b16 %v10136
  %v10205 = vunpack.c.l.b16 %v10137
  %v10206 = vunpack.c.h.b16 %v10137
  %v10207 = vunpack.c.l.b16 %v10138
  %v10208 = vunpack.c.h.b16 %v10138
  %v10209 = vunpack.c.l.b16 %v10139
  %v10210 = vunpack.c.h.b16 %v10139
  %v10211 = vunpack.c.l.b16 %v10140
  %v10212 = vunpack.c.h.b16 %v10140
  %v10213 = vunpack.c.l.b16 %v10141
  %v10214 = vunpack.c.h.b16 %v10141
  %v10215 = vunpack.c.l.b16 %v10142
  %v10216 = vunpack.c.h.b16 %v10142
  %v10217 = vunpack.c.l.b16 %v10143
  %v10218 = vunpack.c.h.b16 %v10143
  %v10219 = vunpack.c.l.b16 %v10144
  %v10220 = vunpack.c.h.b16 %v10144
  %v10221 = vunpack.c.l.b16 %v10145
  %v10222 = vunpack.c.h.b16 %v10145
  %v10223 = vunpack.c.l.b16 %v10146
  %v10224 = vunpack.c.h.b16 %v10146
  %v10225 = vunpack.c.l.b16 %v10147
  %v10226 = vunpack.c.h.b16 %v10147
  %v10227 = vunpack.c.l.b16 %v10148
  %v10228 = vunpack.c.h.b16 %v10148
  %v10229 = vunpack.c.l.b16 %v10149
  %v10230 = vunpack.c.h.b16 %v10149
  %v10231 = vunpack.c.l.b16 %v10150
  %v10232 = vunpack.c.h.b16 %v10150
  %v10233 = vunpack.c.l.b16 %v10151
  %v10234 = vunpack.c.h.b16 %v10151
  %v10235 = vunpack.c.l.b16 %v10152
  %v10236 = vunpack.c.h.b16 %v10152
  %v10237 = vunpack.c.l.b16 %v10153
  %v10238 = vunpack.c.h.b16 %v10153
  %v10239 = vunpack.c.l.b16 %v10154
  %v10240 = vunpack.c.h.b16 %v10154
  %v10241 = vunpack.c.l.b16 %v10155
  %v10242 = vunpack.c.h.b16 %v10155
  %v10243 = vunpack.c.l.b16 %v10156
  %v10244 = vunpack.c.h.b16 %v10156
  %v10245 = vunpack.c.l.b16 %v10157
  %v10246 = vunpack.c.h.b16 %v10157
  %v10247 = vunpack.c.l.b16 %v10158
  %v10248 = vunpack.c.h.b16 %v10158
  %v10249 = vunpack.c.l.b16 %v10159
  %v10250 = vunpack.c.h.b16 %v10159
  %v10251 = vunpack.c.l.b16 %v10160
  %v10252 = vunpack.c.h.b16 %v10160
  %v10253 = vunpack.c.l.b16 %v10161
  %v10254 = vunpack.c.h.b16 %v10161
  %v10255 = vunpack.c.l.b16 %v10162
  %v10256 = vunpack.c.h.b16 %v10162
  %v10257 = vunpack.c.l.b16 %v10163
  %v10258 = vunpack.c.h.b16 %v10163
  %v10259 = vunpack.c.l.b16 %v10164
  %v10260 = vunpack.c.h.b16 %v10164
  %v10261 = vpack.c.b16 %v10201, %v10197
  %v10262 = vpack.c.b16 %v10202, %v10198
  %v10263 = vpack.c.b16 %v10203, %v10199
  %v10264 = vpack.c.b16 %v10204, %v10200
  %v10265 = vpack.c.b16 %v10209, %v10205
  %v10266 = vpack.c.b16 %v10210, %v10206
  %v10267 = vpack.c.b16 %v10211, %v10207
  %v10268 = vpack.c.b16 %v10212, %v10208
  %v10269 = vpack.c.b16 %v10217, %v10213
  %v10270 = vpack.c.b16 %v10218, %v10214
  %v10271 = vpack.c.b16 %v10219, %v10215
  %v10272 = vpack.c.b16 %v10220, %v10216
  %v10273 = vpack.c.b16 %v10225, %v10221
  %v10274 = vpack.c.b16 %v10226, %v10222
  %v10275 = vpack.c.b16 %v10227, %v10223
  %v10276 = vpack.c.b16 %v10228, %v10224
  %v10277 = vpack.c.b16 %v10233, %v10229
  %v10278 = vpack.c.b16 %v10234, %v10230
  %v10279 = vpack.c.b16 %v10235, %v10231
  %v10280 = vpack.c.b16 %v10236, %v10232
  %v10281 = vpack.c.b16 %v10241, %v10237
  %v10282 = vpack.c.b16 %v10242, %v10238
  %v10283 = vpack.c.b16 %v10243, %v10239
  %v10284 = vpack.c.b16 %v10244, %v10240
  %v10285 = vpack.c.b16 %v10249, %v10245
  %v10286 = vpack.c.b16 %v10250, %v10246
  %v10287 = vpack.c.b16 %v10251, %v10247
  %v10288 = vpack.c.b16 %v10252, %v10248
  %v10289 = vpack.c.b16 %v10257, %v10253
  %v10290 = vpack.c.b16 %v10258, %v10254
  %v10291 = vpack.c.b16 %v10259, %v10255
  %v10292 = vpack.c.b16 %v10260, %v10256
  %10325 = vmatprep.subr.bf16.mxu0 %v10262
  %10326 = vmatpush1.bf16.msra.mxu0 %v10261
  %10327 = vmatprep.subr.bf16.mxu0 %v10266
  %10328 = vmatpush1.bf16.msra.mxu0 %v10265
  %10329 = vmatprep.subr.bf16.mxu0 %v10270
  %10330 = vmatpush1.bf16.msra.mxu0 %v10269
  %10331 = vmatprep.subr.bf16.mxu0 %v10274
  %10332 = vmatpush1.bf16.msra.mxu0 %v10273
  %10333 = vmatprep.subr.bf16.mxu0 %v10278
  %10334 = vmatpush1.bf16.msra.mxu0 %v10277
  %10335 = vmatprep.subr.bf16.mxu0 %v10282
  %10336 = vmatpush1.bf16.msra.mxu0 %v10281
  %10337 = vmatprep.subr.bf16.mxu0 %v10286
  %10338 = vmatpush1.bf16.msra.mxu0 %v10285
  %10339 = vmatprep.subr.bf16.mxu0 %v10290
  %10340 = vmatpush1.bf16.msra.mxu0 %v10289
  %10341 = vmatprep.subr.bf16.mxu0 0
  %10342 = vmatpush1.bf16.msra.mxu0 0
  %10343 = vmatprep.subr.bf16.mxu0 0
  %10344 = vmatpush1.bf16.msra.mxu0 0
  %10345 = vmatprep.subr.bf16.mxu0 0
  %10346 = vmatpush1.bf16.msra.mxu0 0
  %10347 = vmatprep.subr.bf16.mxu0 0
  %10348 = vmatpush1.bf16.msra.mxu0 0
  %10349 = vmatprep.subr.bf16.mxu0 0
  %10350 = vmatpush1.bf16.msra.mxu0 0
  %10351 = vmatprep.subr.bf16.mxu0 0
  %10352 = vmatpush1.bf16.msra.mxu0 0
  %10353 = vmatprep.subr.bf16.mxu0 0
  %10354 = vmatpush1.bf16.msra.mxu0 0
  %10355 = vmatprep.subr.bf16.mxu0 0
  %10356 = vmatpush1.bf16.msra.mxu0 0
  %10357 = vmatprep.mubr.bf16.mxu0 0
  %10358 = vmatmul.mubr.bf16.gmra.mrb[0].mxu0 %v9812
  %v10359 = vpop.f32.mrb[0].mxu0
  %v10360 = vadd.f32 0.0, %v10359
  %v10361 = vpop.f32.mrb[0].mxu0
  %v10362 = vadd.f32 0.0, %v10361
  %v10363 = vpop.f32.mrb[0].mxu0
  %v10364 = vadd.f32 0.0, %v10363
  %v10365 = vpop.f32.mrb[0].mxu0
  %v10366 = vadd.f32 0.0, %v10365
  %10367 = vdwg.mxu0
  %10368 = vmatprep.subr.bf16.mxu0 %v10264
  %10369 = vmatpush1.bf16.msra.mxu0 %v10263
  %10370 = vmatprep.subr.bf16.mxu0 %v10268
  %10371 = vmatpush1.bf16.msra.mxu0 %v10267
  %10372 = vmatprep.subr.bf16.mxu0 %v10272
  %10373 = vmatpush1.bf16.msra.mxu0 %v10271
  %10374 = vmatprep.subr.bf16.mxu0 %v10276
  %10375 = vmatpush1.bf16.msra.mxu0 %v10275
  %10376 = vmatprep.subr.bf16.mxu0 %v10280
  %10377 = vmatpush1.bf16.msra.mxu0 %v10279
  %10378 = vmatprep.subr.bf16.mxu0 %v10284
  %10379 = vmatpush1.bf16.msra.mxu0 %v10283
  %10380 = vmatprep.subr.bf16.mxu0 %v10288
  %10381 = vmatpush1.bf16.msra.mxu0 %v10287
  %10382 = vmatprep.subr.bf16.mxu0 %v10292
  %10383 = vmatpush1.bf16.msra.mxu0 %v10291
  %10384 = vmatprep.subr.bf16.mxu0 0
  %10385 = vmatpush1.bf16.msra.mxu0 0
  %10386 = vmatprep.subr.bf16.mxu0 0
  %10387 = vmatpush1.bf16.msra.mxu0 0
  %10388 = vmatprep.subr.bf16.mxu0 0
  %10389 = vmatpush1.bf16.msra.mxu0 0
  %10390 = vmatprep.subr.bf16.mxu0 0
  %10391 = vmatpush1.bf16.msra.mxu0 0
  %10392 = vmatprep.subr.bf16.mxu0 0
  %10393 = vmatpush1.bf16.msra.mxu0 0
  %10394 = vmatprep.subr.bf16.mxu0 0
  %10395 = vmatpush1.bf16.msra.mxu0 0
  %10396 = vmatprep.subr.bf16.mxu0 0
  %10397 = vmatpush1.bf16.msra.mxu0 0
  %10398 = vmatprep.subr.bf16.mxu0 0
  %10399 = vmatpush1.bf16.msra.mxu0 0
  %10400 = vmatprep.mubr.bf16.mxu0 0
  %10401 = vmatmul.mubr.bf16.gmra.mrb[0].mxu0 %v9812
  %v10402 = vpop.f32.mrb[0].mxu0
  %v10403 = vadd.f32 0.0, %v10402
  %v10404 = vpop.f32.mrb[0].mxu0
  %v10405 = vadd.f32 0.0, %v10404
  %v10406 = vpop.f32.mrb[0].mxu0
  %v10407 = vadd.f32 0.0, %v10406
  %v10408 = vpop.f32.mrb[0].mxu0
  %v10409 = vadd.f32 0.0, %v10408
  %10410 = vdwg.mxu0
  %v10411 = vadd.f32 %v10125, %v10360
  %v10412 = vadd.f32 %v10126, %v10362
  %v10413 = vadd.f32 %v10127, %v10403
  %v10414 = vadd.f32 %v10128, %v10405
  %v10415 = vadd.f32 %v10129, %v10364
  %v10416 = vadd.f32 %v10130, %v10366
  %v10417 = vadd.f32 %v10131, %v10407
  %v10418 = vadd.f32 %v10132, %v10409
  %v10419 = vmul.f32 %v10411, 0.5
  %v10420 = vmul.f32 %v10412, 0.5
  %v10421 = vmul.f32 %v10413, 0.5
  %v10422 = vmul.f32 %v10415, 0.5
  %v10423 = vmul.f32 %v10416, 0.5
  %v10424 = vmul.f32 %v10417, 0.5
  %v10425 = vtanh.pop %v10419
  %v10426 = vtanh.pop %v10420
  %v10427 = vtanh.pop %v10421
  %v10428 = vtanh.pop %v10422
  %v10429 = vtanh.pop %v10423
  %v10430 = vtanh.pop %v10424
  %v10431 = vmul.f32 %v10425, 0.5
  %v10432 = vmul.f32 %v10426, 0.5
  %v10433 = vmul.f32 %v10427, 0.5
  %v10434 = vmul.f32 %v10428, 0.5
  %v10435 = vmul.f32 %v10429, 0.5
  %v10436 = vmul.f32 %v10430, 0.5
  %v10437 = vadd.f32 %v10431, 0.5
  %v10438 = vadd.f32 %v10432, 0.5
  %v10439 = vadd.f32 %v10433, 0.5
  %v10440 = vadd.f32 %v10434, 0.5
  %v10441 = vadd.f32 %v10435, 0.5
  %v10442 = vadd.f32 %v10436, 0.5
  %v10443 = vtanh.pop %v10414
  %v10444 = vtanh.pop %v10418
  %v10445 = vmul.f32 %v10438, %v9806
  %v10446 = vmul.f32 %v10441, %v9807
  %v10447 = vmul.f32 %v10437, %v10443
  %v10448 = vmul.f32 %v10440, %v10444
  %v10449 = vadd.f32 %v10445, %v10447
  %v10450 = vadd.f32 %v10446, %v10448
  %v10451 = vtanh.pop %v10449
  %v10452 = vtanh.pop %v10450
  %v10453 = vmul.f32 %v10439, %v10451
  %v10454 = vmul.f32 %v10442, %v10452
  %v10455 = vpack.c.bf16 %v10454, %v10453
  %v10456 = vld [vmem:[%s7] sm:$0xff]
  %v10457 = vld [vmem:[%s7 + $0x8] sm:$0xff]
  %v10458 = vld [vmem:[%s7 + $0x10] sm:$0xff]
  %v10459 = vld [vmem:[%s7 + $0x18] sm:$0xff]
  %v10460 = vld [vmem:[%s7 + $0x20] sm:$0xff]
  %v10461 = vld [vmem:[%s7 + $0x28] sm:$0xff]
  %v10462 = vld [vmem:[%s7 + $0x30] sm:$0xff]
  %v10463 = vld [vmem:[%s7 + $0x38] sm:$0xff]
  %v10464 = vld [vmem:[%s7 + $0x40] sm:$0xff]
  %v10465 = vld [vmem:[%s7 + $0x48] sm:$0xff]
  %v10466 = vld [vmem:[%s7 + $0x50] sm:$0xff]
  %v10467 = vld [vmem:[%s7 + $0x58] sm:$0xff]
  %v10468 = vld [vmem:[%s7 + $0x60] sm:$0xff]
  %v10469 = vld [vmem:[%s7 + $0x68] sm:$0xff]
  %v10470 = vld [vmem:[%s7 + $0x70] sm:$0xff]
  %v10471 = vld [vmem:[%s7 + $0x78] sm:$0xff]
  %v10472 = vld [vmem:[%s7 + $0x80] sm:$0xff]
  %v10473 = vld [vmem:[%s7 + $0x88] sm:$0xff]
  %v10474 = vld [vmem:[%s7 + $0x90] sm:$0xff]
  %v10475 = vld [vmem:[%s7 + $0x98] sm:$0xff]
  %v10476 = vld [vmem:[%s7 + $0xa0] sm:$0xff]
  %v10477 = vld [vmem:[%s7 + $0xa8] sm:$0xff]
  %v10478 = vld [vmem:[%s7 + $0xb0] sm:$0xff]
  %v10479 = vld [vmem:[%s7 + $0xb8] sm:$0xff]
  %v10480 = vld [vmem:[%s7 + $0xc0] sm:$0xff]
  %v10481 = vld [vmem:[%s7 + $0xc8] sm:$0xff]
  %v10482 = vld [vmem:[%s7 + $0xd0] sm:$0xff]
  %v10483 = vld [vmem:[%s7 + $0xd8] sm:$0xff]
  %v10484 = vld [vmem:[%s7 + $0xe0] sm:$0xff]
  %v10485 = vld [vmem:[%s7 + $0xe8] sm:$0xff]
  %v10486 = vld [vmem:[%s7 + $0xf0] sm:$0xff]
  %v10487 = vld [vmem:[%s7 + $0xf8] sm:$0xff]
  %v10488 = vld [vmem:[%s9] sm:$0xf]
  %v10490 = vlaneseq
  %v10491 = vshrl.u32 %v10490, 7
  %v10492 = vsub.s32 0, %v10491
  %v10493 = vrot.slane %v10488, %v10492
  %v10494 = vlaneseq
  %v10495 = vshrl.u32 %v10494, 7
  %v10496 = vsub.s32 1, %v10495
  %v10497 = vrot.slane %v10488, %v10496
  %v10498 = vlaneseq
  %v10499 = vshrl.u32 %v10498, 7
  %v10500 = vsub.s32 2, %v10499
  %v10501 = vrot.slane %v10488, %v10500
  %v10502 = vlaneseq
  %v10503 = vshrl.u32 %v10502, 7
  %v10504 = vsub.s32 3, %v10503
  %v10505 = vrot.slane %v10488, %v10504
  %v10542 = vunpack.c.l.b16 %v10456
  %v10543 = vunpack.c.h.b16 %v10456
  %v10544 = vunpack.c.l.b16 %v10457
  %v10545 = vunpack.c.h.b16 %v10457
  %v10546 = vunpack.c.l.b16 %v10458
  %v10547 = vunpack.c.h.b16 %v10458
  %v10548 = vunpack.c.l.b16 %v10459
  %v10549 = vunpack.c.h.b16 %v10459
  %v10550 = vunpack.c.l.b16 %v10460
  %v10551 = vunpack.c.h.b16 %v10460
  %v10552 = vunpack.c.l.b16 %v10461
  %v10553 = vunpack.c.h.b16 %v10461
  %v10554 = vunpack.c.l.b16 %v10462
  %v10555 = vunpack.c.h.b16 %v10462
  %v10556 = vunpack.c.l.b16 %v10463
  %v10557 = vunpack.c.h.b16 %v10463
  %v10558 = vunpack.c.l.b16 %v10464
  %v10559 = vunpack.c.h.b16 %v10464
  %v10560 = vunpack.c.l.b16 %v10465
  %v10561 = vunpack.c.h.b16 %v10465
  %v10562 = vunpack.c.l.b16 %v10466
  %v10563 = vunpack.c.h.b16 %v10466
  %v10564 = vunpack.c.l.b16 %v10467
  %v10565 = vunpack.c.h.b16 %v10467
  %v10566 = vunpack.c.l.b16 %v10468
  %v10567 = vunpack.c.h.b16 %v10468
  %v10568 = vunpack.c.l.b16 %v10469
  %v10569 = vunpack.c.h.b16 %v10469
  %v10570 = vunpack.c.l.b16 %v10470
  %v10571 = vunpack.c.h.b16 %v10470
  %v10572 = vunpack.c.l.b16 %v10471
  %v10573 = vunpack.c.h.b16 %v10471
  %v10574 = vunpack.c.l.b16 %v10472
  %v10575 = vunpack.c.h.b16 %v10472
  %v10576 = vunpack.c.l.b16 %v10473
  %v10577 = vunpack.c.h.b16 %v10473
  %v10578 = vunpack.c.l.b16 %v10474
  %v10579 = vunpack.c.h.b16 %v10474
  %v10580 = vunpack.c.l.b16 %v10475
  %v10581 = vunpack.c.h.b16 %v10475
  %v10582 = vunpack.c.l.b16 %v10476
  %v10583 = vunpack.c.h.b16 %v10476
  %v10584 = vunpack.c.l.b16 %v10477
  %v10585 = vunpack.c.h.b16 %v10477
  %v10586 = vunpack.c.l.b16 %v10478
  %v10587 = vunpack.c.h.b16 %v10478
  %v10588 = vunpack.c.l.b16 %v10479
  %v10589 = vunpack.c.h.b16 %v10479
  %v10590 = vunpack.c.l.b16 %v10480
  %v10591 = vunpack.c.h.b16 %v10480
  %v10592 = vunpack.c.l.b16 %v10481
  %v10593 = vunpack.c.h.b16 %v10481
  %v10594 = vunpack.c.l.b16 %v10482
  %v10595 = vunpack.c.h.b16 %v10482
  %v10596 = vunpack.c.l.b16 %v10483
  %v10597 = vunpack.c.h.b16 %v10483
  %v10598 = vunpack.c.l.b16 %v10484
  %v10599 = vunpack.c.h.b16 %v10484
  %v10600 = vunpack.c.l.b16 %v10485
  %v10601 = vunpack.c.h.b16 %v10485
  %v10602 = vunpack.c.l.b16 %v10486
  %v10603 = vunpack.c.h.b16 %v10486
  %v10604 = vunpack.c.l.b16 %v10487
  %v10605 = vunpack.c.h.b16 %v10487
  %v10606 = vpack.c.b16 %v10546, %v10542
  %v10607 = vpack.c.b16 %v10547, %v10543
  %v10608 = vpack.c.b16 %v10548, %v10544
  %v10609 = vpack.c.b16 %v10549, %v10545
  %v10610 = vpack.c.b16 %v10554, %v10550
  %v10611 = vpack.c.b16 %v10555, %v10551
  %v10612 = vpack.c.b16 %v10556, %v10552
  %v10613 = vpack.c.b16 %v10557, %v10553
  %v10614 = vpack.c.b16 %v10562, %v10558
  %v10615 = vpack.c.b16 %v10563, %v10559
  %v10616 = vpack.c.b16 %v10564, %v10560
  %v10617 = vpack.c.b16 %v10565, %v10561
  %v10618 = vpack.c.b16 %v10570, %v10566
  %v10619 = vpack.c.b16 %v10571, %v10567
  %v10620 = vpack.c.b16 %v10572, %v10568
  %v10621 = vpack.c.b16 %v10573, %v10569
  %v10622 = vpack.c.b16 %v10578, %v10574
  %v10623 = vpack.c.b16 %v10579, %v10575
  %v10624 = vpack.c.b16 %v10580, %v10576
  %v10625 = vpack.c.b16 %v10581, %v10577
  %v10626 = vpack.c.b16 %v10586, %v10582
  %v10627 = vpack.c.b16 %v10587, %v10583
  %v10628 = vpack.c.b16 %v10588, %v10584
  %v10629 = vpack.c.b16 %v10589, %v10585
  %v10630 = vpack.c.b16 %v10594, %v10590
  %v10631 = vpack.c.b16 %v10595, %v10591
  %v10632 = vpack.c.b16 %v10596, %v10592
  %v10633 = vpack.c.b16 %v10597, %v10593
  %v10634 = vpack.c.b16 %v10602, %v10598
  %v10635 = vpack.c.b16 %v10603, %v10599
  %v10636 = vpack.c.b16 %v10604, %v10600
  %v10637 = vpack.c.b16 %v10605, %v10601
  %10670 = vmatprep.subr.bf16.mxu0 %v10607
  %10671 = vmatpush1.bf16.msra.mxu0 %v10606
  %10672 = vmatprep.subr.bf16.mxu0 %v10611
  %10673 = vmatpush1.bf16.msra.mxu0 %v10610
  %10674 = vmatprep.subr.bf16.mxu0 %v10615
  %10675 = vmatpush1.bf16.msra.mxu0 %v10614
  %10676 = vmatprep.subr.bf16.mxu0 %v10619
  %10677 = vmatpush1.bf16.msra.mxu0 %v10618
  %10678 = vmatprep.subr.bf16.mxu0 %v10623
  %10679 = vmatpush1.bf16.msra.mxu0 %v10622
  %10680 = vmatprep.subr.bf16.mxu0 %v10627
  %10681 = vmatpush1.bf16.msra.mxu0 %v10626
  %10682 = vmatprep.subr.bf16.mxu0 %v10631
  %10683 = vmatpush1.bf16.msra.mxu0 %v10630
  %10684 = vmatprep.subr.bf16.mxu0 %v10635
  %10685 = vmatpush1.bf16.msra.mxu0 %v10634
  %10686 = vmatprep.subr.bf16.mxu0 0
  %10687 = vmatpush1.bf16.msra.mxu0 0
  %10688 = vmatprep.subr.bf16.mxu0 0
  %10689 = vmatpush1.bf16.msra.mxu0 0
  %10690 = vmatprep.subr.bf16.mxu0 0
  %10691 = vmatpush1.bf16.msra.mxu0 0
  %10692 = vmatprep.subr.bf16.mxu0 0
  %10693 = vmatpush1.bf16.msra.mxu0 0
  %10694 = vmatprep.subr.bf16.mxu0 0
  %10695 = vmatpush1.bf16.msra.mxu0 0
  %10696 = vmatprep.subr.bf16.mxu0 0
  %10697 = vmatpush1.bf16.msra.mxu0 0
  %10698 = vmatprep.subr.bf16.mxu0 0
  %10699 = vmatpush1.bf16.msra.mxu0 0
  %10700 = vmatprep.subr.bf16.mxu0 0
  %10701 = vmatpush1.bf16.msra.mxu0 0
  %10702 = vmatprep.mubr.bf16.mxu0 0
  %10703 = vmatmul.mubr.bf16.gmra.mrb[0].mxu0 %v10455
  %v10704 = vpop.f32.mrb[0].mxu0
  %v10705 = vadd.f32 %v10493, %v10704
  %v10706 = vpop.f32.mrb[0].mxu0
  %v10707 = vadd.f32 %v10497, %v10706
  %v10708 = vpop.f32.mrb[0].mxu0
  %v10709 = vadd.f32 %v10493, %v10708
  %v10710 = vpop.f32.mrb[0].mxu0
  %v10711 = vadd.f32 %v10497, %v10710
  %10712 = vdwg.mxu0
  %10713 = vmatprep.subr.bf16.mxu0 %v10609
  %10714 = vmatpush1.bf16.msra.mxu0 %v10608
  %10715 = vmatprep.subr.bf16.mxu0 %v10613
  %10716 = vmatpush1.bf16.msra.mxu0 %v10612
  %10717 = vmatprep.subr.bf16.mxu0 %v10617
  %10718 = vmatpush1.bf16.msra.mxu0 %v10616
  %10719 = vmatprep.subr.bf16.mxu0 %v10621
  %10720 = vmatpush1.bf16.msra.mxu0 %v10620
  %10721 = vmatprep.subr.bf16.mxu0 %v10625
  %10722 = vmatpush1.bf16.msra.mxu0 %v10624
  %10723 = vmatprep.subr.bf16.mxu0 %v10629
  %10724 = vmatpush1.bf16.msra.mxu0 %v10628
  %10725 = vmatprep.subr.bf16.mxu0 %v10633
  %10726 = vmatpush1.bf16.msra.mxu0 %v10632
  %10727 = vmatprep.subr.bf16.mxu0 %v10637
  %10728 = vmatpush1.bf16.msra.mxu0 %v10636
  %10729 = vmatprep.subr.bf16.mxu0 0
  %10730 = vmatpush1.bf16.msra.mxu0 0
  %10731 = vmatprep.subr.bf16.mxu0 0
  %10732 = vmatpush1.bf16.msra.mxu0 0
  %10733 = vmatprep.subr.bf16.mxu0 0
  %10734 = vmatpush1.bf16.msra.mxu0 0
  %10735 = vmatprep.subr.bf16.mxu0 0
  %10736 = vmatpush1.bf16.msra.mxu0 0
  %10737 = vmatprep.subr.bf16.mxu0 0
  %10738 = vmatpush1.bf16.msra.mxu0 0
  %10739 = vmatprep.subr.bf16.mxu0 0
  %10740 = vmatpush1.bf16.msra.mxu0 0
  %10741 = vmatprep.subr.bf16.mxu0 0
  %10742 = vmatpush1.bf16.msra.mxu0 0
  %10743 = vmatprep.subr.bf16.mxu0 0
  %10744 = vmatpush1.bf16.msra.mxu0 0
  %10745 = vmatprep.mubr.bf16.mxu0 0
  %10746 = vmatmul.mubr.bf16.gmra.mrb[0].mxu0 %v10455
  %v10747 = vpop.f32.mrb[0].mxu0
  %v10748 = vadd.f32 %v10501, %v10747
  %v10749 = vpop.f32.mrb[0].mxu0
  %v10750 = vadd.f32 %v10505, %v10749
  %v10751 = vpop.f32.mrb[0].mxu0
  %v10752 = vadd.f32 %v10501, %v10751
  %v10753 = vpop.f32.mrb[0].mxu0
  %v10754 = vadd.f32 %v10505, %v10753
  %10755 = vdwg.mxu0
  %v10756 = vpack.c.bf16 %v10709, %v10705
  %v10757 = vpack.c.bf16 %v10711, %v10707
  %v10758 = vpack.c.bf16 %v10752, %v10748
  %v10759 = vpack.c.bf16 %v10754, %v10750
  %10760 = vst [vmem:[%s4976] sm:$0xff] %v10756
  %10761 = vst [vmem:[%s4976 + $0x8] sm:$0xff] %v10757
  %10762 = vst [vmem:[%s4976 + $0x10] sm:$0xff] %v10758
  %10763 = vst [vmem:[%s4976 + $0x18] sm:$0xff] %v10759
  %v10764 = vld [vmem:[#allocation2] sm:$0xff]
  %v10765 = vld [vmem:[#allocation2 + $0x8] sm:$0xff]
  %v10766 = vld [vmem:[#allocation2 + $0x10] sm:$0xff]
  %v10767 = vld [vmem:[#allocation2 + $0x18] sm:$0xff]
  %v10768 = vunpack.c.l.bf16 %v10764
  %v10769 = vunpack.c.l.bf16 %v10765
  %v10770 = vunpack.c.l.bf16 %v10766
  %v10771 = vunpack.c.l.bf16 %v10767
  %v10772 = vunpack.c.h.bf16 %v10764
  %v10773 = vunpack.c.h.bf16 %v10765
  %v10774 = vunpack.c.h.bf16 %v10766
  %v10775 = vunpack.c.h.bf16 %v10767
  %v10776 = vld [vmem:[%s8] sm:$0xff]
  %v10777 = vld [vmem:[%s8 + $0x8] sm:$0xff]
  %v10778 = vld [vmem:[%s8 + $0x10] sm:$0xff]
  %v10779 = vld [vmem:[%s8 + $0x18] sm:$0xff]
  %v10780 = vld [vmem:[%s8 + $0x20] sm:$0xff]
  %v10781 = vld [vmem:[%s8 + $0x28] sm:$0xff]
  %v10782 = vld [vmem:[%s8 + $0x30] sm:$0xff]
  %v10783 = vld [vmem:[%s8 + $0x38] sm:$0xff]
  %v10784 = vld [vmem:[%s8 + $0x40] sm:$0xff]
  %v10785 = vld [vmem:[%s8 + $0x48] sm:$0xff]
  %v10786 = vld [vmem:[%s8 + $0x50] sm:$0xff]
  %v10787 = vld [vmem:[%s8 + $0x58] sm:$0xff]
  %v10788 = vld [vmem:[%s8 + $0x60] sm:$0xff]
  %v10789 = vld [vmem:[%s8 + $0x68] sm:$0xff]
  %v10790 = vld [vmem:[%s8 + $0x70] sm:$0xff]
  %v10791 = vld [vmem:[%s8 + $0x78] sm:$0xff]
  %v10792 = vld [vmem:[%s8 + $0x80] sm:$0xff]
  %v10793 = vld [vmem:[%s8 + $0x88] sm:$0xff]
  %v10794 = vld [vmem:[%s8 + $0x90] sm:$0xff]
  %v10795 = vld [vmem:[%s8 + $0x98] sm:$0xff]
  %v10796 = vld [vmem:[%s8 + $0xa0] sm:$0xff]
  %v10797 = vld [vmem:[%s8 + $0xa8] sm:$0xff]
  %v10798 = vld [vmem:[%s8 + $0xb0] sm:$0xff]
  %v10799 = vld [vmem:[%s8 + $0xb8] sm:$0xff]
  %v10800 = vld [vmem:[%s8 + $0xc0] sm:$0xff]
  %v10801 = vld [vmem:[%s8 + $0xc8] sm:$0xff]
  %v10802 = vld [vmem:[%s8 + $0xd0] sm:$0xff]
  %v10803 = vld [vmem:[%s8 + $0xd8] sm:$0xff]
  %v10804 = vld [vmem:[%s8 + $0xe0] sm:$0xff]
  %v10805 = vld [vmem:[%s8 + $0xe8] sm:$0xff]
  %v10806 = vld [vmem:[%s8 + $0xf0] sm:$0xff]
  %v10807 = vld [vmem:[%s8 + $0xf8] sm:$0xff]
  %v10840 = vunpack.c.l.b16 %v10776
  %v10841 = vunpack.c.h.b16 %v10776
  %v10842 = vunpack.c.l.b16 %v10777
  %v10843 = vunpack.c.h.b16 %v10777
  %v10844 = vunpack.c.l.b16 %v10778
  %v10845 = vunpack.c.h.b16 %v10778
  %v10846 = vunpack.c.l.b16 %v10779
  %v10847 = vunpack.c.h.b16 %v10779
  %v10848 = vunpack.c.l.b16 %v10780
  %v10849 = vunpack.c.h.b16 %v10780
  %v10850 = vunpack.c.l.b16 %v10781
  %v10851 = vunpack.c.h.b16 %v10781
  %v10852 = vunpack.c.l.b16 %v10782
  %v10853 = vunpack.c.h.b16 %v10782
  %v10854 = vunpack.c.l.b16 %v10783
  %v10855 = vunpack.c.h.b16 %v10783
  %v10856 = vunpack.c.l.b16 %v10784
  %v10857 = vunpack.c.h.b16 %v10784
  %v10858 = vunpack.c.l.b16 %v10785
  %v10859 = vunpack.c.h.b16 %v10785
  %v10860 = vunpack.c.l.b16 %v10786
  %v10861 = vunpack.c.h.b16 %v10786
  %v10862 = vunpack.c.l.b16 %v10787
  %v10863 = vunpack.c.h.b16 %v10787
  %v10864 = vunpack.c.l.b16 %v10788
  %v10865 = vunpack.c.h.b16 %v10788
  %v10866 = vunpack.c.l.b16 %v10789
  %v10867 = vunpack.c.h.b16 %v10789
  %v10868 = vunpack.c.l.b16 %v10790
  %v10869 = vunpack.c.h.b16 %v10790
  %v10870 = vunpack.c.l.b16 %v10791
  %v10871 = vunpack.c.h.b16 %v10791
  %v10872 = vunpack.c.l.b16 %v10792
  %v10873 = vunpack.c.h.b16 %v10792
  %v10874 = vunpack.c.l.b16 %v10793
  %v10875 = vunpack.c.h.b16 %v10793
  %v10876 = vunpack.c.l.b16 %v10794
  %v10877 = vunpack.c.h.b16 %v10794
  %v10878 = vunpack.c.l.b16 %v10795
  %v10879 = vunpack.c.h.b16 %v10795
  %v10880 = vunpack.c.l.b16 %v10796
  %v10881 = vunpack.c.h.b16 %v10796
  %v10882 = vunpack.c.l.b16 %v10797
  %v10883 = vunpack.c.h.b16 %v10797
  %v10884 = vunpack.c.l.b16 %v10798
  %v10885 = vunpack.c.h.b16 %v10798
  %v10886 = vunpack.c.l.b16 %v10799
  %v10887 = vunpack.c.h.b16 %v10799
  %v10888 = vunpack.c.l.b16 %v10800
  %v10889 = vunpack.c.h.b16 %v10800
  %v10890 = vunpack.c.l.b16 %v10801
  %v10891 = vunpack.c.h.b16 %v10801
  %v10892 = vunpack.c.l.b16 %v10802
  %v10893 = vunpack.c.h.b16 %v10802
  %v10894 = vunpack.c.l.b16 %v10803
  %v10895 = vunpack.c.h.b16 %v10803
  %v10896 = vunpack.c.l.b16 %v10804
  %v10897 = vunpack.c.h.b16 %v10804
  %v10898 = vunpack.c.l.b16 %v10805
  %v10899 = vunpack.c.h.b16 %v10805
  %v10900 = vunpack.c.l.b16 %v10806
  %v10901 = vunpack.c.h.b16 %v10806
  %v10902 = vunpack.c.l.b16 %v10807
  %v10903 = vunpack.c.h.b16 %v10807
  %v10904 = vpack.c.b16 %v10844, %v10840
  %v10905 = vpack.c.b16 %v10845, %v10841
  %v10906 = vpack.c.b16 %v10846, %v10842
  %v10907 = vpack.c.b16 %v10847, %v10843
  %v10908 = vpack.c.b16 %v10852, %v10848
  %v10909 = vpack.c.b16 %v10853, %v10849
  %v10910 = vpack.c.b16 %v10854, %v10850
  %v10911 = vpack.c.b16 %v10855, %v10851
  %v10912 = vpack.c.b16 %v10860, %v10856
  %v10913 = vpack.c.b16 %v10861, %v10857
  %v10914 = vpack.c.b16 %v10862, %v10858
  %v10915 = vpack.c.b16 %v10863, %v10859
  %v10916 = vpack.c.b16 %v10868, %v10864
  %v10917 = vpack.c.b16 %v10869, %v10865
  %v10918 = vpack.c.b16 %v10870, %v10866
  %v10919 = vpack.c.b16 %v10871, %v10867
  %v10920 = vpack.c.b16 %v10876, %v10872
  %v10921 = vpack.c.b16 %v10877, %v10873
  %v10922 = vpack.c.b16 %v10878, %v10874
  %v10923 = vpack.c.b16 %v10879, %v10875
  %v10924 = vpack.c.b16 %v10884, %v10880
  %v10925 = vpack.c.b16 %v10885, %v10881
  %v10926 = vpack.c.b16 %v10886, %v10882
  %v10927 = vpack.c.b16 %v10887, %v10883
  %v10928 = vpack.c.b16 %v10892, %v10888
  %v10929 = vpack.c.b16 %v10893, %v10889
  %v10930 = vpack.c.b16 %v10894, %v10890
  %v10931 = vpack.c.b16 %v10895, %v10891
  %v10932 = vpack.c.b16 %v10900, %v10896
  %v10933 = vpack.c.b16 %v10901, %v10897
  %v10934 = vpack.c.b16 %v10902, %v10898
  %v10935 = vpack.c.b16 %v10903, %v10899
  %10968 = vmatprep.subr.bf16.mxu0 %v10905
  %10969 = vmatpush1.bf16.msra.mxu0 %v10904
  %10970 = vmatprep.subr.bf16.mxu0 %v10909
  %10971 = vmatpush1.bf16.msra.mxu0 %v10908
  %10972 = vmatprep.subr.bf16.mxu0 %v10913
  %10973 = vmatpush1.bf16.msra.mxu0 %v10912
  %10974 = vmatprep.subr.bf16.mxu0 %v10917
  %10975 = vmatpush1.bf16.msra.mxu0 %v10916
  %10976 = vmatprep.subr.bf16.mxu0 %v10921
  %10977 = vmatpush1.bf16.msra.mxu0 %v10920
  %10978 = vmatprep.subr.bf16.mxu0 %v10925
  %10979 = vmatpush1.bf16.msra.mxu0 %v10924
  %10980 = vmatprep.subr.bf16.mxu0 %v10929
  %10981 = vmatpush1.bf16.msra.mxu0 %v10928
  %10982 = vmatprep.subr.bf16.mxu0 %v10933
  %10983 = vmatpush1.bf16.msra.mxu0 %v10932
  %10984 = vmatprep.subr.bf16.mxu0 0
  %10985 = vmatpush1.bf16.msra.mxu0 0
  %10986 = vmatprep.subr.bf16.mxu0 0
  %10987 = vmatpush1.bf16.msra.mxu0 0
  %10988 = vmatprep.subr.bf16.mxu0 0
  %10989 = vmatpush1.bf16.msra.mxu0 0
  %10990 = vmatprep.subr.bf16.mxu0 0
  %10991 = vmatpush1.bf16.msra.mxu0 0
  %10992 = vmatprep.subr.bf16.mxu0 0
  %10993 = vmatpush1.bf16.msra.mxu0 0
  %10994 = vmatprep.subr.bf16.mxu0 0
  %10995 = vmatpush1.bf16.msra.mxu0 0
  %10996 = vmatprep.subr.bf16.mxu0 0
  %10997 = vmatpush1.bf16.msra.mxu0 0
  %10998 = vmatprep.subr.bf16.mxu0 0
  %10999 = vmatpush1.bf16.msra.mxu0 0
  %11000 = vmatprep.mubr.bf16.mxu0 0
  %11001 = vmatmul.mubr.bf16.gmra.mrb[0].mxu0 0
  %v11002 = vpop.f32.mrb[0].mxu0
  %v11003 = vadd.f32 0.0, %v11002
  %v11004 = vpop.f32.mrb[0].mxu0
  %v11005 = vadd.f32 0.0, %v11004
  %v11006 = vpop.f32.mrb[0].mxu0
  %v11007 = vadd.f32 0.0, %v11006
  %v11008 = vpop.f32.mrb[0].mxu0
  %v11009 = vadd.f32 0.0, %v11008
  %11010 = vdwg.mxu0
  %11011 = vmatprep.subr.bf16.mxu0 %v10907
  %11012 = vmatpush1.bf16.msra.mxu0 %v10906
  %11013 = vmatprep.subr.bf16.mxu0 %v10911
  %11014 = vmatpush1.bf16.msra.mxu0 %v10910
  %11015 = vmatprep.subr.bf16.mxu0 %v10915
  %11016 = vmatpush1.bf16.msra.mxu0 %v10914
  %11017 = vmatprep.subr.bf16.mxu0 %v10919
  %11018 = vmatpush1.bf16.msra.mxu0 %v10918
  %11019 = vmatprep.subr.bf16.mxu0 %v10923
  %11020 = vmatpush1.bf16.msra.mxu0 %v10922
  %11021 = vmatprep.subr.bf16.mxu0 %v10927
  %11022 = vmatpush1.bf16.msra.mxu0 %v10926
  %11023 = vmatprep.subr.bf16.mxu0 %v10931
  %11024 = vmatpush1.bf16.msra.mxu0 %v10930
  %11025 = vmatprep.subr.bf16.mxu0 %v10935
  %11026 = vmatpush1.bf16.msra.mxu0 %v10934
  %11027 = vmatprep.subr.bf16.mxu0 0
  %11028 = vmatpush1.bf16.msra.mxu0 0
  %11029 = vmatprep.subr.bf16.mxu0 0
  %11030 = vmatpush1.bf16.msra.mxu0 0
  %11031 = vmatprep.subr.bf16.mxu0 0
  %11032 = vmatpush1.bf16.msra.mxu0 0
  %11033 = vmatprep.subr.bf16.mxu0 0
  %11034 = vmatpush1.bf16.msra.mxu0 0
  %11035 = vmatprep.subr.bf16.mxu0 0
  %11036 = vmatpush1.bf16.msra.mxu0 0
  %11037 = vmatprep.subr.bf16.mxu0 0
  %11038 = vmatpush1.bf16.msra.mxu0 0
  %11039 = vmatprep.subr.bf16.mxu0 0
  %11040 = vmatpush1.bf16.msra.mxu0 0
  %11041 = vmatprep.subr.bf16.mxu0 0
  %11042 = vmatpush1.bf16.msra.mxu0 0
  %11043 = vmatprep.mubr.bf16.mxu0 0
  %11044 = vmatmul.mubr.bf16.gmra.mrb[0].mxu0 0
  %v11045 = vpop.f32.mrb[0].mxu0
  %v11046 = vadd.f32 0.0, %v11045
  %v11047 = vpop.f32.mrb[0].mxu0
  %v11048 = vadd.f32 0.0, %v11047
  %v11049 = vpop.f32.mrb[0].mxu0
  %v11050 = vadd.f32 0.0, %v11049
  %v11051 = vpop.f32.mrb[0].mxu0
  %v11052 = vadd.f32 0.0, %v11051
  %11053 = vdwg.mxu0
  %v11054 = vadd.f32 %v10768, %v11003
  %v11055 = vadd.f32 %v10769, %v11005
  %v11056 = vadd.f32 %v10770, %v11046
  %v11057 = vadd.f32 %v10771, %v11048
  %v11058 = vadd.f32 %v10772, %v11007
  %v11059 = vadd.f32 %v10773, %v11009
  %v11060 = vadd.f32 %v10774, %v11050
  %v11061 = vadd.f32 %v10775, %v11052
  %v11062 = vmul.f32 %v11054, 0.5
  %v11063 = vmul.f32 %v11055, 0.5
  %v11064 = vmul.f32 %v11056, 0.5
  %v11065 = vmul.f32 %v11058, 0.5
  %v11066 = vmul.f32 %v11059, 0.5
  %v11067 = vmul.f32 %v11060, 0.5
  %v11068 = vtanh.pop %v11062
  %v11069 = vtanh.pop %v11063
  %v11070 = vtanh.pop %v11064
  %v11071 = vtanh.pop %v11065
  %v11072 = vtanh.pop %v11066
  %v11073 = vtanh.pop %v11067
  %v11074 = vmul.f32 %v11068, 0.5
  %v11075 = vmul.f32 %v11069, 0.5
  %v11076 = vmul.f32 %v11070, 0.5
  %v11077 = vmul.f32 %v11071, 0.5
  %v11078 = vmul.f32 %v11072, 0.5
  %v11079 = vmul.f32 %v11073, 0.5
  %v11080 = vadd.f32 %v11074, 0.5
  %v11081 = vadd.f32 %v11075, 0.5
  %v11082 = vadd.f32 %v11076, 0.5
  %v11083 = vadd.f32 %v11077, 0.5
  %v11084 = vadd.f32 %v11078, 0.5
  %v11085 = vadd.f32 %v11079, 0.5
  %v11086 = vtanh.pop %v11057
  %v11087 = vtanh.pop %v11061
  %v11088 = vmul.f32 %v11081, 0.0
  %v11089 = vmul.f32 %v11084, 0.0
  %v11090 = vmul.f32 %v11080, %v11086
  %v11091 = vmul.f32 %v11083, %v11087
  %v11092 = vadd.f32 %v11088, %v11090
  %v11093 = vadd.f32 %v11089, %v11091
  %v11094 = vtanh.pop %v11092
  %v11095 = vtanh.pop %v11093
  %v11096 = vmul.f32 %v11082, %v11094
  %v11097 = vmul.f32 %v11085, %v11095
  %v11098 = vld [vmem:[%s1112] sm:$0xff]
  %v11099 = vld [vmem:[%s1112 + $0x8] sm:$0xff]
  %v11100 = vld [vmem:[%s1112 + $0x10] sm:$0xff]
  %v11101 = vld [vmem:[%s1112 + $0x18] sm:$0xff]
  %v11102 = vunpack.c.l.bf16 %v11098
  %v11103 = vunpack.c.l.bf16 %v11099
  %v11104 = vunpack.c.l.bf16 %v11100
  %v11105 = vunpack.c.l.bf16 %v11101
  %v11106 = vunpack.c.h.bf16 %v11098
  %v11107 = vunpack.c.h.bf16 %v11099
  %v11108 = vunpack.c.h.bf16 %v11100
  %v11109 = vunpack.c.h.bf16 %v11101
  %v11110 = vpack.c.bf16 %v11097, %v11096
  %11111 = vmatprep.subr.bf16.mxu0 %v10905
  %11112 = vmatpush1.bf16.msra.mxu0 %v10904
  %11113 = vmatprep.subr.bf16.mxu0 %v10909
  %11114 = vmatpush1.bf16.msra.mxu0 %v10908
  %11115 = vmatprep.subr.bf16.mxu0 %v10913
  %11116 = vmatpush1.bf16.msra.mxu0 %v10912
  %11117 = vmatprep.subr.bf16.mxu0 %v10917
  %11118 = vmatpush1.bf16.msra.mxu0 %v10916
  %11119 = vmatprep.subr.bf16.mxu0 %v10921
  %11120 = vmatpush1.bf16.msra.mxu0 %v10920
  %11121 = vmatprep.subr.bf16.mxu0 %v10925
  %11122 = vmatpush1.bf16.msra.mxu0 %v10924
  %11123 = vmatprep.subr.bf16.mxu0 %v10929
  %11124 = vmatpush1.bf16.msra.mxu0 %v10928
  %11125 = vmatprep.subr.bf16.mxu0 %v10933
  %11126 = vmatpush1.bf16.msra.mxu0 %v10932
  %11127 = vmatprep.subr.bf16.mxu0 0
  %11128 = vmatpush1.bf16.msra.mxu0 0
  %11129 = vmatprep.subr.bf16.mxu0 0
  %11130 = vmatpush1.bf16.msra.mxu0 0
  %11131 = vmatprep.subr.bf16.mxu0 0
  %11132 = vmatpush1.bf16.msra.mxu0 0
  %11133 = vmatprep.subr.bf16.mxu0 0
  %11134 = vmatpush1.bf16.msra.mxu0 0
  %11135 = vmatprep.subr.bf16.mxu0 0
  %11136 = vmatpush1.bf16.msra.mxu0 0
  %11137 = vmatprep.subr.bf16.mxu0 0
  %11138 = vmatpush1.bf16.msra.mxu0 0
  %11139 = vmatprep.subr.bf16.mxu0 0
  %11140 = vmatpush1.bf16.msra.mxu0 0
  %11141 = vmatprep.subr.bf16.mxu0 0
  %11142 = vmatpush1.bf16.msra.mxu0 0
  %11143 = vmatprep.mubr.bf16.mxu0 0
  %11144 = vmatmul.mubr.bf16.gmra.mrb[0].mxu0 %v11110
  %v11145 = vpop.f32.mrb[0].mxu0
  %v11146 = vadd.f32 0.0, %v11145
  %v11147 = vpop.f32.mrb[0].mxu0
  %v11148 = vadd.f32 0.0, %v11147
  %v11149 = vpop.f32.mrb[0].mxu0
  %v11150 = vadd.f32 0.0, %v11149
  %v11151 = vpop.f32.mrb[0].mxu0
  %v11152 = vadd.f32 0.0, %v11151
  %11153 = vdwg.mxu0
  %11154 = vmatprep.subr.bf16.mxu0 %v10907
  %11155 = vmatpush1.bf16.msra.mxu0 %v10906
  %11156 = vmatprep.subr.bf16.mxu0 %v10911
  %11157 = vmatpush1.bf16.msra.mxu0 %v10910
  %11158 = vmatprep.subr.bf16.mxu0 %v10915
  %11159 = vmatpush1.bf16.msra.mxu0 %v10914
  %11160 = vmatprep.subr.bf16.mxu0 %v10919
  %11161 = vmatpush1.bf16.msra.mxu0 %v10918
  %11162 = vmatprep.subr.bf16.mxu0 %v10923
  %11163 = vmatpush1.bf16.msra.mxu0 %v10922
  %11164 = vmatprep.subr.bf16.mxu0 %v10927
  %11165 = vmatpush1.bf16.msra.mxu0 %v10926
  %11166 = vmatprep.subr.bf16.mxu0 %v10931
  %11167 = vmatpush1.bf16.msra.mxu0 %v10930
  %11168 = vmatprep.subr.bf16.mxu0 %v10935
  %11169 = vmatpush1.bf16.msra.mxu0 %v10934
  %11170 = vmatprep.subr.bf16.mxu0 0
  %11171 = vmatpush1.bf16.msra.mxu0 0
  %11172 = vmatprep.subr.bf16.mxu0 0
  %11173 = vmatpush1.bf16.msra.mxu0 0
  %11174 = vmatprep.subr.bf16.mxu0 0
  %11175 = vmatpush1.bf16.msra.mxu0 0
  %11176 = vmatprep.subr.bf16.mxu0 0
  %11177 = vmatpush1.bf16.msra.mxu0 0
  %11178 = vmatprep.subr.bf16.mxu0 0
  %11179 = vmatpush1.bf16.msra.mxu0 0
  %11180 = vmatprep.subr.bf16.mxu0 0
  %11181 = vmatpush1.bf16.msra.mxu0 0
  %11182 = vmatprep.subr.bf16.mxu0 0
  %11183 = vmatpush1.bf16.msra.mxu0 0
  %11184 = vmatprep.subr.bf16.mxu0 0
  %11185 = vmatpush1.bf16.msra.mxu0 0
  %11186 = vmatprep.mubr.bf16.mxu0 0
  %11187 = vmatmul.mubr.bf16.gmra.mrb[0].mxu0 %v11110
  %v11188 = vpop.f32.mrb[0].mxu0
  %v11189 = vadd.f32 0.0, %v11188
  %v11190 = vpop.f32.mrb[0].mxu0
  %v11191 = vadd.f32 0.0, %v11190
  %v11192 = vpop.f32.mrb[0].mxu0
  %v11193 = vadd.f32 0.0, %v11192
  %v11194 = vpop.f32.mrb[0].mxu0
  %v11195 = vadd.f32 0.0, %v11194
  %11196 = vdwg.mxu0
  %v11197 = vadd.f32 %v11102, %v11146
  %v11198 = vadd.f32 %v11103, %v11148
  %v11199 = vadd.f32 %v11104, %v11189
  %v11200 = vadd.f32 %v11105, %v11191
  %v11201 = vadd.f32 %v11106, %v11150
  %v11202 = vadd.f32 %v11107, %v11152
  %v11203 = vadd.f32 %v11108, %v11193
  %v11204 = vadd.f32 %v11109, %v11195
  %v11205 = vmul.f32 %v11197, 0.5
  %v11206 = vmul.f32 %v11198, 0.5
  %v11207 = vmul.f32 %v11199, 0.5
  %v11208 = vmul.f32 %v11201, 0.5
  %v11209 = vmul.f32 %v11202, 0.5
  %v11210 = vmul.f32 %v11203, 0.5
  %v11211 = vtanh.pop %v11205
  %v11212 = vtanh.pop %v11206
  %v11213 = vtanh.pop %v11207
  %v11214 = vtanh.pop %v11208
  %v11215 = vtanh.pop %v11209
  %v11216 = vtanh.pop %v11210
  %v11217 = vmul.f32 %v11211, 0.5
  %v11218 = vmul.f32 %v11212, 0.5
  %v11219 = vmul.f32 %v11213, 0.5
  %v11220 = vmul.f32 %v11214, 0.5
  %v11221 = vmul.f32 %v11215, 0.5
  %v11222 = vmul.f32 %v11216, 0.5
  %v11223 = vadd.f32 %v11217, 0.5
  %v11224 = vadd.f32 %v11218, 0.5
  %v11225 = vadd.f32 %v11219, 0.5
  %v11226 = vadd.f32 %v11220, 0.5
  %v11227 = vadd.f32 %v11221, 0.5
  %v11228 = vadd.f32 %v11222, 0.5
  %v11229 = vtanh.pop %v11200
  %v11230 = vtanh.pop %v11204
  %v11231 = vmul.f32 %v11224, %v11092
  %v11232 = vmul.f32 %v11227, %v11093
  %v11233 = vmul.f32 %v11223, %v11229
  %v11234 = vmul.f32 %v11226, %v11230
  %v11235 = vadd.f32 %v11231, %v11233
  %v11236 = vadd.f32 %v11232, %v11234
  %v11237 = vtanh.pop %v11235
  %v11238 = vtanh.pop %v11236
  %v11239 = vmul.f32 %v11225, %v11237
  %v11240 = vmul.f32 %v11228, %v11238
  %v11241 = vld [vmem:[%s1756] sm:$0xff]
  %v11242 = vld [vmem:[%s1756 + $0x8] sm:$0xff]
  %v11243 = vld [vmem:[%s1756 + $0x10] sm:$0xff]
  %v11244 = vld [vmem:[%s1756 + $0x18] sm:$0xff]
  %v11245 = vunpack.c.l.bf16 %v11241
  %v11246 = vunpack.c.l.bf16 %v11242
  %v11247 = vunpack.c.l.bf16 %v11243
  %v11248 = vunpack.c.l.bf16 %v11244
  %v11249 = vunpack.c.h.bf16 %v11241
  %v11250 = vunpack.c.h.bf16 %v11242
  %v11251 = vunpack.c.h.bf16 %v11243
  %v11252 = vunpack.c.h.bf16 %v11244
  %v11253 = vpack.c.bf16 %v11240, %v11239
  %11254 = vmatprep.subr.bf16.mxu0 %v10905
  %11255 = vmatpush1.bf16.msra.mxu0 %v10904
  %11256 = vmatprep.subr.bf16.mxu0 %v10909
  %11257 = vmatpush1.bf16.msra.mxu0 %v10908
  %11258 = vmatprep.subr.bf16.mxu0 %v10913
  %11259 = vmatpush1.bf16.msra.mxu0 %v10912
  %11260 = vmatprep.subr.bf16.mxu0 %v10917
  %11261 = vmatpush1.bf16.msra.mxu0 %v10916
  %11262 = vmatprep.subr.bf16.mxu0 %v10921
  %11263 = vmatpush1.bf16.msra.mxu0 %v10920
  %11264 = vmatprep.subr.bf16.mxu0 %v10925
  %11265 = vmatpush1.bf16.msra.mxu0 %v10924
  %11266 = vmatprep.subr.bf16.mxu0 %v10929
  %11267 = vmatpush1.bf16.msra.mxu0 %v10928
  %11268 = vmatprep.subr.bf16.mxu0 %v10933
  %11269 = vmatpush1.bf16.msra.mxu0 %v10932
  %11270 = vmatprep.subr.bf16.mxu0 0
  %11271 = vmatpush1.bf16.msra.mxu0 0
  %11272 = vmatprep.subr.bf16.mxu0 0
  %11273 = vmatpush1.bf16.msra.mxu0 0
  %11274 = vmatprep.subr.bf16.mxu0 0
  %11275 = vmatpush1.bf16.msra.mxu0 0
  %11276 = vmatprep.subr.bf16.mxu0 0
  %11277 = vmatpush1.bf16.msra.mxu0 0
  %11278 = vmatprep.subr.bf16.mxu0 0
  %11279 = vmatpush1.bf16.msra.mxu0 0
  %11280 = vmatprep.subr.bf16.mxu0 0
  %11281 = vmatpush1.bf16.msra.mxu0 0
  %11282 = vmatprep.subr.bf16.mxu0 0
  %11283 = vmatpush1.bf16.msra.mxu0 0
  %11284 = vmatprep.subr.bf16.mxu0 0
  %11285 = vmatpush1.bf16.msra.mxu0 0
  %11286 = vmatprep.mubr.bf16.mxu0 0
  %11287 = vmatmul.mubr.bf16.gmra.mrb[0].mxu0 %v11253
  %v11288 = vpop.f32.mrb[0].mxu0
  %v11289 = vadd.f32 0.0, %v11288
  %v11290 = vpop.f32.mrb[0].mxu0
  %v11291 = vadd.f32 0.0, %v11290
  %v11292 = vpop.f32.mrb[0].mxu0
  %v11293 = vadd.f32 0.0, %v11292
  %v11294 = vpop.f32.mrb[0].mxu0
  %v11295 = vadd.f32 0.0, %v11294
  %11296 = vdwg.mxu0
  %11297 = vmatprep.subr.bf16.mxu0 %v10907
  %11298 = vmatpush1.bf16.msra.mxu0 %v10906
  %11299 = vmatprep.subr.bf16.mxu0 %v10911
  %11300 = vmatpush1.bf16.msra.mxu0 %v10910
  %11301 = vmatprep.subr.bf16.mxu0 %v10915
  %11302 = vmatpush1.bf16.msra.mxu0 %v10914
  %11303 = vmatprep.subr.bf16.mxu0 %v10919
  %11304 = vmatpush1.bf16.msra.mxu0 %v10918
  %11305 = vmatprep.subr.bf16.mxu0 %v10923
  %11306 = vmatpush1.bf16.msra.mxu0 %v10922
  %11307 = vmatprep.subr.bf16.mxu0 %v10927
  %11308 = vmatpush1.bf16.msra.mxu0 %v10926
  %11309 = vmatprep.subr.bf16.mxu0 %v10931
  %11310 = vmatpush1.bf16.msra.mxu0 %v10930
  %11311 = vmatprep.subr.bf16.mxu0 %v10935
  %11312 = vmatpush1.bf16.msra.mxu0 %v10934
  %11313 = vmatprep.subr.bf16.mxu0 0
  %11314 = vmatpush1.bf16.msra.mxu0 0
  %11315 = vmatprep.subr.bf16.mxu0 0
  %11316 = vmatpush1.bf16.msra.mxu0 0
  %11317 = vmatprep.subr.bf16.mxu0 0
  %11318 = vmatpush1.bf16.msra.mxu0 0
  %11319 = vmatprep.subr.bf16.mxu0 0
  %11320 = vmatpush1.bf16.msra.mxu0 0
  %11321 = vmatprep.subr.bf16.mxu0 0
  %11322 = vmatpush1.bf16.msra.mxu0 0
  %11323 = vmatprep.subr.bf16.mxu0 0
  %11324 = vmatpush1.bf16.msra.mxu0 0
  %11325 = vmatprep.subr.bf16.mxu0 0
  %11326 = vmatpush1.bf16.msra.mxu0 0
  %11327 = vmatprep.subr.bf16.mxu0 0
  %11328 = vmatpush1.bf16.msra.mxu0 0
  %11329 = vmatprep.mubr.bf16.mxu0 0
  %11330 = vmatmul.mubr.bf16.gmra.mrb[0].mxu0 %v11253
  %v11331 = vpop.f32.mrb[0].mxu0
  %v11332 = vadd.f32 0.0, %v11331
  %v11333 = vpop.f32.mrb[0].mxu0
  %v11334 = vadd.f32 0.0, %v11333
  %v11335 = vpop.f32.mrb[0].mxu0
  %v11336 = vadd.f32 0.0, %v11335
  %v11337 = vpop.f32.mrb[0].mxu0
  %v11338 = vadd.f32 0.0, %v11337
  %11339 = vdwg.mxu0
  %v11340 = vadd.f32 %v11245, %v11289
  %v11341 = vadd.f32 %v11246, %v11291
  %v11342 = vadd.f32 %v11247, %v11332
  %v11343 = vadd.f32 %v11248, %v11334
  %v11344 = vadd.f32 %v11249, %v11293
  %v11345 = vadd.f32 %v11250, %v11295
  %v11346 = vadd.f32 %v11251, %v11336
  %v11347 = vadd.f32 %v11252, %v11338
  %v11348 = vmul.f32 %v11340, 0.5
  %v11349 = vmul.f32 %v11341, 0.5
  %v11350 = vmul.f32 %v11342, 0.5
  %v11351 = vmul.f32 %v11344, 0.5
  %v11352 = vmul.f32 %v11345, 0.5
  %v11353 = vmul.f32 %v11346, 0.5
  %v11354 = vtanh.pop %v11348
  %v11355 = vtanh.pop %v11349
  %v11356 = vtanh.pop %v11350
  %v11357 = vtanh.pop %v11351
  %v11358 = vtanh.pop %v11352
  %v11359 = vtanh.pop %v11353
  %v11360 = vmul.f32 %v11354, 0.5
  %v11361 = vmul.f32 %v11355, 0.5
  %v11362 = vmul.f32 %v11356, 0.5
  %v11363 = vmul.f32 %v11357, 0.5
  %v11364 = vmul.f32 %v11358, 0.5
  %v11365 = vmul.f32 %v11359, 0.5
  %v11366 = vadd.f32 %v11360, 0.5
  %v11367 = vadd.f32 %v11361, 0.5
  %v11368 = vadd.f32 %v11362, 0.5
  %v11369 = vadd.f32 %v11363, 0.5
  %v11370 = vadd.f32 %v11364, 0.5
  %v11371 = vadd.f32 %v11365, 0.5
  %v11372 = vtanh.pop %v11343
  %v11373 = vtanh.pop %v11347
  %v11374 = vmul.f32 %v11367, %v11235
  %v11375 = vmul.f32 %v11370, %v11236
  %v11376 = vmul.f32 %v11366, %v11372
  %v11377 = vmul.f32 %v11369, %v11373
  %v11378 = vadd.f32 %v11374, %v11376
  %v11379 = vadd.f32 %v11375, %v11377
  %v11380 = vtanh.pop %v11378
  %v11381 = vtanh.pop %v11379
  %v11382 = vmul.f32 %v11368, %v11380
  %v11383 = vmul.f32 %v11371, %v11381
  %v11384 = vld [vmem:[%s2400] sm:$0xff]
  %v11385 = vld [vmem:[%s2400 + $0x8] sm:$0xff]
  %v11386 = vld [vmem:[%s2400 + $0x10] sm:$0xff]
  %v11387 = vld [vmem:[%s2400 + $0x18] sm:$0xff]
  %v11388 = vunpack.c.l.bf16 %v11384
  %v11389 = vunpack.c.l.bf16 %v11385
  %v11390 = vunpack.c.l.bf16 %v11386
  %v11391 = vunpack.c.l.bf16 %v11387
  %v11392 = vunpack.c.h.bf16 %v11384
  %v11393 = vunpack.c.h.bf16 %v11385
  %v11394 = vunpack.c.h.bf16 %v11386
  %v11395 = vunpack.c.h.bf16 %v11387
  %v11396 = vpack.c.bf16 %v11383, %v11382
  %11397 = vmatprep.subr.bf16.mxu0 %v10905
  %11398 = vmatpush1.bf16.msra.mxu0 %v10904
  %11399 = vmatprep.subr.bf16.mxu0 %v10909
  %11400 = vmatpush1.bf16.msra.mxu0 %v10908
  %11401 = vmatprep.subr.bf16.mxu0 %v10913
  %11402 = vmatpush1.bf16.msra.mxu0 %v10912
  %11403 = vmatprep.subr.bf16.mxu0 %v10917
  %11404 = vmatpush1.bf16.msra.mxu0 %v10916
  %11405 = vmatprep.subr.bf16.mxu0 %v10921
  %11406 = vmatpush1.bf16.msra.mxu0 %v10920
  %11407 = vmatprep.subr.bf16.mxu0 %v10925
  %11408 = vmatpush1.bf16.msra.mxu0 %v10924
  %11409 = vmatprep.subr.bf16.mxu0 %v10929
  %11410 = vmatpush1.bf16.msra.mxu0 %v10928
  %11411 = vmatprep.subr.bf16.mxu0 %v10933
  %11412 = vmatpush1.bf16.msra.mxu0 %v10932
  %11413 = vmatprep.subr.bf16.mxu0 0
  %11414 = vmatpush1.bf16.msra.mxu0 0
  %11415 = vmatprep.subr.bf16.mxu0 0
  %11416 = vmatpush1.bf16.msra.mxu0 0
  %11417 = vmatprep.subr.bf16.mxu0 0
  %11418 = vmatpush1.bf16.msra.mxu0 0
  %11419 = vmatprep.subr.bf16.mxu0 0
  %11420 = vmatpush1.bf16.msra.mxu0 0
  %11421 = vmatprep.subr.bf16.mxu0 0
  %11422 = vmatpush1.bf16.msra.mxu0 0
  %11423 = vmatprep.subr.bf16.mxu0 0
  %11424 = vmatpush1.bf16.msra.mxu0 0
  %11425 = vmatprep.subr.bf16.mxu0 0
  %11426 = vmatpush1.bf16.msra.mxu0 0
  %11427 = vmatprep.subr.bf16.mxu0 0
  %11428 = vmatpush1.bf16.msra.mxu0 0
  %11429 = vmatprep.mubr.bf16.mxu0 0
  %11430 = vmatmul.mubr.bf16.gmra.mrb[0].mxu0 %v11396
  %v11431 = vpop.f32.mrb[0].mxu0
  %v11432 = vadd.f32 0.0, %v11431
  %v11433 = vpop.f32.mrb[0].mxu0
  %v11434 = vadd.f32 0.0, %v11433
  %v11435 = vpop.f32.mrb[0].mxu0
  %v11436 = vadd.f32 0.0, %v11435
  %v11437 = vpop.f32.mrb[0].mxu0
  %v11438 = vadd.f32 0.0, %v11437
  %11439 = vdwg.mxu0
  %11440 = vmatprep.subr.bf16.mxu0 %v10907
  %11441 = vmatpush1.bf16.msra.mxu0 %v10906
  %11442 = vmatprep.subr.bf16.mxu0 %v10911
  %11443 = vmatpush1.bf16.msra.mxu0 %v10910
  %11444 = vmatprep.subr.bf16.mxu0 %v10915
  %11445 = vmatpush1.bf16.msra.mxu0 %v10914
  %11446 = vmatprep.subr.bf16.mxu0 %v10919
  %11447 = vmatpush1.bf16.msra.mxu0 %v10918
  %11448 = vmatprep.subr.bf16.mxu0 %v10923
  %11449 = vmatpush1.bf16.msra.mxu0 %v10922
  %11450 = vmatprep.subr.bf16.mxu0 %v10927
  %11451 = vmatpush1.bf16.msra.mxu0 %v10926
  %11452 = vmatprep.subr.bf16.mxu0 %v10931
  %11453 = vmatpush1.bf16.msra.mxu0 %v10930
  %11454 = vmatprep.subr.bf16.mxu0 %v10935
  %11455 = vmatpush1.bf16.msra.mxu0 %v10934
  %11456 = vmatprep.subr.bf16.mxu0 0
  %11457 = vmatpush1.bf16.msra.mxu0 0
  %11458 = vmatprep.subr.bf16.mxu0 0
  %11459 = vmatpush1.bf16.msra.mxu0 0
  %11460 = vmatprep.subr.bf16.mxu0 0
  %11461 = vmatpush1.bf16.msra.mxu0 0
  %11462 = vmatprep.subr.bf16.mxu0 0
  %11463 = vmatpush1.bf16.msra.mxu0 0
  %11464 = vmatprep.subr.bf16.mxu0 0
  %11465 = vmatpush1.bf16.msra.mxu0 0
  %11466 = vmatprep.subr.bf16.mxu0 0
  %11467 = vmatpush1.bf16.msra.mxu0 0
  %11468 = vmatprep.subr.bf16.mxu0 0
  %11469 = vmatpush1.bf16.msra.mxu0 0
  %11470 = vmatprep.subr.bf16.mxu0 0
  %11471 = vmatpush1.bf16.msra.mxu0 0
  %11472 = vmatprep.mubr.bf16.mxu0 0
  %11473 = vmatmul.mubr.bf16.gmra.mrb[0].mxu0 %v11396
  %v11474 = vpop.f32.mrb[0].mxu0
  %v11475 = vadd.f32 0.0, %v11474
  %v11476 = vpop.f32.mrb[0].mxu0
  %v11477 = vadd.f32 0.0, %v11476
  %v11478 = vpop.f32.mrb[0].mxu0
  %v11479 = vadd.f32 0.0, %v11478
  %v11480 = vpop.f32.mrb[0].mxu0
  %v11481 = vadd.f32 0.0, %v11480
  %11482 = vdwg.mxu0
  %v11483 = vadd.f32 %v11388, %v11432
  %v11484 = vadd.f32 %v11389, %v11434
  %v11485 = vadd.f32 %v11390, %v11475
  %v11486 = vadd.f32 %v11391, %v11477
  %v11487 = vadd.f32 %v11392, %v11436
  %v11488 = vadd.f32 %v11393, %v11438
  %v11489 = vadd.f32 %v11394, %v11479
  %v11490 = vadd.f32 %v11395, %v11481
  %v11491 = vmul.f32 %v11483, 0.5
  %v11492 = vmul.f32 %v11484, 0.5
  %v11493 = vmul.f32 %v11485, 0.5
  %v11494 = vmul.f32 %v11487, 0.5
  %v11495 = vmul.f32 %v11488, 0.5
  %v11496 = vmul.f32 %v11489, 0.5
  %v11497 = vtanh.pop %v11491
  %v11498 = vtanh.pop %v11492
  %v11499 = vtanh.pop %v11493
  %v11500 = vtanh.pop %v11494
  %v11501 = vtanh.pop %v11495
  %v11502 = vtanh.pop %v11496
  %v11503 = vmul.f32 %v11497, 0.5
  %v11504 = vmul.f32 %v11498, 0.5
  %v11505 = vmul.f32 %v11499, 0.5
  %v11506 = vmul.f32 %v11500, 0.5
  %v11507 = vmul.f32 %v11501, 0.5
  %v11508 = vmul.f32 %v11502, 0.5
  %v11509 = vadd.f32 %v11503, 0.5
  %v11510 = vadd.f32 %v11504, 0.5
  %v11511 = vadd.f32 %v11505, 0.5
  %v11512 = vadd.f32 %v11506, 0.5
  %v11513 = vadd.f32 %v11507, 0.5
  %v11514 = vadd.f32 %v11508, 0.5
  %v11515 = vtanh.pop %v11486
  %v11516 = vtanh.pop %v11490
  %v11517 = vmul.f32 %v11510, %v11378
  %v11518 = vmul.f32 %v11513, %v11379
  %v11519 = vmul.f32 %v11509, %v11515
  %v11520 = vmul.f32 %v11512, %v11516
  %v11521 = vadd.f32 %v11517, %v11519
  %v11522 = vadd.f32 %v11518, %v11520
  %v11523 = vtanh.pop %v11521
  %v11524 = vtanh.pop %v11522
  %v11525 = vmul.f32 %v11511, %v11523
  %v11526 = vmul.f32 %v11514, %v11524
  %v11527 = vld [vmem:[%s3044] sm:$0xff]
  %v11528 = vld [vmem:[%s3044 + $0x8] sm:$0xff]
  %v11529 = vld [vmem:[%s3044 + $0x10] sm:$0xff]
  %v11530 = vld [vmem:[%s3044 + $0x18] sm:$0xff]
  %v11531 = vunpack.c.l.bf16 %v11527
  %v11532 = vunpack.c.l.bf16 %v11528
  %v11533 = vunpack.c.l.bf16 %v11529
  %v11534 = vunpack.c.l.bf16 %v11530
  %v11535 = vunpack.c.h.bf16 %v11527
  %v11536 = vunpack.c.h.bf16 %v11528
  %v11537 = vunpack.c.h.bf16 %v11529
  %v11538 = vunpack.c.h.bf16 %v11530
  %v11539 = vpack.c.bf16 %v11526, %v11525
  %11540 = vmatprep.subr.bf16.mxu0 %v10905
  %11541 = vmatpush1.bf16.msra.mxu0 %v10904
  %11542 = vmatprep.subr.bf16.mxu0 %v10909
  %11543 = vmatpush1.bf16.msra.mxu0 %v10908
  %11544 = vmatprep.subr.bf16.mxu0 %v10913
  %11545 = vmatpush1.bf16.msra.mxu0 %v10912
  %11546 = vmatprep.subr.bf16.mxu0 %v10917
  %11547 = vmatpush1.bf16.msra.mxu0 %v10916
  %11548 = vmatprep.subr.bf16.mxu0 %v10921
  %11549 = vmatpush1.bf16.msra.mxu0 %v10920
  %11550 = vmatprep.subr.bf16.mxu0 %v10925
  %11551 = vmatpush1.bf16.msra.mxu0 %v10924
  %11552 = vmatprep.subr.bf16.mxu0 %v10929
  %11553 = vmatpush1.bf16.msra.mxu0 %v10928
  %11554 = vmatprep.subr.bf16.mxu0 %v10933
  %11555 = vmatpush1.bf16.msra.mxu0 %v10932
  %11556 = vmatprep.subr.bf16.mxu0 0
  %11557 = vmatpush1.bf16.msra.mxu0 0
  %11558 = vmatprep.subr.bf16.mxu0 0
  %11559 = vmatpush1.bf16.msra.mxu0 0
  %11560 = vmatprep.subr.bf16.mxu0 0
  %11561 = vmatpush1.bf16.msra.mxu0 0
  %11562 = vmatprep.subr.bf16.mxu0 0
  %11563 = vmatpush1.bf16.msra.mxu0 0
  %11564 = vmatprep.subr.bf16.mxu0 0
  %11565 = vmatpush1.bf16.msra.mxu0 0
  %11566 = vmatprep.subr.bf16.mxu0 0
  %11567 = vmatpush1.bf16.msra.mxu0 0
  %11568 = vmatprep.subr.bf16.mxu0 0
  %11569 = vmatpush1.bf16.msra.mxu0 0
  %11570 = vmatprep.subr.bf16.mxu0 0
  %11571 = vmatpush1.bf16.msra.mxu0 0
  %11572 = vmatprep.mubr.bf16.mxu0 0
  %11573 = vmatmul.mubr.bf16.gmra.mrb[0].mxu0 %v11539
  %v11574 = vpop.f32.mrb[0].mxu0
  %v11575 = vadd.f32 0.0, %v11574
  %v11576 = vpop.f32.mrb[0].mxu0
  %v11577 = vadd.f32 0.0, %v11576
  %v11578 = vpop.f32.mrb[0].mxu0
  %v11579 = vadd.f32 0.0, %v11578
  %v11580 = vpop.f32.mrb[0].mxu0
  %v11581 = vadd.f32 0.0, %v11580
  %11582 = vdwg.mxu0
  %11583 = vmatprep.subr.bf16.mxu0 %v10907
  %11584 = vmatpush1.bf16.msra.mxu0 %v10906
  %11585 = vmatprep.subr.bf16.mxu0 %v10911
  %11586 = vmatpush1.bf16.msra.mxu0 %v10910
  %11587 = vmatprep.subr.bf16.mxu0 %v10915
  %11588 = vmatpush1.bf16.msra.mxu0 %v10914
  %11589 = vmatprep.subr.bf16.mxu0 %v10919
  %11590 = vmatpush1.bf16.msra.mxu0 %v10918
  %11591 = vmatprep.subr.bf16.mxu0 %v10923
  %11592 = vmatpush1.bf16.msra.mxu0 %v10922
  %11593 = vmatprep.subr.bf16.mxu0 %v10927
  %11594 = vmatpush1.bf16.msra.mxu0 %v10926
  %11595 = vmatprep.subr.bf16.mxu0 %v10931
  %11596 = vmatpush1.bf16.msra.mxu0 %v10930
  %11597 = vmatprep.subr.bf16.mxu0 %v10935
  %11598 = vmatpush1.bf16.msra.mxu0 %v10934
  %11599 = vmatprep.subr.bf16.mxu0 0
  %11600 = vmatpush1.bf16.msra.mxu0 0
  %11601 = vmatprep.subr.bf16.mxu0 0
  %11602 = vmatpush1.bf16.msra.mxu0 0
  %11603 = vmatprep.subr.bf16.mxu0 0
  %11604 = vmatpush1.bf16.msra.mxu0 0
  %11605 = vmatprep.subr.bf16.mxu0 0
  %11606 = vmatpush1.bf16.msra.mxu0 0
  %11607 = vmatprep.subr.bf16.mxu0 0
  %11608 = vmatpush1.bf16.msra.mxu0 0
  %11609 = vmatprep.subr.bf16.mxu0 0
  %11610 = vmatpush1.bf16.msra.mxu0 0
  %11611 = vmatprep.subr.bf16.mxu0 0
  %11612 = vmatpush1.bf16.msra.mxu0 0
  %11613 = vmatprep.subr.bf16.mxu0 0
  %11614 = vmatpush1.bf16.msra.mxu0 0
  %11615 = vmatprep.mubr.bf16.mxu0 0
  %11616 = vmatmul.mubr.bf16.gmra.mrb[0].mxu0 %v11539
  %v11617 = vpop.f32.mrb[0].mxu0
  %v11618 = vadd.f32 0.0, %v11617
  %v11619 = vpop.f32.mrb[0].mxu0
  %v11620 = vadd.f32 0.0, %v11619
  %v11621 = vpop.f32.mrb[0].mxu0
  %v11622 = vadd.f32 0.0, %v11621
  %v11623 = vpop.f32.mrb[0].mxu0
  %v11624 = vadd.f32 0.0, %v11623
  %11625 = vdwg.mxu0
  %v11626 = vadd.f32 %v11531, %v11575
  %v11627 = vadd.f32 %v11532, %v11577
  %v11628 = vadd.f32 %v11533, %v11618
  %v11629 = vadd.f32 %v11534, %v11620
  %v11630 = vadd.f32 %v11535, %v11579
  %v11631 = vadd.f32 %v11536, %v11581
  %v11632 = vadd.f32 %v11537, %v11622
  %v11633 = vadd.f32 %v11538, %v11624
  %v11634 = vmul.f32 %v11626, 0.5
  %v11635 = vmul.f32 %v11627, 0.5
  %v11636 = vmul.f32 %v11628, 0.5
  %v11637 = vmul.f32 %v11630, 0.5
  %v11638 = vmul.f32 %v11631, 0.5
  %v11639 = vmul.f32 %v11632, 0.5
  %v11640 = vtanh.pop %v11634
  %v11641 = vtanh.pop %v11635
  %v11642 = vtanh.pop %v11636
  %v11643 = vtanh.pop %v11637
  %v11644 = vtanh.pop %v11638
  %v11645 = vtanh.pop %v11639
  %v11646 = vmul.f32 %v11640, 0.5
  %v11647 = vmul.f32 %v11641, 0.5
  %v11648 = vmul.f32 %v11642, 0.5
  %v11649 = vmul.f32 %v11643, 0.5
  %v11650 = vmul.f32 %v11644, 0.5
  %v11651 = vmul.f32 %v11645, 0.5
  %v11652 = vadd.f32 %v11646, 0.5
  %v11653 = vadd.f32 %v11647, 0.5
  %v11654 = vadd.f32 %v11648, 0.5
  %v11655 = vadd.f32 %v11649, 0.5
  %v11656 = vadd.f32 %v11650, 0.5
  %v11657 = vadd.f32 %v11651, 0.5
  %v11658 = vtanh.pop %v11629
  %v11659 = vtanh.pop %v11633
  %v11660 = vmul.f32 %v11653, %v11521
  %v11661 = vmul.f32 %v11656, %v11522
  %v11662 = vmul.f32 %v11652, %v11658
  %v11663 = vmul.f32 %v11655, %v11659
  %v11664 = vadd.f32 %v11660, %v11662
  %v11665 = vadd.f32 %v11661, %v11663
  %v11666 = vtanh.pop %v11664
  %v11667 = vtanh.pop %v11665
  %v11668 = vmul.f32 %v11654, %v11666
  %v11669 = vmul.f32 %v11657, %v11667
  %v11670 = vld [vmem:[%s3688] sm:$0xff]
  %v11671 = vld [vmem:[%s3688 + $0x8] sm:$0xff]
  %v11672 = vld [vmem:[%s3688 + $0x10] sm:$0xff]
  %v11673 = vld [vmem:[%s3688 + $0x18] sm:$0xff]
  %v11674 = vunpack.c.l.bf16 %v11670
  %v11675 = vunpack.c.l.bf16 %v11671
  %v11676 = vunpack.c.l.bf16 %v11672
  %v11677 = vunpack.c.l.bf16 %v11673
  %v11678 = vunpack.c.h.bf16 %v11670
  %v11679 = vunpack.c.h.bf16 %v11671
  %v11680 = vunpack.c.h.bf16 %v11672
  %v11681 = vunpack.c.h.bf16 %v11673
  %v11682 = vpack.c.bf16 %v11669, %v11668
  %11683 = vmatprep.subr.bf16.mxu0 %v10905
  %11684 = vmatpush1.bf16.msra.mxu0 %v10904
  %11685 = vmatprep.subr.bf16.mxu0 %v10909
  %11686 = vmatpush1.bf16.msra.mxu0 %v10908
  %11687 = vmatprep.subr.bf16.mxu0 %v10913
  %11688 = vmatpush1.bf16.msra.mxu0 %v10912
  %11689 = vmatprep.subr.bf16.mxu0 %v10917
  %11690 = vmatpush1.bf16.msra.mxu0 %v10916
  %11691 = vmatprep.subr.bf16.mxu0 %v10921
  %11692 = vmatpush1.bf16.msra.mxu0 %v10920
  %11693 = vmatprep.subr.bf16.mxu0 %v10925
  %11694 = vmatpush1.bf16.msra.mxu0 %v10924
  %11695 = vmatprep.subr.bf16.mxu0 %v10929
  %11696 = vmatpush1.bf16.msra.mxu0 %v10928
  %11697 = vmatprep.subr.bf16.mxu0 %v10933
  %11698 = vmatpush1.bf16.msra.mxu0 %v10932
  %11699 = vmatprep.subr.bf16.mxu0 0
  %11700 = vmatpush1.bf16.msra.mxu0 0
  %11701 = vmatprep.subr.bf16.mxu0 0
  %11702 = vmatpush1.bf16.msra.mxu0 0
  %11703 = vmatprep.subr.bf16.mxu0 0
  %11704 = vmatpush1.bf16.msra.mxu0 0
  %11705 = vmatprep.subr.bf16.mxu0 0
  %11706 = vmatpush1.bf16.msra.mxu0 0
  %11707 = vmatprep.subr.bf16.mxu0 0
  %11708 = vmatpush1.bf16.msra.mxu0 0
  %11709 = vmatprep.subr.bf16.mxu0 0
  %11710 = vmatpush1.bf16.msra.mxu0 0
  %11711 = vmatprep.subr.bf16.mxu0 0
  %11712 = vmatpush1.bf16.msra.mxu0 0
  %11713 = vmatprep.subr.bf16.mxu0 0
  %11714 = vmatpush1.bf16.msra.mxu0 0
  %11715 = vmatprep.mubr.bf16.mxu0 0
  %11716 = vmatmul.mubr.bf16.gmra.mrb[0].mxu0 %v11682
  %v11717 = vpop.f32.mrb[0].mxu0
  %v11718 = vadd.f32 0.0, %v11717
  %v11719 = vpop.f32.mrb[0].mxu0
  %v11720 = vadd.f32 0.0, %v11719
  %v11721 = vpop.f32.mrb[0].mxu0
  %v11722 = vadd.f32 0.0, %v11721
  %v11723 = vpop.f32.mrb[0].mxu0
  %v11724 = vadd.f32 0.0, %v11723
  %11725 = vdwg.mxu0
  %11726 = vmatprep.subr.bf16.mxu0 %v10907
  %11727 = vmatpush1.bf16.msra.mxu0 %v10906
  %11728 = vmatprep.subr.bf16.mxu0 %v10911
  %11729 = vmatpush1.bf16.msra.mxu0 %v10910
  %11730 = vmatprep.subr.bf16.mxu0 %v10915
  %11731 = vmatpush1.bf16.msra.mxu0 %v10914
  %11732 = vmatprep.subr.bf16.mxu0 %v10919
  %11733 = vmatpush1.bf16.msra.mxu0 %v10918
  %11734 = vmatprep.subr.bf16.mxu0 %v10923
  %11735 = vmatpush1.bf16.msra.mxu0 %v10922
  %11736 = vmatprep.subr.bf16.mxu0 %v10927
  %11737 = vmatpush1.bf16.msra.mxu0 %v10926
  %11738 = vmatprep.subr.bf16.mxu0 %v10931
  %11739 = vmatpush1.bf16.msra.mxu0 %v10930
  %11740 = vmatprep.subr.bf16.mxu0 %v10935
  %11741 = vmatpush1.bf16.msra.mxu0 %v10934
  %11742 = vmatprep.subr.bf16.mxu0 0
  %11743 = vmatpush1.bf16.msra.mxu0 0
  %11744 = vmatprep.subr.bf16.mxu0 0
  %11745 = vmatpush1.bf16.msra.mxu0 0
  %11746 = vmatprep.subr.bf16.mxu0 0
  %11747 = vmatpush1.bf16.msra.mxu0 0
  %11748 = vmatprep.subr.bf16.mxu0 0
  %11749 = vmatpush1.bf16.msra.mxu0 0
  %11750 = vmatprep.subr.bf16.mxu0 0
  %11751 = vmatpush1.bf16.msra.mxu0 0
  %11752 = vmatprep.subr.bf16.mxu0 0
  %11753 = vmatpush1.bf16.msra.mxu0 0
  %11754 = vmatprep.subr.bf16.mxu0 0
  %11755 = vmatpush1.bf16.msra.mxu0 0
  %11756 = vmatprep.subr.bf16.mxu0 0
  %11757 = vmatpush1.bf16.msra.mxu0 0
  %11758 = vmatprep.mubr.bf16.mxu0 0
  %11759 = vmatmul.mubr.bf16.gmra.mrb[0].mxu0 %v11682
  %v11760 = vpop.f32.mrb[0].mxu0
  %v11761 = vadd.f32 0.0, %v11760
  %v11762 = vpop.f32.mrb[0].mxu0
  %v11763 = vadd.f32 0.0, %v11762
  %v11764 = vpop.f32.mrb[0].mxu0
  %v11765 = vadd.f32 0.0, %v11764
  %v11766 = vpop.f32.mrb[0].mxu0
  %v11767 = vadd.f32 0.0, %v11766
  %11768 = vdwg.mxu0
  %v11769 = vadd.f32 %v11674, %v11718
  %v11770 = vadd.f32 %v11675, %v11720
  %v11771 = vadd.f32 %v11676, %v11761
  %v11772 = vadd.f32 %v11677, %v11763
  %v11773 = vadd.f32 %v11678, %v11722
  %v11774 = vadd.f32 %v11679, %v11724
  %v11775 = vadd.f32 %v11680, %v11765
  %v11776 = vadd.f32 %v11681, %v11767
  %v11777 = vmul.f32 %v11769, 0.5
  %v11778 = vmul.f32 %v11770, 0.5
  %v11779 = vmul.f32 %v11771, 0.5
  %v11780 = vmul.f32 %v11773, 0.5
  %v11781 = vmul.f32 %v11774, 0.5
  %v11782 = vmul.f32 %v11775, 0.5
  %v11783 = vtanh.pop %v11777
  %v11784 = vtanh.pop %v11778
  %v11785 = vtanh.pop %v11779
  %v11786 = vtanh.pop %v11780
  %v11787 = vtanh.pop %v11781
  %v11788 = vtanh.pop %v11782
  %v11789 = vmul.f32 %v11783, 0.5
  %v11790 = vmul.f32 %v11784, 0.5
  %v11791 = vmul.f32 %v11785, 0.5
  %v11792 = vmul.f32 %v11786, 0.5
  %v11793 = vmul.f32 %v11787, 0.5
  %v11794 = vmul.f32 %v11788, 0.5
  %v11795 = vadd.f32 %v11789, 0.5
  %v11796 = vadd.f32 %v11790, 0.5
  %v11797 = vadd.f32 %v11791, 0.5
  %v11798 = vadd.f32 %v11792, 0.5
  %v11799 = vadd.f32 %v11793, 0.5
  %v11800 = vadd.f32 %v11794, 0.5
  %v11801 = vtanh.pop %v11772
  %v11802 = vtanh.pop %v11776
  %v11803 = vmul.f32 %v11796, %v11664
  %v11804 = vmul.f32 %v11799, %v11665
  %v11805 = vmul.f32 %v11795, %v11801
  %v11806 = vmul.f32 %v11798, %v11802
  %v11807 = vadd.f32 %v11803, %v11805
  %v11808 = vadd.f32 %v11804, %v11806
  %v11809 = vtanh.pop %v11807
  %v11810 = vtanh.pop %v11808
  %v11811 = vmul.f32 %v11797, %v11809
  %v11812 = vmul.f32 %v11800, %v11810
  %v11813 = vld [vmem:[%s4332] sm:$0xff]
  %v11814 = vld [vmem:[%s4332 + $0x8] sm:$0xff]
  %v11815 = vld [vmem:[%s4332 + $0x10] sm:$0xff]
  %v11816 = vld [vmem:[%s4332 + $0x18] sm:$0xff]
  %v11817 = vunpack.c.l.bf16 %v11813
  %v11818 = vunpack.c.l.bf16 %v11814
  %v11819 = vunpack.c.l.bf16 %v11815
  %v11820 = vunpack.c.l.bf16 %v11816
  %v11821 = vunpack.c.h.bf16 %v11813
  %v11822 = vunpack.c.h.bf16 %v11814
  %v11823 = vunpack.c.h.bf16 %v11815
  %v11824 = vunpack.c.h.bf16 %v11816
  %v11825 = vpack.c.bf16 %v11812, %v11811
  %11826 = vmatprep.subr.bf16.mxu0 %v10905
  %11827 = vmatpush1.bf16.msra.mxu0 %v10904
  %11828 = vmatprep.subr.bf16.mxu0 %v10909
  %11829 = vmatpush1.bf16.msra.mxu0 %v10908
  %11830 = vmatprep.subr.bf16.mxu0 %v10913
  %11831 = vmatpush1.bf16.msra.mxu0 %v10912
  %11832 = vmatprep.subr.bf16.mxu0 %v10917
  %11833 = vmatpush1.bf16.msra.mxu0 %v10916
  %11834 = vmatprep.subr.bf16.mxu0 %v10921
  %11835 = vmatpush1.bf16.msra.mxu0 %v10920
  %11836 = vmatprep.subr.bf16.mxu0 %v10925
  %11837 = vmatpush1.bf16.msra.mxu0 %v10924
  %11838 = vmatprep.subr.bf16.mxu0 %v10929
  %11839 = vmatpush1.bf16.msra.mxu0 %v10928
  %11840 = vmatprep.subr.bf16.mxu0 %v10933
  %11841 = vmatpush1.bf16.msra.mxu0 %v10932
  %11842 = vmatprep.subr.bf16.mxu0 0
  %11843 = vmatpush1.bf16.msra.mxu0 0
  %11844 = vmatprep.subr.bf16.mxu0 0
  %11845 = vmatpush1.bf16.msra.mxu0 0
  %11846 = vmatprep.subr.bf16.mxu0 0
  %11847 = vmatpush1.bf16.msra.mxu0 0
  %11848 = vmatprep.subr.bf16.mxu0 0
  %11849 = vmatpush1.bf16.msra.mxu0 0
  %11850 = vmatprep.subr.bf16.mxu0 0
  %11851 = vmatpush1.bf16.msra.mxu0 0
  %11852 = vmatprep.subr.bf16.mxu0 0
  %11853 = vmatpush1.bf16.msra.mxu0 0
  %11854 = vmatprep.subr.bf16.mxu0 0
  %11855 = vmatpush1.bf16.msra.mxu0 0
  %11856 = vmatprep.subr.bf16.mxu0 0
  %11857 = vmatpush1.bf16.msra.mxu0 0
  %11858 = vmatprep.mubr.bf16.mxu0 0
  %11859 = vmatmul.mubr.bf16.gmra.mrb[0].mxu0 %v11825
  %v11860 = vpop.f32.mrb[0].mxu0
  %v11861 = vadd.f32 0.0, %v11860
  %v11862 = vpop.f32.mrb[0].mxu0
  %v11863 = vadd.f32 0.0, %v11862
  %v11864 = vpop.f32.mrb[0].mxu0
  %v11865 = vadd.f32 0.0, %v11864
  %v11866 = vpop.f32.mrb[0].mxu0
  %v11867 = vadd.f32 0.0, %v11866
  %11868 = vdwg.mxu0
  %11869 = vmatprep.subr.bf16.mxu0 %v10907
  %11870 = vmatpush1.bf16.msra.mxu0 %v10906
  %11871 = vmatprep.subr.bf16.mxu0 %v10911
  %11872 = vmatpush1.bf16.msra.mxu0 %v10910
  %11873 = vmatprep.subr.bf16.mxu0 %v10915
  %11874 = vmatpush1.bf16.msra.mxu0 %v10914
  %11875 = vmatprep.subr.bf16.mxu0 %v10919
  %11876 = vmatpush1.bf16.msra.mxu0 %v10918
  %11877 = vmatprep.subr.bf16.mxu0 %v10923
  %11878 = vmatpush1.bf16.msra.mxu0 %v10922
  %11879 = vmatprep.subr.bf16.mxu0 %v10927
  %11880 = vmatpush1.bf16.msra.mxu0 %v10926
  %11881 = vmatprep.subr.bf16.mxu0 %v10931
  %11882 = vmatpush1.bf16.msra.mxu0 %v10930
  %11883 = vmatprep.subr.bf16.mxu0 %v10935
  %11884 = vmatpush1.bf16.msra.mxu0 %v10934
  %11885 = vmatprep.subr.bf16.mxu0 0
  %11886 = vmatpush1.bf16.msra.mxu0 0
  %11887 = vmatprep.subr.bf16.mxu0 0
  %11888 = vmatpush1.bf16.msra.mxu0 0
  %11889 = vmatprep.subr.bf16.mxu0 0
  %11890 = vmatpush1.bf16.msra.mxu0 0
  %11891 = vmatprep.subr.bf16.mxu0 0
  %11892 = vmatpush1.bf16.msra.mxu0 0
  %11893 = vmatprep.subr.bf16.mxu0 0
  %11894 = vmatpush1.bf16.msra.mxu0 0
  %11895 = vmatprep.subr.bf16.mxu0 0
  %11896 = vmatpush1.bf16.msra.mxu0 0
  %11897 = vmatprep.subr.bf16.mxu0 0
  %11898 = vmatpush1.bf16.msra.mxu0 0
  %11899 = vmatprep.subr.bf16.mxu0 0
  %11900 = vmatpush1.bf16.msra.mxu0 0
  %11901 = vmatprep.mubr.bf16.mxu0 0
  %11902 = vmatmul.mubr.bf16.gmra.mrb[0].mxu0 %v11825
  %v11903 = vpop.f32.mrb[0].mxu0
  %v11904 = vadd.f32 0.0, %v11903
  %v11905 = vpop.f32.mrb[0].mxu0
  %v11906 = vadd.f32 0.0, %v11905
  %v11907 = vpop.f32.mrb[0].mxu0
  %v11908 = vadd.f32 0.0, %v11907
  %v11909 = vpop.f32.mrb[0].mxu0
  %v11910 = vadd.f32 0.0, %v11909
  %11911 = vdwg.mxu0
  %v11912 = vadd.f32 %v11817, %v11861
  %v11913 = vadd.f32 %v11818, %v11863
  %v11914 = vadd.f32 %v11819, %v11904
  %v11915 = vadd.f32 %v11820, %v11906
  %v11916 = vadd.f32 %v11821, %v11865
  %v11917 = vadd.f32 %v11822, %v11867
  %v11918 = vadd.f32 %v11823, %v11908
  %v11919 = vadd.f32 %v11824, %v11910
  %v11920 = vmul.f32 %v11912, 0.5
  %v11921 = vmul.f32 %v11913, 0.5
  %v11922 = vmul.f32 %v11914, 0.5
  %v11923 = vmul.f32 %v11916, 0.5
  %v11924 = vmul.f32 %v11917, 0.5
  %v11925 = vmul.f32 %v11918, 0.5
  %v11926 = vtanh.pop %v11920
  %v11927 = vtanh.pop %v11921
  %v11928 = vtanh.pop %v11922
  %v11929 = vtanh.pop %v11923
  %v11930 = vtanh.pop %v11924
  %v11931 = vtanh.pop %v11925
  %v11932 = vmul.f32 %v11926, 0.5
  %v11933 = vmul.f32 %v11927, 0.5
  %v11934 = vmul.f32 %v11928, 0.5
  %v11935 = vmul.f32 %v11929, 0.5
  %v11936 = vmul.f32 %v11930, 0.5
  %v11937 = vmul.f32 %v11931, 0.5
  %v11938 = vadd.f32 %v11932, 0.5
  %v11939 = vadd.f32 %v11933, 0.5
  %v11940 = vadd.f32 %v11934, 0.5
  %v11941 = vadd.f32 %v11935, 0.5
  %v11942 = vadd.f32 %v11936, 0.5
  %v11943 = vadd.f32 %v11937, 0.5
  %v11944 = vtanh.pop %v11915
  %v11945 = vtanh.pop %v11919
  %v11946 = vmul.f32 %v11939, %v11807
  %v11947 = vmul.f32 %v11942, %v11808
  %v11948 = vmul.f32 %v11938, %v11944
  %v11949 = vmul.f32 %v11941, %v11945
  %v11950 = vadd.f32 %v11946, %v11948
  %v11951 = vadd.f32 %v11947, %v11949
  %v11952 = vtanh.pop %v11950
  %v11953 = vtanh.pop %v11951
  %v11954 = vmul.f32 %v11940, %v11952
  %v11955 = vmul.f32 %v11943, %v11953
  %v11956 = vld [vmem:[%s4976] sm:$0xff]
  %v11957 = vld [vmem:[%s4976 + $0x8] sm:$0xff]
  %v11958 = vld [vmem:[%s4976 + $0x10] sm:$0xff]
  %v11959 = vld [vmem:[%s4976 + $0x18] sm:$0xff]
  %v11960 = vunpack.c.l.bf16 %v11956
  %v11961 = vunpack.c.l.bf16 %v11957
  %v11962 = vunpack.c.l.bf16 %v11958
  %v11963 = vunpack.c.l.bf16 %v11959
  %v11964 = vunpack.c.h.bf16 %v11956
  %v11965 = vunpack.c.h.bf16 %v11957
  %v11966 = vunpack.c.h.bf16 %v11958
  %v11967 = vunpack.c.h.bf16 %v11959
  %v11968 = vpack.c.bf16 %v11955, %v11954
  %11969 = vmatprep.subr.bf16.mxu0 %v10905
  %11970 = vmatpush1.bf16.msra.mxu0 %v10904
  %11971 = vmatprep.subr.bf16.mxu0 %v10909
  %11972 = vmatpush1.bf16.msra.mxu0 %v10908
  %11973 = vmatprep.subr.bf16.mxu0 %v10913
  %11974 = vmatpush1.bf16.msra.mxu0 %v10912
  %11975 = vmatprep.subr.bf16.mxu0 %v10917
  %11976 = vmatpush1.bf16.msra.mxu0 %v10916
  %11977 = vmatprep.subr.bf16.mxu0 %v10921
  %11978 = vmatpush1.bf16.msra.mxu0 %v10920
  %11979 = vmatprep.subr.bf16.mxu0 %v10925
  %11980 = vmatpush1.bf16.msra.mxu0 %v10924
  %11981 = vmatprep.subr.bf16.mxu0 %v10929
  %11982 = vmatpush1.bf16.msra.mxu0 %v10928
  %11983 = vmatprep.subr.bf16.mxu0 %v10933
  %11984 = vmatpush1.bf16.msra.mxu0 %v10932
  %11985 = vmatprep.subr.bf16.mxu0 0
  %11986 = vmatpush1.bf16.msra.mxu0 0
  %11987 = vmatprep.subr.bf16.mxu0 0
  %11988 = vmatpush1.bf16.msra.mxu0 0
  %11989 = vmatprep.subr.bf16.mxu0 0
  %11990 = vmatpush1.bf16.msra.mxu0 0
  %11991 = vmatprep.subr.bf16.mxu0 0
  %11992 = vmatpush1.bf16.msra.mxu0 0
  %11993 = vmatprep.subr.bf16.mxu0 0
  %11994 = vmatpush1.bf16.msra.mxu0 0
  %11995 = vmatprep.subr.bf16.mxu0 0
  %11996 = vmatpush1.bf16.msra.mxu0 0
  %11997 = vmatprep.subr.bf16.mxu0 0
  %11998 = vmatpush1.bf16.msra.mxu0 0
  %11999 = vmatprep.subr.bf16.mxu0 0
  %12000 = vmatpush1.bf16.msra.mxu0 0
  %12001 = vmatprep.mubr.bf16.mxu0 0
  %12002 = vmatmul.mubr.bf16.gmra.mrb[0].mxu0 %v11968
  %v12003 = vpop.f32.mrb[0].mxu0
  %v12004 = vadd.f32 0.0, %v12003
  %v12005 = vpop.f32.mrb[0].mxu0
  %v12006 = vadd.f32 0.0, %v12005
  %v12007 = vpop.f32.mrb[0].mxu0
  %v12008 = vadd.f32 0.0, %v12007
  %v12009 = vpop.f32.mrb[0].mxu0
  %v12010 = vadd.f32 0.0, %v12009
  %12011 = vdwg.mxu0
  %12012 = vmatprep.subr.bf16.mxu0 %v10907
  %12013 = vmatpush1.bf16.msra.mxu0 %v10906
  %12014 = vmatprep.subr.bf16.mxu0 %v10911
  %12015 = vmatpush1.bf16.msra.mxu0 %v10910
  %12016 = vmatprep.subr.bf16.mxu0 %v10915
  %12017 = vmatpush1.bf16.msra.mxu0 %v10914
  %12018 = vmatprep.subr.bf16.mxu0 %v10919
  %12019 = vmatpush1.bf16.msra.mxu0 %v10918
  %12020 = vmatprep.subr.bf16.mxu0 %v10923
  %12021 = vmatpush1.bf16.msra.mxu0 %v10922
  %12022 = vmatprep.subr.bf16.mxu0 %v10927
  %12023 = vmatpush1.bf16.msra.mxu0 %v10926
  %12024 = vmatprep.subr.bf16.mxu0 %v10931
  %12025 = vmatpush1.bf16.msra.mxu0 %v10930
  %12026 = vmatprep.subr.bf16.mxu0 %v10935
  %12027 = vmatpush1.bf16.msra.mxu0 %v10934
  %12028 = vmatprep.subr.bf16.mxu0 0
  %12029 = vmatpush1.bf16.msra.mxu0 0
  %12030 = vmatprep.subr.bf16.mxu0 0
  %12031 = vmatpush1.bf16.msra.mxu0 0
  %12032 = vmatprep.subr.bf16.mxu0 0
  %12033 = vmatpush1.bf16.msra.mxu0 0
  %12034 = vmatprep.subr.bf16.mxu0 0
  %12035 = vmatpush1.bf16.msra.mxu0 0
  %12036 = vmatprep.subr.bf16.mxu0 0
  %12037 = vmatpush1.bf16.msra.mxu0 0
  %12038 = vmatprep.subr.bf16.mxu0 0
  %12039 = vmatpush1.bf16.msra.mxu0 0
  %12040 = vmatprep.subr.bf16.mxu0 0
  %12041 = vmatpush1.bf16.msra.mxu0 0
  %12042 = vmatprep.subr.bf16.mxu0 0
  %12043 = vmatpush1.bf16.msra.mxu0 0
  %12044 = vmatprep.mubr.bf16.mxu0 0
  %12045 = vmatmul.mubr.bf16.gmra.mrb[0].mxu0 %v11968
  %v12046 = vpop.f32.mrb[0].mxu0
  %v12047 = vadd.f32 0.0, %v12046
  %v12048 = vpop.f32.mrb[0].mxu0
  %v12049 = vadd.f32 0.0, %v12048
  %v12050 = vpop.f32.mrb[0].mxu0
  %v12051 = vadd.f32 0.0, %v12050
  %v12052 = vpop.f32.mrb[0].mxu0
  %v12053 = vadd.f32 0.0, %v12052
  %12054 = vdwg.mxu0
  %v12055 = vadd.f32 %v11960, %v12004
  %v12056 = vadd.f32 %v11961, %v12006
  %v12057 = vadd.f32 %v11962, %v12047
  %v12058 = vadd.f32 %v11963, %v12049
  %v12059 = vadd.f32 %v11964, %v12008
  %v12060 = vadd.f32 %v11965, %v12010
  %v12061 = vadd.f32 %v11966, %v12051
  %v12062 = vadd.f32 %v11967, %v12053
  %v12063 = vmul.f32 %v12055, 0.5
  %v12064 = vmul.f32 %v12056, 0.5
  %v12065 = vmul.f32 %v12057, 0.5
  %v12066 = vmul.f32 %v12059, 0.5
  %v12067 = vmul.f32 %v12060, 0.5
  %v12068 = vmul.f32 %v12061, 0.5
  %v12069 = vtanh.pop %v12063
  %v12070 = vtanh.pop %v12064
  %v12071 = vtanh.pop %v12065
  %v12072 = vtanh.pop %v12066
  %v12073 = vtanh.pop %v12067
  %v12074 = vtanh.pop %v12068
  %v12075 = vmul.f32 %v12069, 0.5
  %v12076 = vmul.f32 %v12070, 0.5
  %v12077 = vmul.f32 %v12071, 0.5
  %v12078 = vmul.f32 %v12072, 0.5
  %v12079 = vmul.f32 %v12073, 0.5
  %v12080 = vmul.f32 %v12074, 0.5
  %v12081 = vadd.f32 %v12075, 0.5
  %v12082 = vadd.f32 %v12076, 0.5
  %v12083 = vadd.f32 %v12077, 0.5
  %v12084 = vadd.f32 %v12078, 0.5
  %v12085 = vadd.f32 %v12079, 0.5
  %v12086 = vadd.f32 %v12080, 0.5
  %v12087 = vtanh.pop %v12058
  %v12088 = vtanh.pop %v12062
  %v12089 = vmul.f32 %v12082, %v11950
  %v12090 = vmul.f32 %v12085, %v11951
  %v12091 = vmul.f32 %v12081, %v12087
  %v12092 = vmul.f32 %v12084, %v12088
  %v12093 = vadd.f32 %v12089, %v12091
  %v12094 = vadd.f32 %v12090, %v12092
  %v12095 = vtanh.pop %v12093
  %v12096 = vtanh.pop %v12094
  %v12097 = vmul.f32 %v12083, %v12095
  %v12098 = vmul.f32 %v12086, %v12096
  %v12099 = vld [vmem:[%s10] sm:$0xff]
  %v12100 = vld [vmem:[%s10 + $0x8] sm:$0xff]
  %v12101 = vld [vmem:[%s10 + $0x10] sm:$0xff]
  %v12102 = vld [vmem:[%s10 + $0x18] sm:$0xff]
  %v12103 = vld [vmem:[%s10 + $0x20] sm:$0xff]
  %v12104 = vld [vmem:[%s10 + $0x28] sm:$0xff]
  %v12105 = vld [vmem:[%s10 + $0x30] sm:$0xff]
  %v12106 = vld [vmem:[%s10 + $0x38] sm:$0xff]
  %v12107 = vld [vmem:[%s10 + $0x40] sm:$0xff]
  %v12108 = vld [vmem:[%s10 + $0x48] sm:$0xff]
  %v12109 = vld [vmem:[%s10 + $0x50] sm:$0xff]
  %v12110 = vld [vmem:[%s10 + $0x58] sm:$0xff]
  %v12111 = vld [vmem:[%s10 + $0x60] sm:$0xff]
  %v12112 = vld [vmem:[%s10 + $0x68] sm:$0xff]
  %v12113 = vld [vmem:[%s10 + $0x70] sm:$0xff]
  %v12114 = vld [vmem:[%s10 + $0x78] sm:$0xff]
  %v12115 = vld [vmem:[#allocation3] sm:$0x1]
  %v12117 = vlaneseq
  %v12118 = vshrl.u32 %v12117, 7
  %v12119 = vsub.s32 0, %v12118
  %v12120 = vrot.slane %v12115, %v12119
  %12122 = vmatprep.subr.mxu0 0.0
  %12123 = vmatpush1.msra.mxu0 %v12099
  %12124 = vmatprep.subr.mxu0 0.0
  %12125 = vmatpush1.msra.mxu0 %v12100
  %12126 = vmatprep.subr.mxu0 0.0
  %12127 = vmatpush1.msra.mxu0 %v12101
  %12128 = vmatprep.subr.mxu0 0.0
  %12129 = vmatpush1.msra.mxu0 %v12102
  %12130 = vmatprep.subr.mxu0 0.0
  %12131 = vmatpush1.msra.mxu0 %v12103
  %12132 = vmatprep.subr.mxu0 0.0
  %12133 = vmatpush1.msra.mxu0 %v12104
  %12134 = vmatprep.subr.mxu0 0.0
  %12135 = vmatpush1.msra.mxu0 %v12105
  %12136 = vmatprep.subr.mxu0 0.0
  %12137 = vmatpush1.msra.mxu0 %v12106
  %12138 = vmatprep.subr.mxu0 0.0
  %12139 = vmatpush1.msra.mxu0 %v12107
  %12140 = vmatprep.subr.mxu0 0.0
  %12141 = vmatpush1.msra.mxu0 %v12108
  %12142 = vmatprep.subr.mxu0 0.0
  %12143 = vmatpush1.msra.mxu0 %v12109
  %12144 = vmatprep.subr.mxu0 0.0
  %12145 = vmatpush1.msra.mxu0 %v12110
  %12146 = vmatprep.subr.mxu0 0.0
  %12147 = vmatpush1.msra.mxu0 %v12111
  %12148 = vmatprep.subr.mxu0 0.0
  %12149 = vmatpush1.msra.mxu0 %v12112
  %12150 = vmatprep.subr.mxu0 0.0
  %12151 = vmatpush1.msra.mxu0 %v12113
  %12152 = vmatprep.subr.mxu0 0.0
  %12153 = vmatpush1.msra.mxu0 %v12114
  %12154 = vmatprep.subr.mxu0 0.0
  %12155 = vmatpush1.msra.mxu0 0.0
  %12156 = vmatprep.subr.mxu0 0.0
  %12157 = vmatpush1.msra.mxu0 0.0
  %12158 = vmatprep.subr.mxu0 0.0
  %12159 = vmatpush1.msra.mxu0 0.0
  %12160 = vmatprep.subr.mxu0 0.0
  %12161 = vmatpush1.msra.mxu0 0.0
  %12162 = vmatprep.subr.mxu0 0.0
  %12163 = vmatpush1.msra.mxu0 0.0
  %12164 = vmatprep.subr.mxu0 0.0
  %12165 = vmatpush1.msra.mxu0 0.0
  %12166 = vmatprep.subr.mxu0 0.0
  %12167 = vmatpush1.msra.mxu0 0.0
  %12168 = vmatprep.subr.mxu0 0.0
  %12169 = vmatpush1.msra.mxu0 0.0
  %12170 = vmatprep.subr.mxu0 0.0
  %12171 = vmatpush1.msra.mxu0 0.0
  %12172 = vmatprep.subr.mxu0 0.0
  %12173 = vmatpush1.msra.mxu0 0.0
  %12174 = vmatprep.subr.mxu0 0.0
  %12175 = vmatpush1.msra.mxu0 0.0
  %12176 = vmatprep.subr.mxu0 0.0
  %12177 = vmatpush1.msra.mxu0 0.0
  %12178 = vmatprep.subr.mxu0 0.0
  %12179 = vmatpush1.msra.mxu0 0.0
  %12180 = vmatprep.subr.mxu0 0.0
  %12181 = vmatpush1.msra.mxu0 0.0
  %12182 = vmatprep.subr.mxu0 0.0
  %12183 = vmatpush1.msra.mxu0 0.0
  %12184 = vmatprep.subr.mxu0 0.0
  %12185 = vmatpush1.msra.mxu0 0.0
  %12186 = vmatprep.mubr.f32.mxu0 0.0
  %12187 = vmatmul.mubr.f32.gmra.mrb[0].mxu0 %v12097
  %v12188 = vpop.f32.mrb[0].mxu0
  %v12189 = vadd.f32 %v12120, %v12188
  %v12190 = vpop.f32.mrb[0].mxu0
  %12191 = vmatprep.mubr.f32.mxu0 0.0
  %12192 = vmatmul.mubr.f32.gmra.mrb[0].mxu0 %v12098
  %v12193 = vpop.f32.mrb[0].mxu0
  %v12194 = vadd.f32 %v12120, %v12193
  %v12195 = vpop.f32.mrb[0].mxu0
  %12196 = vdwg.mxu0
  %vm12197 = vcmask 7168
  %12198 = vst.msk [vmem:[%s12] sm:$0xff] %vm12197, %v12189
  %12199 = vst.msk [vmem:[%s12 + $0x8] sm:$0xff] %vm12197, %v12194
  // Predicated region
  $region50: #{lstm_model_forward.1} parent=0 // pred_check
    _
  $region51: #{lstm_model_forward.1} parent=0 // pred_check_branch
    %12201 = sbr.rel (0) target = $region53
  $region52: #{lstm_model_forward.1} parent=0 // pred_region
    _
  $region53: #{lstm_model_forward.1} parent=0 // pred_fallthru
    _
  // Predicated region
  $region54: #{lstm_model_forward.1} parent=0 // pred_check
    _
  $region55: #{lstm_model_forward.1} parent=0 // pred_check_branch
    %12203 = sbr.rel (0) target = $region57
  $region56: #{lstm_model_forward.1} parent=0 // pred_region
    _
  $region57: #{lstm_model_forward.1} parent=0 // pred_fallthru
    _

</llo_original>
